<compile_context>
chip_gen: v7x
topology: tpu7x:2x2x1
jax: 0.10.0
libtpu: 0.0.40
codegen_flags: <defaults>
</compile_context>

<pallas_src>
import math
import numpy as np

import jax
import jax.numpy as jnp
from jax import lax
from jax.experimental import pallas as pl
from jax.experimental.pallas import tpu as pltpu

# ----------------------------------------------------------------------------
# Config (the `args` dict of the reference script), chosen small.
# ----------------------------------------------------------------------------
ARGS = dict(
    dropout=0.1,            # inference: all Dropout layers are no-ops
    decoder_layers=2,
    vocab_size=128,
    max_dec_len=8,          # seq_len of the decoder
    dimension=128,          # d_model
    use_beam_search=False,
    beam_width=3,
    start_token_id=1,
    end_token_id=2,
    beam_length_penalty=0.6,
)
N_HEADS = 16                # hard-coded in XLDecoder
ENC_LEN = 16
BATCH = 2

D = ARGS['dimension']
V = ARGS['vocab_size']
L = ARGS['max_dec_len']
NL = ARGS['decoder_layers']
H = N_HEADS
DH = D // H
HL = H * L                  # packed (head, key-pos) lane axis for self-attn = 128
HE = H * ENC_LEN            # packed (head, enc-pos) lane axis for cross-attn = 256
DFF = 4 * D
E = ENC_LEN

NEG = -1e30
LN_EPS = 1e-5
EPS = 1e-6
SCALE = 1.0 / math.sqrt(DH)
BF = jnp.bfloat16


# ----------------------------------------------------------------------------
# Helpers traced into the kernel body.
# ----------------------------------------------------------------------------
def _layer_norm(x, g, b, eps=LN_EPS):
    mu = jnp.mean(x, axis=-1, keepdims=True)
    var = jnp.mean((x - mu) ** 2, axis=-1, keepdims=True)
    return (x - mu) * lax.rsqrt(var + eps) * g + b


def _gelu_tanh(x):
    # TODO(synk): torch nn.GELU() uses exact erf; tanh approximation used so the
    # transcendental runs on the EUP slot (numeric deviation < ~1e-3).
    c = math.sqrt(2.0 / math.pi)
    return 0.5 * x * (1.0 + jnp.tanh(c * (x + 0.044715 * x * x * x)))


def _mm(a_bf, b_bf):
    # bf16 MXU matmul with f32 accumulation.
    return jnp.dot(a_bf, b_bf, preferred_element_type=jnp.float32)


def _mm_nt(a_bf, b_bf):
    # a (M, K) @ b (N, K)^T -> (M, N), bf16 operands, f32 accumulate.
    return lax.dot_general(a_bf, b_bf, (((1,), (1,)), ((), ())),
                           preferred_element_type=jnp.float32)


def _pack_heads(x_bf, mask_bf):
    # (rows, D) -> (H*rows, D): row (h, j) keeps x[j] on head-h columns only.
    # Pure sublane concatenation + mask multiply (no MXU, no relayout).
    return jnp.concatenate([x_bf] * H, axis=0) * mask_bf


def _softmax_rows(s):
    s = s - jnp.max(s, axis=1, keepdims=True)
    p = jnp.exp(s)
    return p * pl.reciprocal(jnp.sum(p, axis=1, keepdims=True), approx=True)


# ----------------------------------------------------------------------------
# Fused kernel: full decoder stack + output head, one batch element per program.
# ----------------------------------------------------------------------------
def qg_fused_kernel(
    dec_ref, enc_ref, emask_ref, ids_ref, tgt_ref,                      # batched
    cmask_ref, hmask_ref, hmaske_ref, diag_ref, rks_ref,                # consts
    wqkv_ref, rwb_ref, rrb_ref, wo_ref, ln1g_ref, ln1b_ref,             # layers
    wiq_ref, wikv_ref, wio_ref, ln2g_ref, ln2b_ref,
    w1_ref, b1_ref, w2_ref, b2_ref, ln3g_ref, ln3b_ref,
    whead_ref, bhead_ref, wms_ref, bms_ref,                             # head
    loss_ref, cnt_ref,
):
    core = dec_ref[0]                                # (L, D) decoder input emb, f32
    enc = enc_ref[0]                                 # (E, D) encoder rep, f32
    enc_b = enc.astype(BF)
    emask_he = emask_ref[0]                          # (1, H*E) padding mask (tiled)
    neg_he = (1.0 - emask_he) * NEG                  # (1, H*E)
    neg_e = neg_he[:, :E]                            # (1, E)  (head-0 block)

    cmask = cmask_ref[...]                           # (L, HL) causal mask, f32
    hmask = hmask_ref[...]                           # (HL, D) head-column mask, bf16
    hmask_e = hmaske_ref[...]                        # (HE, D) head-column mask, bf16
    diag = diag_ref[...]                             # (L, L*D) row-selection, bf16

    for l in range(NL):
        w = core
        w_b = w.astype(BF)

        # ---- masked (causal) relative-position self-attention, all heads -----
        qkv = _mm(w_b, wqkv_ref[l])                  # (L, 3D) fused q|k|v
        q = qkv[:, :D]
        k_b = qkv[:, D:2 * D].astype(BF)
        v_b = qkv[:, 2 * D:].astype(BF)

        k_pack = _pack_heads(k_b, hmask)             # (HL, D) row (h,j)=k[j]|head h
        v_pack = _pack_heads(v_b, hmask)             # (HL, D)

        qrw = (q + rwb_ref[l]).astype(BF)            # (L, D)
        qrr = (q + rrb_ref[l]).astype(BF)

        # AC[i,(h,j)] = sum_d (q+rwb)[i,(h,d)] * k[j,(h,d)]     -> (L, HL)
        ac = _mm_nt(qrw, k_pack)
        # BD with the Transformer-XL rel-shift folded into the host constant:
        # BD[i,(h,j)] = sum_d (q+rrb)[i,(h,d)] * rk[(j+L-1-i) mod L, (h,d)]
        qrr_exp = jnp.concatenate([qrr] * L, axis=1) * diag    # (L, L*D)
        bd = _mm(qrr_exp, rks_ref[l])                          # (L, HL)

        s = (ac + bd) * SCALE
        s = jnp.where(cmask > 0.0, s, NEG)
        # TODO(synk): row-wise max (over all heads) is used as the softmax
        # stabilizer instead of a per-(row, head) max; mathematically identical,
        # only weaker against extreme (>~80) cross-head logit spreads.
        s = s - jnp.max(s, axis=1, keepdims=True)
        p = jnp.exp(s).astype(BF)                    # (L, HL) unnormalized probs

        num = _mm(p, v_pack)                         # (L, D)  per-head weighted sums
        den = _mm(p, hmask)                          # (L, D)  per-head prob sums
        attn_vec = num * pl.reciprocal(jnp.maximum(den, 1e-30), approx=True)
        attn_out = _mm(attn_vec.astype(BF), wo_ref[l])
        mask_attn = _layer_norm(w + attn_out, ln1g_ref[l], ln1b_ref[l])

        # ---- encoder/decoder (interaction) attention, all heads --------------
        iq = _mm(mask_attn.astype(BF), wiq_ref[l])   # (L, D)
        ikv = _mm(enc_b, wikv_ref[l])                # (E, 2D) fused k|v
        ik_b = ikv[:, :D].astype(BF)
        iv_b = ikv[:, D:].astype(BF)
        ik_pack = _pack_heads(ik_b, hmask_e)         # (HE, D)
        iv_pack = _pack_heads(iv_b, hmask_e)         # (HE, D)

        sc = _mm_nt(iq.astype(BF), ik_pack) * SCALE + neg_he   # (L, HE)
        sc = sc - jnp.max(sc, axis=1, keepdims=True)
        p2 = jnp.exp(sc).astype(BF)

        num2 = _mm(p2, iv_pack)                      # (L, D)
        den2 = _mm(p2, hmask_e)                      # (L, D)
        attn_vec2 = num2 * pl.reciprocal(jnp.maximum(den2, 1e-30), approx=True)
        int_out = _mm(attn_vec2.astype(BF), wio_ref[l])
        interaction = _layer_norm(int_out + mask_attn, ln2g_ref[l], ln2b_ref[l])

        # ---- position-wise FFN ------------------------------------------------
        h1 = _mm(interaction.astype(BF), w1_ref[l]) + b1_ref[l]   # (L, DFF)
        h2 = _mm(_gelu_tanh(h1).astype(BF), w2_ref[l]) + b2_ref[l]
        core = _layer_norm(interaction + h2, ln3g_ref[l], ln3b_ref[l])

    # ---- output head: tied vocab softmax + copy dist + mode gate + NLL -------
    ids = ids_ref[0]                                 # (E, 1) int32
    tgt = tgt_ref[0]                                 # (L, 1) int32
    core_b = core.astype(BF)

    head = _mm(core_b, whead_ref[...]) + bhead_ref[...]    # (L, V+D) fused
    vl = head[:, :V]                                 # (L, V)  folded wout@embT
    cpy = head[:, V:]                                # (L, D)  copy projection

    vp = _softmax_rows(vl)                           # (L, V)

    il = _mm_nt(cpy.astype(BF), enc_b) + neg_e       # (L, E)
    ip = _softmax_rows(il)

    ms_pre = jnp.sum(core * wms_ref[...], axis=1, keepdims=True) + bms_ref[...]
    ms = pl.reciprocal(1.0 + jnp.exp(-ms_pre), approx=True)   # sigmoid, (L, 1)

    vp = vp * ms
    # scatter_add over the vocab dim via a one-hot matmul (duplicates sum).
    onehot_ids = (ids == lax.broadcasted_iota(jnp.int32, (E, V), 1)).astype(BF)
    vp = vp + _mm(((1.0 - ms) * ip).astype(BF), onehot_ids)

    onehot_t = (tgt == lax.broadcasted_iota(jnp.int32, (L, V), 1)
                ).astype(jnp.float32)                # (L, V)
    pred = jnp.sum(vp * onehot_t, axis=1, keepdims=True)      # (L, 1)
    nz = (tgt != 0).astype(jnp.float32)              # (L, 1)
    li = -jnp.log(pred + EPS) * nz

    loss_ref[0] = jnp.sum(li, keepdims=True)         # (1, 1)
    cnt_ref[0] = jnp.sum(nz, keepdims=True)          # (1, 1)


# ----------------------------------------------------------------------------
# pallas_call wrapper
# ----------------------------------------------------------------------------
def _rep_spec(shape):
    n = len(shape)
    return pl.BlockSpec(tuple(shape), lambda b, n=n: (0,) * n)


def _batch_spec(shape):
    n = len(shape)
    return pl.BlockSpec((1,) + tuple(shape[1:]),
                        lambda b, n=n: (b,) + (0,) * (n - 1))


def run_qg_decoder(dec_emb, enc_rep, emask_he, ids_col, tgt_col, consts, params):
    bsz = dec_emb.shape[0]
    inputs = [
        dec_emb, enc_rep, emask_he, ids_col, tgt_col,
        consts['cmask'], consts['hmask'], consts['hmask_e'],
        consts['diagmask'], consts['rks'],
        params['wqkv'], params['rwb'], params['rrb'], params['wo'],
        params['ln1g'], params['ln1b'],
        params['wiq'], params['wikv'], params['wio'],
        params['ln2g'], params['ln2b'],
        params['w1'], params['b1'], params['w2'], params['b2'],
        params['ln3g'], params['ln3b'],
        params['whead'], params['bhead'], params['wms'], params['bms'],
    ]
    batched = {0, 1, 2, 3, 4}
    in_specs = [(_batch_spec(a.shape) if i in batched else _rep_spec(a.shape))
                for i, a in enumerate(inputs)]
    out_shape = (jax.ShapeDtypeStruct((bsz, 1, 1), jnp.float32),
                 jax.ShapeDtypeStruct((bsz, 1, 1), jnp.float32))
    out_specs = (_batch_spec((bsz, 1, 1)), _batch_spec((bsz, 1, 1)))
    return pl.pallas_call(
        qg_fused_kernel,
        grid=(bsz,),
        in_specs=in_specs,
        out_specs=out_specs,
        out_shape=out_shape,
        compiler_params=pltpu.CompilerParams(dimension_semantics=("parallel",)),
    )(*inputs)


# ----------------------------------------------------------------------------
# Host-side constants: lane-major packing / masking helpers, and the
# rel-shifted relative-position keys (r @ r_net, shift folded in) per layer.
# ----------------------------------------------------------------------------
def build_constants(wr):
    """wr: (NL, D, D) float32 numpy, pre-transposed for `x @ W`."""
    # XL sinusoidal relative position embedding r (constant at inference).
    pos_seq = np.arange(L - 1, -1, -1.0, dtype=np.float32)
    inv_freq = 1.0 / (10000.0 ** (np.arange(0.0, D, 2.0, dtype=np.float32) / D))
    sin_inp = pos_seq[:, None] * inv_freq[None, :]
    r = np.concatenate([np.sin(sin_inp), np.cos(sin_inp)], axis=-1)   # (L, D)
    rk = np.einsum('ld,ndk->nlk', r, wr).astype(np.float32)           # (NL, L, D)

    # RKS folds head selection + the Transformer-XL rel-shift:
    #   RKS[n, i*D + (h*DH+d), h*L + j] = rk[n, (j+L-1-i) mod L, h*DH+d]
    # so BD_shifted = (qrr expanded over i') @ RKS in ONE matmul.
    rks = np.zeros((NL, L * D, HL), np.float32)
    for i in range(L):
        for j in range(L):
            src = (j + L - 1 - i) % L
            for h in range(H):
                rks[:, i * D + h * DH:i * D + (h + 1) * DH, h * L + j] = \
                    rk[:, src, h * DH:(h + 1) * DH]

    cmask = np.tile(np.tril(np.ones((L, L), np.float32)), (1, H))     # (L, HL)
    hmask = np.kron(np.eye(H, dtype=np.float32),
                    np.ones((L, DH), np.float32))                     # (HL, D)
    hmask_e = np.kron(np.eye(H, dtype=np.float32),
                      np.ones((E, DH), np.float32))                   # (HE, D)
    diagmask = np.kron(np.eye(L, dtype=np.float32),
                       np.ones((1, D), np.float32))                   # (L, L*D)

    return dict(
        cmask=jnp.asarray(cmask, jnp.float32),
        hmask=jnp.asarray(hmask, BF),
        hmask_e=jnp.asarray(hmask_e, BF),
        diagmask=jnp.asarray(diagmask, BF),
        rks=jnp.asarray(rks, BF),
    )


# ----------------------------------------------------------------------------
# Parameter init (deterministic, synthetic — no checkpoint loading).
# Linear weights stored pre-transposed ("x @ W"), fused along N where possible,
# stacked to (n_layers, ...); matmul weights in bfloat16, biases / LN in f32.
# ----------------------------------------------------------------------------
def init_params(key):
    keys = jax.random.split(key, 96)
    it = iter(keys)

    def nrm(shape, scale=0.02):
        return scale * jax.random.normal(next(it), shape, jnp.float32)

    def stack(shape):
        return jnp.stack([nrm(shape) for _ in range(NL)], axis=0)

    word_emb = nrm((V, D))          # shared embedding (tied output projection)
    seg_emb = nrm((2, D))           # encoder stand-in
    enc_pos_emb = nrm((E, D))       # encoder stand-in

    ones_d = jnp.ones((NL, 1, D), jnp.float32)
    zeros_d = jnp.zeros((NL, 1, D), jnp.float32)

    wq, wk, wv = stack((D, D)), stack((D, D)), stack((D, D))
    wr = stack((D, D))              # folded into the RKS constant (not a kernel arg)
    wik, wiv = stack((D, D)), stack((D, D))

    params = dict(
        word_emb=word_emb, seg_emb=seg_emb, enc_pos_emb=enc_pos_emb,
        wr=wr,
        # self-attention (heads fused over columns; qkv fused along N)
        wqkv=jnp.concatenate([wq, wk, wv], axis=2).astype(BF),   # (NL, D, 3D)
        rwb=stack((1, D)), rrb=stack((1, D)),
        wo=stack((D, D)).astype(BF),
        ln1g=ones_d, ln1b=zeros_d,
        # interaction attention (k|v fused along N)
        wiq=stack((D, D)).astype(BF),
        wikv=jnp.concatenate([wik, wiv], axis=2).astype(BF),     # (NL, D, 2D)
        wio=stack((D, D)).astype(BF),
        ln2g=ones_d, ln2b=zeros_d,
        # FFN
        w1=stack((D, DFF)).astype(BF),
        b1=jnp.zeros((NL, 1, DFF), jnp.float32),
        w2=stack((DFF, D)).astype(BF),
        b2=zeros_d,
        ln3g=ones_d, ln3b=zeros_d,
    )

    # output head: fold tied-embedding vocab projection at init, fuse with copy.
    wout, bout = nrm((D, D)), nrm((1, D))
    wcopy, bcopy = nrm((D, D)), nrm((1, D))
    params.update(dict(
        whead=jnp.concatenate([wout @ word_emb.T, wcopy], axis=1).astype(BF),  # (D, V+D)
        bhead=jnp.concatenate([bout @ word_emb.T, bcopy], axis=1),             # (1, V+D)
        wms=nrm((1, D)),
        bms=nrm((1, 1)),
    ))
    return params


# ----------------------------------------------------------------------------
# Full forward pass (QuestionGeneration.forward, teacher-forcing branch).
# ----------------------------------------------------------------------------
def question_generation_forward(params, consts, input_ids, input_mask, input_seg,
                                decode_input, decode_target):
    bsz, e = input_ids.shape

    # TODO(synk): full BertModel (RoBERTa) encoder not replicated; deterministic
    # embedding + LayerNorm stand-in in plain JAX (glue).
    we = params['word_emb']
    x = we[input_ids] + params['seg_emb'][input_seg] + params['enc_pos_emb'][None, :e, :]
    mu = jnp.mean(x, axis=-1, keepdims=True)
    var = jnp.mean((x - mu) ** 2, axis=-1, keepdims=True)
    encoder_rep = ((x - mu) / jnp.sqrt(var + 1e-12)).astype(jnp.float32)   # (B,E,D)

    decode_embed = we[decode_input].astype(jnp.float32)                    # (B,L,D)
    # encoder padding mask, pre-tiled to the lane-major (head, enc-pos) axis.
    emask_he = jnp.tile(input_mask.astype(jnp.float32), (1, H))[:, None, :]  # (B,1,H*E)
    ids_col = input_ids.astype(jnp.int32)[:, :, None]                      # (B,E,1)
    tgt_col = decode_target.astype(jnp.int32)[:, :, None]                  # (B,L,1)

    loss_sums, counts = run_qg_decoder(decode_embed, encoder_rep, emask_he,
                                       ids_col, tgt_col, consts, params)

    loss = jnp.sum(loss_sums) / jnp.sum(counts)
    return jnp.full((bsz,), loss, jnp.float32)          # loss[None].repeat(bsz)


# ----------------------------------------------------------------------------
if __name__ == "__main__":
    key = jax.random.PRNGKey(0)
    pkey, dkey = jax.random.split(key)
    params = init_params(pkey)
    consts = build_constants(np.asarray(params['wr'], np.float32))

    k1, k2, k3, k4 = jax.random.split(dkey, 4)
    input_ids = jax.random.randint(k1, (BATCH, E), 0, V, dtype=jnp.int32)
    input_seg = jax.random.randint(k2, (BATCH, E), 0, 2, dtype=jnp.int32)
    input_mask = jnp.ones((BATCH, E), jnp.float32).at[1, E - 3:].set(0.0)
    decode_input = jax.random.randint(k3, (BATCH, L), 1, V, dtype=jnp.int32)
    decode_target = jax.random.randint(k4, (BATCH, L), 0, V, dtype=jnp.int32)
    decode_target = decode_target.at[:, 0].set(ARGS['start_token_id'] + 4)

    fwd = jax.jit(question_generation_forward)
    out = fwd(params, consts, input_ids, input_mask, input_seg,
              decode_input, decode_target)
    out = jax.block_until_ready(out)

    assert out.shape == (BATCH,)
    assert bool(jnp.all(jnp.isfinite(out)))
    print("KERNEL_OK")
</pallas_src>

<mosaic_0001>
module attributes {stable_mosaic.version = 11 : i64} {
  func.func @qg_fused_kernel(%arg0: i32, %arg1: memref<1x8x128xf32, #tpu.memory_space<vmem>>, %arg2: memref<1x16x128xf32, #tpu.memory_space<vmem>>, %arg3: memref<1x1x256xf32, #tpu.memory_space<vmem>>, %arg4: memref<1x16x1xi32, #tpu.memory_space<vmem>>, %arg5: memref<1x8x1xi32, #tpu.memory_space<vmem>>, %arg6: memref<8x128xf32, #tpu.memory_space<vmem>>, %arg7: memref<128x128xbf16, #tpu.memory_space<vmem>>, %arg8: memref<256x128xbf16, #tpu.memory_space<vmem>>, %arg9: memref<8x1024xbf16, #tpu.memory_space<vmem>>, %arg10: memref<2x1024x128xbf16, #tpu.memory_space<vmem>>, %arg11: memref<2x128x384xbf16, #tpu.memory_space<vmem>>, %arg12: memref<2x1x128xf32, #tpu.memory_space<vmem>>, %arg13: memref<2x1x128xf32, #tpu.memory_space<vmem>>, %arg14: memref<2x128x128xbf16, #tpu.memory_space<vmem>>, %arg15: memref<2x1x128xf32, #tpu.memory_space<vmem>>, %arg16: memref<2x1x128xf32, #tpu.memory_space<vmem>>, %arg17: memref<2x128x128xbf16, #tpu.memory_space<vmem>>, %arg18: memref<2x128x256xbf16, #tpu.memory_space<vmem>>, %arg19: memref<2x128x128xbf16, #tpu.memory_space<vmem>>, %arg20: memref<2x1x128xf32, #tpu.memory_space<vmem>>, %arg21: memref<2x1x128xf32, #tpu.memory_space<vmem>>, %arg22: memref<2x128x512xbf16, #tpu.memory_space<vmem>>, %arg23: memref<2x1x512xf32, #tpu.memory_space<vmem>>, %arg24: memref<2x512x128xbf16, #tpu.memory_space<vmem>>, %arg25: memref<2x1x128xf32, #tpu.memory_space<vmem>>, %arg26: memref<2x1x128xf32, #tpu.memory_space<vmem>>, %arg27: memref<2x1x128xf32, #tpu.memory_space<vmem>>, %arg28: memref<128x256xbf16, #tpu.memory_space<vmem>>, %arg29: memref<1x256xf32, #tpu.memory_space<vmem>>, %arg30: memref<1x128xf32, #tpu.memory_space<vmem>>, %arg31: memref<1x1xf32, #tpu.memory_space<vmem>>, %arg32: memref<1x1x1xf32, #tpu.memory_space<vmem>>, %arg33: memref<1x1x1xf32, #tpu.memory_space<vmem>>) attributes {dimension_semantics = [#tpu.dimension_semantics<parallel>], iteration_bounds = array<i64: 2>, scalar_prefetch = 0 : i64, scratch_operands = 0 : i64, tpu.core_type = #tpu.core_type<tc>, window_params = [{transform_indices = @transform_0, window_bounds = array<i64: 1, 8, 128>}, {transform_indices = @transform_1, window_bounds = array<i64: 1, 16, 128>}, {transform_indices = @transform_2, window_bounds = array<i64: 1, 1, 256>}, {transform_indices = @transform_3, window_bounds = array<i64: 1, 16, 1>}, {transform_indices = @transform_4, window_bounds = array<i64: 1, 8, 1>}, {pipeline_mode = #tpu.pipeline_mode<synchronous>, transform_indices = @transform_5, window_bounds = array<i64: 8, 128>}, {pipeline_mode = #tpu.pipeline_mode<synchronous>, transform_indices = @transform_6, window_bounds = array<i64: 128, 128>}, {pipeline_mode = #tpu.pipeline_mode<synchronous>, transform_indices = @transform_7, window_bounds = array<i64: 256, 128>}, {pipeline_mode = #tpu.pipeline_mode<synchronous>, transform_indices = @transform_8, window_bounds = array<i64: 8, 1024>}, {pipeline_mode = #tpu.pipeline_mode<synchronous>, transform_indices = @transform_9, window_bounds = array<i64: 2, 1024, 128>}, {pipeline_mode = #tpu.pipeline_mode<synchronous>, transform_indices = @transform_10, window_bounds = array<i64: 2, 128, 384>}, {pipeline_mode = #tpu.pipeline_mode<synchronous>, transform_indices = @transform_11, window_bounds = array<i64: 2, 1, 128>}, {pipeline_mode = #tpu.pipeline_mode<synchronous>, transform_indices = @transform_12, window_bounds = array<i64: 2, 1, 128>}, {pipeline_mode = #tpu.pipeline_mode<synchronous>, transform_indices = @transform_13, window_bounds = array<i64: 2, 128, 128>}, {pipeline_mode = #tpu.pipeline_mode<synchronous>, transform_indices = @transform_14, window_bounds = array<i64: 2, 1, 128>}, {pipeline_mode = #tpu.pipeline_mode<synchronous>, transform_indices = @transform_15, window_bounds = array<i64: 2, 1, 128>}, {pipeline_mode = #tpu.pipeline_mode<synchronous>, transform_indices = @transform_16, window_bounds = array<i64: 2, 128, 128>}, {pipeline_mode = #tpu.pipeline_mode<synchronous>, transform_indices = @transform_17, window_bounds = array<i64: 2, 128, 256>}, {pipeline_mode = #tpu.pipeline_mode<synchronous>, transform_indices = @transform_18, window_bounds = array<i64: 2, 128, 128>}, {pipeline_mode = #tpu.pipeline_mode<synchronous>, transform_indices = @transform_19, window_bounds = array<i64: 2, 1, 128>}, {pipeline_mode = #tpu.pipeline_mode<synchronous>, transform_indices = @transform_20, window_bounds = array<i64: 2, 1, 128>}, {pipeline_mode = #tpu.pipeline_mode<synchronous>, transform_indices = @transform_21, window_bounds = array<i64: 2, 128, 512>}, {pipeline_mode = #tpu.pipeline_mode<synchronous>, transform_indices = @transform_22, window_bounds = array<i64: 2, 1, 512>}, {pipeline_mode = #tpu.pipeline_mode<synchronous>, transform_indices = @transform_23, window_bounds = array<i64: 2, 512, 128>}, {pipeline_mode = #tpu.pipeline_mode<synchronous>, transform_indices = @transform_24, window_bounds = array<i64: 2, 1, 128>}, {pipeline_mode = #tpu.pipeline_mode<synchronous>, transform_indices = @transform_25, window_bounds = array<i64: 2, 1, 128>}, {pipeline_mode = #tpu.pipeline_mode<synchronous>, transform_indices = @transform_26, window_bounds = array<i64: 2, 1, 128>}, {pipeline_mode = #tpu.pipeline_mode<synchronous>, transform_indices = @transform_27, window_bounds = array<i64: 128, 256>}, {pipeline_mode = #tpu.pipeline_mode<synchronous>, transform_indices = @transform_28, window_bounds = array<i64: 1, 256>}, {pipeline_mode = #tpu.pipeline_mode<synchronous>, transform_indices = @transform_29, window_bounds = array<i64: 1, 128>}, {pipeline_mode = #tpu.pipeline_mode<synchronous>, transform_indices = @transform_30, window_bounds = array<i64: 1, 1>}, {transform_indices = @transform_31, window_bounds = array<i64: 1, 1, 1>}, {transform_indices = @transform_32, window_bounds = array<i64: 1, 1, 1>}]} {
    %c0 = arith.constant 0 : index
    %c0_0 = arith.constant 0 : index
    %c0_1 = arith.constant 0 : index
    %0 = vector.load %arg1[%c0, %c0_0, %c0_1] : memref<1x8x128xf32, #tpu.memory_space<vmem>>, vector<1x8x128xf32>
    %1 = vector.shape_cast %0 : vector<1x8x128xf32> to vector<8x128xf32>
    %c0_2 = arith.constant 0 : index
    %c0_3 = arith.constant 0 : index
    %c0_4 = arith.constant 0 : index
    %2 = vector.load %arg2[%c0_2, %c0_3, %c0_4] : memref<1x16x128xf32, #tpu.memory_space<vmem>>, vector<1x16x128xf32>
    %3 = vector.shape_cast %2 : vector<1x16x128xf32> to vector<16x128xf32>
    %4 = arith.truncf %3 : vector<16x128xf32> to vector<16x128xbf16>
    %c0_5 = arith.constant 0 : index
    %c0_6 = arith.constant 0 : index
    %c0_7 = arith.constant 0 : index
    %5 = vector.load %arg3[%c0_5, %c0_6, %c0_7] : memref<1x1x256xf32, #tpu.memory_space<vmem>>, vector<1x1x256xf32>
    %6 = vector.shape_cast %5 : vector<1x1x256xf32> to vector<1x256xf32>
    %cst = arith.constant 1.000000e+00 : f32
    %7 = vector.broadcast %cst : f32 to vector<1x256xf32>
    %8 = arith.subf %7, %6 : vector<1x256xf32>
    %cst_8 = arith.constant -1.000000e+30 : f32
    %9 = vector.broadcast %cst_8 : f32 to vector<1x256xf32>
    %10 = arith.mulf %8, %9 : vector<1x256xf32>
    %11 = vector.extract_strided_slice %10 {offsets = [0, 0], sizes = [1, 16], strides = [1, 1]} : vector<1x256xf32> to vector<1x16xf32>
    %c0_9 = arith.constant 0 : index
    %c0_10 = arith.constant 0 : index
    %12 = vector.load %arg6[%c0_9, %c0_10] : memref<8x128xf32, #tpu.memory_space<vmem>>, vector<8x128xf32>
    %c0_11 = arith.constant 0 : index
    %c0_12 = arith.constant 0 : index
    %13 = vector.load %arg7[%c0_11, %c0_12] : memref<128x128xbf16, #tpu.memory_space<vmem>>, vector<128x128xbf16>
    %c0_13 = arith.constant 0 : index
    %c0_14 = arith.constant 0 : index
    %14 = vector.load %arg8[%c0_13, %c0_14] : memref<256x128xbf16, #tpu.memory_space<vmem>>, vector<256x128xbf16>
    %c0_15 = arith.constant 0 : index
    %c0_16 = arith.constant 0 : index
    %15 = vector.load %arg9[%c0_15, %c0_16] : memref<8x1024xbf16, #tpu.memory_space<vmem>>, vector<8x1024xbf16>
    %16 = arith.truncf %1 : vector<8x128xf32> to vector<8x128xbf16>
    %c0_17 = arith.constant 0 : index
    %c0_18 = arith.constant 0 : index
    %c0_19 = arith.constant 0 : index
    %17 = vector.load %arg11[%c0_17, %c0_18, %c0_19] : memref<2x128x384xbf16, #tpu.memory_space<vmem>>, vector<1x128x384xbf16>
    %18 = vector.shape_cast %17 : vector<1x128x384xbf16> to vector<128x384xbf16>
    %cst_20 = arith.constant dense<0.000000e+00> : vector<8x384xf32>
    %19 = tpu.matmul %16, %18, %cst_20 {dimension_numbers = #tpu.dot_dimension_numbers<[1], [0], [0], [1], [0, 0, 1, 1], [], []>} : vector<8x128xbf16>, vector<128x384xbf16>, vector<8x384xf32> -> vector<8x384xf32>
    %20 = vector.extract_strided_slice %19 {offsets = [0, 0], sizes = [8, 128], strides = [1, 1]} : vector<8x384xf32> to vector<8x128xf32>
    %21 = vector.extract_strided_slice %19 {offsets = [0, 128], sizes = [8, 128], strides = [1, 1]} : vector<8x384xf32> to vector<8x128xf32>
    %22 = arith.truncf %21 : vector<8x128xf32> to vector<8x128xbf16>
    %23 = vector.extract_strided_slice %19 {offsets = [0, 256], sizes = [8, 128], strides = [1, 1]} : vector<8x384xf32> to vector<8x128xf32>
    %24 = arith.truncf %23 : vector<8x128xf32> to vector<8x128xbf16>
    %25 = tpu.concatenate %22, %22, %22, %22, %22, %22, %22, %22, %22, %22, %22, %22, %22, %22, %22, %22 in 0 : vector<8x128xbf16>, vector<8x128xbf16>, vector<8x128xbf16>, vector<8x128xbf16>, vector<8x128xbf16>, vector<8x128xbf16>, vector<8x128xbf16>, vector<8x128xbf16>, vector<8x128xbf16>, vector<8x128xbf16>, vector<8x128xbf16>, vector<8x128xbf16>, vector<8x128xbf16>, vector<8x128xbf16>, vector<8x128xbf16>, vector<8x128xbf16> -> vector<128x128xbf16>
    %26 = arith.mulf %25, %13 : vector<128x128xbf16>
    %27 = tpu.concatenate %24, %24, %24, %24, %24, %24, %24, %24, %24, %24, %24, %24, %24, %24, %24, %24 in 0 : vector<8x128xbf16>, vector<8x128xbf16>, vector<8x128xbf16>, vector<8x128xbf16>, vector<8x128xbf16>, vector<8x128xbf16>, vector<8x128xbf16>, vector<8x128xbf16>, vector<8x128xbf16>, vector<8x128xbf16>, vector<8x128xbf16>, vector<8x128xbf16>, vector<8x128xbf16>, vector<8x128xbf16>, vector<8x128xbf16>, vector<8x128xbf16> -> vector<128x128xbf16>
    %28 = arith.mulf %27, %13 : vector<128x128xbf16>
    %c0_21 = arith.constant 0 : index
    %c0_22 = arith.constant 0 : index
    %c0_23 = arith.constant 0 : index
    %29 = vector.load %arg12[%c0_21, %c0_22, %c0_23] : memref<2x1x128xf32, #tpu.memory_space<vmem>>, vector<1x1x128xf32>
    %30 = vector.shape_cast %29 : vector<1x1x128xf32> to vector<1x128xf32>
    %31 = vector.broadcast %30 : vector<1x128xf32> to vector<8x128xf32>
    %32 = arith.addf %20, %31 : vector<8x128xf32>
    %33 = arith.truncf %32 : vector<8x128xf32> to vector<8x128xbf16>
    %c0_24 = arith.constant 0 : index
    %c0_25 = arith.constant 0 : index
    %c0_26 = arith.constant 0 : index
    %34 = vector.load %arg13[%c0_24, %c0_25, %c0_26] : memref<2x1x128xf32, #tpu.memory_space<vmem>>, vector<1x1x128xf32>
    %35 = vector.shape_cast %34 : vector<1x1x128xf32> to vector<1x128xf32>
    %36 = vector.broadcast %35 : vector<1x128xf32> to vector<8x128xf32>
    %37 = arith.addf %20, %36 : vector<8x128xf32>
    %38 = arith.truncf %37 : vector<8x128xf32> to vector<8x128xbf16>
    %cst_27 = arith.constant dense<0.000000e+00> : vector<8x128xf32>
    %39 = tpu.matmul %33, %26, %cst_27 {dimension_numbers = #tpu.dot_dimension_numbers<[1], [1], [0], [0], [0, 0, 1, 0], [], []>} : vector<8x128xbf16>, vector<128x128xbf16>, vector<8x128xf32> -> vector<8x128xf32>
    %40 = tpu.concatenate %38, %38, %38, %38, %38, %38, %38, %38 in 1 : vector<8x128xbf16>, vector<8x128xbf16>, vector<8x128xbf16>, vector<8x128xbf16>, vector<8x128xbf16>, vector<8x128xbf16>, vector<8x128xbf16>, vector<8x128xbf16> -> vector<8x1024xbf16>
    %41 = arith.mulf %40, %15 : vector<8x1024xbf16>
    %c0_28 = arith.constant 0 : index
    %c0_29 = arith.constant 0 : index
    %c0_30 = arith.constant 0 : index
    %42 = vector.load %arg10[%c0_28, %c0_29, %c0_30] : memref<2x1024x128xbf16, #tpu.memory_space<vmem>>, vector<1x1024x128xbf16>
    %43 = vector.shape_cast %42 : vector<1x1024x128xbf16> to vector<1024x128xbf16>
    %cst_31 = arith.constant dense<0.000000e+00> : vector<8x128xf32>
    %44 = tpu.matmul %41, %43, %cst_31 {dimension_numbers = #tpu.dot_dimension_numbers<[1], [0], [0], [1], [0, 0, 1, 1], [], []>} : vector<8x1024xbf16>, vector<1024x128xbf16>, vector<8x128xf32> -> vector<8x128xf32>
    %45 = arith.addf %39, %44 : vector<8x128xf32>
    %cst_32 = arith.constant 0.353553385 : f32
    %46 = vector.broadcast %cst_32 : f32 to vector<8x128xf32>
    %47 = arith.mulf %45, %46 : vector<8x128xf32>
    %cst_33 = arith.constant 0.000000e+00 : f32
    %48 = vector.broadcast %cst_33 : f32 to vector<8x128xf32>
    %49 = arith.cmpf ogt, %12, %48 : vector<8x128xf32>
    %cst_34 = arith.constant -1.000000e+30 : f32
    %50 = vector.broadcast %cst_34 : f32 to vector<8x128xf32>
    %51 = arith.select %49, %47, %50 : vector<8x128xi1>, vector<8x128xf32>
    %cst_35 = arith.constant dense<0xFF800000> : vector<8xf32>
    %52 = vector.multi_reduction <maximumf>, %51, %cst_35 [1] : vector<8x128xf32> to vector<8xf32>
    %53 = vector.shape_cast %52 : vector<8xf32> to vector<8x1xf32>
    %54 = vector.broadcast %53 : vector<8x1xf32> to vector<8x128xf32>
    %55 = arith.subf %51, %54 : vector<8x128xf32>
    %56 = math.exp %55 : vector<8x128xf32>
    %57 = arith.truncf %56 : vector<8x128xf32> to vector<8x128xbf16>
    %cst_36 = arith.constant dense<0.000000e+00> : vector<8x128xf32>
    %58 = tpu.matmul %57, %28, %cst_36 {dimension_numbers = #tpu.dot_dimension_numbers<[1], [0], [0], [1], [0, 0, 1, 1], [], []>} : vector<8x128xbf16>, vector<128x128xbf16>, vector<8x128xf32> -> vector<8x128xf32>
    %cst_37 = arith.constant dense<0.000000e+00> : vector<8x128xf32>
    %59 = tpu.matmul %57, %13, %cst_37 {dimension_numbers = #tpu.dot_dimension_numbers<[1], [0], [0], [1], [0, 0, 1, 1], [], []>} : vector<8x128xbf16>, vector<128x128xbf16>, vector<8x128xf32> -> vector<8x128xf32>
    %cst_38 = arith.constant 1.000000e-30 : f32
    %60 = vector.broadcast %cst_38 : f32 to vector<8x128xf32>
    %61 = arith.maximumf %59, %60 : vector<8x128xf32>
    %62 = tpu.reciprocal %61 {approx = true} : vector<8x128xf32> -> vector<8x128xf32>
    %63 = arith.mulf %58, %62 : vector<8x128xf32>
    %64 = arith.truncf %63 : vector<8x128xf32> to vector<8x128xbf16>
    %c0_39 = arith.constant 0 : index
    %c0_40 = arith.constant 0 : index
    %c0_41 = arith.constant 0 : index
    %65 = vector.load %arg14[%c0_39, %c0_40, %c0_41] : memref<2x128x128xbf16, #tpu.memory_space<vmem>>, vector<1x128x128xbf16>
    %66 = vector.shape_cast %65 : vector<1x128x128xbf16> to vector<128x128xbf16>
    %cst_42 = arith.constant dense<0.000000e+00> : vector<8x128xf32>
    %67 = tpu.matmul %64, %66, %cst_42 {dimension_numbers = #tpu.dot_dimension_numbers<[1], [0], [0], [1], [0, 0, 1, 1], [], []>} : vector<8x128xbf16>, vector<128x128xbf16>, vector<8x128xf32> -> vector<8x128xf32>
    %68 = arith.addf %1, %67 : vector<8x128xf32>
    %c0_43 = arith.constant 0 : index
    %c0_44 = arith.constant 0 : index
    %c0_45 = arith.constant 0 : index
    %69 = vector.load %arg15[%c0_43, %c0_44, %c0_45] : memref<2x1x128xf32, #tpu.memory_space<vmem>>, vector<1x1x128xf32>
    %70 = vector.shape_cast %69 : vector<1x1x128xf32> to vector<1x128xf32>
    %c0_46 = arith.constant 0 : index
    %c0_47 = arith.constant 0 : index
    %c0_48 = arith.constant 0 : index
    %71 = vector.load %arg16[%c0_46, %c0_47, %c0_48] : memref<2x1x128xf32, #tpu.memory_space<vmem>>, vector<1x1x128xf32>
    %72 = vector.shape_cast %71 : vector<1x1x128xf32> to vector<1x128xf32>
    %cst_49 = arith.constant dense<0.000000e+00> : vector<8xf32>
    %73 = vector.multi_reduction <add>, %68, %cst_49 [1] : vector<8x128xf32> to vector<8xf32>
    %74 = vector.shape_cast %73 : vector<8xf32> to vector<8x1xf32>
    %cst_50 = arith.constant 1.280000e+02 : f32
    %75 = vector.broadcast %cst_50 : f32 to vector<8x1xf32>
    %76 = arith.divf %74, %75 : vector<8x1xf32>
    %77 = vector.broadcast %76 : vector<8x1xf32> to vector<8x128xf32>
    %78 = arith.subf %68, %77 : vector<8x128xf32>
    %79 = arith.mulf %78, %78 : vector<8x128xf32>
    %cst_51 = arith.constant dense<0.000000e+00> : vector<8xf32>
    %80 = vector.multi_reduction <add>, %79, %cst_51 [1] : vector<8x128xf32> to vector<8xf32>
    %81 = vector.shape_cast %80 : vector<8xf32> to vector<8x1xf32>
    %cst_52 = arith.constant 1.280000e+02 : f32
    %82 = vector.broadcast %cst_52 : f32 to vector<8x1xf32>
    %83 = arith.divf %81, %82 : vector<8x1xf32>
    %84 = vector.broadcast %76 : vector<8x1xf32> to vector<8x128xf32>
    %85 = arith.subf %68, %84 : vector<8x128xf32>
    %cst_53 = arith.constant 9.99999974E-6 : f32
    %86 = vector.broadcast %cst_53 : f32 to vector<8x1xf32>
    %87 = arith.addf %83, %86 : vector<8x1xf32>
    %88 = math.rsqrt %87 : vector<8x1xf32>
    %89 = vector.broadcast %88 : vector<8x1xf32> to vector<8x128xf32>
    %90 = arith.mulf %85, %89 : vector<8x128xf32>
    %91 = vector.broadcast %70 : vector<1x128xf32> to vector<8x128xf32>
    %92 = arith.mulf %90, %91 : vector<8x128xf32>
    %93 = vector.broadcast %72 : vector<1x128xf32> to vector<8x128xf32>
    %94 = arith.addf %92, %93 : vector<8x128xf32>
    %95 = arith.truncf %94 : vector<8x128xf32> to vector<8x128xbf16>
    %c0_54 = arith.constant 0 : index
    %c0_55 = arith.constant 0 : index
    %c0_56 = arith.constant 0 : index
    %96 = vector.load %arg17[%c0_54, %c0_55, %c0_56] : memref<2x128x128xbf16, #tpu.memory_space<vmem>>, vector<1x128x128xbf16>
    %97 = vector.shape_cast %96 : vector<1x128x128xbf16> to vector<128x128xbf16>
    %cst_57 = arith.constant dense<0.000000e+00> : vector<8x128xf32>
    %98 = tpu.matmul %95, %97, %cst_57 {dimension_numbers = #tpu.dot_dimension_numbers<[1], [0], [0], [1], [0, 0, 1, 1], [], []>} : vector<8x128xbf16>, vector<128x128xbf16>, vector<8x128xf32> -> vector<8x128xf32>
    %c0_58 = arith.constant 0 : index
    %c0_59 = arith.constant 0 : index
    %c0_60 = arith.constant 0 : index
    %99 = vector.load %arg18[%c0_58, %c0_59, %c0_60] : memref<2x128x256xbf16, #tpu.memory_space<vmem>>, vector<1x128x256xbf16>
    %100 = vector.shape_cast %99 : vector<1x128x256xbf16> to vector<128x256xbf16>
    %cst_61 = arith.constant dense<0.000000e+00> : vector<16x256xf32>
    %101 = tpu.matmul %4, %100, %cst_61 {dimension_numbers = #tpu.dot_dimension_numbers<[1], [0], [0], [1], [0, 0, 1, 1], [], []>} : vector<16x128xbf16>, vector<128x256xbf16>, vector<16x256xf32> -> vector<16x256xf32>
    %102 = vector.extract_strided_slice %101 {offsets = [0, 0], sizes = [16, 128], strides = [1, 1]} : vector<16x256xf32> to vector<16x128xf32>
    %103 = arith.truncf %102 : vector<16x128xf32> to vector<16x128xbf16>
    %104 = vector.extract_strided_slice %101 {offsets = [0, 128], sizes = [16, 128], strides = [1, 1]} : vector<16x256xf32> to vector<16x128xf32>
    %105 = arith.truncf %104 : vector<16x128xf32> to vector<16x128xbf16>
    %106 = tpu.concatenate %103, %103, %103, %103, %103, %103, %103, %103, %103, %103, %103, %103, %103, %103, %103, %103 in 0 : vector<16x128xbf16>, vector<16x128xbf16>, vector<16x128xbf16>, vector<16x128xbf16>, vector<16x128xbf16>, vector<16x128xbf16>, vector<16x128xbf16>, vector<16x128xbf16>, vector<16x128xbf16>, vector<16x128xbf16>, vector<16x128xbf16>, vector<16x128xbf16>, vector<16x128xbf16>, vector<16x128xbf16>, vector<16x128xbf16>, vector<16x128xbf16> -> vector<256x128xbf16>
    %107 = arith.mulf %106, %14 : vector<256x128xbf16>
    %108 = tpu.concatenate %105, %105, %105, %105, %105, %105, %105, %105, %105, %105, %105, %105, %105, %105, %105, %105 in 0 : vector<16x128xbf16>, vector<16x128xbf16>, vector<16x128xbf16>, vector<16x128xbf16>, vector<16x128xbf16>, vector<16x128xbf16>, vector<16x128xbf16>, vector<16x128xbf16>, vector<16x128xbf16>, vector<16x128xbf16>, vector<16x128xbf16>, vector<16x128xbf16>, vector<16x128xbf16>, vector<16x128xbf16>, vector<16x128xbf16>, vector<16x128xbf16> -> vector<256x128xbf16>
    %109 = arith.mulf %108, %14 : vector<256x128xbf16>
    %110 = arith.truncf %98 : vector<8x128xf32> to vector<8x128xbf16>
    %cst_62 = arith.constant dense<0.000000e+00> : vector<8x256xf32>
    %111 = tpu.matmul %110, %107, %cst_62 {dimension_numbers = #tpu.dot_dimension_numbers<[1], [1], [0], [0], [0, 0, 1, 0], [], []>} : vector<8x128xbf16>, vector<256x128xbf16>, vector<8x256xf32> -> vector<8x256xf32>
    %cst_63 = arith.constant 0.353553385 : f32
    %112 = vector.broadcast %cst_63 : f32 to vector<8x256xf32>
    %113 = arith.mulf %111, %112 : vector<8x256xf32>
    %114 = vector.broadcast %10 : vector<1x256xf32> to vector<8x256xf32>
    %115 = arith.addf %113, %114 : vector<8x256xf32>
    %cst_64 = arith.constant dense<0xFF800000> : vector<8xf32>
    %116 = vector.multi_reduction <maximumf>, %115, %cst_64 [1] : vector<8x256xf32> to vector<8xf32>
    %117 = vector.shape_cast %116 : vector<8xf32> to vector<8x1xf32>
    %118 = vector.broadcast %117 : vector<8x1xf32> to vector<8x256xf32>
    %119 = arith.subf %115, %118 : vector<8x256xf32>
    %120 = math.exp %119 : vector<8x256xf32>
    %121 = arith.truncf %120 : vector<8x256xf32> to vector<8x256xbf16>
    %cst_65 = arith.constant dense<0.000000e+00> : vector<8x128xf32>
    %122 = tpu.matmul %121, %109, %cst_65 {dimension_numbers = #tpu.dot_dimension_numbers<[1], [0], [0], [1], [0, 0, 1, 1], [], []>} : vector<8x256xbf16>, vector<256x128xbf16>, vector<8x128xf32> -> vector<8x128xf32>
    %cst_66 = arith.constant dense<0.000000e+00> : vector<8x128xf32>
    %123 = tpu.matmul %121, %14, %cst_66 {dimension_numbers = #tpu.dot_dimension_numbers<[1], [0], [0], [1], [0, 0, 1, 1], [], []>} : vector<8x256xbf16>, vector<256x128xbf16>, vector<8x128xf32> -> vector<8x128xf32>
    %cst_67 = arith.constant 1.000000e-30 : f32
    %124 = vector.broadcast %cst_67 : f32 to vector<8x128xf32>
    %125 = arith.maximumf %123, %124 : vector<8x128xf32>
    %126 = tpu.reciprocal %125 {approx = true} : vector<8x128xf32> -> vector<8x128xf32>
    %127 = arith.mulf %122, %126 : vector<8x128xf32>
    %128 = arith.truncf %127 : vector<8x128xf32> to vector<8x128xbf16>
    %c0_68 = arith.constant 0 : index
    %c0_69 = arith.constant 0 : index
    %c0_70 = arith.constant 0 : index
    %129 = vector.load %arg19[%c0_68, %c0_69, %c0_70] : memref<2x128x128xbf16, #tpu.memory_space<vmem>>, vector<1x128x128xbf16>
    %130 = vector.shape_cast %129 : vector<1x128x128xbf16> to vector<128x128xbf16>
    %cst_71 = arith.constant dense<0.000000e+00> : vector<8x128xf32>
    %131 = tpu.matmul %128, %130, %cst_71 {dimension_numbers = #tpu.dot_dimension_numbers<[1], [0], [0], [1], [0, 0, 1, 1], [], []>} : vector<8x128xbf16>, vector<128x128xbf16>, vector<8x128xf32> -> vector<8x128xf32>
    %132 = arith.addf %131, %94 : vector<8x128xf32>
    %c0_72 = arith.constant 0 : index
    %c0_73 = arith.constant 0 : index
    %c0_74 = arith.constant 0 : index
    %133 = vector.load %arg20[%c0_72, %c0_73, %c0_74] : memref<2x1x128xf32, #tpu.memory_space<vmem>>, vector<1x1x128xf32>
    %134 = vector.shape_cast %133 : vector<1x1x128xf32> to vector<1x128xf32>
    %c0_75 = arith.constant 0 : index
    %c0_76 = arith.constant 0 : index
    %c0_77 = arith.constant 0 : index
    %135 = vector.load %arg21[%c0_75, %c0_76, %c0_77] : memref<2x1x128xf32, #tpu.memory_space<vmem>>, vector<1x1x128xf32>
    %136 = vector.shape_cast %135 : vector<1x1x128xf32> to vector<1x128xf32>
    %cst_78 = arith.constant dense<0.000000e+00> : vector<8xf32>
    %137 = vector.multi_reduction <add>, %132, %cst_78 [1] : vector<8x128xf32> to vector<8xf32>
    %138 = vector.shape_cast %137 : vector<8xf32> to vector<8x1xf32>
    %cst_79 = arith.constant 1.280000e+02 : f32
    %139 = vector.broadcast %cst_79 : f32 to vector<8x1xf32>
    %140 = arith.divf %138, %139 : vector<8x1xf32>
    %141 = vector.broadcast %140 : vector<8x1xf32> to vector<8x128xf32>
    %142 = arith.subf %132, %141 : vector<8x128xf32>
    %143 = arith.mulf %142, %142 : vector<8x128xf32>
    %cst_80 = arith.constant dense<0.000000e+00> : vector<8xf32>
    %144 = vector.multi_reduction <add>, %143, %cst_80 [1] : vector<8x128xf32> to vector<8xf32>
    %145 = vector.shape_cast %144 : vector<8xf32> to vector<8x1xf32>
    %cst_81 = arith.constant 1.280000e+02 : f32
    %146 = vector.broadcast %cst_81 : f32 to vector<8x1xf32>
    %147 = arith.divf %145, %146 : vector<8x1xf32>
    %148 = vector.broadcast %140 : vector<8x1xf32> to vector<8x128xf32>
    %149 = arith.subf %132, %148 : vector<8x128xf32>
    %cst_82 = arith.constant 9.99999974E-6 : f32
    %150 = vector.broadcast %cst_82 : f32 to vector<8x1xf32>
    %151 = arith.addf %147, %150 : vector<8x1xf32>
    %152 = math.rsqrt %151 : vector<8x1xf32>
    %153 = vector.broadcast %152 : vector<8x1xf32> to vector<8x128xf32>
    %154 = arith.mulf %149, %153 : vector<8x128xf32>
    %155 = vector.broadcast %134 : vector<1x128xf32> to vector<8x128xf32>
    %156 = arith.mulf %154, %155 : vector<8x128xf32>
    %157 = vector.broadcast %136 : vector<1x128xf32> to vector<8x128xf32>
    %158 = arith.addf %156, %157 : vector<8x128xf32>
    %159 = arith.truncf %158 : vector<8x128xf32> to vector<8x128xbf16>
    %c0_83 = arith.constant 0 : index
    %c0_84 = arith.constant 0 : index
    %c0_85 = arith.constant 0 : index
    %160 = vector.load %arg22[%c0_83, %c0_84, %c0_85] : memref<2x128x512xbf16, #tpu.memory_space<vmem>>, vector<1x128x512xbf16>
    %161 = vector.shape_cast %160 : vector<1x128x512xbf16> to vector<128x512xbf16>
    %cst_86 = arith.constant dense<0.000000e+00> : vector<8x512xf32>
    %162 = tpu.matmul %159, %161, %cst_86 {dimension_numbers = #tpu.dot_dimension_numbers<[1], [0], [0], [1], [0, 0, 1, 1], [], []>} : vector<8x128xbf16>, vector<128x512xbf16>, vector<8x512xf32> -> vector<8x512xf32>
    %c0_87 = arith.constant 0 : index
    %c0_88 = arith.constant 0 : index
    %c0_89 = arith.constant 0 : index
    %163 = vector.load %arg23[%c0_87, %c0_88, %c0_89] : memref<2x1x512xf32, #tpu.memory_space<vmem>>, vector<1x1x512xf32>
    %164 = vector.shape_cast %163 : vector<1x1x512xf32> to vector<1x512xf32>
    %165 = vector.broadcast %164 : vector<1x512xf32> to vector<8x512xf32>
    %166 = arith.addf %162, %165 : vector<8x512xf32>
    %cst_90 = arith.constant 5.000000e-01 : f32
    %167 = vector.broadcast %cst_90 : f32 to vector<8x512xf32>
    %168 = arith.mulf %167, %166 : vector<8x512xf32>
    %cst_91 = arith.constant 4.471500e-02 : f32
    %169 = vector.broadcast %cst_91 : f32 to vector<8x512xf32>
    %170 = arith.mulf %169, %166 : vector<8x512xf32>
    %171 = arith.mulf %170, %166 : vector<8x512xf32>
    %172 = arith.mulf %171, %166 : vector<8x512xf32>
    %173 = arith.addf %166, %172 : vector<8x512xf32>
    %cst_92 = arith.constant 0.797884583 : f32
    %174 = vector.broadcast %cst_92 : f32 to vector<8x512xf32>
    %175 = arith.mulf %174, %173 : vector<8x512xf32>
    %176 = math.tanh %175 : vector<8x512xf32>
    %cst_93 = arith.constant 1.000000e+00 : f32
    %177 = vector.broadcast %cst_93 : f32 to vector<8x512xf32>
    %178 = arith.addf %177, %176 : vector<8x512xf32>
    %179 = arith.mulf %168, %178 : vector<8x512xf32>
    %180 = arith.truncf %179 : vector<8x512xf32> to vector<8x512xbf16>
    %c0_94 = arith.constant 0 : index
    %c0_95 = arith.constant 0 : index
    %c0_96 = arith.constant 0 : index
    %181 = vector.load %arg24[%c0_94, %c0_95, %c0_96] : memref<2x512x128xbf16, #tpu.memory_space<vmem>>, vector<1x512x128xbf16>
    %182 = vector.shape_cast %181 : vector<1x512x128xbf16> to vector<512x128xbf16>
    %cst_97 = arith.constant dense<0.000000e+00> : vector<8x128xf32>
    %183 = tpu.matmul %180, %182, %cst_97 {dimension_numbers = #tpu.dot_dimension_numbers<[1], [0], [0], [1], [0, 0, 1, 1], [], []>} : vector<8x512xbf16>, vector<512x128xbf16>, vector<8x128xf32> -> vector<8x128xf32>
    %c0_98 = arith.constant 0 : index
    %c0_99 = arith.constant 0 : index
    %c0_100 = arith.constant 0 : index
    %184 = vector.load %arg25[%c0_98, %c0_99, %c0_100] : memref<2x1x128xf32, #tpu.memory_space<vmem>>, vector<1x1x128xf32>
    %185 = vector.shape_cast %184 : vector<1x1x128xf32> to vector<1x128xf32>
    %186 = vector.broadcast %185 : vector<1x128xf32> to vector<8x128xf32>
    %187 = arith.addf %183, %186 : vector<8x128xf32>
    %188 = arith.addf %158, %187 : vector<8x128xf32>
    %c0_101 = arith.constant 0 : index
    %c0_102 = arith.constant 0 : index
    %c0_103 = arith.constant 0 : index
    %189 = vector.load %arg26[%c0_101, %c0_102, %c0_103] : memref<2x1x128xf32, #tpu.memory_space<vmem>>, vector<1x1x128xf32>
    %190 = vector.shape_cast %189 : vector<1x1x128xf32> to vector<1x128xf32>
    %c0_104 = arith.constant 0 : index
    %c0_105 = arith.constant 0 : index
    %c0_106 = arith.constant 0 : index
    %191 = vector.load %arg27[%c0_104, %c0_105, %c0_106] : memref<2x1x128xf32, #tpu.memory_space<vmem>>, vector<1x1x128xf32>
    %192 = vector.shape_cast %191 : vector<1x1x128xf32> to vector<1x128xf32>
    %cst_107 = arith.constant dense<0.000000e+00> : vector<8xf32>
    %193 = vector.multi_reduction <add>, %188, %cst_107 [1] : vector<8x128xf32> to vector<8xf32>
    %194 = vector.shape_cast %193 : vector<8xf32> to vector<8x1xf32>
    %cst_108 = arith.constant 1.280000e+02 : f32
    %195 = vector.broadcast %cst_108 : f32 to vector<8x1xf32>
    %196 = arith.divf %194, %195 : vector<8x1xf32>
    %197 = vector.broadcast %196 : vector<8x1xf32> to vector<8x128xf32>
    %198 = arith.subf %188, %197 : vector<8x128xf32>
    %199 = arith.mulf %198, %198 : vector<8x128xf32>
    %cst_109 = arith.constant dense<0.000000e+00> : vector<8xf32>
    %200 = vector.multi_reduction <add>, %199, %cst_109 [1] : vector<8x128xf32> to vector<8xf32>
    %201 = vector.shape_cast %200 : vector<8xf32> to vector<8x1xf32>
    %cst_110 = arith.constant 1.280000e+02 : f32
    %202 = vector.broadcast %cst_110 : f32 to vector<8x1xf32>
    %203 = arith.divf %201, %202 : vector<8x1xf32>
    %204 = vector.broadcast %196 : vector<8x1xf32> to vector<8x128xf32>
    %205 = arith.subf %188, %204 : vector<8x128xf32>
    %cst_111 = arith.constant 9.99999974E-6 : f32
    %206 = vector.broadcast %cst_111 : f32 to vector<8x1xf32>
    %207 = arith.addf %203, %206 : vector<8x1xf32>
    %208 = math.rsqrt %207 : vector<8x1xf32>
    %209 = vector.broadcast %208 : vector<8x1xf32> to vector<8x128xf32>
    %210 = arith.mulf %205, %209 : vector<8x128xf32>
    %211 = vector.broadcast %190 : vector<1x128xf32> to vector<8x128xf32>
    %212 = arith.mulf %210, %211 : vector<8x128xf32>
    %213 = vector.broadcast %192 : vector<1x128xf32> to vector<8x128xf32>
    %214 = arith.addf %212, %213 : vector<8x128xf32>
    %215 = arith.truncf %214 : vector<8x128xf32> to vector<8x128xbf16>
    %c1 = arith.constant 1 : index
    %c0_112 = arith.constant 0 : index
    %c0_113 = arith.constant 0 : index
    %216 = vector.load %arg11[%c1, %c0_112, %c0_113] : memref<2x128x384xbf16, #tpu.memory_space<vmem>>, vector<1x128x384xbf16>
    %217 = vector.shape_cast %216 : vector<1x128x384xbf16> to vector<128x384xbf16>
    %cst_114 = arith.constant dense<0.000000e+00> : vector<8x384xf32>
    %218 = tpu.matmul %215, %217, %cst_114 {dimension_numbers = #tpu.dot_dimension_numbers<[1], [0], [0], [1], [0, 0, 1, 1], [], []>} : vector<8x128xbf16>, vector<128x384xbf16>, vector<8x384xf32> -> vector<8x384xf32>
    %219 = vector.extract_strided_slice %218 {offsets = [0, 0], sizes = [8, 128], strides = [1, 1]} : vector<8x384xf32> to vector<8x128xf32>
    %220 = vector.extract_strided_slice %218 {offsets = [0, 128], sizes = [8, 128], strides = [1, 1]} : vector<8x384xf32> to vector<8x128xf32>
    %221 = arith.truncf %220 : vector<8x128xf32> to vector<8x128xbf16>
    %222 = vector.extract_strided_slice %218 {offsets = [0, 256], sizes = [8, 128], strides = [1, 1]} : vector<8x384xf32> to vector<8x128xf32>
    %223 = arith.truncf %222 : vector<8x128xf32> to vector<8x128xbf16>
    %224 = tpu.concatenate %221, %221, %221, %221, %221, %221, %221, %221, %221, %221, %221, %221, %221, %221, %221, %221 in 0 : vector<8x128xbf16>, vector<8x128xbf16>, vector<8x128xbf16>, vector<8x128xbf16>, vector<8x128xbf16>, vector<8x128xbf16>, vector<8x128xbf16>, vector<8x128xbf16>, vector<8x128xbf16>, vector<8x128xbf16>, vector<8x128xbf16>, vector<8x128xbf16>, vector<8x128xbf16>, vector<8x128xbf16>, vector<8x128xbf16>, vector<8x128xbf16> -> vector<128x128xbf16>
    %225 = arith.mulf %224, %13 : vector<128x128xbf16>
    %226 = tpu.concatenate %223, %223, %223, %223, %223, %223, %223, %223, %223, %223, %223, %223, %223, %223, %223, %223 in 0 : vector<8x128xbf16>, vector<8x128xbf16>, vector<8x128xbf16>, vector<8x128xbf16>, vector<8x128xbf16>, vector<8x128xbf16>, vector<8x128xbf16>, vector<8x128xbf16>, vector<8x128xbf16>, vector<8x128xbf16>, vector<8x128xbf16>, vector<8x128xbf16>, vector<8x128xbf16>, vector<8x128xbf16>, vector<8x128xbf16>, vector<8x128xbf16> -> vector<128x128xbf16>
    %227 = arith.mulf %226, %13 : vector<128x128xbf16>
    %c1_115 = arith.constant 1 : index
    %c0_116 = arith.constant 0 : index
    %c0_117 = arith.constant 0 : index
    %228 = vector.load %arg12[%c1_115, %c0_116, %c0_117] : memref<2x1x128xf32, #tpu.memory_space<vmem>>, vector<1x1x128xf32>
    %229 = vector.shape_cast %228 : vector<1x1x128xf32> to vector<1x128xf32>
    %230 = vector.broadcast %229 : vector<1x128xf32> to vector<8x128xf32>
    %231 = arith.addf %219, %230 : vector<8x128xf32>
    %232 = arith.truncf %231 : vector<8x128xf32> to vector<8x128xbf16>
    %c1_118 = arith.constant 1 : index
    %c0_119 = arith.constant 0 : index
    %c0_120 = arith.constant 0 : index
    %233 = vector.load %arg13[%c1_118, %c0_119, %c0_120] : memref<2x1x128xf32, #tpu.memory_space<vmem>>, vector<1x1x128xf32>
    %234 = vector.shape_cast %233 : vector<1x1x128xf32> to vector<1x128xf32>
    %235 = vector.broadcast %234 : vector<1x128xf32> to vector<8x128xf32>
    %236 = arith.addf %219, %235 : vector<8x128xf32>
    %237 = arith.truncf %236 : vector<8x128xf32> to vector<8x128xbf16>
    %cst_121 = arith.constant dense<0.000000e+00> : vector<8x128xf32>
    %238 = tpu.matmul %232, %225, %cst_121 {dimension_numbers = #tpu.dot_dimension_numbers<[1], [1], [0], [0], [0, 0, 1, 0], [], []>} : vector<8x128xbf16>, vector<128x128xbf16>, vector<8x128xf32> -> vector<8x128xf32>
    %239 = tpu.concatenate %237, %237, %237, %237, %237, %237, %237, %237 in 1 : vector<8x128xbf16>, vector<8x128xbf16>, vector<8x128xbf16>, vector<8x128xbf16>, vector<8x128xbf16>, vector<8x128xbf16>, vector<8x128xbf16>, vector<8x128xbf16> -> vector<8x1024xbf16>
    %240 = arith.mulf %239, %15 : vector<8x1024xbf16>
    %c1_122 = arith.constant 1 : index
    %c0_123 = arith.constant 0 : index
    %c0_124 = arith.constant 0 : index
    %241 = vector.load %arg10[%c1_122, %c0_123, %c0_124] : memref<2x1024x128xbf16, #tpu.memory_space<vmem>>, vector<1x1024x128xbf16>
    %242 = vector.shape_cast %241 : vector<1x1024x128xbf16> to vector<1024x128xbf16>
    %cst_125 = arith.constant dense<0.000000e+00> : vector<8x128xf32>
    %243 = tpu.matmul %240, %242, %cst_125 {dimension_numbers = #tpu.dot_dimension_numbers<[1], [0], [0], [1], [0, 0, 1, 1], [], []>} : vector<8x1024xbf16>, vector<1024x128xbf16>, vector<8x128xf32> -> vector<8x128xf32>
    %244 = arith.addf %238, %243 : vector<8x128xf32>
    %cst_126 = arith.constant 0.353553385 : f32
    %245 = vector.broadcast %cst_126 : f32 to vector<8x128xf32>
    %246 = arith.mulf %244, %245 : vector<8x128xf32>
    %cst_127 = arith.constant 0.000000e+00 : f32
    %247 = vector.broadcast %cst_127 : f32 to vector<8x128xf32>
    %248 = arith.cmpf ogt, %12, %247 : vector<8x128xf32>
    %cst_128 = arith.constant -1.000000e+30 : f32
    %249 = vector.broadcast %cst_128 : f32 to vector<8x128xf32>
    %250 = arith.select %248, %246, %249 : vector<8x128xi1>, vector<8x128xf32>
    %cst_129 = arith.constant dense<0xFF800000> : vector<8xf32>
    %251 = vector.multi_reduction <maximumf>, %250, %cst_129 [1] : vector<8x128xf32> to vector<8xf32>
    %252 = vector.shape_cast %251 : vector<8xf32> to vector<8x1xf32>
    %253 = vector.broadcast %252 : vector<8x1xf32> to vector<8x128xf32>
    %254 = arith.subf %250, %253 : vector<8x128xf32>
    %255 = math.exp %254 : vector<8x128xf32>
    %256 = arith.truncf %255 : vector<8x128xf32> to vector<8x128xbf16>
    %cst_130 = arith.constant dense<0.000000e+00> : vector<8x128xf32>
    %257 = tpu.matmul %256, %227, %cst_130 {dimension_numbers = #tpu.dot_dimension_numbers<[1], [0], [0], [1], [0, 0, 1, 1], [], []>} : vector<8x128xbf16>, vector<128x128xbf16>, vector<8x128xf32> -> vector<8x128xf32>
    %cst_131 = arith.constant dense<0.000000e+00> : vector<8x128xf32>
    %258 = tpu.matmul %256, %13, %cst_131 {dimension_numbers = #tpu.dot_dimension_numbers<[1], [0], [0], [1], [0, 0, 1, 1], [], []>} : vector<8x128xbf16>, vector<128x128xbf16>, vector<8x128xf32> -> vector<8x128xf32>
    %cst_132 = arith.constant 1.000000e-30 : f32
    %259 = vector.broadcast %cst_132 : f32 to vector<8x128xf32>
    %260 = arith.maximumf %258, %259 : vector<8x128xf32>
    %261 = tpu.reciprocal %260 {approx = true} : vector<8x128xf32> -> vector<8x128xf32>
    %262 = arith.mulf %257, %261 : vector<8x128xf32>
    %263 = arith.truncf %262 : vector<8x128xf32> to vector<8x128xbf16>
    %c1_133 = arith.constant 1 : index
    %c0_134 = arith.constant 0 : index
    %c0_135 = arith.constant 0 : index
    %264 = vector.load %arg14[%c1_133, %c0_134, %c0_135] : memref<2x128x128xbf16, #tpu.memory_space<vmem>>, vector<1x128x128xbf16>
    %265 = vector.shape_cast %264 : vector<1x128x128xbf16> to vector<128x128xbf16>
    %cst_136 = arith.constant dense<0.000000e+00> : vector<8x128xf32>
    %266 = tpu.matmul %263, %265, %cst_136 {dimension_numbers = #tpu.dot_dimension_numbers<[1], [0], [0], [1], [0, 0, 1, 1], [], []>} : vector<8x128xbf16>, vector<128x128xbf16>, vector<8x128xf32> -> vector<8x128xf32>
    %267 = arith.addf %214, %266 : vector<8x128xf32>
    %c1_137 = arith.constant 1 : index
    %c0_138 = arith.constant 0 : index
    %c0_139 = arith.constant 0 : index
    %268 = vector.load %arg15[%c1_137, %c0_138, %c0_139] : memref<2x1x128xf32, #tpu.memory_space<vmem>>, vector<1x1x128xf32>
    %269 = vector.shape_cast %268 : vector<1x1x128xf32> to vector<1x128xf32>
    %c1_140 = arith.constant 1 : index
    %c0_141 = arith.constant 0 : index
    %c0_142 = arith.constant 0 : index
    %270 = vector.load %arg16[%c1_140, %c0_141, %c0_142] : memref<2x1x128xf32, #tpu.memory_space<vmem>>, vector<1x1x128xf32>
    %271 = vector.shape_cast %270 : vector<1x1x128xf32> to vector<1x128xf32>
    %cst_143 = arith.constant dense<0.000000e+00> : vector<8xf32>
    %272 = vector.multi_reduction <add>, %267, %cst_143 [1] : vector<8x128xf32> to vector<8xf32>
    %273 = vector.shape_cast %272 : vector<8xf32> to vector<8x1xf32>
    %cst_144 = arith.constant 1.280000e+02 : f32
    %274 = vector.broadcast %cst_144 : f32 to vector<8x1xf32>
    %275 = arith.divf %273, %274 : vector<8x1xf32>
    %276 = vector.broadcast %275 : vector<8x1xf32> to vector<8x128xf32>
    %277 = arith.subf %267, %276 : vector<8x128xf32>
    %278 = arith.mulf %277, %277 : vector<8x128xf32>
    %cst_145 = arith.constant dense<0.000000e+00> : vector<8xf32>
    %279 = vector.multi_reduction <add>, %278, %cst_145 [1] : vector<8x128xf32> to vector<8xf32>
    %280 = vector.shape_cast %279 : vector<8xf32> to vector<8x1xf32>
    %cst_146 = arith.constant 1.280000e+02 : f32
    %281 = vector.broadcast %cst_146 : f32 to vector<8x1xf32>
    %282 = arith.divf %280, %281 : vector<8x1xf32>
    %283 = vector.broadcast %275 : vector<8x1xf32> to vector<8x128xf32>
    %284 = arith.subf %267, %283 : vector<8x128xf32>
    %cst_147 = arith.constant 9.99999974E-6 : f32
    %285 = vector.broadcast %cst_147 : f32 to vector<8x1xf32>
    %286 = arith.addf %282, %285 : vector<8x1xf32>
    %287 = math.rsqrt %286 : vector<8x1xf32>
    %288 = vector.broadcast %287 : vector<8x1xf32> to vector<8x128xf32>
    %289 = arith.mulf %284, %288 : vector<8x128xf32>
    %290 = vector.broadcast %269 : vector<1x128xf32> to vector<8x128xf32>
    %291 = arith.mulf %289, %290 : vector<8x128xf32>
    %292 = vector.broadcast %271 : vector<1x128xf32> to vector<8x128xf32>
    %293 = arith.addf %291, %292 : vector<8x128xf32>
    %294 = arith.truncf %293 : vector<8x128xf32> to vector<8x128xbf16>
    %c1_148 = arith.constant 1 : index
    %c0_149 = arith.constant 0 : index
    %c0_150 = arith.constant 0 : index
    %295 = vector.load %arg17[%c1_148, %c0_149, %c0_150] : memref<2x128x128xbf16, #tpu.memory_space<vmem>>, vector<1x128x128xbf16>
    %296 = vector.shape_cast %295 : vector<1x128x128xbf16> to vector<128x128xbf16>
    %cst_151 = arith.constant dense<0.000000e+00> : vector<8x128xf32>
    %297 = tpu.matmul %294, %296, %cst_151 {dimension_numbers = #tpu.dot_dimension_numbers<[1], [0], [0], [1], [0, 0, 1, 1], [], []>} : vector<8x128xbf16>, vector<128x128xbf16>, vector<8x128xf32> -> vector<8x128xf32>
    %c1_152 = arith.constant 1 : index
    %c0_153 = arith.constant 0 : index
    %c0_154 = arith.constant 0 : index
    %298 = vector.load %arg18[%c1_152, %c0_153, %c0_154] : memref<2x128x256xbf16, #tpu.memory_space<vmem>>, vector<1x128x256xbf16>
    %299 = vector.shape_cast %298 : vector<1x128x256xbf16> to vector<128x256xbf16>
    %cst_155 = arith.constant dense<0.000000e+00> : vector<16x256xf32>
    %300 = tpu.matmul %4, %299, %cst_155 {dimension_numbers = #tpu.dot_dimension_numbers<[1], [0], [0], [1], [0, 0, 1, 1], [], []>} : vector<16x128xbf16>, vector<128x256xbf16>, vector<16x256xf32> -> vector<16x256xf32>
    %301 = vector.extract_strided_slice %300 {offsets = [0, 0], sizes = [16, 128], strides = [1, 1]} : vector<16x256xf32> to vector<16x128xf32>
    %302 = arith.truncf %301 : vector<16x128xf32> to vector<16x128xbf16>
    %303 = vector.extract_strided_slice %300 {offsets = [0, 128], sizes = [16, 128], strides = [1, 1]} : vector<16x256xf32> to vector<16x128xf32>
    %304 = arith.truncf %303 : vector<16x128xf32> to vector<16x128xbf16>
    %305 = tpu.concatenate %302, %302, %302, %302, %302, %302, %302, %302, %302, %302, %302, %302, %302, %302, %302, %302 in 0 : vector<16x128xbf16>, vector<16x128xbf16>, vector<16x128xbf16>, vector<16x128xbf16>, vector<16x128xbf16>, vector<16x128xbf16>, vector<16x128xbf16>, vector<16x128xbf16>, vector<16x128xbf16>, vector<16x128xbf16>, vector<16x128xbf16>, vector<16x128xbf16>, vector<16x128xbf16>, vector<16x128xbf16>, vector<16x128xbf16>, vector<16x128xbf16> -> vector<256x128xbf16>
    %306 = arith.mulf %305, %14 : vector<256x128xbf16>
    %307 = tpu.concatenate %304, %304, %304, %304, %304, %304, %304, %304, %304, %304, %304, %304, %304, %304, %304, %304 in 0 : vector<16x128xbf16>, vector<16x128xbf16>, vector<16x128xbf16>, vector<16x128xbf16>, vector<16x128xbf16>, vector<16x128xbf16>, vector<16x128xbf16>, vector<16x128xbf16>, vector<16x128xbf16>, vector<16x128xbf16>, vector<16x128xbf16>, vector<16x128xbf16>, vector<16x128xbf16>, vector<16x128xbf16>, vector<16x128xbf16>, vector<16x128xbf16> -> vector<256x128xbf16>
    %308 = arith.mulf %307, %14 : vector<256x128xbf16>
    %309 = arith.truncf %297 : vector<8x128xf32> to vector<8x128xbf16>
    %cst_156 = arith.constant dense<0.000000e+00> : vector<8x256xf32>
    %310 = tpu.matmul %309, %306, %cst_156 {dimension_numbers = #tpu.dot_dimension_numbers<[1], [1], [0], [0], [0, 0, 1, 0], [], []>} : vector<8x128xbf16>, vector<256x128xbf16>, vector<8x256xf32> -> vector<8x256xf32>
    %cst_157 = arith.constant 0.353553385 : f32
    %311 = vector.broadcast %cst_157 : f32 to vector<8x256xf32>
    %312 = arith.mulf %310, %311 : vector<8x256xf32>
    %313 = vector.broadcast %10 : vector<1x256xf32> to vector<8x256xf32>
    %314 = arith.addf %312, %313 : vector<8x256xf32>
    %cst_158 = arith.constant dense<0xFF800000> : vector<8xf32>
    %315 = vector.multi_reduction <maximumf>, %314, %cst_158 [1] : vector<8x256xf32> to vector<8xf32>
    %316 = vector.shape_cast %315 : vector<8xf32> to vector<8x1xf32>
    %317 = vector.broadcast %316 : vector<8x1xf32> to vector<8x256xf32>
    %318 = arith.subf %314, %317 : vector<8x256xf32>
    %319 = math.exp %318 : vector<8x256xf32>
    %320 = arith.truncf %319 : vector<8x256xf32> to vector<8x256xbf16>
    %cst_159 = arith.constant dense<0.000000e+00> : vector<8x128xf32>
    %321 = tpu.matmul %320, %308, %cst_159 {dimension_numbers = #tpu.dot_dimension_numbers<[1], [0], [0], [1], [0, 0, 1, 1], [], []>} : vector<8x256xbf16>, vector<256x128xbf16>, vector<8x128xf32> -> vector<8x128xf32>
    %cst_160 = arith.constant dense<0.000000e+00> : vector<8x128xf32>
    %322 = tpu.matmul %320, %14, %cst_160 {dimension_numbers = #tpu.dot_dimension_numbers<[1], [0], [0], [1], [0, 0, 1, 1], [], []>} : vector<8x256xbf16>, vector<256x128xbf16>, vector<8x128xf32> -> vector<8x128xf32>
    %cst_161 = arith.constant 1.000000e-30 : f32
    %323 = vector.broadcast %cst_161 : f32 to vector<8x128xf32>
    %324 = arith.maximumf %322, %323 : vector<8x128xf32>
    %325 = tpu.reciprocal %324 {approx = true} : vector<8x128xf32> -> vector<8x128xf32>
    %326 = arith.mulf %321, %325 : vector<8x128xf32>
    %327 = arith.truncf %326 : vector<8x128xf32> to vector<8x128xbf16>
    %c1_162 = arith.constant 1 : index
    %c0_163 = arith.constant 0 : index
    %c0_164 = arith.constant 0 : index
    %328 = vector.load %arg19[%c1_162, %c0_163, %c0_164] : memref<2x128x128xbf16, #tpu.memory_space<vmem>>, vector<1x128x128xbf16>
    %329 = vector.shape_cast %328 : vector<1x128x128xbf16> to vector<128x128xbf16>
    %cst_165 = arith.constant dense<0.000000e+00> : vector<8x128xf32>
    %330 = tpu.matmul %327, %329, %cst_165 {dimension_numbers = #tpu.dot_dimension_numbers<[1], [0], [0], [1], [0, 0, 1, 1], [], []>} : vector<8x128xbf16>, vector<128x128xbf16>, vector<8x128xf32> -> vector<8x128xf32>
    %331 = arith.addf %330, %293 : vector<8x128xf32>
    %c1_166 = arith.constant 1 : index
    %c0_167 = arith.constant 0 : index
    %c0_168 = arith.constant 0 : index
    %332 = vector.load %arg20[%c1_166, %c0_167, %c0_168] : memref<2x1x128xf32, #tpu.memory_space<vmem>>, vector<1x1x128xf32>
    %333 = vector.shape_cast %332 : vector<1x1x128xf32> to vector<1x128xf32>
    %c1_169 = arith.constant 1 : index
    %c0_170 = arith.constant 0 : index
    %c0_171 = arith.constant 0 : index
    %334 = vector.load %arg21[%c1_169, %c0_170, %c0_171] : memref<2x1x128xf32, #tpu.memory_space<vmem>>, vector<1x1x128xf32>
    %335 = vector.shape_cast %334 : vector<1x1x128xf32> to vector<1x128xf32>
    %cst_172 = arith.constant dense<0.000000e+00> : vector<8xf32>
    %336 = vector.multi_reduction <add>, %331, %cst_172 [1] : vector<8x128xf32> to vector<8xf32>
    %337 = vector.shape_cast %336 : vector<8xf32> to vector<8x1xf32>
    %cst_173 = arith.constant 1.280000e+02 : f32
    %338 = vector.broadcast %cst_173 : f32 to vector<8x1xf32>
    %339 = arith.divf %337, %338 : vector<8x1xf32>
    %340 = vector.broadcast %339 : vector<8x1xf32> to vector<8x128xf32>
    %341 = arith.subf %331, %340 : vector<8x128xf32>
    %342 = arith.mulf %341, %341 : vector<8x128xf32>
    %cst_174 = arith.constant dense<0.000000e+00> : vector<8xf32>
    %343 = vector.multi_reduction <add>, %342, %cst_174 [1] : vector<8x128xf32> to vector<8xf32>
    %344 = vector.shape_cast %343 : vector<8xf32> to vector<8x1xf32>
    %cst_175 = arith.constant 1.280000e+02 : f32
    %345 = vector.broadcast %cst_175 : f32 to vector<8x1xf32>
    %346 = arith.divf %344, %345 : vector<8x1xf32>
    %347 = vector.broadcast %339 : vector<8x1xf32> to vector<8x128xf32>
    %348 = arith.subf %331, %347 : vector<8x128xf32>
    %cst_176 = arith.constant 9.99999974E-6 : f32
    %349 = vector.broadcast %cst_176 : f32 to vector<8x1xf32>
    %350 = arith.addf %346, %349 : vector<8x1xf32>
    %351 = math.rsqrt %350 : vector<8x1xf32>
    %352 = vector.broadcast %351 : vector<8x1xf32> to vector<8x128xf32>
    %353 = arith.mulf %348, %352 : vector<8x128xf32>
    %354 = vector.broadcast %333 : vector<1x128xf32> to vector<8x128xf32>
    %355 = arith.mulf %353, %354 : vector<8x128xf32>
    %356 = vector.broadcast %335 : vector<1x128xf32> to vector<8x128xf32>
    %357 = arith.addf %355, %356 : vector<8x128xf32>
    %358 = arith.truncf %357 : vector<8x128xf32> to vector<8x128xbf16>
    %c1_177 = arith.constant 1 : index
    %c0_178 = arith.constant 0 : index
    %c0_179 = arith.constant 0 : index
    %359 = vector.load %arg22[%c1_177, %c0_178, %c0_179] : memref<2x128x512xbf16, #tpu.memory_space<vmem>>, vector<1x128x512xbf16>
    %360 = vector.shape_cast %359 : vector<1x128x512xbf16> to vector<128x512xbf16>
    %cst_180 = arith.constant dense<0.000000e+00> : vector<8x512xf32>
    %361 = tpu.matmul %358, %360, %cst_180 {dimension_numbers = #tpu.dot_dimension_numbers<[1], [0], [0], [1], [0, 0, 1, 1], [], []>} : vector<8x128xbf16>, vector<128x512xbf16>, vector<8x512xf32> -> vector<8x512xf32>
    %c1_181 = arith.constant 1 : index
    %c0_182 = arith.constant 0 : index
    %c0_183 = arith.constant 0 : index
    %362 = vector.load %arg23[%c1_181, %c0_182, %c0_183] : memref<2x1x512xf32, #tpu.memory_space<vmem>>, vector<1x1x512xf32>
    %363 = vector.shape_cast %362 : vector<1x1x512xf32> to vector<1x512xf32>
    %364 = vector.broadcast %363 : vector<1x512xf32> to vector<8x512xf32>
    %365 = arith.addf %361, %364 : vector<8x512xf32>
    %cst_184 = arith.constant 5.000000e-01 : f32
    %366 = vector.broadcast %cst_184 : f32 to vector<8x512xf32>
    %367 = arith.mulf %366, %365 : vector<8x512xf32>
    %cst_185 = arith.constant 4.471500e-02 : f32
    %368 = vector.broadcast %cst_185 : f32 to vector<8x512xf32>
    %369 = arith.mulf %368, %365 : vector<8x512xf32>
    %370 = arith.mulf %369, %365 : vector<8x512xf32>
    %371 = arith.mulf %370, %365 : vector<8x512xf32>
    %372 = arith.addf %365, %371 : vector<8x512xf32>
    %cst_186 = arith.constant 0.797884583 : f32
    %373 = vector.broadcast %cst_186 : f32 to vector<8x512xf32>
    %374 = arith.mulf %373, %372 : vector<8x512xf32>
    %375 = math.tanh %374 : vector<8x512xf32>
    %cst_187 = arith.constant 1.000000e+00 : f32
    %376 = vector.broadcast %cst_187 : f32 to vector<8x512xf32>
    %377 = arith.addf %376, %375 : vector<8x512xf32>
    %378 = arith.mulf %367, %377 : vector<8x512xf32>
    %379 = arith.truncf %378 : vector<8x512xf32> to vector<8x512xbf16>
    %c1_188 = arith.constant 1 : index
    %c0_189 = arith.constant 0 : index
    %c0_190 = arith.constant 0 : index
    %380 = vector.load %arg24[%c1_188, %c0_189, %c0_190] : memref<2x512x128xbf16, #tpu.memory_space<vmem>>, vector<1x512x128xbf16>
    %381 = vector.shape_cast %380 : vector<1x512x128xbf16> to vector<512x128xbf16>
    %cst_191 = arith.constant dense<0.000000e+00> : vector<8x128xf32>
    %382 = tpu.matmul %379, %381, %cst_191 {dimension_numbers = #tpu.dot_dimension_numbers<[1], [0], [0], [1], [0, 0, 1, 1], [], []>} : vector<8x512xbf16>, vector<512x128xbf16>, vector<8x128xf32> -> vector<8x128xf32>
    %c1_192 = arith.constant 1 : index
    %c0_193 = arith.constant 0 : index
    %c0_194 = arith.constant 0 : index
    %383 = vector.load %arg25[%c1_192, %c0_193, %c0_194] : memref<2x1x128xf32, #tpu.memory_space<vmem>>, vector<1x1x128xf32>
    %384 = vector.shape_cast %383 : vector<1x1x128xf32> to vector<1x128xf32>
    %385 = vector.broadcast %384 : vector<1x128xf32> to vector<8x128xf32>
    %386 = arith.addf %382, %385 : vector<8x128xf32>
    %387 = arith.addf %357, %386 : vector<8x128xf32>
    %c1_195 = arith.constant 1 : index
    %c0_196 = arith.constant 0 : index
    %c0_197 = arith.constant 0 : index
    %388 = vector.load %arg26[%c1_195, %c0_196, %c0_197] : memref<2x1x128xf32, #tpu.memory_space<vmem>>, vector<1x1x128xf32>
    %389 = vector.shape_cast %388 : vector<1x1x128xf32> to vector<1x128xf32>
    %c1_198 = arith.constant 1 : index
    %c0_199 = arith.constant 0 : index
    %c0_200 = arith.constant 0 : index
    %390 = vector.load %arg27[%c1_198, %c0_199, %c0_200] : memref<2x1x128xf32, #tpu.memory_space<vmem>>, vector<1x1x128xf32>
    %391 = vector.shape_cast %390 : vector<1x1x128xf32> to vector<1x128xf32>
    %cst_201 = arith.constant dense<0.000000e+00> : vector<8xf32>
    %392 = vector.multi_reduction <add>, %387, %cst_201 [1] : vector<8x128xf32> to vector<8xf32>
    %393 = vector.shape_cast %392 : vector<8xf32> to vector<8x1xf32>
    %cst_202 = arith.constant 1.280000e+02 : f32
    %394 = vector.broadcast %cst_202 : f32 to vector<8x1xf32>
    %395 = arith.divf %393, %394 : vector<8x1xf32>
    %396 = vector.broadcast %395 : vector<8x1xf32> to vector<8x128xf32>
    %397 = arith.subf %387, %396 : vector<8x128xf32>
    %398 = arith.mulf %397, %397 : vector<8x128xf32>
    %cst_203 = arith.constant dense<0.000000e+00> : vector<8xf32>
    %399 = vector.multi_reduction <add>, %398, %cst_203 [1] : vector<8x128xf32> to vector<8xf32>
    %400 = vector.shape_cast %399 : vector<8xf32> to vector<8x1xf32>
    %cst_204 = arith.constant 1.280000e+02 : f32
    %401 = vector.broadcast %cst_204 : f32 to vector<8x1xf32>
    %402 = arith.divf %400, %401 : vector<8x1xf32>
    %403 = vector.broadcast %395 : vector<8x1xf32> to vector<8x128xf32>
    %404 = arith.subf %387, %403 : vector<8x128xf32>
    %cst_205 = arith.constant 9.99999974E-6 : f32
    %405 = vector.broadcast %cst_205 : f32 to vector<8x1xf32>
    %406 = arith.addf %402, %405 : vector<8x1xf32>
    %407 = math.rsqrt %406 : vector<8x1xf32>
    %408 = vector.broadcast %407 : vector<8x1xf32> to vector<8x128xf32>
    %409 = arith.mulf %404, %408 : vector<8x128xf32>
    %410 = vector.broadcast %389 : vector<1x128xf32> to vector<8x128xf32>
    %411 = arith.mulf %409, %410 : vector<8x128xf32>
    %412 = vector.broadcast %391 : vector<1x128xf32> to vector<8x128xf32>
    %413 = arith.addf %411, %412 : vector<8x128xf32>
    %c0_206 = arith.constant 0 : index
    %c0_207 = arith.constant 0 : index
    %c0_208 = arith.constant 0 : index
    %414 = vector.load %arg4[%c0_206, %c0_207, %c0_208] : memref<1x16x1xi32, #tpu.memory_space<vmem>>, vector<1x16x1xi32>
    %415 = vector.shape_cast %414 : vector<1x16x1xi32> to vector<16x1xi32>
    %c0_209 = arith.constant 0 : index
    %c0_210 = arith.constant 0 : index
    %c0_211 = arith.constant 0 : index
    %416 = vector.load %arg5[%c0_209, %c0_210, %c0_211] : memref<1x8x1xi32, #tpu.memory_space<vmem>>, vector<1x8x1xi32>
    %417 = vector.shape_cast %416 : vector<1x8x1xi32> to vector<8x1xi32>
    %418 = arith.truncf %413 : vector<8x128xf32> to vector<8x128xbf16>
    %c0_212 = arith.constant 0 : index
    %c0_213 = arith.constant 0 : index
    %419 = vector.load %arg28[%c0_212, %c0_213] : memref<128x256xbf16, #tpu.memory_space<vmem>>, vector<128x256xbf16>
    %cst_214 = arith.constant dense<0.000000e+00> : vector<8x256xf32>
    %420 = tpu.matmul %418, %419, %cst_214 {dimension_numbers = #tpu.dot_dimension_numbers<[1], [0], [0], [1], [0, 0, 1, 1], [], []>} : vector<8x128xbf16>, vector<128x256xbf16>, vector<8x256xf32> -> vector<8x256xf32>
    %c0_215 = arith.constant 0 : index
    %c0_216 = arith.constant 0 : index
    %421 = vector.load %arg29[%c0_215, %c0_216] : memref<1x256xf32, #tpu.memory_space<vmem>>, vector<1x256xf32>
    %422 = vector.broadcast %421 : vector<1x256xf32> to vector<8x256xf32>
    %423 = arith.addf %420, %422 : vector<8x256xf32>
    %424 = vector.extract_strided_slice %423 {offsets = [0, 0], sizes = [8, 128], strides = [1, 1]} : vector<8x256xf32> to vector<8x128xf32>
    %425 = vector.extract_strided_slice %423 {offsets = [0, 128], sizes = [8, 128], strides = [1, 1]} : vector<8x256xf32> to vector<8x128xf32>
    %cst_217 = arith.constant dense<0xFF800000> : vector<8xf32>
    %426 = vector.multi_reduction <maximumf>, %424, %cst_217 [1] : vector<8x128xf32> to vector<8xf32>
    %427 = vector.shape_cast %426 : vector<8xf32> to vector<8x1xf32>
    %428 = vector.broadcast %427 : vector<8x1xf32> to vector<8x128xf32>
    %429 = arith.subf %424, %428 : vector<8x128xf32>
    %430 = math.exp %429 : vector<8x128xf32>
    %cst_218 = arith.constant dense<0.000000e+00> : vector<8xf32>
    %431 = vector.multi_reduction <add>, %430, %cst_218 [1] : vector<8x128xf32> to vector<8xf32>
    %432 = vector.shape_cast %431 : vector<8xf32> to vector<8x1xf32>
    %433 = tpu.reciprocal %432 {approx = true} : vector<8x1xf32> -> vector<8x1xf32>
    %434 = vector.broadcast %433 : vector<8x1xf32> to vector<8x128xf32>
    %435 = arith.mulf %430, %434 : vector<8x128xf32>
    %436 = arith.truncf %425 : vector<8x128xf32> to vector<8x128xbf16>
    %cst_219 = arith.constant dense<0.000000e+00> : vector<8x16xf32>
    %437 = tpu.matmul %436, %4, %cst_219 {dimension_numbers = #tpu.dot_dimension_numbers<[1], [1], [0], [0], [0, 0, 1, 0], [], []>} : vector<8x128xbf16>, vector<16x128xbf16>, vector<8x16xf32> -> vector<8x16xf32>
    %438 = vector.broadcast %11 : vector<1x16xf32> to vector<8x16xf32>
    %439 = arith.addf %437, %438 : vector<8x16xf32>
    %cst_220 = arith.constant dense<0xFF800000> : vector<8xf32>
    %440 = vector.multi_reduction <maximumf>, %439, %cst_220 [1] : vector<8x16xf32> to vector<8xf32>
    %441 = vector.shape_cast %440 : vector<8xf32> to vector<8x1xf32>
    %442 = vector.broadcast %441 : vector<8x1xf32> to vector<8x16xf32>
    %443 = arith.subf %439, %442 : vector<8x16xf32>
    %444 = math.exp %443 : vector<8x16xf32>
    %cst_221 = arith.constant dense<0.000000e+00> : vector<8xf32>
    %445 = vector.multi_reduction <add>, %444, %cst_221 [1] : vector<8x16xf32> to vector<8xf32>
    %446 = vector.shape_cast %445 : vector<8xf32> to vector<8x1xf32>
    %447 = tpu.reciprocal %446 {approx = true} : vector<8x1xf32> -> vector<8x1xf32>
    %448 = vector.broadcast %447 : vector<8x1xf32> to vector<8x16xf32>
    %449 = arith.mulf %444, %448 : vector<8x16xf32>
    %c0_222 = arith.constant 0 : index
    %c0_223 = arith.constant 0 : index
    %450 = vector.load %arg30[%c0_222, %c0_223] : memref<1x128xf32, #tpu.memory_space<vmem>>, vector<1x128xf32>
    %451 = vector.broadcast %450 : vector<1x128xf32> to vector<8x128xf32>
    %452 = arith.mulf %413, %451 : vector<8x128xf32>
    %cst_224 = arith.constant dense<0.000000e+00> : vector<8xf32>
    %453 = vector.multi_reduction <add>, %452, %cst_224 [1] : vector<8x128xf32> to vector<8xf32>
    %454 = vector.shape_cast %453 : vector<8xf32> to vector<8x1xf32>
    %c0_225 = arith.constant 0 : index
    %c0_226 = arith.constant 0 : index
    %455 = vector.load %arg31[%c0_225, %c0_226] : memref<1x1xf32, #tpu.memory_space<vmem>>, vector<1x1xf32>
    %456 = vector.broadcast %455 : vector<1x1xf32> to vector<8x1xf32>
    %457 = arith.addf %454, %456 : vector<8x1xf32>
    %cst_227 = arith.constant 0.000000e+00 : f32
    %458 = vector.broadcast %cst_227 : f32 to vector<8x1xf32>
    %459 = arith.subf %458, %457 : vector<8x1xf32>
    %460 = math.exp %459 : vector<8x1xf32>
    %cst_228 = arith.constant 1.000000e+00 : f32
    %461 = vector.broadcast %cst_228 : f32 to vector<8x1xf32>
    %462 = arith.addf %461, %460 : vector<8x1xf32>
    %463 = tpu.reciprocal %462 {approx = true} : vector<8x1xf32> -> vector<8x1xf32>
    %464 = vector.broadcast %463 : vector<8x1xf32> to vector<8x128xf32>
    %465 = arith.mulf %435, %464 : vector<8x128xf32>
    %466 = tpu.iota {dimensions = array<i32: 1>} : vector<16x128xi32>
    %467 = vector.broadcast %415 : vector<16x1xi32> to vector<16x128xi32>
    %468 = arith.cmpi eq, %467, %466 : vector<16x128xi32>
    %469 = arith.extui %468 : vector<16x128xi1> to vector<16x128xi32>
    %470 = arith.sitofp %469 : vector<16x128xi32> to vector<16x128xf32>
    %471 = arith.truncf %470 : vector<16x128xf32> to vector<16x128xbf16>
    %cst_229 = arith.constant 1.000000e+00 : f32
    %472 = vector.broadcast %cst_229 : f32 to vector<8x1xf32>
    %473 = arith.subf %472, %463 : vector<8x1xf32>
    %474 = vector.broadcast %473 : vector<8x1xf32> to vector<8x16xf32>
    %475 = arith.mulf %474, %449 : vector<8x16xf32>
    %476 = arith.truncf %475 : vector<8x16xf32> to vector<8x16xbf16>
    %cst_230 = arith.constant dense<0.000000e+00> : vector<8x128xf32>
    %477 = tpu.matmul %476, %471, %cst_230 {dimension_numbers = #tpu.dot_dimension_numbers<[1], [0], [0], [1], [0, 0, 1, 1], [], []>} : vector<8x16xbf16>, vector<16x128xbf16>, vector<8x128xf32> -> vector<8x128xf32>
    %478 = arith.addf %465, %477 : vector<8x128xf32>
    %479 = tpu.iota {dimensions = array<i32: 1>} : vector<8x128xi32>
    %480 = vector.broadcast %417 : vector<8x1xi32> to vector<8x128xi32>
    %481 = arith.cmpi eq, %480, %479 : vector<8x128xi32>
    %482 = arith.extui %481 : vector<8x128xi1> to vector<8x128xi32>
    %483 = arith.sitofp %482 : vector<8x128xi32> to vector<8x128xf32>
    %484 = arith.mulf %478, %483 : vector<8x128xf32>
    %cst_231 = arith.constant dense<0.000000e+00> : vector<8xf32>
    %485 = vector.multi_reduction <add>, %484, %cst_231 [1] : vector<8x128xf32> to vector<8xf32>
    %486 = vector.shape_cast %485 : vector<8xf32> to vector<8x1xf32>
    %c0_i32 = arith.constant 0 : i32
    %487 = vector.broadcast %c0_i32 : i32 to vector<8x1xi32>
    %488 = arith.cmpi ne, %417, %487 : vector<8x1xi32>
    %489 = arith.extui %488 : vector<8x1xi1> to vector<8x1xi32>
    %490 = arith.sitofp %489 : vector<8x1xi32> to vector<8x1xf32>
    %cst_232 = arith.constant 9.99999997E-7 : f32
    %491 = vector.broadcast %cst_232 : f32 to vector<8x1xf32>
    %492 = arith.addf %486, %491 : vector<8x1xf32>
    %493 = math.log %492 : vector<8x1xf32>
    %cst_233 = arith.constant 0.000000e+00 : f32
    %494 = vector.broadcast %cst_233 : f32 to vector<8x1xf32>
    %495 = arith.subf %494, %493 : vector<8x1xf32>
    %496 = arith.mulf %495, %490 : vector<8x1xf32>
    %497 = vector.shape_cast %496 : vector<8x1xf32> to vector<1x8x1xf32>
    %cst_234 = arith.constant dense<0.000000e+00> : vector<1xf32>
    %498 = vector.multi_reduction <add>, %497, %cst_234 [1, 2] : vector<1x8x1xf32> to vector<1xf32>
    %499 = vector.shape_cast %498 : vector<1xf32> to vector<1x1x1xf32>
    %500 = vector.extract %499[0, 0, 0] : f32 from vector<1x1x1xf32>
    %501 = vector.broadcast %500 : f32 to vector<1x1xf32>
    %c0_235 = arith.constant 0 : index
    %c0_236 = arith.constant 0 : index
    %c0_237 = arith.constant 0 : index
    %502 = vector.load %arg32[%c0_235, %c0_236, %c0_237] : memref<1x1x1xf32, #tpu.memory_space<vmem>>, vector<1x1x1xf32>
    %503 = vector.shape_cast %502 : vector<1x1x1xf32> to vector<1x1xf32>
    %504 = vector.shape_cast %501 : vector<1x1xf32> to vector<1x1x1xf32>
    tpu.vector_store %arg32[%c0_235, %c0_236, %c0_237], %504 {strides = array<i32>} : memref<1x1x1xf32, #tpu.memory_space<vmem>>, vector<1x1x1xf32>,
    %505 = vector.shape_cast %490 : vector<8x1xf32> to vector<1x8x1xf32>
    %cst_238 = arith.constant dense<0.000000e+00> : vector<1xf32>
    %506 = vector.multi_reduction <add>, %505, %cst_238 [1, 2] : vector<1x8x1xf32> to vector<1xf32>
    %507 = vector.shape_cast %506 : vector<1xf32> to vector<1x1x1xf32>
    %508 = vector.extract %507[0, 0, 0] : f32 from vector<1x1x1xf32>
    %509 = vector.broadcast %508 : f32 to vector<1x1xf32>
    %c0_239 = arith.constant 0 : index
    %c0_240 = arith.constant 0 : index
    %c0_241 = arith.constant 0 : index
    %510 = vector.load %arg33[%c0_239, %c0_240, %c0_241] : memref<1x1x1xf32, #tpu.memory_space<vmem>>, vector<1x1x1xf32>
    %511 = vector.shape_cast %510 : vector<1x1x1xf32> to vector<1x1xf32>
    %512 = vector.shape_cast %509 : vector<1x1xf32> to vector<1x1x1xf32>
    tpu.vector_store %arg33[%c0_239, %c0_240, %c0_241], %512 {strides = array<i32>} : memref<1x1x1xf32, #tpu.memory_space<vmem>>, vector<1x1x1xf32>,
    return
  }
  func.func @transform_0(%arg0: i32) -> (i32, i32, i32) {
    %c0_i32 = arith.constant 0 : i32
    %c0_i32_0 = arith.constant 0 : i32
    %c0_i32_1 = arith.constant 0 : i32
    return %arg0, %c0_i32, %c0_i32_0 : i32, i32, i32
  }
  func.func @transform_1(%arg0: i32) -> (i32, i32, i32) {
    %c0_i32 = arith.constant 0 : i32
    %c0_i32_0 = arith.constant 0 : i32
    %c0_i32_1 = arith.constant 0 : i32
    return %arg0, %c0_i32, %c0_i32_0 : i32, i32, i32
  }
  func.func @transform_2(%arg0: i32) -> (i32, i32, i32) {
    %c0_i32 = arith.constant 0 : i32
    %c0_i32_0 = arith.constant 0 : i32
    %c0_i32_1 = arith.constant 0 : i32
    return %arg0, %c0_i32, %c0_i32_0 : i32, i32, i32
  }
  func.func @transform_3(%arg0: i32) -> (i32, i32, i32) {
    %c0_i32 = arith.constant 0 : i32
    %c0_i32_0 = arith.constant 0 : i32
    %c0_i32_1 = arith.constant 0 : i32
    return %arg0, %c0_i32, %c0_i32_0 : i32, i32, i32
  }
  func.func @transform_4(%arg0: i32) -> (i32, i32, i32) {
    %c0_i32 = arith.constant 0 : i32
    %c0_i32_0 = arith.constant 0 : i32
    %c0_i32_1 = arith.constant 0 : i32
    return %arg0, %c0_i32, %c0_i32_0 : i32, i32, i32
  }
  func.func @transform_5(%arg0: i32) -> (i32, i32) {
    %c0_i32 = arith.constant 0 : i32
    %c0_i32_0 = arith.constant 0 : i32
    %c0_i32_1 = arith.constant 0 : i32
    return %c0_i32, %c0_i32_0 : i32, i32
  }
  func.func @transform_6(%arg0: i32) -> (i32, i32) {
    %c0_i32 = arith.constant 0 : i32
    %c0_i32_0 = arith.constant 0 : i32
    %c0_i32_1 = arith.constant 0 : i32
    return %c0_i32, %c0_i32_0 : i32, i32
  }
  func.func @transform_7(%arg0: i32) -> (i32, i32) {
    %c0_i32 = arith.constant 0 : i32
    %c0_i32_0 = arith.constant 0 : i32
    %c0_i32_1 = arith.constant 0 : i32
    return %c0_i32, %c0_i32_0 : i32, i32
  }
  func.func @transform_8(%arg0: i32) -> (i32, i32) {
    %c0_i32 = arith.constant 0 : i32
    %c0_i32_0 = arith.constant 0 : i32
    %c0_i32_1 = arith.constant 0 : i32
    return %c0_i32, %c0_i32_0 : i32, i32
  }
  func.func @transform_9(%arg0: i32) -> (i32, i32, i32) {
    %c0_i32 = arith.constant 0 : i32
    %c0_i32_0 = arith.constant 0 : i32
    %c0_i32_1 = arith.constant 0 : i32
    %c0_i32_2 = arith.constant 0 : i32
    return %c0_i32, %c0_i32_0, %c0_i32_1 : i32, i32, i32
  }
  func.func @transform_10(%arg0: i32) -> (i32, i32, i32) {
    %c0_i32 = arith.constant 0 : i32
    %c0_i32_0 = arith.constant 0 : i32
    %c0_i32_1 = arith.constant 0 : i32
    %c0_i32_2 = arith.constant 0 : i32
    return %c0_i32, %c0_i32_0, %c0_i32_1 : i32, i32, i32
  }
  func.func @transform_11(%arg0: i32) -> (i32, i32, i32) {
    %c0_i32 = arith.constant 0 : i32
    %c0_i32_0 = arith.constant 0 : i32
    %c0_i32_1 = arith.constant 0 : i32
    %c0_i32_2 = arith.constant 0 : i32
    return %c0_i32, %c0_i32_0, %c0_i32_1 : i32, i32, i32
  }
  func.func @transform_12(%arg0: i32) -> (i32, i32, i32) {
    %c0_i32 = arith.constant 0 : i32
    %c0_i32_0 = arith.constant 0 : i32
    %c0_i32_1 = arith.constant 0 : i32
    %c0_i32_2 = arith.constant 0 : i32
    return %c0_i32, %c0_i32_0, %c0_i32_1 : i32, i32, i32
  }
  func.func @transform_13(%arg0: i32) -> (i32, i32, i32) {
    %c0_i32 = arith.constant 0 : i32
    %c0_i32_0 = arith.constant 0 : i32
    %c0_i32_1 = arith.constant 0 : i32
    %c0_i32_2 = arith.constant 0 : i32
    return %c0_i32, %c0_i32_0, %c0_i32_1 : i32, i32, i32
  }
  func.func @transform_14(%arg0: i32) -> (i32, i32, i32) {
    %c0_i32 = arith.constant 0 : i32
    %c0_i32_0 = arith.constant 0 : i32
    %c0_i32_1 = arith.constant 0 : i32
    %c0_i32_2 = arith.constant 0 : i32
    return %c0_i32, %c0_i32_0, %c0_i32_1 : i32, i32, i32
  }
  func.func @transform_15(%arg0: i32) -> (i32, i32, i32) {
    %c0_i32 = arith.constant 0 : i32
    %c0_i32_0 = arith.constant 0 : i32
    %c0_i32_1 = arith.constant 0 : i32
    %c0_i32_2 = arith.constant 0 : i32
    return %c0_i32, %c0_i32_0, %c0_i32_1 : i32, i32, i32
  }
  func.func @transform_16(%arg0: i32) -> (i32, i32, i32) {
    %c0_i32 = arith.constant 0 : i32
    %c0_i32_0 = arith.constant 0 : i32
    %c0_i32_1 = arith.constant 0 : i32
    %c0_i32_2 = arith.constant 0 : i32
    return %c0_i32, %c0_i32_0, %c0_i32_1 : i32, i32, i32
  }
  func.func @transform_17(%arg0: i32) -> (i32, i32, i32) {
    %c0_i32 = arith.constant 0 : i32
    %c0_i32_0 = arith.constant 0 : i32
    %c0_i32_1 = arith.constant 0 : i32
    %c0_i32_2 = arith.constant 0 : i32
    return %c0_i32, %c0_i32_0, %c0_i32_1 : i32, i32, i32
  }
  func.func @transform_18(%arg0: i32) -> (i32, i32, i32) {
    %c0_i32 = arith.constant 0 : i32
    %c0_i32_0 = arith.constant 0 : i32
    %c0_i32_1 = arith.constant 0 : i32
    %c0_i32_2 = arith.constant 0 : i32
    return %c0_i32, %c0_i32_0, %c0_i32_1 : i32, i32, i32
  }
  func.func @transform_19(%arg0: i32) -> (i32, i32, i32) {
    %c0_i32 = arith.constant 0 : i32
    %c0_i32_0 = arith.constant 0 : i32
    %c0_i32_1 = arith.constant 0 : i32
    %c0_i32_2 = arith.constant 0 : i32
    return %c0_i32, %c0_i32_0, %c0_i32_1 : i32, i32, i32
  }
  func.func @transform_20(%arg0: i32) -> (i32, i32, i32) {
    %c0_i32 = arith.constant 0 : i32
    %c0_i32_0 = arith.constant 0 : i32
    %c0_i32_1 = arith.constant 0 : i32
    %c0_i32_2 = arith.constant 0 : i32
    return %c0_i32, %c0_i32_0, %c0_i32_1 : i32, i32, i32
  }
  func.func @transform_21(%arg0: i32) -> (i32, i32, i32) {
    %c0_i32 = arith.constant 0 : i32
    %c0_i32_0 = arith.constant 0 : i32
    %c0_i32_1 = arith.constant 0 : i32
    %c0_i32_2 = arith.constant 0 : i32
    return %c0_i32, %c0_i32_0, %c0_i32_1 : i32, i32, i32
  }
  func.func @transform_22(%arg0: i32) -> (i32, i32, i32) {
    %c0_i32 = arith.constant 0 : i32
    %c0_i32_0 = arith.constant 0 : i32
    %c0_i32_1 = arith.constant 0 : i32
    %c0_i32_2 = arith.constant 0 : i32
    return %c0_i32, %c0_i32_0, %c0_i32_1 : i32, i32, i32
  }
  func.func @transform_23(%arg0: i32) -> (i32, i32, i32) {
    %c0_i32 = arith.constant 0 : i32
    %c0_i32_0 = arith.constant 0 : i32
    %c0_i32_1 = arith.constant 0 : i32
    %c0_i32_2 = arith.constant 0 : i32
    return %c0_i32, %c0_i32_0, %c0_i32_1 : i32, i32, i32
  }
  func.func @transform_24(%arg0: i32) -> (i32, i32, i32) {
    %c0_i32 = arith.constant 0 : i32
    %c0_i32_0 = arith.constant 0 : i32
    %c0_i32_1 = arith.constant 0 : i32
    %c0_i32_2 = arith.constant 0 : i32
    return %c0_i32, %c0_i32_0, %c0_i32_1 : i32, i32, i32
  }
  func.func @transform_25(%arg0: i32) -> (i32, i32, i32) {
    %c0_i32 = arith.constant 0 : i32
    %c0_i32_0 = arith.constant 0 : i32
    %c0_i32_1 = arith.constant 0 : i32
    %c0_i32_2 = arith.constant 0 : i32
    return %c0_i32, %c0_i32_0, %c0_i32_1 : i32, i32, i32
  }
  func.func @transform_26(%arg0: i32) -> (i32, i32, i32) {
    %c0_i32 = arith.constant 0 : i32
    %c0_i32_0 = arith.constant 0 : i32
    %c0_i32_1 = arith.constant 0 : i32
    %c0_i32_2 = arith.constant 0 : i32
    return %c0_i32, %c0_i32_0, %c0_i32_1 : i32, i32, i32
  }
  func.func @transform_27(%arg0: i32) -> (i32, i32) {
    %c0_i32 = arith.constant 0 : i32
    %c0_i32_0 = arith.constant 0 : i32
    %c0_i32_1 = arith.constant 0 : i32
    return %c0_i32, %c0_i32_0 : i32, i32
  }
  func.func @transform_28(%arg0: i32) -> (i32, i32) {
    %c0_i32 = arith.constant 0 : i32
    %c0_i32_0 = arith.constant 0 : i32
    %c0_i32_1 = arith.constant 0 : i32
    return %c0_i32, %c0_i32_0 : i32, i32
  }
  func.func @transform_29(%arg0: i32) -> (i32, i32) {
    %c0_i32 = arith.constant 0 : i32
    %c0_i32_0 = arith.constant 0 : i32
    %c0_i32_1 = arith.constant 0 : i32
    return %c0_i32, %c0_i32_0 : i32, i32
  }
  func.func @transform_30(%arg0: i32) -> (i32, i32) {
    %c0_i32 = arith.constant 0 : i32
    %c0_i32_0 = arith.constant 0 : i32
    %c0_i32_1 = arith.constant 0 : i32
    return %c0_i32, %c0_i32_0 : i32, i32
  }
  func.func @transform_31(%arg0: i32) -> (i32, i32, i32) {
    %c0_i32 = arith.constant 0 : i32
    %c0_i32_0 = arith.constant 0 : i32
    %c0_i32_1 = arith.constant 0 : i32
    return %arg0, %c0_i32, %c0_i32_0 : i32, i32, i32
  }
  func.func @transform_32(%arg0: i32) -> (i32, i32, i32) {
    %c0_i32 = arith.constant 0 : i32
    %c0_i32_0 = arith.constant 0 : i32
    %c0_i32_1 = arith.constant 0 : i32
    return %arg0, %c0_i32, %c0_i32_0 : i32, i32, i32
  }
}

</mosaic_0001>

<llo_original>
// kernel: question_generation_forward.1
$region0: #{question_generation_forward.1}
  #allocation0 [shape = 'u32[]', space=smem, size = 0x4, offset = 0x4, fixed_abs, tag = 'smem constant byte address 0x4 - core index']
  #allocation1 [shape = 'u32[144,128]{1,0:T(1,128)}', space=vmem, size = 0x12000, scoped, tag = 'internal scratch']
  #allocation2 [shape = 'f32[1,1]{1,0:T(1,128)S(1)}', space=vmem, size = 0x200, scoped, tag = 'scoped memory for question_generation_forward.1']
  %s0 = inlined_call_operand.smem [shape: u32[33], index: -1, kind: input, shape index: {}]
  %s1 = sld [smem:[%s0]]
  %s2 = scalar_lea.smem %s0, 1
  %s3 = sld [smem:[%s2]]
  %s4 = scalar_lea.smem %s0, 2
  %s5 = sld [smem:[%s4]]
  %s6 = scalar_lea.smem %s0, 3
  %s7 = sld [smem:[%s6]]
  %s8 = scalar_lea.smem %s0, 4
  %s9 = sld [smem:[%s8]]
  %s10 = scalar_lea.smem %s0, 5
  %s11 = sld [smem:[%s10]]
  %s12 = scalar_lea.smem %s0, 6
  %s13 = sld [smem:[%s12]]
  %s14 = scalar_lea.smem %s0, 7
  %s15 = sld [smem:[%s14]]
  %s16 = scalar_lea.smem %s0, 8
  %s17 = sld [smem:[%s16]]
  %s18 = scalar_lea.smem %s0, 9
  %s19 = sld [smem:[%s18]]
  %s20 = scalar_lea.smem %s0, 10
  %s21 = sld [smem:[%s20]]
  %s22 = scalar_lea.smem %s0, 11
  %s23 = sld [smem:[%s22]]
  %s24 = scalar_lea.smem %s0, 12
  %s25 = sld [smem:[%s24]]
  %s26 = scalar_lea.smem %s0, 13
  %s27 = sld [smem:[%s26]]
  %s28 = scalar_lea.smem %s0, 14
  %s29 = sld [smem:[%s28]]
  %s30 = scalar_lea.smem %s0, 15
  %s31 = sld [smem:[%s30]]
  %s32 = scalar_lea.smem %s0, 16
  %s33 = sld [smem:[%s32]]
  %s34 = scalar_lea.smem %s0, 17
  %s35 = sld [smem:[%s34]]
  %s36 = scalar_lea.smem %s0, 18
  %s37 = sld [smem:[%s36]]
  %s38 = scalar_lea.smem %s0, 19
  %s39 = sld [smem:[%s38]]
  %s40 = scalar_lea.smem %s0, 20
  %s41 = sld [smem:[%s40]]
  %s42 = scalar_lea.smem %s0, 21
  %s43 = sld [smem:[%s42]]
  %s44 = scalar_lea.smem %s0, 22
  %s45 = sld [smem:[%s44]]
  %s46 = scalar_lea.smem %s0, 23
  %s47 = sld [smem:[%s46]]
  %s48 = scalar_lea.smem %s0, 24
  %s49 = sld [smem:[%s48]]
  %s50 = scalar_lea.smem %s0, 25
  %s51 = sld [smem:[%s50]]
  %s52 = scalar_lea.smem %s0, 26
  %s53 = sld [smem:[%s52]]
  %s54 = scalar_lea.smem %s0, 27
  %s55 = sld [smem:[%s54]]
  %s56 = scalar_lea.smem %s0, 28
  %s57 = sld [smem:[%s56]]
  %s58 = scalar_lea.smem %s0, 29
  %s59 = sld [smem:[%s58]]
  %s60 = scalar_lea.smem %s0, 30
  %s61 = sld [smem:[%s60]]
  %s62 = scalar_lea.smem %s0, 31
  %s63 = sld [smem:[%s62]]
  %s64 = scalar_lea.smem %s0, 32
  %s65 = sld [smem:[%s64]]
  %66 = xla_tuple %s63, %s65
  %s67 = sld [smem:[#allocation0]]
  $region237: #{question_generation_forward.1} parent=0
    _
  %s69 = ssub.s32 1, %s67
  %s70 = scalar_select 0, %s69, %s67
  %v71 = vstv %s61
  %72 = vst [vmem:[#allocation2] sm:$0x1] %v71
  $region1: #{question_generation_forward.1} parent=0
    #allocation3 [shape = 'u8[65536]{0}', space=vmem, size = 0x10000, scoped, tag = 'input window, operand 7, single buffered']
    #allocation4 [shape = 's32[2]{0}', space=sflag, size = 0x8, scoped, tag = 'scoped memory for question_generation_forward.1']
    #allocation5 [shape = 'u8[524288]{0}', space=vmem, size = 0x80000, scoped, tag = 'input window, operand 9, single buffered']
    #allocation6 [shape = 's32[1]{0}', space=sflag, size = 0x4, scoped, tag = 'scoped memory for question_generation_forward.1']
    #allocation7 [shape = 'u8[1024]{0}', space=vmem, size = 0x400, scoped, tag = 'input window, operand 12, single buffered']
    #allocation8 [shape = 'u8[65536]{0}', space=vmem, size = 0x10000, scoped, tag = 'input window, operand 13, single buffered']
    #allocation9 [shape = 's32[1]{0}', space=sflag, size = 0x4, scoped, tag = 'scoped memory for question_generation_forward.1']
    #allocation10 [shape = 'u8[1024]{0}', space=vmem, size = 0x400, scoped, tag = 'input window, operand 14, single buffered']
    #allocation11 [shape = 'u8[1024]{0}', space=vmem, size = 0x400, scoped, tag = 'input window, operand 15, single buffered']
    #allocation12 [shape = 's32[1]{0}', space=sflag, size = 0x4, scoped, tag = 'scoped memory for question_generation_forward.1']
    #allocation13 [shape = 'u8[65536]{0}', space=vmem, size = 0x10000, scoped, tag = 'input window, operand 16, single buffered']
    #allocation14 [shape = 'u8[65536]{0}', space=vmem, size = 0x10000, scoped, tag = 'input window, operand 18, single buffered']
    #allocation15 [shape = 's32[1]{0}', space=sflag, size = 0x4, scoped, tag = 'scoped memory for question_generation_forward.1']
    #allocation16 [shape = 'u8[1024]{0}', space=vmem, size = 0x400, scoped, tag = 'input window, operand 19, single buffered']
    #allocation17 [shape = 'u8[1024]{0}', space=vmem, size = 0x400, scoped, tag = 'input window, operand 20, single buffered']
    #allocation18 [shape = 's32[1]{0}', space=sflag, size = 0x4, scoped, tag = 'scoped memory for question_generation_forward.1']
    #allocation19 [shape = 'u8[4096]{0}', space=vmem, size = 0x1000, scoped, tag = 'input window, operand 22, single buffered']
    #allocation20 [shape = 'u8[262144]{0}', space=vmem, size = 0x40000, scoped, tag = 'input window, operand 23, single buffered']
    #allocation21 [shape = 's32[1]{0}', space=sflag, size = 0x4, scoped, tag = 'scoped memory for question_generation_forward.1']
    #allocation22 [shape = 'u8[1024]{0}', space=vmem, size = 0x400, scoped, tag = 'input window, operand 24, single buffered']
    #allocation23 [shape = 'u8[1024]{0}', space=vmem, size = 0x400, scoped, tag = 'input window, operand 25, single buffered']
    #allocation24 [shape = 's32[1]{0}', space=sflag, size = 0x4, scoped, tag = 'scoped memory for question_generation_forward.1']
    #allocation25 [shape = 'u8[1024]{0}', space=vmem, size = 0x400, scoped, tag = 'input window, operand 26, single buffered']
    #allocation26 [shape = 'u8[65536]{0}', space=vmem, size = 0x10000, scoped, tag = 'input window, operand 27, single buffered']
    #allocation27 [shape = 's32[1]{0}', space=sflag, size = 0x4, scoped, tag = 'scoped memory for question_generation_forward.1']
    #allocation28 [shape = 'u8[1024]{0}', space=vmem, size = 0x400, scoped, tag = 'input window, operand 28, single buffered']
    #allocation29 [shape = 'u8[512]{0}', space=vmem, size = 0x400, scoped, tag = 'input window, operand 29, single buffered']
    #allocation30 [shape = 's32[1]{0}', space=sflag, size = 0x4, scoped, tag = 'scoped memory for question_generation_forward.1']
    %73 = vsyncpa [#allocation4], 0
    %74 = vsyncpa [#allocation6], 0
    %75 = vsyncpa [#allocation9], 0
    %76 = vsyncpa [#allocation12], 0
    %77 = vsyncpa [#allocation15], 0
    %78 = vsyncpa [#allocation18], 0
    %79 = vsyncpa [#allocation21], 0
    %80 = vsyncpa [#allocation24], 0
    %81 = vsyncpa [#allocation27], 0
    %82 = vsyncpa [#allocation30], 0
    loop: start=0, step=1, limit=4
    $region2: #{question_generation_forward.1} parent=1 // loop_pre_header
      _
    $region3: #{question_generation_forward.1} parent=1 // loop_header
      %s84 = sphi 0, %s88
      %p85 = scmp.ge.s32.totalorder %s84, 4
      %s94 = sphi 0, %s96
      %s97 = sphi 0, %s94
      %s98 = sphi 0, %s97
      %s114 = sphi 0, %s98
      %s120 = sphi 0, %s122
      %s123 = sphi 0, %s120
      %s124 = sphi 0, %s123
      %s140 = sphi 0, %s124
      %s146 = sphi 0, %s148
      %s149 = sphi 0, %s146
      %s150 = sphi 0, %s149
      %s166 = sphi 0, %s150
      %s172 = sphi 0, %s174
      %s175 = sphi 0, %s172
      %s176 = sphi 0, %s175
      %s192 = sphi 0, %s176
      %s198 = sphi 0, %s200
      %s201 = sphi 0, %s198
      %s202 = sphi 0, %s201
      %s218 = sphi 0, %s202
      %s222 = sphi 0, %s222
      %s224 = sphi 0, %s222
      %s225 = sphi 0, %s224
      %s239 = sphi 0, %s225
      %s243 = sphi 0, %s243
      %s245 = sphi 0, %s243
      %s246 = sphi 0, %s245
      %s260 = sphi 0, %s246
      %s264 = sphi 0, %s264
      %s266 = sphi 0, %s264
      %s267 = sphi 0, %s266
      %s281 = sphi 0, %s267
      %s285 = sphi 0, %s285
      %s287 = sphi 0, %s285
      %s288 = sphi 0, %s287
      %s302 = sphi 0, %s288
      %s306 = sphi 0, %s306
      %s308 = sphi 0, %s306
      %s309 = sphi 0, %s308
      %s323 = sphi 0, %s309
      %s327 = sphi 0, %s327
      %s329 = sphi 0, %s327
      %s330 = sphi 0, %s329
      %s344 = sphi 0, %s330
      %s348 = sphi 0, %s348
      %s350 = sphi 0, %s348
      %s351 = sphi 0, %s350
      %s365 = sphi 0, %s351
      %s369 = sphi 0, %s369
      %s371 = sphi 0, %s369
      %s372 = sphi 0, %s371
      %s386 = sphi 0, %s372
      %s390 = sphi 0, %s390
      %s392 = sphi 0, %s390
      %s393 = sphi 0, %s392
      %s407 = sphi 0, %s393
      %s411 = sphi 0, %s411
      %s413 = sphi 0, %s411
      %s414 = sphi 0, %s413
      %s428 = sphi 0, %s414
      %s432 = sphi 0, %s432
      %s434 = sphi 0, %s432
      %s435 = sphi 0, %s434
      %s449 = sphi 0, %s435
      %s453 = sphi 0, %s453
      %s455 = sphi 0, %s453
      %s456 = sphi 0, %s455
      %s470 = sphi 0, %s456
      %s474 = sphi 0, %s474
      %s476 = sphi 0, %s474
      %s477 = sphi 0, %s476
      %s491 = sphi 0, %s477
      %s495 = sphi 0, %s495
      %s497 = sphi 0, %s495
      %s498 = sphi 0, %s497
      %s512 = sphi 0, %s498
      %s516 = sphi 0, %s516
      %s518 = sphi 0, %s516
      %s519 = sphi 0, %s518
      %s533 = sphi 0, %s519
      %s537 = sphi 0, %s537
      %s539 = sphi 0, %s537
      %s540 = sphi 0, %s539
      %s554 = sphi 0, %s540
      %s558 = sphi 0, %s558
      %s560 = sphi 0, %s558
      %s561 = sphi 0, %s560
      %s575 = sphi 0, %s561
      %s579 = sphi 0, %s579
      %s581 = sphi 0, %s579
      %s582 = sphi 0, %s581
      %s596 = sphi 0, %s582
      %s600 = sphi 0, %s600
      %s602 = sphi 0, %s600
      %s603 = sphi 0, %s602
      %s617 = sphi 0, %s603
      %s621 = sphi 0, %s621
      %s623 = sphi 0, %s621
      %s624 = sphi 0, %s623
      %s638 = sphi 0, %s624
      %s642 = sphi 0, %s642
      %s644 = sphi 0, %s642
      %s645 = sphi 0, %s644
      %s659 = sphi 0, %s645
      %s663 = sphi 0, %s663
      %s665 = sphi 0, %s663
      %s666 = sphi 0, %s665
      %s680 = sphi 0, %s666
      %s684 = sphi 0, %s684
      %s686 = sphi 0, %s684
      %s687 = sphi 0, %s686
      %s701 = sphi 0, %s687
      %s705 = sphi 0, %s705
      %s707 = sphi 0, %s705
      %s708 = sphi 0, %s707
      %s722 = sphi 0, %s708
      %s726 = sphi 0, %s726
      %s728 = sphi 0, %s726
      %s729 = sphi 0, %s728
      %s743 = sphi 0, %s729
      %s747 = sphi 0, %s747
      %s749 = sphi 0, %s747
      %s750 = sphi 0, %s749
      %s764 = sphi 0, %s750
      %s770 = sphi 0, %s772
      %s773 = sphi 0, %s770
      %s774 = sphi 0, %s773
      %s790 = sphi 0, %s774
      %s796 = sphi 0, %s798
      %s799 = sphi 0, %s796
      %s800 = sphi 0, %s799
      %s816 = sphi 0, %s800
    $region4: #{question_generation_forward.1} parent=1 // loop_header_branch
      %87 = sbr.rel (%p85) target = $region8
    $region5: #{question_generation_forward.1} parent=1 // loop_body
      %s89 = ssub.s32 %s84, 1
      %s90 = ssub.s32 %s84, 2
      %s91 = sadd.s32 %s84, 1
      %s92 = ssub.s32 %s84, %s91
      %p93 = scmp.eq.s32.totalorder %s92, 0
      %s95 = sadd.s32 %s94, 1
      %s96 = scalar_select %p93, %s94, %s95
      %p99 = pneg %p93
      %p100 = scmp.eq.s32.totalorder %s84, 1
      %p101 = por %p99, %p100
      %p102 = scmp.ne.s32.totalorder %s94, %s97
      %p103 = scmp.eq.s32.totalorder %s84, 0
      %p104 = por %p102, %p103
      %p105 = scmp.ne.s32.totalorder %s94, %s97
      %p106 = scmp.eq.s32.totalorder %s89, 1
      %p107 = por %p105, %p106
      %p108 = scmp.ne.s32.totalorder %s97, %s98
      %p109 = scmp.eq.s32.totalorder %s89, 0
      %p110 = por %p108, %p109
      %p111 = scmp.ne.s32.totalorder %s97, %s98
      %p112 = scmp.eq.s32.totalorder %s90, 1
      %p113 = por %p111, %p112
      %p115 = scmp.ne.s32.totalorder %s98, %s114
      %p116 = scmp.eq.s32.totalorder %s90, 0
      %p117 = por %p115, %p116
      %s118 = ssub.s32 %s84, %s91
      %p119 = scmp.eq.s32.totalorder %s118, 0
      %s121 = sadd.s32 %s120, 1
      %s122 = scalar_select %p119, %s120, %s121
      %p125 = pneg %p119
      %p126 = scmp.eq.s32.totalorder %s84, 1
      %p127 = por %p125, %p126
      %p128 = scmp.ne.s32.totalorder %s120, %s123
      %p129 = scmp.eq.s32.totalorder %s84, 0
      %p130 = por %p128, %p129
      %p131 = scmp.ne.s32.totalorder %s120, %s123
      %p132 = scmp.eq.s32.totalorder %s89, 1
      %p133 = por %p131, %p132
      %p134 = scmp.ne.s32.totalorder %s123, %s124
      %p135 = scmp.eq.s32.totalorder %s89, 0
      %p136 = por %p134, %p135
      %p137 = scmp.ne.s32.totalorder %s123, %s124
      %p138 = scmp.eq.s32.totalorder %s90, 1
      %p139 = por %p137, %p138
      %p141 = scmp.ne.s32.totalorder %s124, %s140
      %p142 = scmp.eq.s32.totalorder %s90, 0
      %p143 = por %p141, %p142
      %s144 = ssub.s32 %s84, %s91
      %p145 = scmp.eq.s32.totalorder %s144, 0
      %s147 = sadd.s32 %s146, 1
      %s148 = scalar_select %p145, %s146, %s147
      %p151 = pneg %p145
      %p152 = scmp.eq.s32.totalorder %s84, 1
      %p153 = por %p151, %p152
      %p154 = scmp.ne.s32.totalorder %s146, %s149
      %p155 = scmp.eq.s32.totalorder %s84, 0
      %p156 = por %p154, %p155
      %p157 = scmp.ne.s32.totalorder %s146, %s149
      %p158 = scmp.eq.s32.totalorder %s89, 1
      %p159 = por %p157, %p158
      %p160 = scmp.ne.s32.totalorder %s149, %s150
      %p161 = scmp.eq.s32.totalorder %s89, 0
      %p162 = por %p160, %p161
      %p163 = scmp.ne.s32.totalorder %s149, %s150
      %p164 = scmp.eq.s32.totalorder %s90, 1
      %p165 = por %p163, %p164
      %p167 = scmp.ne.s32.totalorder %s150, %s166
      %p168 = scmp.eq.s32.totalorder %s90, 0
      %p169 = por %p167, %p168
      %s170 = ssub.s32 %s84, %s91
      %p171 = scmp.eq.s32.totalorder %s170, 0
      %s173 = sadd.s32 %s172, 1
      %s174 = scalar_select %p171, %s172, %s173
      %p177 = pneg %p171
      %p178 = scmp.eq.s32.totalorder %s84, 1
      %p179 = por %p177, %p178
      %p180 = scmp.ne.s32.totalorder %s172, %s175
      %p181 = scmp.eq.s32.totalorder %s84, 0
      %p182 = por %p180, %p181
      %p183 = scmp.ne.s32.totalorder %s172, %s175
      %p184 = scmp.eq.s32.totalorder %s89, 1
      %p185 = por %p183, %p184
      %p186 = scmp.ne.s32.totalorder %s175, %s176
      %p187 = scmp.eq.s32.totalorder %s89, 0
      %p188 = por %p186, %p187
      %p189 = scmp.ne.s32.totalorder %s175, %s176
      %p190 = scmp.eq.s32.totalorder %s90, 1
      %p191 = por %p189, %p190
      %p193 = scmp.ne.s32.totalorder %s176, %s192
      %p194 = scmp.eq.s32.totalorder %s90, 0
      %p195 = por %p193, %p194
      %s196 = ssub.s32 %s84, %s91
      %p197 = scmp.eq.s32.totalorder %s196, 0
      %s199 = sadd.s32 %s198, 1
      %s200 = scalar_select %p197, %s198, %s199
      %p203 = pneg %p197
      %p204 = scmp.eq.s32.totalorder %s84, 1
      %p205 = por %p203, %p204
      %p206 = scmp.ne.s32.totalorder %s198, %s201
      %p207 = scmp.eq.s32.totalorder %s84, 0
      %p208 = por %p206, %p207
      %p209 = scmp.ne.s32.totalorder %s198, %s201
      %p210 = scmp.eq.s32.totalorder %s89, 1
      %p211 = por %p209, %p210
      %p212 = scmp.ne.s32.totalorder %s201, %s202
      %p213 = scmp.eq.s32.totalorder %s89, 0
      %p214 = por %p212, %p213
      %p215 = scmp.ne.s32.totalorder %s201, %s202
      %p216 = scmp.eq.s32.totalorder %s90, 1
      %p217 = por %p215, %p216
      %p219 = scmp.ne.s32.totalorder %s202, %s218
      %p220 = scmp.eq.s32.totalorder %s90, 0
      %p221 = por %p219, %p220
      %s223 = sadd.s32 %s222, 1
      %p226 = scmp.eq.s32.totalorder %s84, 1
      %p227 = scmp.ne.s32.totalorder %s222, %s224
      %p228 = scmp.eq.s32.totalorder %s84, 0
      %p229 = por %p227, %p228
      %p230 = scmp.ne.s32.totalorder %s222, %s224
      %p231 = scmp.eq.s32.totalorder %s89, 1
      %p232 = por %p230, %p231
      %p233 = scmp.ne.s32.totalorder %s224, %s225
      %p234 = scmp.eq.s32.totalorder %s89, 0
      %p235 = por %p233, %p234
      %p236 = scmp.ne.s32.totalorder %s224, %s225
      %p237 = scmp.eq.s32.totalorder %s90, 1
      %p238 = por %p236, %p237
      %p240 = scmp.ne.s32.totalorder %s225, %s239
      %p241 = scmp.eq.s32.totalorder %s90, 0
      %p242 = por %p240, %p241
      %s244 = sadd.s32 %s243, 1
      %p247 = scmp.eq.s32.totalorder %s84, 1
      %p248 = scmp.ne.s32.totalorder %s243, %s245
      %p249 = scmp.eq.s32.totalorder %s84, 0
      %p250 = por %p248, %p249
      %p251 = scmp.ne.s32.totalorder %s243, %s245
      %p252 = scmp.eq.s32.totalorder %s89, 1
      %p253 = por %p251, %p252
      %p254 = scmp.ne.s32.totalorder %s245, %s246
      %p255 = scmp.eq.s32.totalorder %s89, 0
      %p256 = por %p254, %p255
      %p257 = scmp.ne.s32.totalorder %s245, %s246
      %p258 = scmp.eq.s32.totalorder %s90, 1
      %p259 = por %p257, %p258
      %p261 = scmp.ne.s32.totalorder %s246, %s260
      %p262 = scmp.eq.s32.totalorder %s90, 0
      %p263 = por %p261, %p262
      %s265 = sadd.s32 %s264, 1
      %p268 = scmp.eq.s32.totalorder %s84, 1
      %p269 = scmp.ne.s32.totalorder %s264, %s266
      %p270 = scmp.eq.s32.totalorder %s84, 0
      %p271 = por %p269, %p270
      %p272 = scmp.ne.s32.totalorder %s264, %s266
      %p273 = scmp.eq.s32.totalorder %s89, 1
      %p274 = por %p272, %p273
      %p275 = scmp.ne.s32.totalorder %s266, %s267
      %p276 = scmp.eq.s32.totalorder %s89, 0
      %p277 = por %p275, %p276
      %p278 = scmp.ne.s32.totalorder %s266, %s267
      %p279 = scmp.eq.s32.totalorder %s90, 1
      %p280 = por %p278, %p279
      %p282 = scmp.ne.s32.totalorder %s267, %s281
      %p283 = scmp.eq.s32.totalorder %s90, 0
      %p284 = por %p282, %p283
      %s286 = sadd.s32 %s285, 1
      %p289 = scmp.eq.s32.totalorder %s84, 1
      %p290 = scmp.ne.s32.totalorder %s285, %s287
      %p291 = scmp.eq.s32.totalorder %s84, 0
      %p292 = por %p290, %p291
      %p293 = scmp.ne.s32.totalorder %s285, %s287
      %p294 = scmp.eq.s32.totalorder %s89, 1
      %p295 = por %p293, %p294
      %p296 = scmp.ne.s32.totalorder %s287, %s288
      %p297 = scmp.eq.s32.totalorder %s89, 0
      %p298 = por %p296, %p297
      %p299 = scmp.ne.s32.totalorder %s287, %s288
      %p300 = scmp.eq.s32.totalorder %s90, 1
      %p301 = por %p299, %p300
      %p303 = scmp.ne.s32.totalorder %s288, %s302
      %p304 = scmp.eq.s32.totalorder %s90, 0
      %p305 = por %p303, %p304
      %s307 = sadd.s32 %s306, 1
      %p310 = scmp.eq.s32.totalorder %s84, 1
      %p311 = scmp.ne.s32.totalorder %s306, %s308
      %p312 = scmp.eq.s32.totalorder %s84, 0
      %p313 = por %p311, %p312
      %p314 = scmp.ne.s32.totalorder %s306, %s308
      %p315 = scmp.eq.s32.totalorder %s89, 1
      %p316 = por %p314, %p315
      %p317 = scmp.ne.s32.totalorder %s308, %s309
      %p318 = scmp.eq.s32.totalorder %s89, 0
      %p319 = por %p317, %p318
      %p320 = scmp.ne.s32.totalorder %s308, %s309
      %p321 = scmp.eq.s32.totalorder %s90, 1
      %p322 = por %p320, %p321
      %p324 = scmp.ne.s32.totalorder %s309, %s323
      %p325 = scmp.eq.s32.totalorder %s90, 0
      %p326 = por %p324, %p325
      %s328 = sadd.s32 %s327, 1
      %p331 = scmp.eq.s32.totalorder %s84, 1
      %p332 = scmp.ne.s32.totalorder %s327, %s329
      %p333 = scmp.eq.s32.totalorder %s84, 0
      %p334 = por %p332, %p333
      %p335 = scmp.ne.s32.totalorder %s327, %s329
      %p336 = scmp.eq.s32.totalorder %s89, 1
      %p337 = por %p335, %p336
      %p338 = scmp.ne.s32.totalorder %s329, %s330
      %p339 = scmp.eq.s32.totalorder %s89, 0
      %p340 = por %p338, %p339
      %p341 = scmp.ne.s32.totalorder %s329, %s330
      %p342 = scmp.eq.s32.totalorder %s90, 1
      %p343 = por %p341, %p342
      %p345 = scmp.ne.s32.totalorder %s330, %s344
      %p346 = scmp.eq.s32.totalorder %s90, 0
      %p347 = por %p345, %p346
      %s349 = sadd.s32 %s348, 1
      %p352 = scmp.eq.s32.totalorder %s84, 1
      %p353 = scmp.ne.s32.totalorder %s348, %s350
      %p354 = scmp.eq.s32.totalorder %s84, 0
      %p355 = por %p353, %p354
      %p356 = scmp.ne.s32.totalorder %s348, %s350
      %p357 = scmp.eq.s32.totalorder %s89, 1
      %p358 = por %p356, %p357
      %p359 = scmp.ne.s32.totalorder %s350, %s351
      %p360 = scmp.eq.s32.totalorder %s89, 0
      %p361 = por %p359, %p360
      %p362 = scmp.ne.s32.totalorder %s350, %s351
      %p363 = scmp.eq.s32.totalorder %s90, 1
      %p364 = por %p362, %p363
      %p366 = scmp.ne.s32.totalorder %s351, %s365
      %p367 = scmp.eq.s32.totalorder %s90, 0
      %p368 = por %p366, %p367
      %s370 = sadd.s32 %s369, 1
      %p373 = scmp.eq.s32.totalorder %s84, 1
      %p374 = scmp.ne.s32.totalorder %s369, %s371
      %p375 = scmp.eq.s32.totalorder %s84, 0
      %p376 = por %p374, %p375
      %p377 = scmp.ne.s32.totalorder %s369, %s371
      %p378 = scmp.eq.s32.totalorder %s89, 1
      %p379 = por %p377, %p378
      %p380 = scmp.ne.s32.totalorder %s371, %s372
      %p381 = scmp.eq.s32.totalorder %s89, 0
      %p382 = por %p380, %p381
      %p383 = scmp.ne.s32.totalorder %s371, %s372
      %p384 = scmp.eq.s32.totalorder %s90, 1
      %p385 = por %p383, %p384
      %p387 = scmp.ne.s32.totalorder %s372, %s386
      %p388 = scmp.eq.s32.totalorder %s90, 0
      %p389 = por %p387, %p388
      %s391 = sadd.s32 %s390, 1
      %p394 = scmp.eq.s32.totalorder %s84, 1
      %p395 = scmp.ne.s32.totalorder %s390, %s392
      %p396 = scmp.eq.s32.totalorder %s84, 0
      %p397 = por %p395, %p396
      %p398 = scmp.ne.s32.totalorder %s390, %s392
      %p399 = scmp.eq.s32.totalorder %s89, 1
      %p400 = por %p398, %p399
      %p401 = scmp.ne.s32.totalorder %s392, %s393
      %p402 = scmp.eq.s32.totalorder %s89, 0
      %p403 = por %p401, %p402
      %p404 = scmp.ne.s32.totalorder %s392, %s393
      %p405 = scmp.eq.s32.totalorder %s90, 1
      %p406 = por %p404, %p405
      %p408 = scmp.ne.s32.totalorder %s393, %s407
      %p409 = scmp.eq.s32.totalorder %s90, 0
      %p410 = por %p408, %p409
      %s412 = sadd.s32 %s411, 1
      %p415 = scmp.eq.s32.totalorder %s84, 1
      %p416 = scmp.ne.s32.totalorder %s411, %s413
      %p417 = scmp.eq.s32.totalorder %s84, 0
      %p418 = por %p416, %p417
      %p419 = scmp.ne.s32.totalorder %s411, %s413
      %p420 = scmp.eq.s32.totalorder %s89, 1
      %p421 = por %p419, %p420
      %p422 = scmp.ne.s32.totalorder %s413, %s414
      %p423 = scmp.eq.s32.totalorder %s89, 0
      %p424 = por %p422, %p423
      %p425 = scmp.ne.s32.totalorder %s413, %s414
      %p426 = scmp.eq.s32.totalorder %s90, 1
      %p427 = por %p425, %p426
      %p429 = scmp.ne.s32.totalorder %s414, %s428
      %p430 = scmp.eq.s32.totalorder %s90, 0
      %p431 = por %p429, %p430
      %s433 = sadd.s32 %s432, 1
      %p436 = scmp.eq.s32.totalorder %s84, 1
      %p437 = scmp.ne.s32.totalorder %s432, %s434
      %p438 = scmp.eq.s32.totalorder %s84, 0
      %p439 = por %p437, %p438
      %p440 = scmp.ne.s32.totalorder %s432, %s434
      %p441 = scmp.eq.s32.totalorder %s89, 1
      %p442 = por %p440, %p441
      %p443 = scmp.ne.s32.totalorder %s434, %s435
      %p444 = scmp.eq.s32.totalorder %s89, 0
      %p445 = por %p443, %p444
      %p446 = scmp.ne.s32.totalorder %s434, %s435
      %p447 = scmp.eq.s32.totalorder %s90, 1
      %p448 = por %p446, %p447
      %p450 = scmp.ne.s32.totalorder %s435, %s449
      %p451 = scmp.eq.s32.totalorder %s90, 0
      %p452 = por %p450, %p451
      %s454 = sadd.s32 %s453, 1
      %p457 = scmp.eq.s32.totalorder %s84, 1
      %p458 = scmp.ne.s32.totalorder %s453, %s455
      %p459 = scmp.eq.s32.totalorder %s84, 0
      %p460 = por %p458, %p459
      %p461 = scmp.ne.s32.totalorder %s453, %s455
      %p462 = scmp.eq.s32.totalorder %s89, 1
      %p463 = por %p461, %p462
      %p464 = scmp.ne.s32.totalorder %s455, %s456
      %p465 = scmp.eq.s32.totalorder %s89, 0
      %p466 = por %p464, %p465
      %p467 = scmp.ne.s32.totalorder %s455, %s456
      %p468 = scmp.eq.s32.totalorder %s90, 1
      %p469 = por %p467, %p468
      %p471 = scmp.ne.s32.totalorder %s456, %s470
      %p472 = scmp.eq.s32.totalorder %s90, 0
      %p473 = por %p471, %p472
      %s475 = sadd.s32 %s474, 1
      %p478 = scmp.eq.s32.totalorder %s84, 1
      %p479 = scmp.ne.s32.totalorder %s474, %s476
      %p480 = scmp.eq.s32.totalorder %s84, 0
      %p481 = por %p479, %p480
      %p482 = scmp.ne.s32.totalorder %s474, %s476
      %p483 = scmp.eq.s32.totalorder %s89, 1
      %p484 = por %p482, %p483
      %p485 = scmp.ne.s32.totalorder %s476, %s477
      %p486 = scmp.eq.s32.totalorder %s89, 0
      %p487 = por %p485, %p486
      %p488 = scmp.ne.s32.totalorder %s476, %s477
      %p489 = scmp.eq.s32.totalorder %s90, 1
      %p490 = por %p488, %p489
      %p492 = scmp.ne.s32.totalorder %s477, %s491
      %p493 = scmp.eq.s32.totalorder %s90, 0
      %p494 = por %p492, %p493
      %s496 = sadd.s32 %s495, 1
      %p499 = scmp.eq.s32.totalorder %s84, 1
      %p500 = scmp.ne.s32.totalorder %s495, %s497
      %p501 = scmp.eq.s32.totalorder %s84, 0
      %p502 = por %p500, %p501
      %p503 = scmp.ne.s32.totalorder %s495, %s497
      %p504 = scmp.eq.s32.totalorder %s89, 1
      %p505 = por %p503, %p504
      %p506 = scmp.ne.s32.totalorder %s497, %s498
      %p507 = scmp.eq.s32.totalorder %s89, 0
      %p508 = por %p506, %p507
      %p509 = scmp.ne.s32.totalorder %s497, %s498
      %p510 = scmp.eq.s32.totalorder %s90, 1
      %p511 = por %p509, %p510
      %p513 = scmp.ne.s32.totalorder %s498, %s512
      %p514 = scmp.eq.s32.totalorder %s90, 0
      %p515 = por %p513, %p514
      %s517 = sadd.s32 %s516, 1
      %p520 = scmp.eq.s32.totalorder %s84, 1
      %p521 = scmp.ne.s32.totalorder %s516, %s518
      %p522 = scmp.eq.s32.totalorder %s84, 0
      %p523 = por %p521, %p522
      %p524 = scmp.ne.s32.totalorder %s516, %s518
      %p525 = scmp.eq.s32.totalorder %s89, 1
      %p526 = por %p524, %p525
      %p527 = scmp.ne.s32.totalorder %s518, %s519
      %p528 = scmp.eq.s32.totalorder %s89, 0
      %p529 = por %p527, %p528
      %p530 = scmp.ne.s32.totalorder %s518, %s519
      %p531 = scmp.eq.s32.totalorder %s90, 1
      %p532 = por %p530, %p531
      %p534 = scmp.ne.s32.totalorder %s519, %s533
      %p535 = scmp.eq.s32.totalorder %s90, 0
      %p536 = por %p534, %p535
      %s538 = sadd.s32 %s537, 1
      %p541 = scmp.eq.s32.totalorder %s84, 1
      %p542 = scmp.ne.s32.totalorder %s537, %s539
      %p543 = scmp.eq.s32.totalorder %s84, 0
      %p544 = por %p542, %p543
      %p545 = scmp.ne.s32.totalorder %s537, %s539
      %p546 = scmp.eq.s32.totalorder %s89, 1
      %p547 = por %p545, %p546
      %p548 = scmp.ne.s32.totalorder %s539, %s540
      %p549 = scmp.eq.s32.totalorder %s89, 0
      %p550 = por %p548, %p549
      %p551 = scmp.ne.s32.totalorder %s539, %s540
      %p552 = scmp.eq.s32.totalorder %s90, 1
      %p553 = por %p551, %p552
      %p555 = scmp.ne.s32.totalorder %s540, %s554
      %p556 = scmp.eq.s32.totalorder %s90, 0
      %p557 = por %p555, %p556
      %s559 = sadd.s32 %s558, 1
      %p562 = scmp.eq.s32.totalorder %s84, 1
      %p563 = scmp.ne.s32.totalorder %s558, %s560
      %p564 = scmp.eq.s32.totalorder %s84, 0
      %p565 = por %p563, %p564
      %p566 = scmp.ne.s32.totalorder %s558, %s560
      %p567 = scmp.eq.s32.totalorder %s89, 1
      %p568 = por %p566, %p567
      %p569 = scmp.ne.s32.totalorder %s560, %s561
      %p570 = scmp.eq.s32.totalorder %s89, 0
      %p571 = por %p569, %p570
      %p572 = scmp.ne.s32.totalorder %s560, %s561
      %p573 = scmp.eq.s32.totalorder %s90, 1
      %p574 = por %p572, %p573
      %p576 = scmp.ne.s32.totalorder %s561, %s575
      %p577 = scmp.eq.s32.totalorder %s90, 0
      %p578 = por %p576, %p577
      %s580 = sadd.s32 %s579, 1
      %p583 = scmp.eq.s32.totalorder %s84, 1
      %p584 = scmp.ne.s32.totalorder %s579, %s581
      %p585 = scmp.eq.s32.totalorder %s84, 0
      %p586 = por %p584, %p585
      %p587 = scmp.ne.s32.totalorder %s579, %s581
      %p588 = scmp.eq.s32.totalorder %s89, 1
      %p589 = por %p587, %p588
      %p590 = scmp.ne.s32.totalorder %s581, %s582
      %p591 = scmp.eq.s32.totalorder %s89, 0
      %p592 = por %p590, %p591
      %p593 = scmp.ne.s32.totalorder %s581, %s582
      %p594 = scmp.eq.s32.totalorder %s90, 1
      %p595 = por %p593, %p594
      %p597 = scmp.ne.s32.totalorder %s582, %s596
      %p598 = scmp.eq.s32.totalorder %s90, 0
      %p599 = por %p597, %p598
      %s601 = sadd.s32 %s600, 1
      %p604 = scmp.eq.s32.totalorder %s84, 1
      %p605 = scmp.ne.s32.totalorder %s600, %s602
      %p606 = scmp.eq.s32.totalorder %s84, 0
      %p607 = por %p605, %p606
      %p608 = scmp.ne.s32.totalorder %s600, %s602
      %p609 = scmp.eq.s32.totalorder %s89, 1
      %p610 = por %p608, %p609
      %p611 = scmp.ne.s32.totalorder %s602, %s603
      %p612 = scmp.eq.s32.totalorder %s89, 0
      %p613 = por %p611, %p612
      %p614 = scmp.ne.s32.totalorder %s602, %s603
      %p615 = scmp.eq.s32.totalorder %s90, 1
      %p616 = por %p614, %p615
      %p618 = scmp.ne.s32.totalorder %s603, %s617
      %p619 = scmp.eq.s32.totalorder %s90, 0
      %p620 = por %p618, %p619
      %s622 = sadd.s32 %s621, 1
      %p625 = scmp.eq.s32.totalorder %s84, 1
      %p626 = scmp.ne.s32.totalorder %s621, %s623
      %p627 = scmp.eq.s32.totalorder %s84, 0
      %p628 = por %p626, %p627
      %p629 = scmp.ne.s32.totalorder %s621, %s623
      %p630 = scmp.eq.s32.totalorder %s89, 1
      %p631 = por %p629, %p630
      %p632 = scmp.ne.s32.totalorder %s623, %s624
      %p633 = scmp.eq.s32.totalorder %s89, 0
      %p634 = por %p632, %p633
      %p635 = scmp.ne.s32.totalorder %s623, %s624
      %p636 = scmp.eq.s32.totalorder %s90, 1
      %p637 = por %p635, %p636
      %p639 = scmp.ne.s32.totalorder %s624, %s638
      %p640 = scmp.eq.s32.totalorder %s90, 0
      %p641 = por %p639, %p640
      %s643 = sadd.s32 %s642, 1
      %p646 = scmp.eq.s32.totalorder %s84, 1
      %p647 = scmp.ne.s32.totalorder %s642, %s644
      %p648 = scmp.eq.s32.totalorder %s84, 0
      %p649 = por %p647, %p648
      %p650 = scmp.ne.s32.totalorder %s642, %s644
      %p651 = scmp.eq.s32.totalorder %s89, 1
      %p652 = por %p650, %p651
      %p653 = scmp.ne.s32.totalorder %s644, %s645
      %p654 = scmp.eq.s32.totalorder %s89, 0
      %p655 = por %p653, %p654
      %p656 = scmp.ne.s32.totalorder %s644, %s645
      %p657 = scmp.eq.s32.totalorder %s90, 1
      %p658 = por %p656, %p657
      %p660 = scmp.ne.s32.totalorder %s645, %s659
      %p661 = scmp.eq.s32.totalorder %s90, 0
      %p662 = por %p660, %p661
      %s664 = sadd.s32 %s663, 1
      %p667 = scmp.eq.s32.totalorder %s84, 1
      %p668 = scmp.ne.s32.totalorder %s663, %s665
      %p669 = scmp.eq.s32.totalorder %s84, 0
      %p670 = por %p668, %p669
      %p671 = scmp.ne.s32.totalorder %s663, %s665
      %p672 = scmp.eq.s32.totalorder %s89, 1
      %p673 = por %p671, %p672
      %p674 = scmp.ne.s32.totalorder %s665, %s666
      %p675 = scmp.eq.s32.totalorder %s89, 0
      %p676 = por %p674, %p675
      %p677 = scmp.ne.s32.totalorder %s665, %s666
      %p678 = scmp.eq.s32.totalorder %s90, 1
      %p679 = por %p677, %p678
      %p681 = scmp.ne.s32.totalorder %s666, %s680
      %p682 = scmp.eq.s32.totalorder %s90, 0
      %p683 = por %p681, %p682
      %s685 = sadd.s32 %s684, 1
      %p688 = scmp.eq.s32.totalorder %s84, 1
      %p689 = scmp.ne.s32.totalorder %s684, %s686
      %p690 = scmp.eq.s32.totalorder %s84, 0
      %p691 = por %p689, %p690
      %p692 = scmp.ne.s32.totalorder %s684, %s686
      %p693 = scmp.eq.s32.totalorder %s89, 1
      %p694 = por %p692, %p693
      %p695 = scmp.ne.s32.totalorder %s686, %s687
      %p696 = scmp.eq.s32.totalorder %s89, 0
      %p697 = por %p695, %p696
      %p698 = scmp.ne.s32.totalorder %s686, %s687
      %p699 = scmp.eq.s32.totalorder %s90, 1
      %p700 = por %p698, %p699
      %p702 = scmp.ne.s32.totalorder %s687, %s701
      %p703 = scmp.eq.s32.totalorder %s90, 0
      %p704 = por %p702, %p703
      %s706 = sadd.s32 %s705, 1
      %p709 = scmp.eq.s32.totalorder %s84, 1
      %p710 = scmp.ne.s32.totalorder %s705, %s707
      %p711 = scmp.eq.s32.totalorder %s84, 0
      %p712 = por %p710, %p711
      %p713 = scmp.ne.s32.totalorder %s705, %s707
      %p714 = scmp.eq.s32.totalorder %s89, 1
      %p715 = por %p713, %p714
      %p716 = scmp.ne.s32.totalorder %s707, %s708
      %p717 = scmp.eq.s32.totalorder %s89, 0
      %p718 = por %p716, %p717
      %p719 = scmp.ne.s32.totalorder %s707, %s708
      %p720 = scmp.eq.s32.totalorder %s90, 1
      %p721 = por %p719, %p720
      %p723 = scmp.ne.s32.totalorder %s708, %s722
      %p724 = scmp.eq.s32.totalorder %s90, 0
      %p725 = por %p723, %p724
      %s727 = sadd.s32 %s726, 1
      %p730 = scmp.eq.s32.totalorder %s84, 1
      %p731 = scmp.ne.s32.totalorder %s726, %s728
      %p732 = scmp.eq.s32.totalorder %s84, 0
      %p733 = por %p731, %p732
      %p734 = scmp.ne.s32.totalorder %s726, %s728
      %p735 = scmp.eq.s32.totalorder %s89, 1
      %p736 = por %p734, %p735
      %p737 = scmp.ne.s32.totalorder %s728, %s729
      %p738 = scmp.eq.s32.totalorder %s89, 0
      %p739 = por %p737, %p738
      %p740 = scmp.ne.s32.totalorder %s728, %s729
      %p741 = scmp.eq.s32.totalorder %s90, 1
      %p742 = por %p740, %p741
      %p744 = scmp.ne.s32.totalorder %s729, %s743
      %p745 = scmp.eq.s32.totalorder %s90, 0
      %p746 = por %p744, %p745
      %s748 = sadd.s32 %s747, 1
      %p751 = scmp.eq.s32.totalorder %s84, 1
      %p752 = scmp.ne.s32.totalorder %s747, %s749
      %p753 = scmp.eq.s32.totalorder %s84, 0
      %p754 = por %p752, %p753
      %p755 = scmp.ne.s32.totalorder %s747, %s749
      %p756 = scmp.eq.s32.totalorder %s89, 1
      %p757 = por %p755, %p756
      %p758 = scmp.ne.s32.totalorder %s749, %s750
      %p759 = scmp.eq.s32.totalorder %s89, 0
      %p760 = por %p758, %p759
      %p761 = scmp.ne.s32.totalorder %s749, %s750
      %p762 = scmp.eq.s32.totalorder %s90, 1
      %p763 = por %p761, %p762
      %p765 = scmp.ne.s32.totalorder %s750, %s764
      %p766 = scmp.eq.s32.totalorder %s90, 0
      %p767 = por %p765, %p766
      %s768 = ssub.s32 %s84, %s91
      %p769 = scmp.eq.s32.totalorder %s768, 0
      %s771 = sadd.s32 %s770, 1
      %s772 = scalar_select %p769, %s770, %s771
      %p775 = pneg %p769
      %p776 = scmp.eq.s32.totalorder %s84, 1
      %p777 = por %p775, %p776
      %p778 = scmp.ne.s32.totalorder %s770, %s773
      %p779 = scmp.eq.s32.totalorder %s84, 0
      %p780 = por %p778, %p779
      %p781 = scmp.ne.s32.totalorder %s770, %s773
      %p782 = scmp.eq.s32.totalorder %s89, 1
      %p783 = por %p781, %p782
      %p784 = scmp.ne.s32.totalorder %s773, %s774
      %p785 = scmp.eq.s32.totalorder %s89, 0
      %p786 = por %p784, %p785
      %p787 = scmp.ne.s32.totalorder %s773, %s774
      %p788 = scmp.eq.s32.totalorder %s90, 1
      %p789 = por %p787, %p788
      %p791 = scmp.ne.s32.totalorder %s774, %s790
      %p792 = scmp.eq.s32.totalorder %s90, 0
      %p793 = por %p791, %p792
      %s794 = ssub.s32 %s84, %s91
      %p795 = scmp.eq.s32.totalorder %s794, 0
      %s797 = sadd.s32 %s796, 1
      %s798 = scalar_select %p795, %s796, %s797
      %p801 = pneg %p795
      %p802 = scmp.eq.s32.totalorder %s84, 1
      %p803 = por %p801, %p802
      %p804 = scmp.ne.s32.totalorder %s796, %s799
      %p805 = scmp.eq.s32.totalorder %s84, 0
      %p806 = por %p804, %p805
      %p807 = scmp.ne.s32.totalorder %s796, %s799
      %p808 = scmp.eq.s32.totalorder %s89, 1
      %p809 = por %p807, %p808
      %p810 = scmp.ne.s32.totalorder %s799, %s800
      %p811 = scmp.eq.s32.totalorder %s89, 0
      %p812 = por %p810, %p811
      %p813 = scmp.ne.s32.totalorder %s799, %s800
      %p814 = scmp.eq.s32.totalorder %s90, 1
      %p815 = por %p813, %p814
      %p817 = scmp.ne.s32.totalorder %s800, %s816
      %p818 = scmp.eq.s32.totalorder %s90, 0
      %p819 = por %p817, %p818
      %p820 = scmp.le.s32.totalorder 1, %s84
      %p821 = scmp.lt.s32.totalorder %s84, 3
      %p822 = pnand %p820, %p821
      %p823 = pneg %p822
      // Predicated region
      $region9: #{question_generation_forward.1} parent=5 // pred_check
        _
      $region10: #{question_generation_forward.1} parent=5 // pred_check_branch
        %825 = sbr.rel (%p822) target = $region12
      $region11: #{question_generation_forward.1} parent=5 // pred_region
        %s826 = ssub.s32 %s84, 1
        // Predicated region
        $region13: #{question_generation_forward.1} parent=11 // pred_check
          %p827 = pneg %p235
        $region14: #{question_generation_forward.1} parent=11 // pred_check_branch
          %829 = sbr.rel (%p827) target = $region16
        $region15: #{question_generation_forward.1} parent=11 // pred_region
          _
        $region16: #{question_generation_forward.1} parent=11 // pred_fallthru
          _
        // Predicated region
        $region17: #{question_generation_forward.1} parent=11 // pred_check
          %p830 = pneg %p256
        $region18: #{question_generation_forward.1} parent=11 // pred_check_branch
          %832 = sbr.rel (%p830) target = $region20
        $region19: #{question_generation_forward.1} parent=11 // pred_region
          _
        $region20: #{question_generation_forward.1} parent=11 // pred_fallthru
          _
        // Predicated region
        $region21: #{question_generation_forward.1} parent=11 // pred_check
          %p833 = pneg %p277
        $region22: #{question_generation_forward.1} parent=11 // pred_check_branch
          %835 = sbr.rel (%p833) target = $region24
        $region23: #{question_generation_forward.1} parent=11 // pred_region
          %s837 = ssub.s32 2048, 2048
          %838 = vsyncadd [#allocation4], %s837
          %s839 = sshll.u32 [#allocation3], 4
          %s840 = int_to_ptr.vmem [resolvable:$true] %s839
          %845 = dma.hbm_to_vmem [thread:$0]  %s15, 2048, %s840, [#allocation4], 64, 64, 4
        $region24: #{question_generation_forward.1} parent=11 // pred_fallthru
          _
        // Predicated region
        $region25: #{question_generation_forward.1} parent=11 // pred_check
          %p846 = pneg %p298
        $region26: #{question_generation_forward.1} parent=11 // pred_check_branch
          %848 = sbr.rel (%p846) target = $region28
        $region27: #{question_generation_forward.1} parent=11 // pred_region
          _
        $region28: #{question_generation_forward.1} parent=11 // pred_fallthru
          _
        // Predicated region
        $region29: #{question_generation_forward.1} parent=11 // pred_check
          %p849 = pneg %p319
        $region30: #{question_generation_forward.1} parent=11 // pred_check_branch
          %851 = sbr.rel (%p849) target = $region32
        $region31: #{question_generation_forward.1} parent=11 // pred_region
          %s853 = ssub.s32 16384, 16384
          %854 = vsyncadd [#allocation6], %s853
          %s855 = sshll.u32 [#allocation5], 4
          %s856 = int_to_ptr.vmem [resolvable:$true] %s855
          %861 = dma.hbm_to_vmem [thread:$0]  %s19, 16384, %s856, [#allocation6], 64, 64, 4
        $region32: #{question_generation_forward.1} parent=11 // pred_fallthru
          _
        // Predicated region
        $region33: #{question_generation_forward.1} parent=11 // pred_check
          %p862 = pneg %p340
        $region34: #{question_generation_forward.1} parent=11 // pred_check_branch
          %864 = sbr.rel (%p862) target = $region36
        $region35: #{question_generation_forward.1} parent=11 // pred_region
          _
        $region36: #{question_generation_forward.1} parent=11 // pred_fallthru
          _
        // Predicated region
        $region37: #{question_generation_forward.1} parent=11 // pred_check
          %p865 = pneg %p361
        $region38: #{question_generation_forward.1} parent=11 // pred_check_branch
          %867 = sbr.rel (%p865) target = $region40
        $region39: #{question_generation_forward.1} parent=11 // pred_region
          _
        $region40: #{question_generation_forward.1} parent=11 // pred_fallthru
          _
        // Predicated region
        $region41: #{question_generation_forward.1} parent=11 // pred_check
          %p868 = pneg %p382
        $region42: #{question_generation_forward.1} parent=11 // pred_check_branch
          %870 = sbr.rel (%p868) target = $region44
        $region43: #{question_generation_forward.1} parent=11 // pred_region
          %s872 = ssub.s32 32, 32
          %873 = vsyncadd [#allocation6], %s872
          %s874 = sshll.u32 [#allocation7], 4
          %s875 = int_to_ptr.vmem [resolvable:$true] %s874
          %880 = dma.hbm_to_vmem [thread:$0]  %s25, 32, %s875, [#allocation6], 16, 16, 1
        $region44: #{question_generation_forward.1} parent=11 // pred_fallthru
          _
        // Predicated region
        $region45: #{question_generation_forward.1} parent=11 // pred_check
          %p881 = pneg %p403
        $region46: #{question_generation_forward.1} parent=11 // pred_check_branch
          %883 = sbr.rel (%p881) target = $region48
        $region47: #{question_generation_forward.1} parent=11 // pred_region
          %s885 = ssub.s32 2048, 2048
          %886 = vsyncadd [#allocation9], %s885
          %s887 = sshll.u32 [#allocation8], 4
          %s888 = int_to_ptr.vmem [resolvable:$true] %s887
          %893 = dma.hbm_to_vmem [thread:$0]  %s27, 2048, %s888, [#allocation9], 64, 64, 4
        $region48: #{question_generation_forward.1} parent=11 // pred_fallthru
          _
        // Predicated region
        $region49: #{question_generation_forward.1} parent=11 // pred_check
          %p894 = pneg %p424
        $region50: #{question_generation_forward.1} parent=11 // pred_check_branch
          %896 = sbr.rel (%p894) target = $region52
        $region51: #{question_generation_forward.1} parent=11 // pred_region
          %s898 = ssub.s32 32, 32
          %899 = vsyncadd [#allocation9], %s898
          %s900 = sshll.u32 [#allocation10], 4
          %s901 = int_to_ptr.vmem [resolvable:$true] %s900
          %906 = dma.hbm_to_vmem [thread:$0]  %s29, 32, %s901, [#allocation9], 16, 16, 1
        $region52: #{question_generation_forward.1} parent=11 // pred_fallthru
          _
        // Predicated region
        $region53: #{question_generation_forward.1} parent=11 // pred_check
          %p907 = pneg %p445
        $region54: #{question_generation_forward.1} parent=11 // pred_check_branch
          %909 = sbr.rel (%p907) target = $region56
        $region55: #{question_generation_forward.1} parent=11 // pred_region
          %s911 = ssub.s32 32, 32
          %912 = vsyncadd [#allocation12], %s911
          %s913 = sshll.u32 [#allocation11], 4
          %s914 = int_to_ptr.vmem [resolvable:$true] %s913
          %919 = dma.hbm_to_vmem [thread:$0]  %s31, 32, %s914, [#allocation12], 16, 16, 1
        $region56: #{question_generation_forward.1} parent=11 // pred_fallthru
          _
        // Predicated region
        $region57: #{question_generation_forward.1} parent=11 // pred_check
          %p920 = pneg %p466
        $region58: #{question_generation_forward.1} parent=11 // pred_check_branch
          %922 = sbr.rel (%p920) target = $region60
        $region59: #{question_generation_forward.1} parent=11 // pred_region
          %s924 = ssub.s32 2048, 2048
          %925 = vsyncadd [#allocation12], %s924
          %s926 = sshll.u32 [#allocation13], 4
          %s927 = int_to_ptr.vmem [resolvable:$true] %s926
          %932 = dma.hbm_to_vmem [thread:$0]  %s33, 2048, %s927, [#allocation12], 64, 64, 4
        $region60: #{question_generation_forward.1} parent=11 // pred_fallthru
          _
        // Predicated region
        $region61: #{question_generation_forward.1} parent=11 // pred_check
          %p933 = pneg %p487
        $region62: #{question_generation_forward.1} parent=11 // pred_check_branch
          %935 = sbr.rel (%p933) target = $region64
        $region63: #{question_generation_forward.1} parent=11 // pred_region
          _
        $region64: #{question_generation_forward.1} parent=11 // pred_fallthru
          _
        // Predicated region
        $region65: #{question_generation_forward.1} parent=11 // pred_check
          %p936 = pneg %p508
        $region66: #{question_generation_forward.1} parent=11 // pred_check_branch
          %938 = sbr.rel (%p936) target = $region68
        $region67: #{question_generation_forward.1} parent=11 // pred_region
          %s940 = ssub.s32 2048, 2048
          %941 = vsyncadd [#allocation15], %s940
          %s942 = sshll.u32 [#allocation14], 4
          %s943 = int_to_ptr.vmem [resolvable:$true] %s942
          %948 = dma.hbm_to_vmem [thread:$0]  %s37, 2048, %s943, [#allocation15], 64, 64, 4
        $region68: #{question_generation_forward.1} parent=11 // pred_fallthru
          _
        // Predicated region
        $region69: #{question_generation_forward.1} parent=11 // pred_check
          %p949 = pneg %p529
        $region70: #{question_generation_forward.1} parent=11 // pred_check_branch
          %951 = sbr.rel (%p949) target = $region72
        $region71: #{question_generation_forward.1} parent=11 // pred_region
          %s953 = ssub.s32 32, 32
          %954 = vsyncadd [#allocation15], %s953
          %s955 = sshll.u32 [#allocation16], 4
          %s956 = int_to_ptr.vmem [resolvable:$true] %s955
          %961 = dma.hbm_to_vmem [thread:$0]  %s39, 32, %s956, [#allocation15], 16, 16, 1
        $region72: #{question_generation_forward.1} parent=11 // pred_fallthru
          _
        // Predicated region
        $region73: #{question_generation_forward.1} parent=11 // pred_check
          %p962 = pneg %p550
        $region74: #{question_generation_forward.1} parent=11 // pred_check_branch
          %964 = sbr.rel (%p962) target = $region76
        $region75: #{question_generation_forward.1} parent=11 // pred_region
          %s966 = ssub.s32 32, 32
          %967 = vsyncadd [#allocation18], %s966
          %s968 = sshll.u32 [#allocation17], 4
          %s969 = int_to_ptr.vmem [resolvable:$true] %s968
          %974 = dma.hbm_to_vmem [thread:$0]  %s41, 32, %s969, [#allocation18], 16, 16, 1
        $region76: #{question_generation_forward.1} parent=11 // pred_fallthru
          _
        // Predicated region
        $region77: #{question_generation_forward.1} parent=11 // pred_check
          %p975 = pneg %p571
        $region78: #{question_generation_forward.1} parent=11 // pred_check_branch
          %977 = sbr.rel (%p975) target = $region80
        $region79: #{question_generation_forward.1} parent=11 // pred_region
          _
        $region80: #{question_generation_forward.1} parent=11 // pred_fallthru
          _
        // Predicated region
        $region81: #{question_generation_forward.1} parent=11 // pred_check
          %p978 = pneg %p592
        $region82: #{question_generation_forward.1} parent=11 // pred_check_branch
          %980 = sbr.rel (%p978) target = $region84
        $region83: #{question_generation_forward.1} parent=11 // pred_region
          %s982 = ssub.s32 128, 128
          %983 = vsyncadd [#allocation18], %s982
          %s984 = sshll.u32 [#allocation19], 4
          %s985 = int_to_ptr.vmem [resolvable:$true] %s984
          %990 = dma.hbm_to_vmem [thread:$0]  %s45, 128, %s985, [#allocation18], 64, 64, 4
        $region84: #{question_generation_forward.1} parent=11 // pred_fallthru
          _
        // Predicated region
        $region85: #{question_generation_forward.1} parent=11 // pred_check
          %p991 = pneg %p613
        $region86: #{question_generation_forward.1} parent=11 // pred_check_branch
          %993 = sbr.rel (%p991) target = $region88
        $region87: #{question_generation_forward.1} parent=11 // pred_region
          %s995 = ssub.s32 8192, 8192
          %996 = vsyncadd [#allocation21], %s995
          %s997 = sshll.u32 [#allocation20], 4
          %s998 = int_to_ptr.vmem [resolvable:$true] %s997
          %1003 = dma.hbm_to_vmem [thread:$0]  %s47, 8192, %s998, [#allocation21], 64, 64, 4
        $region88: #{question_generation_forward.1} parent=11 // pred_fallthru
          _
        // Predicated region
        $region89: #{question_generation_forward.1} parent=11 // pred_check
          %p1004 = pneg %p634
        $region90: #{question_generation_forward.1} parent=11 // pred_check_branch
          %1006 = sbr.rel (%p1004) target = $region92
        $region91: #{question_generation_forward.1} parent=11 // pred_region
          %s1008 = ssub.s32 32, 32
          %1009 = vsyncadd [#allocation21], %s1008
          %s1010 = sshll.u32 [#allocation22], 4
          %s1011 = int_to_ptr.vmem [resolvable:$true] %s1010
          %1016 = dma.hbm_to_vmem [thread:$0]  %s49, 32, %s1011, [#allocation21], 16, 16, 1
        $region92: #{question_generation_forward.1} parent=11 // pred_fallthru
          _
        // Predicated region
        $region93: #{question_generation_forward.1} parent=11 // pred_check
          %p1017 = pneg %p655
        $region94: #{question_generation_forward.1} parent=11 // pred_check_branch
          %1019 = sbr.rel (%p1017) target = $region96
        $region95: #{question_generation_forward.1} parent=11 // pred_region
          %s1021 = ssub.s32 32, 32
          %1022 = vsyncadd [#allocation24], %s1021
          %s1023 = sshll.u32 [#allocation23], 4
          %s1024 = int_to_ptr.vmem [resolvable:$true] %s1023
          %1029 = dma.hbm_to_vmem [thread:$0]  %s51, 32, %s1024, [#allocation24], 16, 16, 1
        $region96: #{question_generation_forward.1} parent=11 // pred_fallthru
          _
        // Predicated region
        $region97: #{question_generation_forward.1} parent=11 // pred_check
          %p1030 = pneg %p676
        $region98: #{question_generation_forward.1} parent=11 // pred_check_branch
          %1032 = sbr.rel (%p1030) target = $region100
        $region99: #{question_generation_forward.1} parent=11 // pred_region
          %s1034 = ssub.s32 32, 32
          %1035 = vsyncadd [#allocation24], %s1034
          %s1036 = sshll.u32 [#allocation25], 4
          %s1037 = int_to_ptr.vmem [resolvable:$true] %s1036
          %1042 = dma.hbm_to_vmem [thread:$0]  %s53, 32, %s1037, [#allocation24], 16, 16, 1
        $region100: #{question_generation_forward.1} parent=11 // pred_fallthru
          _
        // Predicated region
        $region101: #{question_generation_forward.1} parent=11 // pred_check
          %p1043 = pneg %p697
        $region102: #{question_generation_forward.1} parent=11 // pred_check_branch
          %1045 = sbr.rel (%p1043) target = $region104
        $region103: #{question_generation_forward.1} parent=11 // pred_region
          %s1047 = ssub.s32 2048, 2048
          %1048 = vsyncadd [#allocation27], %s1047
          %s1049 = sshll.u32 [#allocation26], 4
          %s1050 = int_to_ptr.vmem [resolvable:$true] %s1049
          %1055 = dma.hbm_to_vmem [thread:$0]  %s55, 2048, %s1050, [#allocation27], 128, 128, 8
        $region104: #{question_generation_forward.1} parent=11 // pred_fallthru
          _
        // Predicated region
        $region105: #{question_generation_forward.1} parent=11 // pred_check
          %p1056 = pneg %p718
        $region106: #{question_generation_forward.1} parent=11 // pred_check_branch
          %1058 = sbr.rel (%p1056) target = $region108
        $region107: #{question_generation_forward.1} parent=11 // pred_region
          %s1060 = ssub.s32 32, 32
          %1061 = vsyncadd [#allocation27], %s1060
          %s1063 = sshll.u32 [#allocation28], 4
          %s1064 = int_to_ptr.vmem [resolvable:$true] %s1063
          %1066 = dma.hbm_to_vmem [thread:$0]  %s57, 32, %s1064, [#allocation27]
        $region108: #{question_generation_forward.1} parent=11 // pred_fallthru
          _
        // Predicated region
        $region109: #{question_generation_forward.1} parent=11 // pred_check
          %p1067 = pneg %p739
        $region110: #{question_generation_forward.1} parent=11 // pred_check_branch
          %1069 = sbr.rel (%p1067) target = $region112
        $region111: #{question_generation_forward.1} parent=11 // pred_region
          %s1071 = ssub.s32 16, 16
          %1072 = vsyncadd [#allocation30], %s1071
          %s1074 = sshll.u32 [#allocation29], 4
          %s1075 = int_to_ptr.vmem [resolvable:$true] %s1074
          %1077 = dma.hbm_to_vmem [thread:$0]  %s59, 16, %s1075, [#allocation30]
        $region112: #{question_generation_forward.1} parent=11 // pred_fallthru
          _
        // Predicated region
        $region113: #{question_generation_forward.1} parent=11 // pred_check
          %p1078 = pneg %p760
        $region114: #{question_generation_forward.1} parent=11 // pred_check_branch
          %1080 = sbr.rel (%p1078) target = $region116
        $region115: #{question_generation_forward.1} parent=11 // pred_region
          _
        $region116: #{question_generation_forward.1} parent=11 // pred_fallthru
          _
      $region12: #{question_generation_forward.1} parent=5 // pred_fallthru
        _
      %p1081 = scmp.lt.s32.totalorder %s84, 2
      // Predicated region
      $region117: #{question_generation_forward.1} parent=5 // pred_check
        %p1082 = pneg %p1081
      $region118: #{question_generation_forward.1} parent=5 // pred_check_branch
        %1084 = sbr.rel (%p1082) target = $region120
      $region119: #{question_generation_forward.1} parent=5 // pred_region
        // Predicated region
        $region121: #{question_generation_forward.1} parent=119 // pred_check
          %p1085 = pneg %p104
        $region122: #{question_generation_forward.1} parent=119 // pred_check_branch
          %1087 = sbr.rel (%p1085) target = $region124
        $region123: #{question_generation_forward.1} parent=119 // pred_region
          %p1088 = scmp.lt.s32.totalorder %s84, 1
          %s1089 = scalar_select %p1088, %s84, 1
          %s1090 = smul.addr %s1089, 8
          %s1091 = scalar_lea.vmem %s1, %s1090
        $region124: #{question_generation_forward.1} parent=119 // pred_fallthru
          _
        // Predicated region
        $region125: #{question_generation_forward.1} parent=119 // pred_check
          %p1092 = pneg %p130
        $region126: #{question_generation_forward.1} parent=119 // pred_check_branch
          %1094 = sbr.rel (%p1092) target = $region128
        $region127: #{question_generation_forward.1} parent=119 // pred_region
          %p1095 = scmp.lt.s32.totalorder %s84, 1
          %s1096 = scalar_select %p1095, %s84, 1
          %s1097 = smul.addr %s1096, 2
          %s1098 = smul.addr %s1097, 8
          %s1099 = scalar_lea.vmem %s3, %s1098
        $region128: #{question_generation_forward.1} parent=119 // pred_fallthru
          _
        // Predicated region
        $region129: #{question_generation_forward.1} parent=119 // pred_check
          %p1100 = pneg %p156
        $region130: #{question_generation_forward.1} parent=119 // pred_check_branch
          %1102 = sbr.rel (%p1100) target = $region132
        $region131: #{question_generation_forward.1} parent=119 // pred_region
          %p1103 = scmp.lt.s32.totalorder %s84, 1
          %s1104 = scalar_select %p1103, %s84, 1
          %s1105 = smul.addr %s1104, 2
          %s1106 = scalar_lea.vmem %s5, %s1105
        $region132: #{question_generation_forward.1} parent=119 // pred_fallthru
          _
        // Predicated region
        $region133: #{question_generation_forward.1} parent=119 // pred_check
          %p1107 = pneg %p182
        $region134: #{question_generation_forward.1} parent=119 // pred_check_branch
          %1109 = sbr.rel (%p1107) target = $region136
        $region135: #{question_generation_forward.1} parent=119 // pred_region
          %p1110 = scmp.lt.s32.totalorder %s84, 1
          %s1111 = scalar_select %p1110, %s84, 1
          %s1112 = smul.addr %s1111, 2
          %s1113 = smul.addr %s1112, 8
          %s1114 = scalar_lea.vmem %s7, %s1113
        $region136: #{question_generation_forward.1} parent=119 // pred_fallthru
          _
        // Predicated region
        $region137: #{question_generation_forward.1} parent=119 // pred_check
          %p1115 = pneg %p208
        $region138: #{question_generation_forward.1} parent=119 // pred_check_branch
          %1117 = sbr.rel (%p1115) target = $region140
        $region139: #{question_generation_forward.1} parent=119 // pred_region
          %p1118 = scmp.lt.s32.totalorder %s84, 1
          %s1119 = scalar_select %p1118, %s84, 1
          %s1120 = smul.addr %s1119, 8
          %s1121 = scalar_lea.vmem %s9, %s1120
        $region140: #{question_generation_forward.1} parent=119 // pred_fallthru
          _
      $region120: #{question_generation_forward.1} parent=5 // pred_fallthru
        _
      %p1122 = scmp.le.s32.totalorder 1, %s84
      %p1123 = scmp.lt.s32.totalorder %s84, 3
      %p1124 = pnand %p1122, %p1123
      %p1125 = pneg %p1124
      // Predicated region
      $region141: #{question_generation_forward.1} parent=5 // pred_check
        _
      $region142: #{question_generation_forward.1} parent=5 // pred_check_branch
        %1127 = sbr.rel (%p1124) target = $region144
      $region143: #{question_generation_forward.1} parent=5 // pred_region
        %s1128 = ssub.s32 %s84, 1
        // Predicated region
        $region145: #{question_generation_forward.1} parent=143 // pred_check
          %p1129 = pneg %p277
        $region146: #{question_generation_forward.1} parent=143 // pred_check_branch
          %1131 = sbr.rel (%p1129) target = $region148
        $region147: #{question_generation_forward.1} parent=143 // pred_region
          %1132 = dma.done [#allocation4], 2048
        $region148: #{question_generation_forward.1} parent=143 // pred_fallthru
          _
        // Predicated region
        $region149: #{question_generation_forward.1} parent=143 // pred_check
          %p1133 = pneg %p319
        $region150: #{question_generation_forward.1} parent=143 // pred_check_branch
          %1135 = sbr.rel (%p1133) target = $region152
        $region151: #{question_generation_forward.1} parent=143 // pred_region
          %1136 = dma.done [#allocation6], 16384
        $region152: #{question_generation_forward.1} parent=143 // pred_fallthru
          _
        // Predicated region
        $region153: #{question_generation_forward.1} parent=143 // pred_check
          %p1137 = pneg %p382
        $region154: #{question_generation_forward.1} parent=143 // pred_check_branch
          %1139 = sbr.rel (%p1137) target = $region156
        $region155: #{question_generation_forward.1} parent=143 // pred_region
          %1140 = dma.done [#allocation6], 32
        $region156: #{question_generation_forward.1} parent=143 // pred_fallthru
          _
        // Predicated region
        $region157: #{question_generation_forward.1} parent=143 // pred_check
          %p1141 = pneg %p403
        $region158: #{question_generation_forward.1} parent=143 // pred_check_branch
          %1143 = sbr.rel (%p1141) target = $region160
        $region159: #{question_generation_forward.1} parent=143 // pred_region
          %1144 = dma.done [#allocation9], 2048
        $region160: #{question_generation_forward.1} parent=143 // pred_fallthru
          _
        // Predicated region
        $region161: #{question_generation_forward.1} parent=143 // pred_check
          %p1145 = pneg %p424
        $region162: #{question_generation_forward.1} parent=143 // pred_check_branch
          %1147 = sbr.rel (%p1145) target = $region164
        $region163: #{question_generation_forward.1} parent=143 // pred_region
          %1148 = dma.done [#allocation9], 32
        $region164: #{question_generation_forward.1} parent=143 // pred_fallthru
          _
        // Predicated region
        $region165: #{question_generation_forward.1} parent=143 // pred_check
          %p1149 = pneg %p445
        $region166: #{question_generation_forward.1} parent=143 // pred_check_branch
          %1151 = sbr.rel (%p1149) target = $region168
        $region167: #{question_generation_forward.1} parent=143 // pred_region
          %1152 = dma.done [#allocation12], 32
        $region168: #{question_generation_forward.1} parent=143 // pred_fallthru
          _
        // Predicated region
        $region169: #{question_generation_forward.1} parent=143 // pred_check
          %p1153 = pneg %p466
        $region170: #{question_generation_forward.1} parent=143 // pred_check_branch
          %1155 = sbr.rel (%p1153) target = $region172
        $region171: #{question_generation_forward.1} parent=143 // pred_region
          %1156 = dma.done [#allocation12], 2048
        $region172: #{question_generation_forward.1} parent=143 // pred_fallthru
          _
        // Predicated region
        $region173: #{question_generation_forward.1} parent=143 // pred_check
          %p1157 = pneg %p508
        $region174: #{question_generation_forward.1} parent=143 // pred_check_branch
          %1159 = sbr.rel (%p1157) target = $region176
        $region175: #{question_generation_forward.1} parent=143 // pred_region
          %1160 = dma.done [#allocation15], 2048
        $region176: #{question_generation_forward.1} parent=143 // pred_fallthru
          _
        // Predicated region
        $region177: #{question_generation_forward.1} parent=143 // pred_check
          %p1161 = pneg %p529
        $region178: #{question_generation_forward.1} parent=143 // pred_check_branch
          %1163 = sbr.rel (%p1161) target = $region180
        $region179: #{question_generation_forward.1} parent=143 // pred_region
          %1164 = dma.done [#allocation15], 32
        $region180: #{question_generation_forward.1} parent=143 // pred_fallthru
          _
        // Predicated region
        $region181: #{question_generation_forward.1} parent=143 // pred_check
          %p1165 = pneg %p550
        $region182: #{question_generation_forward.1} parent=143 // pred_check_branch
          %1167 = sbr.rel (%p1165) target = $region184
        $region183: #{question_generation_forward.1} parent=143 // pred_region
          %1168 = dma.done [#allocation18], 32
        $region184: #{question_generation_forward.1} parent=143 // pred_fallthru
          _
        // Predicated region
        $region185: #{question_generation_forward.1} parent=143 // pred_check
          %p1169 = pneg %p592
        $region186: #{question_generation_forward.1} parent=143 // pred_check_branch
          %1171 = sbr.rel (%p1169) target = $region188
        $region187: #{question_generation_forward.1} parent=143 // pred_region
          %1172 = dma.done [#allocation18], 128
        $region188: #{question_generation_forward.1} parent=143 // pred_fallthru
          _
        // Predicated region
        $region189: #{question_generation_forward.1} parent=143 // pred_check
          %p1173 = pneg %p613
        $region190: #{question_generation_forward.1} parent=143 // pred_check_branch
          %1175 = sbr.rel (%p1173) target = $region192
        $region191: #{question_generation_forward.1} parent=143 // pred_region
          %1176 = dma.done [#allocation21], 8192
        $region192: #{question_generation_forward.1} parent=143 // pred_fallthru
          _
        // Predicated region
        $region193: #{question_generation_forward.1} parent=143 // pred_check
          %p1177 = pneg %p634
        $region194: #{question_generation_forward.1} parent=143 // pred_check_branch
          %1179 = sbr.rel (%p1177) target = $region196
        $region195: #{question_generation_forward.1} parent=143 // pred_region
          %1180 = dma.done [#allocation21], 32
        $region196: #{question_generation_forward.1} parent=143 // pred_fallthru
          _
        // Predicated region
        $region197: #{question_generation_forward.1} parent=143 // pred_check
          %p1181 = pneg %p655
        $region198: #{question_generation_forward.1} parent=143 // pred_check_branch
          %1183 = sbr.rel (%p1181) target = $region200
        $region199: #{question_generation_forward.1} parent=143 // pred_region
          %1184 = dma.done [#allocation24], 32
        $region200: #{question_generation_forward.1} parent=143 // pred_fallthru
          _
        // Predicated region
        $region201: #{question_generation_forward.1} parent=143 // pred_check
          %p1185 = pneg %p676
        $region202: #{question_generation_forward.1} parent=143 // pred_check_branch
          %1187 = sbr.rel (%p1185) target = $region204
        $region203: #{question_generation_forward.1} parent=143 // pred_region
          %1188 = dma.done [#allocation24], 32
        $region204: #{question_generation_forward.1} parent=143 // pred_fallthru
          _
        // Predicated region
        $region205: #{question_generation_forward.1} parent=143 // pred_check
          %p1189 = pneg %p697
        $region206: #{question_generation_forward.1} parent=143 // pred_check_branch
          %1191 = sbr.rel (%p1189) target = $region208
        $region207: #{question_generation_forward.1} parent=143 // pred_region
          %1192 = dma.done [#allocation27], 2048
        $region208: #{question_generation_forward.1} parent=143 // pred_fallthru
          _
        // Predicated region
        $region209: #{question_generation_forward.1} parent=143 // pred_check
          %p1193 = pneg %p718
        $region210: #{question_generation_forward.1} parent=143 // pred_check_branch
          %1195 = sbr.rel (%p1193) target = $region212
        $region211: #{question_generation_forward.1} parent=143 // pred_region
          %1196 = dma.done [#allocation27], 32
        $region212: #{question_generation_forward.1} parent=143 // pred_fallthru
          _
        // Predicated region
        $region213: #{question_generation_forward.1} parent=143 // pred_check
          %p1197 = pneg %p739
        $region214: #{question_generation_forward.1} parent=143 // pred_check_branch
          %1199 = sbr.rel (%p1197) target = $region216
        $region215: #{question_generation_forward.1} parent=143 // pred_region
          %1200 = dma.done [#allocation30], 16
        $region216: #{question_generation_forward.1} parent=143 // pred_fallthru
          _
        %p1201 = scmp.lt.s32.totalorder %s89, 1
        %s1202 = scalar_select %p1201, %s89, 1
        %s1203 = smul.addr %s1202, 8
        %s1204 = scalar_lea.vmem %s1, %s1203
        %p1205 = pneg %p110
        %p1206 = pneg %p107
        %p1207 = scmp.lt.s32.totalorder %s89, 1
        %s1208 = scalar_select %p1207, %s89, 1
        %s1209 = smul.addr %s1208, 2
        %s1210 = smul.addr %s1209, 8
        %s1211 = scalar_lea.vmem %s3, %s1210
        %p1212 = pneg %p136
        %p1213 = pneg %p133
        %p1214 = scmp.lt.s32.totalorder %s89, 1
        %s1215 = scalar_select %p1214, %s89, 1
        %s1216 = smul.addr %s1215, 2
        %s1217 = scalar_lea.vmem %s5, %s1216
        %p1218 = pneg %p162
        %p1219 = pneg %p159
        %p1220 = scmp.lt.s32.totalorder %s89, 1
        %s1221 = scalar_select %p1220, %s89, 1
        %s1222 = smul.addr %s1221, 2
        %s1223 = smul.addr %s1222, 8
        %s1224 = scalar_lea.vmem %s7, %s1223
        %p1225 = pneg %p188
        %p1226 = pneg %p185
        %p1227 = scmp.lt.s32.totalorder %s89, 1
        %s1228 = scalar_select %p1227, %s89, 1
        %s1229 = smul.addr %s1228, 8
        %s1230 = scalar_lea.vmem %s9, %s1229
        %p1231 = pneg %p214
        %p1232 = pneg %p211
        %p1233 = pneg %p235
        %p1234 = pneg %p232
        %p1235 = pneg %p256
        %p1236 = pneg %p253
        %p1237 = pneg %p277
        %p1238 = pneg %p274
        %p1239 = pneg %p298
        %p1240 = pneg %p295
        %p1241 = pneg %p319
        %p1242 = pneg %p316
        %p1243 = pneg %p340
        %p1244 = pneg %p337
        %p1245 = pneg %p361
        %p1246 = pneg %p358
        %p1247 = pneg %p382
        %p1248 = pneg %p379
        %p1249 = pneg %p403
        %p1250 = pneg %p400
        %p1251 = pneg %p424
        %p1252 = pneg %p421
        %p1253 = pneg %p445
        %p1254 = pneg %p442
        %p1255 = pneg %p466
        %p1256 = pneg %p463
        %p1257 = pneg %p487
        %p1258 = pneg %p484
        %p1259 = pneg %p508
        %p1260 = pneg %p505
        %p1261 = pneg %p529
        %p1262 = pneg %p526
        %p1263 = pneg %p550
        %p1264 = pneg %p547
        %p1265 = pneg %p571
        %p1266 = pneg %p568
        %p1267 = pneg %p592
        %p1268 = pneg %p589
        %p1269 = pneg %p613
        %p1270 = pneg %p610
        %p1271 = pneg %p634
        %p1272 = pneg %p631
        %p1273 = pneg %p655
        %p1274 = pneg %p652
        %p1275 = pneg %p676
        %p1276 = pneg %p673
        %p1277 = pneg %p697
        %p1278 = pneg %p694
        %p1279 = pneg %p718
        %p1280 = pneg %p715
        %p1281 = pneg %p739
        %p1282 = pneg %p736
        %p1283 = pneg %p760
        %p1284 = pneg %p757
        %p1285 = pneg %p786
        %p1286 = pneg %p783
        %p1287 = scmp.lt.s32.totalorder %s89, 1
        %s1288 = scalar_select %p1287, %s89, 1
        %s1289 = scalar_lea.vmem %s63, %s1288
        %p1290 = pneg %p812
        %p1291 = pneg %p809
        %p1292 = scmp.lt.s32.totalorder %s89, 1
        %s1293 = scalar_select %p1292, %s89, 1
        %s1294 = scalar_lea.vmem %s65, %s1293
        %p1295 = scmp.lt.s32.totalorder %s89, 1
        %s1296 = scalar_select %p1295, %s89, 1
        %s1297 = smul.addr %s1296, 8
        %s1298 = scalar_lea.vmem %s1, %s1297
        %p1299 = scmp.lt.s32.totalorder %s89, 1
        %s1300 = scalar_select %p1299, %s89, 1
        %s1301 = smul.addr %s1300, 2
        %s1302 = smul.addr %s1301, 8
        %s1303 = scalar_lea.vmem %s3, %s1302
        %p1304 = scmp.lt.s32.totalorder %s89, 1
        %s1305 = scalar_select %p1304, %s89, 1
        %s1306 = smul.addr %s1305, 2
        %s1307 = scalar_lea.vmem %s5, %s1306
        %p1308 = scmp.lt.s32.totalorder %s89, 1
        %s1309 = scalar_select %p1308, %s89, 1
        %s1310 = smul.addr %s1309, 2
        %s1311 = smul.addr %s1310, 8
        %s1312 = scalar_lea.vmem %s7, %s1311
        %p1313 = scmp.lt.s32.totalorder %s89, 1
        %s1314 = scalar_select %p1313, %s89, 1
        %s1315 = smul.addr %s1314, 8
        %s1316 = scalar_lea.vmem %s9, %s1315
        %p1317 = scmp.lt.s32.totalorder %s89, 1
        %s1318 = scalar_select %p1317, %s89, 1
        %s1319 = scalar_lea.vmem %s63, %s1318
        %p1320 = scmp.lt.s32.totalorder %s89, 1
        %s1321 = scalar_select %p1320, %s89, 1
        %s1322 = scalar_lea.vmem %s65, %s1321
        %v1324 = vld [vmem:[%s1298] sm:$0xff]
        %v1325 = vld [vmem:[%s1303] sm:$0xff]
        %v1326 = vld [vmem:[%s1303 + $0x8] sm:$0xff]
        %v1327 = vpack.c.bf16 %v1326, %v1325
        %v1328 = vld [vmem:[%s1307] sm:$0x3]
        %v1329 = vsub.f32 1.0, %v1328
        %v1330 = vmul.f32 %v1329, -1e+30
        %v1331 = vld [vmem:[%s11] sm:$0xff]
        %v1332 = vld [vmem:[%s13] sm:$0xf]
        %v1333 = vld [vmem:[%s13 + $0x4] sm:$0xf]
        %v1334 = vld [vmem:[%s13 + $0x8] sm:$0xf]
        %v1335 = vld [vmem:[%s13 + $0xc] sm:$0xf]
        %v1336 = vld [vmem:[%s13 + $0x10] sm:$0xf]
        %v1337 = vld [vmem:[%s13 + $0x14] sm:$0xf]
        %v1338 = vld [vmem:[%s13 + $0x18] sm:$0xf]
        %v1339 = vld [vmem:[%s13 + $0x1c] sm:$0xf]
        %v1340 = vld [vmem:[%s13 + $0x20] sm:$0xf]
        %v1341 = vld [vmem:[%s13 + $0x24] sm:$0xf]
        %v1342 = vld [vmem:[%s13 + $0x28] sm:$0xf]
        %v1343 = vld [vmem:[%s13 + $0x2c] sm:$0xf]
        %v1344 = vld [vmem:[%s13 + $0x30] sm:$0xf]
        %v1345 = vld [vmem:[%s13 + $0x34] sm:$0xf]
        %v1346 = vld [vmem:[%s13 + $0x38] sm:$0xf]
        %v1347 = vld [vmem:[%s13 + $0x3c] sm:$0xf]
        %v1348 = vld [vmem:[#allocation3] sm:$0xf]
        %v1349 = vld [vmem:[#allocation3 + $0x4] sm:$0xf]
        %v1350 = vld [vmem:[#allocation3 + $0x8] sm:$0xf]
        %v1351 = vld [vmem:[#allocation3 + $0xc] sm:$0xf]
        %v1352 = vld [vmem:[#allocation3 + $0x10] sm:$0xf]
        %v1353 = vld [vmem:[#allocation3 + $0x14] sm:$0xf]
        %v1354 = vld [vmem:[#allocation3 + $0x18] sm:$0xf]
        %v1355 = vld [vmem:[#allocation3 + $0x1c] sm:$0xf]
        %v1356 = vld [vmem:[#allocation3 + $0x20] sm:$0xf]
        %v1357 = vld [vmem:[#allocation3 + $0x24] sm:$0xf]
        %v1358 = vld [vmem:[#allocation3 + $0x28] sm:$0xf]
        %v1359 = vld [vmem:[#allocation3 + $0x2c] sm:$0xf]
        %v1360 = vld [vmem:[#allocation3 + $0x30] sm:$0xf]
        %v1361 = vld [vmem:[#allocation3 + $0x34] sm:$0xf]
        %v1362 = vld [vmem:[#allocation3 + $0x38] sm:$0xf]
        %v1363 = vld [vmem:[#allocation3 + $0x3c] sm:$0xf]
        %v1364 = vld [vmem:[#allocation3 + $0x40] sm:$0xf]
        %v1365 = vld [vmem:[#allocation3 + $0x44] sm:$0xf]
        %v1366 = vld [vmem:[#allocation3 + $0x48] sm:$0xf]
        %v1367 = vld [vmem:[#allocation3 + $0x4c] sm:$0xf]
        %v1368 = vld [vmem:[#allocation3 + $0x50] sm:$0xf]
        %v1369 = vld [vmem:[#allocation3 + $0x54] sm:$0xf]
        %v1370 = vld [vmem:[#allocation3 + $0x58] sm:$0xf]
        %v1371 = vld [vmem:[#allocation3 + $0x5c] sm:$0xf]
        %v1372 = vld [vmem:[#allocation3 + $0x60] sm:$0xf]
        %v1373 = vld [vmem:[#allocation3 + $0x64] sm:$0xf]
        %v1374 = vld [vmem:[#allocation3 + $0x68] sm:$0xf]
        %v1375 = vld [vmem:[#allocation3 + $0x6c] sm:$0xf]
        %v1376 = vld [vmem:[#allocation3 + $0x70] sm:$0xf]
        %v1377 = vld [vmem:[#allocation3 + $0x74] sm:$0xf]
        %v1378 = vld [vmem:[#allocation3 + $0x78] sm:$0xf]
        %v1379 = vld [vmem:[#allocation3 + $0x7c] sm:$0xf]
        %v1380 = vld [vmem:[%s17] sm:$0xff]
        %v1381 = vld [vmem:[%s17 + $0x8] sm:$0xff]
        %v1382 = vld [vmem:[%s17 + $0x10] sm:$0xff]
        %v1383 = vld [vmem:[%s17 + $0x18] sm:$0xff]
        %v1384 = vpack.c.bf16 %v1324, %v1324
        %v1385 = vld [vmem:[%s21] sm:$0xff]
        %v1386 = vld [vmem:[%s21 + $0x8] sm:$0xf]
        %v1387 = vld [vmem:[%s21 + $0xc] sm:$0xff]
        %v1388 = vld [vmem:[%s21 + $0x14] sm:$0xf]
        %v1389 = vld [vmem:[%s21 + $0x18] sm:$0xff]
        %v1390 = vld [vmem:[%s21 + $0x20] sm:$0xf]
        %v1391 = vld [vmem:[%s21 + $0x24] sm:$0xff]
        %v1392 = vld [vmem:[%s21 + $0x2c] sm:$0xf]
        %v1393 = vld [vmem:[%s21 + $0x30] sm:$0xff]
        %v1394 = vld [vmem:[%s21 + $0x38] sm:$0xf]
        %v1395 = vld [vmem:[%s21 + $0x3c] sm:$0xff]
        %v1396 = vld [vmem:[%s21 + $0x44] sm:$0xf]
        %v1397 = vld [vmem:[%s21 + $0x48] sm:$0xff]
        %v1398 = vld [vmem:[%s21 + $0x50] sm:$0xf]
        %v1399 = vld [vmem:[%s21 + $0x54] sm:$0xff]
        %v1400 = vld [vmem:[%s21 + $0x5c] sm:$0xf]
        %v1401 = vld [vmem:[%s21 + $0x60] sm:$0xff]
        %v1402 = vld [vmem:[%s21 + $0x68] sm:$0xf]
        %v1403 = vld [vmem:[%s21 + $0x6c] sm:$0xff]
        %v1404 = vld [vmem:[%s21 + $0x74] sm:$0xf]
        %v1405 = vld [vmem:[%s21 + $0x78] sm:$0xff]
        %v1406 = vld [vmem:[%s21 + $0x80] sm:$0xf]
        %v1407 = vld [vmem:[%s21 + $0x84] sm:$0xff]
        %v1408 = vld [vmem:[%s21 + $0x8c] sm:$0xf]
        %v1409 = vld [vmem:[%s21 + $0x90] sm:$0xff]
        %v1410 = vld [vmem:[%s21 + $0x98] sm:$0xf]
        %v1411 = vld [vmem:[%s21 + $0x9c] sm:$0xff]
        %v1412 = vld [vmem:[%s21 + $0xa4] sm:$0xf]
        %v1413 = vld [vmem:[%s21 + $0xa8] sm:$0xff]
        %v1414 = vld [vmem:[%s21 + $0xb0] sm:$0xf]
        %v1415 = vld [vmem:[%s21 + $0xb4] sm:$0xff]
        %v1416 = vld [vmem:[%s21 + $0xbc] sm:$0xf]
        %v1449 = vunpack.c.l.b16 %v1385
        %v1450 = vunpack.c.h.b16 %v1385
        %v1451 = vunpack.c.l.b16 %v1386
        %v1452 = vunpack.c.l.b16 %v1387
        %v1453 = vunpack.c.h.b16 %v1387
        %v1454 = vunpack.c.l.b16 %v1388
        %v1455 = vunpack.c.l.b16 %v1389
        %v1456 = vunpack.c.h.b16 %v1389
        %v1457 = vunpack.c.l.b16 %v1390
        %v1458 = vunpack.c.l.b16 %v1391
        %v1459 = vunpack.c.h.b16 %v1391
        %v1460 = vunpack.c.l.b16 %v1392
        %v1461 = vunpack.c.l.b16 %v1393
        %v1462 = vunpack.c.h.b16 %v1393
        %v1463 = vunpack.c.l.b16 %v1394
        %v1464 = vunpack.c.l.b16 %v1395
        %v1465 = vunpack.c.h.b16 %v1395
        %v1466 = vunpack.c.l.b16 %v1396
        %v1467 = vunpack.c.l.b16 %v1397
        %v1468 = vunpack.c.h.b16 %v1397
        %v1469 = vunpack.c.l.b16 %v1398
        %v1470 = vunpack.c.l.b16 %v1399
        %v1471 = vunpack.c.h.b16 %v1399
        %v1472 = vunpack.c.l.b16 %v1400
        %v1473 = vunpack.c.l.b16 %v1401
        %v1474 = vunpack.c.h.b16 %v1401
        %v1475 = vunpack.c.l.b16 %v1402
        %v1476 = vunpack.c.l.b16 %v1403
        %v1477 = vunpack.c.h.b16 %v1403
        %v1478 = vunpack.c.l.b16 %v1404
        %v1479 = vunpack.c.l.b16 %v1405
        %v1480 = vunpack.c.h.b16 %v1405
        %v1481 = vunpack.c.l.b16 %v1406
        %v1482 = vunpack.c.l.b16 %v1407
        %v1483 = vunpack.c.h.b16 %v1407
        %v1484 = vunpack.c.l.b16 %v1408
        %v1485 = vunpack.c.l.b16 %v1409
        %v1486 = vunpack.c.h.b16 %v1409
        %v1487 = vunpack.c.l.b16 %v1410
        %v1488 = vunpack.c.l.b16 %v1411
        %v1489 = vunpack.c.h.b16 %v1411
        %v1490 = vunpack.c.l.b16 %v1412
        %v1491 = vunpack.c.l.b16 %v1413
        %v1492 = vunpack.c.h.b16 %v1413
        %v1493 = vunpack.c.l.b16 %v1414
        %v1494 = vunpack.c.l.b16 %v1415
        %v1495 = vunpack.c.h.b16 %v1415
        %v1496 = vunpack.c.l.b16 %v1416
        %v1497 = vpack.c.b16 %v1452, %v1449
        %v1498 = vpack.c.b16 %v1453, %v1450
        %v1499 = vpack.c.b16 %v1454, %v1451
        %v1500 = vpack.c.b16 %v1458, %v1455
        %v1501 = vpack.c.b16 %v1459, %v1456
        %v1502 = vpack.c.b16 %v1460, %v1457
        %v1503 = vpack.c.b16 %v1464, %v1461
        %v1504 = vpack.c.b16 %v1465, %v1462
        %v1505 = vpack.c.b16 %v1466, %v1463
        %v1506 = vpack.c.b16 %v1470, %v1467
        %v1507 = vpack.c.b16 %v1471, %v1468
        %v1508 = vpack.c.b16 %v1472, %v1469
        %v1509 = vpack.c.b16 %v1476, %v1473
        %v1510 = vpack.c.b16 %v1477, %v1474
        %v1511 = vpack.c.b16 %v1478, %v1475
        %v1512 = vpack.c.b16 %v1482, %v1479
        %v1513 = vpack.c.b16 %v1483, %v1480
        %v1514 = vpack.c.b16 %v1484, %v1481
        %v1515 = vpack.c.b16 %v1488, %v1485
        %v1516 = vpack.c.b16 %v1489, %v1486
        %v1517 = vpack.c.b16 %v1490, %v1487
        %v1518 = vpack.c.b16 %v1494, %v1491
        %v1519 = vpack.c.b16 %v1495, %v1492
        %v1520 = vpack.c.b16 %v1496, %v1493
        %1545 = vmatprep.subr.bf16.mxu0 %v1498
        %1546 = vmatpush1.bf16.msra.mxu0 %v1497
        %1547 = vmatprep.subr.bf16.mxu0 %v1501
        %1548 = vmatpush1.bf16.msra.mxu0 %v1500
        %1549 = vmatprep.subr.bf16.mxu0 %v1504
        %1550 = vmatpush1.bf16.msra.mxu0 %v1503
        %1551 = vmatprep.subr.bf16.mxu0 %v1507
        %1552 = vmatpush1.bf16.msra.mxu0 %v1506
        %1553 = vmatprep.subr.bf16.mxu0 %v1510
        %1554 = vmatpush1.bf16.msra.mxu0 %v1509
        %1555 = vmatprep.subr.bf16.mxu0 %v1513
        %1556 = vmatpush1.bf16.msra.mxu0 %v1512
        %1557 = vmatprep.subr.bf16.mxu0 %v1516
        %1558 = vmatpush1.bf16.msra.mxu0 %v1515
        %1559 = vmatprep.subr.bf16.mxu0 %v1519
        %1560 = vmatpush1.bf16.msra.mxu0 %v1518
        %1561 = vmatprep.subr.bf16.mxu0 0
        %1562 = vmatpush1.bf16.msra.mxu0 0
        %1563 = vmatprep.subr.bf16.mxu0 0
        %1564 = vmatpush1.bf16.msra.mxu0 0
        %1565 = vmatprep.subr.bf16.mxu0 0
        %1566 = vmatpush1.bf16.msra.mxu0 0
        %1567 = vmatprep.subr.bf16.mxu0 0
        %1568 = vmatpush1.bf16.msra.mxu0 0
        %1569 = vmatprep.subr.bf16.mxu0 0
        %1570 = vmatpush1.bf16.msra.mxu0 0
        %1571 = vmatprep.subr.bf16.mxu0 0
        %1572 = vmatpush1.bf16.msra.mxu0 0
        %1573 = vmatprep.subr.bf16.mxu0 0
        %1574 = vmatpush1.bf16.msra.mxu0 0
        %1575 = vmatprep.subr.bf16.mxu0 0
        %1576 = vmatpush1.bf16.msra.mxu0 0
        %1577 = vmatprep.mubr.bf16.mxu0 0
        %1578 = vmatmul.mubr.bf16.gmra.mrb[0].mxu0 %v1384
        %v1579 = vpop.f32.mrb[0].mxu0
        %v1580 = vadd.f32 0.0, %v1579
        %v1581 = vpop.f32.mrb[0].mxu0
        %v1582 = vadd.f32 0.0, %v1581
        %v1583 = vpop.f32.mrb[0].mxu0
        %v1584 = vpop.f32.mrb[0].mxu0
        %1585 = vdwg.mxu0
        %1586 = vmatprep.subr.bf16.mxu0 0
        %1587 = vmatpush1.bf16.msra.mxu0 %v1499
        %1588 = vmatprep.subr.bf16.mxu0 0
        %1589 = vmatpush1.bf16.msra.mxu0 %v1502
        %1590 = vmatprep.subr.bf16.mxu0 0
        %1591 = vmatpush1.bf16.msra.mxu0 %v1505
        %1592 = vmatprep.subr.bf16.mxu0 0
        %1593 = vmatpush1.bf16.msra.mxu0 %v1508
        %1594 = vmatprep.subr.bf16.mxu0 0
        %1595 = vmatpush1.bf16.msra.mxu0 %v1511
        %1596 = vmatprep.subr.bf16.mxu0 0
        %1597 = vmatpush1.bf16.msra.mxu0 %v1514
        %1598 = vmatprep.subr.bf16.mxu0 0
        %1599 = vmatpush1.bf16.msra.mxu0 %v1517
        %1600 = vmatprep.subr.bf16.mxu0 0
        %1601 = vmatpush1.bf16.msra.mxu0 %v1520
        %1602 = vmatprep.subr.bf16.mxu0 0
        %1603 = vmatpush1.bf16.msra.mxu0 0
        %1604 = vmatprep.subr.bf16.mxu0 0
        %1605 = vmatpush1.bf16.msra.mxu0 0
        %1606 = vmatprep.subr.bf16.mxu0 0
        %1607 = vmatpush1.bf16.msra.mxu0 0
        %1608 = vmatprep.subr.bf16.mxu0 0
        %1609 = vmatpush1.bf16.msra.mxu0 0
        %1610 = vmatprep.subr.bf16.mxu0 0
        %1611 = vmatpush1.bf16.msra.mxu0 0
        %1612 = vmatprep.subr.bf16.mxu0 0
        %1613 = vmatpush1.bf16.msra.mxu0 0
        %1614 = vmatprep.subr.bf16.mxu0 0
        %1615 = vmatpush1.bf16.msra.mxu0 0
        %1616 = vmatprep.subr.bf16.mxu0 0
        %1617 = vmatpush1.bf16.msra.mxu0 0
        %1618 = vmatprep.mubr.bf16.mxu0 0
        %1619 = vmatmul.mubr.bf16.gmra.mrb[0].mxu0 %v1384
        %v1620 = vpop.f32.mrb[0].mxu0
        %v1621 = vadd.f32 0.0, %v1620
        %v1622 = vpop.f32.mrb[0].mxu0
        %v1623 = vpop.f32.mrb[0].mxu0
        %v1624 = vpop.f32.mrb[0].mxu0
        %1625 = vdwg.mxu0
        %v1626 = vpack.c.bf16 %v1582, %v1582
        %v1627 = vpack.c.bf16 %v1621, %v1621
        %v1629 = vrot.slane %v1626, 4
        %vm1630 = vcmask 1043456
        %v1633 = vsel %vm1630, %v1626, %v1629
        %v1651 = vunpack.c.l.b16 %v1332
        %v1652 = vunpack.c.l.b16 %v1333
        %v1653 = vunpack.c.l.b16 %v1334
        %v1654 = vunpack.c.l.b16 %v1335
        %v1655 = vunpack.c.l.b16 %v1336
        %v1656 = vunpack.c.l.b16 %v1337
        %v1657 = vunpack.c.l.b16 %v1338
        %v1658 = vunpack.c.l.b16 %v1339
        %v1659 = vunpack.c.l.b16 %v1340
        %v1660 = vunpack.c.l.b16 %v1341
        %v1661 = vunpack.c.l.b16 %v1342
        %v1662 = vunpack.c.l.b16 %v1343
        %v1663 = vunpack.c.l.b16 %v1344
        %v1664 = vunpack.c.l.b16 %v1345
        %v1665 = vunpack.c.l.b16 %v1346
        %v1666 = vunpack.c.l.b16 %v1347
        %v1667 = vpack.c.b16 %v1652, %v1651
        %v1668 = vpack.c.b16 %v1654, %v1653
        %v1669 = vpack.c.b16 %v1656, %v1655
        %v1670 = vpack.c.b16 %v1658, %v1657
        %v1671 = vpack.c.b16 %v1660, %v1659
        %v1672 = vpack.c.b16 %v1662, %v1661
        %v1673 = vpack.c.b16 %v1664, %v1663
        %v1674 = vpack.c.b16 %v1666, %v1665
        %v1683 = vmul.bf16 %v1633, %v1667
        %v1684 = vmul.bf16 %v1633, %v1668
        %v1685 = vmul.bf16 %v1633, %v1669
        %v1686 = vmul.bf16 %v1633, %v1670
        %v1687 = vmul.bf16 %v1633, %v1671
        %v1688 = vmul.bf16 %v1633, %v1672
        %v1689 = vmul.bf16 %v1633, %v1673
        %v1690 = vmul.bf16 %v1633, %v1674
        %v1692 = vrot.slane %v1627, 4
        %v1695 = vsel %vm1630, %v1627, %v1692
        %v1697 = vmul.bf16 %v1695, %v1667
        %v1698 = vmul.bf16 %v1695, %v1668
        %v1699 = vmul.bf16 %v1695, %v1669
        %v1700 = vmul.bf16 %v1695, %v1670
        %v1701 = vmul.bf16 %v1695, %v1671
        %v1702 = vmul.bf16 %v1695, %v1672
        %v1703 = vmul.bf16 %v1695, %v1673
        %v1704 = vmul.bf16 %v1695, %v1674
        %v1705 = vld [vmem:[%s23] sm:$0x1]
        %v1707 = vlaneseq
        %v1708 = vshrl.u32 %v1707, 7
        %v1709 = vsub.s32 0, %v1708
        %v1710 = vrot.slane %v1705, %v1709
        %v1712 = vadd.f32 %v1580, %v1710
        %v1713 = vpack.c.bf16 %v1712, %v1712
        %v1714 = vld [vmem:[#allocation7] sm:$0x1]
        %v1716 = vlaneseq
        %v1717 = vshrl.u32 %v1716, 7
        %v1718 = vsub.s32 0, %v1717
        %v1719 = vrot.slane %v1714, %v1718
        %v1721 = vadd.f32 %v1580, %v1719
        %v1722 = vpack.c.bf16 %v1721, %v1721
        %v1727 = vunpack.c.l.b16 %v1380
        %v1728 = vunpack.c.h.b16 %v1380
        %v1729 = vunpack.c.l.b16 %v1381
        %v1730 = vunpack.c.h.b16 %v1381
        %v1731 = vunpack.c.l.b16 %v1382
        %v1732 = vunpack.c.h.b16 %v1382
        %v1733 = vunpack.c.l.b16 %v1383
        %v1734 = vunpack.c.h.b16 %v1383
        %v1735 = vpack.c.b16 %v1727, %v1727
        %v1736 = vpack.c.b16 %v1728, %v1728
        %v1737 = vpack.c.b16 %v1729, %v1729
        %v1738 = vpack.c.b16 %v1730, %v1730
        %v1739 = vpack.c.b16 %v1731, %v1731
        %v1740 = vpack.c.b16 %v1732, %v1732
        %v1741 = vpack.c.b16 %v1733, %v1733
        %v1742 = vpack.c.b16 %v1734, %v1734
        %v1751 = vmul.bf16 %v1722, %v1735
        %v1752 = vmul.bf16 %v1722, %v1736
        %v1753 = vmul.bf16 %v1722, %v1737
        %v1754 = vmul.bf16 %v1722, %v1738
        %v1755 = vmul.bf16 %v1722, %v1739
        %v1756 = vmul.bf16 %v1722, %v1740
        %v1757 = vmul.bf16 %v1722, %v1741
        %v1758 = vmul.bf16 %v1722, %v1742
        %v1759 = vld [vmem:[#allocation5] sm:$0xf]
        %v1760 = vld [vmem:[#allocation5 + $0x4] sm:$0xf]
        %v1761 = vld [vmem:[#allocation5 + $0x8] sm:$0xf]
        %v1762 = vld [vmem:[#allocation5 + $0xc] sm:$0xf]
        %v1763 = vld [vmem:[#allocation5 + $0x10] sm:$0xf]
        %v1764 = vld [vmem:[#allocation5 + $0x14] sm:$0xf]
        %v1765 = vld [vmem:[#allocation5 + $0x18] sm:$0xf]
        %v1766 = vld [vmem:[#allocation5 + $0x1c] sm:$0xf]
        %v1767 = vld [vmem:[#allocation5 + $0x20] sm:$0xf]
        %v1768 = vld [vmem:[#allocation5 + $0x24] sm:$0xf]
        %v1769 = vld [vmem:[#allocation5 + $0x28] sm:$0xf]
        %v1770 = vld [vmem:[#allocation5 + $0x2c] sm:$0xf]
        %v1771 = vld [vmem:[#allocation5 + $0x30] sm:$0xf]
        %v1772 = vld [vmem:[#allocation5 + $0x34] sm:$0xf]
        %v1773 = vld [vmem:[#allocation5 + $0x38] sm:$0xf]
        %v1774 = vld [vmem:[#allocation5 + $0x3c] sm:$0xf]
        %v1775 = vld [vmem:[#allocation5 + $0x40] sm:$0xf]
        %v1776 = vld [vmem:[#allocation5 + $0x44] sm:$0xf]
        %v1777 = vld [vmem:[#allocation5 + $0x48] sm:$0xf]
        %v1778 = vld [vmem:[#allocation5 + $0x4c] sm:$0xf]
        %v1779 = vld [vmem:[#allocation5 + $0x50] sm:$0xf]
        %v1780 = vld [vmem:[#allocation5 + $0x54] sm:$0xf]
        %v1781 = vld [vmem:[#allocation5 + $0x58] sm:$0xf]
        %v1782 = vld [vmem:[#allocation5 + $0x5c] sm:$0xf]
        %v1783 = vld [vmem:[#allocation5 + $0x60] sm:$0xf]
        %v1784 = vld [vmem:[#allocation5 + $0x64] sm:$0xf]
        %v1785 = vld [vmem:[#allocation5 + $0x68] sm:$0xf]
        %v1786 = vld [vmem:[#allocation5 + $0x6c] sm:$0xf]
        %v1787 = vld [vmem:[#allocation5 + $0x70] sm:$0xf]
        %v1788 = vld [vmem:[#allocation5 + $0x74] sm:$0xf]
        %v1789 = vld [vmem:[#allocation5 + $0x78] sm:$0xf]
        %v1790 = vld [vmem:[#allocation5 + $0x7c] sm:$0xf]
        %v1791 = vld [vmem:[#allocation5 + $0x80] sm:$0xf]
        %v1792 = vld [vmem:[#allocation5 + $0x84] sm:$0xf]
        %v1793 = vld [vmem:[#allocation5 + $0x88] sm:$0xf]
        %v1794 = vld [vmem:[#allocation5 + $0x8c] sm:$0xf]
        %v1795 = vld [vmem:[#allocation5 + $0x90] sm:$0xf]
        %v1796 = vld [vmem:[#allocation5 + $0x94] sm:$0xf]
        %v1797 = vld [vmem:[#allocation5 + $0x98] sm:$0xf]
        %v1798 = vld [vmem:[#allocation5 + $0x9c] sm:$0xf]
        %v1799 = vld [vmem:[#allocation5 + $0xa0] sm:$0xf]
        %v1800 = vld [vmem:[#allocation5 + $0xa4] sm:$0xf]
        %v1801 = vld [vmem:[#allocation5 + $0xa8] sm:$0xf]
        %v1802 = vld [vmem:[#allocation5 + $0xac] sm:$0xf]
        %v1803 = vld [vmem:[#allocation5 + $0xb0] sm:$0xf]
        %v1804 = vld [vmem:[#allocation5 + $0xb4] sm:$0xf]
        %v1805 = vld [vmem:[#allocation5 + $0xb8] sm:$0xf]
        %v1806 = vld [vmem:[#allocation5 + $0xbc] sm:$0xf]
        %v1807 = vld [vmem:[#allocation5 + $0xc0] sm:$0xf]
        %v1808 = vld [vmem:[#allocation5 + $0xc4] sm:$0xf]
        %v1809 = vld [vmem:[#allocation5 + $0xc8] sm:$0xf]
        %v1810 = vld [vmem:[#allocation5 + $0xcc] sm:$0xf]
        %v1811 = vld [vmem:[#allocation5 + $0xd0] sm:$0xf]
        %v1812 = vld [vmem:[#allocation5 + $0xd4] sm:$0xf]
        %v1813 = vld [vmem:[#allocation5 + $0xd8] sm:$0xf]
        %v1814 = vld [vmem:[#allocation5 + $0xdc] sm:$0xf]
        %v1815 = vld [vmem:[#allocation5 + $0xe0] sm:$0xf]
        %v1816 = vld [vmem:[#allocation5 + $0xe4] sm:$0xf]
        %v1817 = vld [vmem:[#allocation5 + $0xe8] sm:$0xf]
        %v1818 = vld [vmem:[#allocation5 + $0xec] sm:$0xf]
        %v1819 = vld [vmem:[#allocation5 + $0xf0] sm:$0xf]
        %v1820 = vld [vmem:[#allocation5 + $0xf4] sm:$0xf]
        %v1821 = vld [vmem:[#allocation5 + $0xf8] sm:$0xf]
        %v1822 = vld [vmem:[#allocation5 + $0xfc] sm:$0xf]
        %v1823 = vld [vmem:[#allocation5 + $0x100] sm:$0xf]
        %v1824 = vld [vmem:[#allocation5 + $0x104] sm:$0xf]
        %v1825 = vld [vmem:[#allocation5 + $0x108] sm:$0xf]
        %v1826 = vld [vmem:[#allocation5 + $0x10c] sm:$0xf]
        %v1827 = vld [vmem:[#allocation5 + $0x110] sm:$0xf]
        %v1828 = vld [vmem:[#allocation5 + $0x114] sm:$0xf]
        %v1829 = vld [vmem:[#allocation5 + $0x118] sm:$0xf]
        %v1830 = vld [vmem:[#allocation5 + $0x11c] sm:$0xf]
        %v1831 = vld [vmem:[#allocation5 + $0x120] sm:$0xf]
        %v1832 = vld [vmem:[#allocation5 + $0x124] sm:$0xf]
        %v1833 = vld [vmem:[#allocation5 + $0x128] sm:$0xf]
        %v1834 = vld [vmem:[#allocation5 + $0x12c] sm:$0xf]
        %v1835 = vld [vmem:[#allocation5 + $0x130] sm:$0xf]
        %v1836 = vld [vmem:[#allocation5 + $0x134] sm:$0xf]
        %v1837 = vld [vmem:[#allocation5 + $0x138] sm:$0xf]
        %v1838 = vld [vmem:[#allocation5 + $0x13c] sm:$0xf]
        %v1839 = vld [vmem:[#allocation5 + $0x140] sm:$0xf]
        %v1840 = vld [vmem:[#allocation5 + $0x144] sm:$0xf]
        %v1841 = vld [vmem:[#allocation5 + $0x148] sm:$0xf]
        %v1842 = vld [vmem:[#allocation5 + $0x14c] sm:$0xf]
        %v1843 = vld [vmem:[#allocation5 + $0x150] sm:$0xf]
        %v1844 = vld [vmem:[#allocation5 + $0x154] sm:$0xf]
        %v1845 = vld [vmem:[#allocation5 + $0x158] sm:$0xf]
        %v1846 = vld [vmem:[#allocation5 + $0x15c] sm:$0xf]
        %v1847 = vld [vmem:[#allocation5 + $0x160] sm:$0xf]
        %v1848 = vld [vmem:[#allocation5 + $0x164] sm:$0xf]
        %v1849 = vld [vmem:[#allocation5 + $0x168] sm:$0xf]
        %v1850 = vld [vmem:[#allocation5 + $0x16c] sm:$0xf]
        %v1851 = vld [vmem:[#allocation5 + $0x170] sm:$0xf]
        %v1852 = vld [vmem:[#allocation5 + $0x174] sm:$0xf]
        %v1853 = vld [vmem:[#allocation5 + $0x178] sm:$0xf]
        %v1854 = vld [vmem:[#allocation5 + $0x17c] sm:$0xf]
        %v1855 = vld [vmem:[#allocation5 + $0x180] sm:$0xf]
        %v1856 = vld [vmem:[#allocation5 + $0x184] sm:$0xf]
        %v1857 = vld [vmem:[#allocation5 + $0x188] sm:$0xf]
        %v1858 = vld [vmem:[#allocation5 + $0x18c] sm:$0xf]
        %v1859 = vld [vmem:[#allocation5 + $0x190] sm:$0xf]
        %v1860 = vld [vmem:[#allocation5 + $0x194] sm:$0xf]
        %v1861 = vld [vmem:[#allocation5 + $0x198] sm:$0xf]
        %v1862 = vld [vmem:[#allocation5 + $0x19c] sm:$0xf]
        %v1863 = vld [vmem:[#allocation5 + $0x1a0] sm:$0xf]
        %v1864 = vld [vmem:[#allocation5 + $0x1a4] sm:$0xf]
        %v1865 = vld [vmem:[#allocation5 + $0x1a8] sm:$0xf]
        %v1866 = vld [vmem:[#allocation5 + $0x1ac] sm:$0xf]
        %v1867 = vld [vmem:[#allocation5 + $0x1b0] sm:$0xf]
        %v1868 = vld [vmem:[#allocation5 + $0x1b4] sm:$0xf]
        %v1869 = vld [vmem:[#allocation5 + $0x1b8] sm:$0xf]
        %v1870 = vld [vmem:[#allocation5 + $0x1bc] sm:$0xf]
        %v1871 = vld [vmem:[#allocation5 + $0x1c0] sm:$0xf]
        %v1872 = vld [vmem:[#allocation5 + $0x1c4] sm:$0xf]
        %v1873 = vld [vmem:[#allocation5 + $0x1c8] sm:$0xf]
        %v1874 = vld [vmem:[#allocation5 + $0x1cc] sm:$0xf]
        %v1875 = vld [vmem:[#allocation5 + $0x1d0] sm:$0xf]
        %v1876 = vld [vmem:[#allocation5 + $0x1d4] sm:$0xf]
        %v1877 = vld [vmem:[#allocation5 + $0x1d8] sm:$0xf]
        %v1878 = vld [vmem:[#allocation5 + $0x1dc] sm:$0xf]
        %v1879 = vld [vmem:[#allocation5 + $0x1e0] sm:$0xf]
        %v1880 = vld [vmem:[#allocation5 + $0x1e4] sm:$0xf]
        %v1881 = vld [vmem:[#allocation5 + $0x1e8] sm:$0xf]
        %v1882 = vld [vmem:[#allocation5 + $0x1ec] sm:$0xf]
        %v1883 = vld [vmem:[#allocation5 + $0x1f0] sm:$0xf]
        %v1884 = vld [vmem:[#allocation5 + $0x1f4] sm:$0xf]
        %v1885 = vld [vmem:[#allocation5 + $0x1f8] sm:$0xf]
        %v1886 = vld [vmem:[#allocation5 + $0x1fc] sm:$0xf]
        %v2015 = vunpack.c.l.b16 %v1759
        %v2016 = vunpack.c.l.b16 %v1760
        %v2017 = vunpack.c.l.b16 %v1761
        %v2018 = vunpack.c.l.b16 %v1762
        %v2019 = vunpack.c.l.b16 %v1763
        %v2020 = vunpack.c.l.b16 %v1764
        %v2021 = vunpack.c.l.b16 %v1765
        %v2022 = vunpack.c.l.b16 %v1766
        %v2023 = vunpack.c.l.b16 %v1767
        %v2024 = vunpack.c.l.b16 %v1768
        %v2025 = vunpack.c.l.b16 %v1769
        %v2026 = vunpack.c.l.b16 %v1770
        %v2027 = vunpack.c.l.b16 %v1771
        %v2028 = vunpack.c.l.b16 %v1772
        %v2029 = vunpack.c.l.b16 %v1773
        %v2030 = vunpack.c.l.b16 %v1774
        %v2031 = vunpack.c.l.b16 %v1775
        %v2032 = vunpack.c.l.b16 %v1776
        %v2033 = vunpack.c.l.b16 %v1777
        %v2034 = vunpack.c.l.b16 %v1778
        %v2035 = vunpack.c.l.b16 %v1779
        %v2036 = vunpack.c.l.b16 %v1780
        %v2037 = vunpack.c.l.b16 %v1781
        %v2038 = vunpack.c.l.b16 %v1782
        %v2039 = vunpack.c.l.b16 %v1783
        %v2040 = vunpack.c.l.b16 %v1784
        %v2041 = vunpack.c.l.b16 %v1785
        %v2042 = vunpack.c.l.b16 %v1786
        %v2043 = vunpack.c.l.b16 %v1787
        %v2044 = vunpack.c.l.b16 %v1788
        %v2045 = vunpack.c.l.b16 %v1789
        %v2046 = vunpack.c.l.b16 %v1790
        %v2047 = vunpack.c.l.b16 %v1791
        %v2048 = vunpack.c.l.b16 %v1792
        %v2049 = vunpack.c.l.b16 %v1793
        %v2050 = vunpack.c.l.b16 %v1794
        %v2051 = vunpack.c.l.b16 %v1795
        %v2052 = vunpack.c.l.b16 %v1796
        %v2053 = vunpack.c.l.b16 %v1797
        %v2054 = vunpack.c.l.b16 %v1798
        %v2055 = vunpack.c.l.b16 %v1799
        %v2056 = vunpack.c.l.b16 %v1800
        %v2057 = vunpack.c.l.b16 %v1801
        %v2058 = vunpack.c.l.b16 %v1802
        %v2059 = vunpack.c.l.b16 %v1803
        %v2060 = vunpack.c.l.b16 %v1804
        %v2061 = vunpack.c.l.b16 %v1805
        %v2062 = vunpack.c.l.b16 %v1806
        %v2063 = vunpack.c.l.b16 %v1807
        %v2064 = vunpack.c.l.b16 %v1808
        %v2065 = vunpack.c.l.b16 %v1809
        %v2066 = vunpack.c.l.b16 %v1810
        %v2067 = vunpack.c.l.b16 %v1811
        %v2068 = vunpack.c.l.b16 %v1812
        %v2069 = vunpack.c.l.b16 %v1813
        %v2070 = vunpack.c.l.b16 %v1814
        %v2071 = vunpack.c.l.b16 %v1815
        %v2072 = vunpack.c.l.b16 %v1816
        %v2073 = vunpack.c.l.b16 %v1817
        %v2074 = vunpack.c.l.b16 %v1818
        %v2075 = vunpack.c.l.b16 %v1819
        %v2076 = vunpack.c.l.b16 %v1820
        %v2077 = vunpack.c.l.b16 %v1821
        %v2078 = vunpack.c.l.b16 %v1822
        %v2079 = vunpack.c.l.b16 %v1823
        %v2080 = vunpack.c.l.b16 %v1824
        %v2081 = vunpack.c.l.b16 %v1825
        %v2082 = vunpack.c.l.b16 %v1826
        %v2083 = vunpack.c.l.b16 %v1827
        %v2084 = vunpack.c.l.b16 %v1828
        %v2085 = vunpack.c.l.b16 %v1829
        %v2086 = vunpack.c.l.b16 %v1830
        %v2087 = vunpack.c.l.b16 %v1831
        %v2088 = vunpack.c.l.b16 %v1832
        %v2089 = vunpack.c.l.b16 %v1833
        %v2090 = vunpack.c.l.b16 %v1834
        %v2091 = vunpack.c.l.b16 %v1835
        %v2092 = vunpack.c.l.b16 %v1836
        %v2093 = vunpack.c.l.b16 %v1837
        %v2094 = vunpack.c.l.b16 %v1838
        %v2095 = vunpack.c.l.b16 %v1839
        %v2096 = vunpack.c.l.b16 %v1840
        %v2097 = vunpack.c.l.b16 %v1841
        %v2098 = vunpack.c.l.b16 %v1842
        %v2099 = vunpack.c.l.b16 %v1843
        %v2100 = vunpack.c.l.b16 %v1844
        %v2101 = vunpack.c.l.b16 %v1845
        %v2102 = vunpack.c.l.b16 %v1846
        %v2103 = vunpack.c.l.b16 %v1847
        %v2104 = vunpack.c.l.b16 %v1848
        %v2105 = vunpack.c.l.b16 %v1849
        %v2106 = vunpack.c.l.b16 %v1850
        %v2107 = vunpack.c.l.b16 %v1851
        %v2108 = vunpack.c.l.b16 %v1852
        %v2109 = vunpack.c.l.b16 %v1853
        %v2110 = vunpack.c.l.b16 %v1854
        %v2111 = vunpack.c.l.b16 %v1855
        %v2112 = vunpack.c.l.b16 %v1856
        %v2113 = vunpack.c.l.b16 %v1857
        %v2114 = vunpack.c.l.b16 %v1858
        %v2115 = vunpack.c.l.b16 %v1859
        %v2116 = vunpack.c.l.b16 %v1860
        %v2117 = vunpack.c.l.b16 %v1861
        %v2118 = vunpack.c.l.b16 %v1862
        %v2119 = vunpack.c.l.b16 %v1863
        %v2120 = vunpack.c.l.b16 %v1864
        %v2121 = vunpack.c.l.b16 %v1865
        %v2122 = vunpack.c.l.b16 %v1866
        %v2123 = vunpack.c.l.b16 %v1867
        %v2124 = vunpack.c.l.b16 %v1868
        %v2125 = vunpack.c.l.b16 %v1869
        %v2126 = vunpack.c.l.b16 %v1870
        %v2127 = vunpack.c.l.b16 %v1871
        %v2128 = vunpack.c.l.b16 %v1872
        %v2129 = vunpack.c.l.b16 %v1873
        %v2130 = vunpack.c.l.b16 %v1874
        %v2131 = vunpack.c.l.b16 %v1875
        %v2132 = vunpack.c.l.b16 %v1876
        %v2133 = vunpack.c.l.b16 %v1877
        %v2134 = vunpack.c.l.b16 %v1878
        %v2135 = vunpack.c.l.b16 %v1879
        %v2136 = vunpack.c.l.b16 %v1880
        %v2137 = vunpack.c.l.b16 %v1881
        %v2138 = vunpack.c.l.b16 %v1882
        %v2139 = vunpack.c.l.b16 %v1883
        %v2140 = vunpack.c.l.b16 %v1884
        %v2141 = vunpack.c.l.b16 %v1885
        %v2142 = vunpack.c.l.b16 %v1886
        %v2143 = vpack.c.b16 %v2016, %v2015
        %v2144 = vpack.c.b16 %v2018, %v2017
        %v2145 = vpack.c.b16 %v2020, %v2019
        %v2146 = vpack.c.b16 %v2022, %v2021
        %v2147 = vpack.c.b16 %v2024, %v2023
        %v2148 = vpack.c.b16 %v2026, %v2025
        %v2149 = vpack.c.b16 %v2028, %v2027
        %v2150 = vpack.c.b16 %v2030, %v2029
        %v2151 = vpack.c.b16 %v2032, %v2031
        %v2152 = vpack.c.b16 %v2034, %v2033
        %v2153 = vpack.c.b16 %v2036, %v2035
        %v2154 = vpack.c.b16 %v2038, %v2037
        %v2155 = vpack.c.b16 %v2040, %v2039
        %v2156 = vpack.c.b16 %v2042, %v2041
        %v2157 = vpack.c.b16 %v2044, %v2043
        %v2158 = vpack.c.b16 %v2046, %v2045
        %v2159 = vpack.c.b16 %v2048, %v2047
        %v2160 = vpack.c.b16 %v2050, %v2049
        %v2161 = vpack.c.b16 %v2052, %v2051
        %v2162 = vpack.c.b16 %v2054, %v2053
        %v2163 = vpack.c.b16 %v2056, %v2055
        %v2164 = vpack.c.b16 %v2058, %v2057
        %v2165 = vpack.c.b16 %v2060, %v2059
        %v2166 = vpack.c.b16 %v2062, %v2061
        %v2167 = vpack.c.b16 %v2064, %v2063
        %v2168 = vpack.c.b16 %v2066, %v2065
        %v2169 = vpack.c.b16 %v2068, %v2067
        %v2170 = vpack.c.b16 %v2070, %v2069
        %v2171 = vpack.c.b16 %v2072, %v2071
        %v2172 = vpack.c.b16 %v2074, %v2073
        %v2173 = vpack.c.b16 %v2076, %v2075
        %v2174 = vpack.c.b16 %v2078, %v2077
        %v2175 = vpack.c.b16 %v2080, %v2079
        %v2176 = vpack.c.b16 %v2082, %v2081
        %v2177 = vpack.c.b16 %v2084, %v2083
        %v2178 = vpack.c.b16 %v2086, %v2085
        %v2179 = vpack.c.b16 %v2088, %v2087
        %v2180 = vpack.c.b16 %v2090, %v2089
        %v2181 = vpack.c.b16 %v2092, %v2091
        %v2182 = vpack.c.b16 %v2094, %v2093
        %v2183 = vpack.c.b16 %v2096, %v2095
        %v2184 = vpack.c.b16 %v2098, %v2097
        %v2185 = vpack.c.b16 %v2100, %v2099
        %v2186 = vpack.c.b16 %v2102, %v2101
        %v2187 = vpack.c.b16 %v2104, %v2103
        %v2188 = vpack.c.b16 %v2106, %v2105
        %v2189 = vpack.c.b16 %v2108, %v2107
        %v2190 = vpack.c.b16 %v2110, %v2109
        %v2191 = vpack.c.b16 %v2112, %v2111
        %v2192 = vpack.c.b16 %v2114, %v2113
        %v2193 = vpack.c.b16 %v2116, %v2115
        %v2194 = vpack.c.b16 %v2118, %v2117
        %v2195 = vpack.c.b16 %v2120, %v2119
        %v2196 = vpack.c.b16 %v2122, %v2121
        %v2197 = vpack.c.b16 %v2124, %v2123
        %v2198 = vpack.c.b16 %v2126, %v2125
        %v2199 = vpack.c.b16 %v2128, %v2127
        %v2200 = vpack.c.b16 %v2130, %v2129
        %v2201 = vpack.c.b16 %v2132, %v2131
        %v2202 = vpack.c.b16 %v2134, %v2133
        %v2203 = vpack.c.b16 %v2136, %v2135
        %v2204 = vpack.c.b16 %v2138, %v2137
        %v2205 = vpack.c.b16 %v2140, %v2139
        %v2206 = vpack.c.b16 %v2142, %v2141
        %2271 = vmatprep.subr.bf16.mxu0 0
        %2272 = vmatpush1.bf16.msra.mxu0 %v2143
        %2273 = vmatprep.subr.bf16.mxu0 0
        %2274 = vmatpush1.bf16.msra.mxu0 %v2144
        %2275 = vmatprep.subr.bf16.mxu0 0
        %2276 = vmatpush1.bf16.msra.mxu0 %v2145
        %2277 = vmatprep.subr.bf16.mxu0 0
        %2278 = vmatpush1.bf16.msra.mxu0 %v2146
        %2279 = vmatprep.subr.bf16.mxu0 0
        %2280 = vmatpush1.bf16.msra.mxu0 %v2147
        %2281 = vmatprep.subr.bf16.mxu0 0
        %2282 = vmatpush1.bf16.msra.mxu0 %v2148
        %2283 = vmatprep.subr.bf16.mxu0 0
        %2284 = vmatpush1.bf16.msra.mxu0 %v2149
        %2285 = vmatprep.subr.bf16.mxu0 0
        %2286 = vmatpush1.bf16.msra.mxu0 %v2150
        %2287 = vmatprep.subr.bf16.mxu0 0
        %2288 = vmatpush1.bf16.msra.mxu0 %v2151
        %2289 = vmatprep.subr.bf16.mxu0 0
        %2290 = vmatpush1.bf16.msra.mxu0 %v2152
        %2291 = vmatprep.subr.bf16.mxu0 0
        %2292 = vmatpush1.bf16.msra.mxu0 %v2153
        %2293 = vmatprep.subr.bf16.mxu0 0
        %2294 = vmatpush1.bf16.msra.mxu0 %v2154
        %2295 = vmatprep.subr.bf16.mxu0 0
        %2296 = vmatpush1.bf16.msra.mxu0 %v2155
        %2297 = vmatprep.subr.bf16.mxu0 0
        %2298 = vmatpush1.bf16.msra.mxu0 %v2156
        %2299 = vmatprep.subr.bf16.mxu0 0
        %2300 = vmatpush1.bf16.msra.mxu0 %v2157
        %2301 = vmatprep.subr.bf16.mxu0 0
        %2302 = vmatpush1.bf16.msra.mxu0 %v2158
        %2303 = vmatprep.mubr.bf16.mxu0 %v1752
        %2304 = vmatmul.mubr.bf16.gmra.mrb[0].mxu0 %v1751
        %v2305 = vpop.f32.mrb[0].mxu0
        %v2306 = vadd.f32 0.0, %v2305
        %v2307 = vpop.f32.mrb[0].mxu0
        %v2308 = vpop.f32.mrb[0].mxu0
        %v2309 = vpop.f32.mrb[0].mxu0
        %2310 = vdwg.mxu0
        %2311 = vmatprep.subr.bf16.mxu0 0
        %2312 = vmatpush1.bf16.msra.mxu0 %v2159
        %2313 = vmatprep.subr.bf16.mxu0 0
        %2314 = vmatpush1.bf16.msra.mxu0 %v2160
        %2315 = vmatprep.subr.bf16.mxu0 0
        %2316 = vmatpush1.bf16.msra.mxu0 %v2161
        %2317 = vmatprep.subr.bf16.mxu0 0
        %2318 = vmatpush1.bf16.msra.mxu0 %v2162
        %2319 = vmatprep.subr.bf16.mxu0 0
        %2320 = vmatpush1.bf16.msra.mxu0 %v2163
        %2321 = vmatprep.subr.bf16.mxu0 0
        %2322 = vmatpush1.bf16.msra.mxu0 %v2164
        %2323 = vmatprep.subr.bf16.mxu0 0
        %2324 = vmatpush1.bf16.msra.mxu0 %v2165
        %2325 = vmatprep.subr.bf16.mxu0 0
        %2326 = vmatpush1.bf16.msra.mxu0 %v2166
        %2327 = vmatprep.subr.bf16.mxu0 0
        %2328 = vmatpush1.bf16.msra.mxu0 %v2167
        %2329 = vmatprep.subr.bf16.mxu0 0
        %2330 = vmatpush1.bf16.msra.mxu0 %v2168
        %2331 = vmatprep.subr.bf16.mxu0 0
        %2332 = vmatpush1.bf16.msra.mxu0 %v2169
        %2333 = vmatprep.subr.bf16.mxu0 0
        %2334 = vmatpush1.bf16.msra.mxu0 %v2170
        %2335 = vmatprep.subr.bf16.mxu0 0
        %2336 = vmatpush1.bf16.msra.mxu0 %v2171
        %2337 = vmatprep.subr.bf16.mxu0 0
        %2338 = vmatpush1.bf16.msra.mxu0 %v2172
        %2339 = vmatprep.subr.bf16.mxu0 0
        %2340 = vmatpush1.bf16.msra.mxu0 %v2173
        %2341 = vmatprep.subr.bf16.mxu0 0
        %2342 = vmatpush1.bf16.msra.mxu0 %v2174
        %2343 = vmatprep.mubr.bf16.mxu0 %v1754
        %2344 = vmatmul.mubr.bf16.gmra.mrb[0].mxu0 %v1753
        %v2345 = vpop.f32.mrb[0].mxu0
        %v2346 = vadd.f32 %v2306, %v2345
        %v2347 = vpop.f32.mrb[0].mxu0
        %v2348 = vpop.f32.mrb[0].mxu0
        %v2349 = vpop.f32.mrb[0].mxu0
        %2350 = vdwg.mxu0
        %2351 = vmatprep.subr.bf16.mxu0 0
        %2352 = vmatpush1.bf16.msra.mxu0 %v2175
        %2353 = vmatprep.subr.bf16.mxu0 0
        %2354 = vmatpush1.bf16.msra.mxu0 %v2176
        %2355 = vmatprep.subr.bf16.mxu0 0
        %2356 = vmatpush1.bf16.msra.mxu0 %v2177
        %2357 = vmatprep.subr.bf16.mxu0 0
        %2358 = vmatpush1.bf16.msra.mxu0 %v2178
        %2359 = vmatprep.subr.bf16.mxu0 0
        %2360 = vmatpush1.bf16.msra.mxu0 %v2179
        %2361 = vmatprep.subr.bf16.mxu0 0
        %2362 = vmatpush1.bf16.msra.mxu0 %v2180
        %2363 = vmatprep.subr.bf16.mxu0 0
        %2364 = vmatpush1.bf16.msra.mxu0 %v2181
        %2365 = vmatprep.subr.bf16.mxu0 0
        %2366 = vmatpush1.bf16.msra.mxu0 %v2182
        %2367 = vmatprep.subr.bf16.mxu0 0
        %2368 = vmatpush1.bf16.msra.mxu0 %v2183
        %2369 = vmatprep.subr.bf16.mxu0 0
        %2370 = vmatpush1.bf16.msra.mxu0 %v2184
        %2371 = vmatprep.subr.bf16.mxu0 0
        %2372 = vmatpush1.bf16.msra.mxu0 %v2185
        %2373 = vmatprep.subr.bf16.mxu0 0
        %2374 = vmatpush1.bf16.msra.mxu0 %v2186
        %2375 = vmatprep.subr.bf16.mxu0 0
        %2376 = vmatpush1.bf16.msra.mxu0 %v2187
        %2377 = vmatprep.subr.bf16.mxu0 0
        %2378 = vmatpush1.bf16.msra.mxu0 %v2188
        %2379 = vmatprep.subr.bf16.mxu0 0
        %2380 = vmatpush1.bf16.msra.mxu0 %v2189
        %2381 = vmatprep.subr.bf16.mxu0 0
        %2382 = vmatpush1.bf16.msra.mxu0 %v2190
        %2383 = vmatprep.mubr.bf16.mxu0 %v1756
        %2384 = vmatmul.mubr.bf16.gmra.mrb[0].mxu0 %v1755
        %v2385 = vpop.f32.mrb[0].mxu0
        %v2386 = vadd.f32 %v2346, %v2385
        %v2387 = vpop.f32.mrb[0].mxu0
        %v2388 = vpop.f32.mrb[0].mxu0
        %v2389 = vpop.f32.mrb[0].mxu0
        %2390 = vdwg.mxu0
        %2391 = vmatprep.subr.bf16.mxu0 0
        %2392 = vmatpush1.bf16.msra.mxu0 %v2191
        %2393 = vmatprep.subr.bf16.mxu0 0
        %2394 = vmatpush1.bf16.msra.mxu0 %v2192
        %2395 = vmatprep.subr.bf16.mxu0 0
        %2396 = vmatpush1.bf16.msra.mxu0 %v2193
        %2397 = vmatprep.subr.bf16.mxu0 0
        %2398 = vmatpush1.bf16.msra.mxu0 %v2194
        %2399 = vmatprep.subr.bf16.mxu0 0
        %2400 = vmatpush1.bf16.msra.mxu0 %v2195
        %2401 = vmatprep.subr.bf16.mxu0 0
        %2402 = vmatpush1.bf16.msra.mxu0 %v2196
        %2403 = vmatprep.subr.bf16.mxu0 0
        %2404 = vmatpush1.bf16.msra.mxu0 %v2197
        %2405 = vmatprep.subr.bf16.mxu0 0
        %2406 = vmatpush1.bf16.msra.mxu0 %v2198
        %2407 = vmatprep.subr.bf16.mxu0 0
        %2408 = vmatpush1.bf16.msra.mxu0 %v2199
        %2409 = vmatprep.subr.bf16.mxu0 0
        %2410 = vmatpush1.bf16.msra.mxu0 %v2200
        %2411 = vmatprep.subr.bf16.mxu0 0
        %2412 = vmatpush1.bf16.msra.mxu0 %v2201
        %2413 = vmatprep.subr.bf16.mxu0 0
        %2414 = vmatpush1.bf16.msra.mxu0 %v2202
        %2415 = vmatprep.subr.bf16.mxu0 0
        %2416 = vmatpush1.bf16.msra.mxu0 %v2203
        %2417 = vmatprep.subr.bf16.mxu0 0
        %2418 = vmatpush1.bf16.msra.mxu0 %v2204
        %2419 = vmatprep.subr.bf16.mxu0 0
        %2420 = vmatpush1.bf16.msra.mxu0 %v2205
        %2421 = vmatprep.subr.bf16.mxu0 0
        %2422 = vmatpush1.bf16.msra.mxu0 %v2206
        %2423 = vmatprep.mubr.bf16.mxu0 %v1758
        %2424 = vmatmul.mubr.bf16.gmra.mrb[0].mxu0 %v1757
        %v2425 = vpop.f32.mrb[0].mxu0
        %v2426 = vadd.f32 %v2386, %v2425
        %v2427 = vpop.f32.mrb[0].mxu0
        %v2428 = vpop.f32.mrb[0].mxu0
        %v2429 = vpop.f32.mrb[0].mxu0
        %2430 = vdwg.mxu0
        %2431 = vmatprep.subr.bf16.mxu0 0
        %2432 = vmatpush1.bf16.xpose.msra.mxu0 %v1683
        %2433 = vmatprep.subr.bf16.mxu0 0
        %2434 = vmatpush1.bf16.xpose.msra.mxu0 %v1684
        %2435 = vmatprep.subr.bf16.mxu0 0
        %2436 = vmatpush1.bf16.xpose.msra.mxu0 %v1685
        %2437 = vmatprep.subr.bf16.mxu0 0
        %2438 = vmatpush1.bf16.xpose.msra.mxu0 %v1686
        %2439 = vmatprep.subr.bf16.mxu0 0
        %2440 = vmatpush1.bf16.xpose.msra.mxu0 %v1687
        %2441 = vmatprep.subr.bf16.mxu0 0
        %2442 = vmatpush1.bf16.xpose.msra.mxu0 %v1688
        %2443 = vmatprep.subr.bf16.mxu0 0
        %2444 = vmatpush1.bf16.xpose.msra.mxu0 %v1689
        %2445 = vmatprep.subr.bf16.mxu0 0
        %2446 = vmatpush1.bf16.xpose.msra.mxu0 %v1690
        %2447 = vmatprep.subr.bf16.mxu0 0
        %2448 = vmatpush1.bf16.xpose.msra.mxu0 0
        %2449 = vmatprep.subr.bf16.mxu0 0
        %2450 = vmatpush1.bf16.xpose.msra.mxu0 0
        %2451 = vmatprep.subr.bf16.mxu0 0
        %2452 = vmatpush1.bf16.xpose.msra.mxu0 0
        %2453 = vmatprep.subr.bf16.mxu0 0
        %2454 = vmatpush1.bf16.xpose.msra.mxu0 0
        %2455 = vmatprep.subr.bf16.mxu0 0
        %2456 = vmatpush1.bf16.xpose.msra.mxu0 0
        %2457 = vmatprep.subr.bf16.mxu0 0
        %2458 = vmatpush1.bf16.xpose.msra.mxu0 0
        %2459 = vmatprep.subr.bf16.mxu0 0
        %2460 = vmatpush1.bf16.xpose.msra.mxu0 0
        %2461 = vmatprep.subr.bf16.mxu0 0
        %2462 = vmatpush1.bf16.xpose.msra.mxu0 0
        %2463 = vmatprep.mubr.bf16.mxu0 0
        %2464 = vmatmul.mubr.bf16.gmra.mrb[0].mxu0 %v1713
        %v2465 = vpop.f32.mrb[0].mxu0
        %v2466 = vadd.f32 %v2426, %v2465
        %v2467 = vpop.f32.mrb[0].mxu0
        %v2468 = vpop.f32.mrb[0].mxu0
        %v2469 = vpop.f32.mrb[0].mxu0
        %2470 = vdwg.mxu0
        %v2471 = vmul.f32 %v2466, 0.35355338
        %vm2472 = vcmp.gt.f32.partialorder %v1331, 0.0
        %v2473 = vsel %vm2472, %v2471, -1e+30
        %2474 = vmax.xlane.f32.xlu0 %v2473
        %v2475 = vpop.xlane.xlu0 %2474
        %v2476 = vsub.f32 %v2473, %v2475
        %v2477 = vmul.f32 %v2476, 1.442695
        %v2478 = vpow.pop %v2477
        %v2479 = vpack.c.bf16 %v2478, %v2478
        %2480 = vmatprep.subr.bf16.mxu0 0
        %2481 = vmatpush1.bf16.msra.mxu0 %v1697
        %2482 = vmatprep.subr.bf16.mxu0 0
        %2483 = vmatpush1.bf16.msra.mxu0 %v1698
        %2484 = vmatprep.subr.bf16.mxu0 0
        %2485 = vmatpush1.bf16.msra.mxu0 %v1699
        %2486 = vmatprep.subr.bf16.mxu0 0
        %2487 = vmatpush1.bf16.msra.mxu0 %v1700
        %2488 = vmatprep.subr.bf16.mxu0 0
        %2489 = vmatpush1.bf16.msra.mxu0 %v1701
        %2490 = vmatprep.subr.bf16.mxu0 0
        %2491 = vmatpush1.bf16.msra.mxu0 %v1702
        %2492 = vmatprep.subr.bf16.mxu0 0
        %2493 = vmatpush1.bf16.msra.mxu0 %v1703
        %2494 = vmatprep.subr.bf16.mxu0 0
        %2495 = vmatpush1.bf16.msra.mxu0 %v1704
        %2496 = vmatprep.subr.bf16.mxu0 0
        %2497 = vmatpush1.bf16.msra.mxu0 0
        %2498 = vmatprep.subr.bf16.mxu0 0
        %2499 = vmatpush1.bf16.msra.mxu0 0
        %2500 = vmatprep.subr.bf16.mxu0 0
        %2501 = vmatpush1.bf16.msra.mxu0 0
        %2502 = vmatprep.subr.bf16.mxu0 0
        %2503 = vmatpush1.bf16.msra.mxu0 0
        %2504 = vmatprep.subr.bf16.mxu0 0
        %2505 = vmatpush1.bf16.msra.mxu0 0
        %2506 = vmatprep.subr.bf16.mxu0 0
        %2507 = vmatpush1.bf16.msra.mxu0 0
        %2508 = vmatprep.subr.bf16.mxu0 0
        %2509 = vmatpush1.bf16.msra.mxu0 0
        %2510 = vmatprep.subr.bf16.mxu0 0
        %2511 = vmatpush1.bf16.msra.mxu0 0
        %2512 = vmatprep.mubr.bf16.mxu0 0
        %2513 = vmatmul.mubr.bf16.gmra.mrb[0].mxu0 %v2479
        %v2514 = vpop.f32.mrb[0].mxu0
        %v2515 = vadd.f32 0.0, %v2514
        %v2516 = vpop.f32.mrb[0].mxu0
        %v2517 = vpop.f32.mrb[0].mxu0
        %v2518 = vpop.f32.mrb[0].mxu0
        %2519 = vdwg.mxu0
        %2520 = vmatprep.subr.bf16.mxu0 0
        %2521 = vmatpush1.bf16.msra.mxu0 %v1667
        %2522 = vmatprep.subr.bf16.mxu0 0
        %2523 = vmatpush1.bf16.msra.mxu0 %v1668
        %2524 = vmatprep.subr.bf16.mxu0 0
        %2525 = vmatpush1.bf16.msra.mxu0 %v1669
        %2526 = vmatprep.subr.bf16.mxu0 0
        %2527 = vmatpush1.bf16.msra.mxu0 %v1670
        %2528 = vmatprep.subr.bf16.mxu0 0
        %2529 = vmatpush1.bf16.msra.mxu0 %v1671
        %2530 = vmatprep.subr.bf16.mxu0 0
        %2531 = vmatpush1.bf16.msra.mxu0 %v1672
        %2532 = vmatprep.subr.bf16.mxu0 0
        %2533 = vmatpush1.bf16.msra.mxu0 %v1673
        %2534 = vmatprep.subr.bf16.mxu0 0
        %2535 = vmatpush1.bf16.msra.mxu0 %v1674
        %2536 = vmatprep.subr.bf16.mxu0 0
        %2537 = vmatpush1.bf16.msra.mxu0 0
        %2538 = vmatprep.subr.bf16.mxu0 0
        %2539 = vmatpush1.bf16.msra.mxu0 0
        %2540 = vmatprep.subr.bf16.mxu0 0
        %2541 = vmatpush1.bf16.msra.mxu0 0
        %2542 = vmatprep.subr.bf16.mxu0 0
        %2543 = vmatpush1.bf16.msra.mxu0 0
        %2544 = vmatprep.subr.bf16.mxu0 0
        %2545 = vmatpush1.bf16.msra.mxu0 0
        %2546 = vmatprep.subr.bf16.mxu0 0
        %2547 = vmatpush1.bf16.msra.mxu0 0
        %2548 = vmatprep.subr.bf16.mxu0 0
        %2549 = vmatpush1.bf16.msra.mxu0 0
        %2550 = vmatprep.subr.bf16.mxu0 0
        %2551 = vmatpush1.bf16.msra.mxu0 0
        %2552 = vmatprep.mubr.bf16.mxu0 0
        %2553 = vmatmul.mubr.bf16.gmra.mrb[0].mxu0 %v2479
        %v2554 = vpop.f32.mrb[0].mxu0
        %v2555 = vadd.f32 0.0, %v2554
        %v2556 = vpop.f32.mrb[0].mxu0
        %v2557 = vpop.f32.mrb[0].mxu0
        %v2558 = vpop.f32.mrb[0].mxu0
        %2559 = vdwg.mxu0
        %v2560 = vmax.f32 %v2555, 1e-30
        %v2561 = vrcp.pop %v2560
        %v2562 = vmul.f32 %v2515, %v2561
        %v2563 = vpack.c.bf16 %v2562, %v2562
        %v2564 = vld [vmem:[#allocation8] sm:$0xf]
        %v2565 = vld [vmem:[#allocation8 + $0x4] sm:$0xf]
        %v2566 = vld [vmem:[#allocation8 + $0x8] sm:$0xf]
        %v2567 = vld [vmem:[#allocation8 + $0xc] sm:$0xf]
        %v2568 = vld [vmem:[#allocation8 + $0x10] sm:$0xf]
        %v2569 = vld [vmem:[#allocation8 + $0x14] sm:$0xf]
        %v2570 = vld [vmem:[#allocation8 + $0x18] sm:$0xf]
        %v2571 = vld [vmem:[#allocation8 + $0x1c] sm:$0xf]
        %v2572 = vld [vmem:[#allocation8 + $0x20] sm:$0xf]
        %v2573 = vld [vmem:[#allocation8 + $0x24] sm:$0xf]
        %v2574 = vld [vmem:[#allocation8 + $0x28] sm:$0xf]
        %v2575 = vld [vmem:[#allocation8 + $0x2c] sm:$0xf]
        %v2576 = vld [vmem:[#allocation8 + $0x30] sm:$0xf]
        %v2577 = vld [vmem:[#allocation8 + $0x34] sm:$0xf]
        %v2578 = vld [vmem:[#allocation8 + $0x38] sm:$0xf]
        %v2579 = vld [vmem:[#allocation8 + $0x3c] sm:$0xf]
        %v2596 = vunpack.c.l.b16 %v2564
        %v2597 = vunpack.c.l.b16 %v2565
        %v2598 = vunpack.c.l.b16 %v2566
        %v2599 = vunpack.c.l.b16 %v2567
        %v2600 = vunpack.c.l.b16 %v2568
        %v2601 = vunpack.c.l.b16 %v2569
        %v2602 = vunpack.c.l.b16 %v2570
        %v2603 = vunpack.c.l.b16 %v2571
        %v2604 = vunpack.c.l.b16 %v2572
        %v2605 = vunpack.c.l.b16 %v2573
        %v2606 = vunpack.c.l.b16 %v2574
        %v2607 = vunpack.c.l.b16 %v2575
        %v2608 = vunpack.c.l.b16 %v2576
        %v2609 = vunpack.c.l.b16 %v2577
        %v2610 = vunpack.c.l.b16 %v2578
        %v2611 = vunpack.c.l.b16 %v2579
        %v2612 = vpack.c.b16 %v2597, %v2596
        %v2613 = vpack.c.b16 %v2599, %v2598
        %v2614 = vpack.c.b16 %v2601, %v2600
        %v2615 = vpack.c.b16 %v2603, %v2602
        %v2616 = vpack.c.b16 %v2605, %v2604
        %v2617 = vpack.c.b16 %v2607, %v2606
        %v2618 = vpack.c.b16 %v2609, %v2608
        %v2619 = vpack.c.b16 %v2611, %v2610
        %2628 = vmatprep.subr.bf16.mxu0 0
        %2629 = vmatpush1.bf16.msra.mxu0 %v2612
        %2630 = vmatprep.subr.bf16.mxu0 0
        %2631 = vmatpush1.bf16.msra.mxu0 %v2613
        %2632 = vmatprep.subr.bf16.mxu0 0
        %2633 = vmatpush1.bf16.msra.mxu0 %v2614
        %2634 = vmatprep.subr.bf16.mxu0 0
        %2635 = vmatpush1.bf16.msra.mxu0 %v2615
        %2636 = vmatprep.subr.bf16.mxu0 0
        %2637 = vmatpush1.bf16.msra.mxu0 %v2616
        %2638 = vmatprep.subr.bf16.mxu0 0
        %2639 = vmatpush1.bf16.msra.mxu0 %v2617
        %2640 = vmatprep.subr.bf16.mxu0 0
        %2641 = vmatpush1.bf16.msra.mxu0 %v2618
        %2642 = vmatprep.subr.bf16.mxu0 0
        %2643 = vmatpush1.bf16.msra.mxu0 %v2619
        %2644 = vmatprep.subr.bf16.mxu0 0
        %2645 = vmatpush1.bf16.msra.mxu0 0
        %2646 = vmatprep.subr.bf16.mxu0 0
        %2647 = vmatpush1.bf16.msra.mxu0 0
        %2648 = vmatprep.subr.bf16.mxu0 0
        %2649 = vmatpush1.bf16.msra.mxu0 0
        %2650 = vmatprep.subr.bf16.mxu0 0
        %2651 = vmatpush1.bf16.msra.mxu0 0
        %2652 = vmatprep.subr.bf16.mxu0 0
        %2653 = vmatpush1.bf16.msra.mxu0 0
        %2654 = vmatprep.subr.bf16.mxu0 0
        %2655 = vmatpush1.bf16.msra.mxu0 0
        %2656 = vmatprep.subr.bf16.mxu0 0
        %2657 = vmatpush1.bf16.msra.mxu0 0
        %2658 = vmatprep.subr.bf16.mxu0 0
        %2659 = vmatpush1.bf16.msra.mxu0 0
        %2660 = vmatprep.mubr.bf16.mxu0 0
        %2661 = vmatmul.mubr.bf16.gmra.mrb[0].mxu0 %v2563
        %v2662 = vpop.f32.mrb[0].mxu0
        %v2663 = vadd.f32 0.0, %v2662
        %v2664 = vpop.f32.mrb[0].mxu0
        %v2665 = vpop.f32.mrb[0].mxu0
        %v2666 = vpop.f32.mrb[0].mxu0
        %2667 = vdwg.mxu0
        %v2668 = vadd.f32 %v1324, %v2663
        %v2669 = vld [vmem:[#allocation10] sm:$0x1]
        %v2670 = vld [vmem:[#allocation11] sm:$0x1]
        %2671 = vadd.xlane.f32.xlu0 %v2668
        %v2672 = vpop.xlane.xlu0 %2671
        %v2673 = vrcp.pop 128.0
        %v2674 = vmul.f32 %v2672, %v2673
        %v2675 = vsub.f32 %v2668, %v2674
        %v2676 = vmul.f32 %v2675, %v2675
        %2677 = vadd.xlane.f32.xlu0 %v2676
        %v2678 = vpop.xlane.xlu0 %2677
        %v2679 = vmul.f32 %v2678, %v2673
        %v2680 = vadd.f32 %v2679, 1e-05
        %v2681 = vrsqrt.pop %v2680
        %v2682 = vmul.f32 %v2675, %v2681
        %v2684 = vlaneseq
        %v2685 = vshrl.u32 %v2684, 7
        %v2686 = vsub.s32 0, %v2685
        %v2687 = vrot.slane %v2669, %v2686
        %v2689 = vmul.f32 %v2682, %v2687
        %v2691 = vlaneseq
        %v2692 = vshrl.u32 %v2691, 7
        %v2693 = vsub.s32 0, %v2692
        %v2694 = vrot.slane %v2670, %v2693
        %v2696 = vadd.f32 %v2689, %v2694
        %v2697 = vpack.c.bf16 %v2696, %v2696
        %v2698 = vld [vmem:[#allocation13] sm:$0xf]
        %v2699 = vld [vmem:[#allocation13 + $0x4] sm:$0xf]
        %v2700 = vld [vmem:[#allocation13 + $0x8] sm:$0xf]
        %v2701 = vld [vmem:[#allocation13 + $0xc] sm:$0xf]
        %v2702 = vld [vmem:[#allocation13 + $0x10] sm:$0xf]
        %v2703 = vld [vmem:[#allocation13 + $0x14] sm:$0xf]
        %v2704 = vld [vmem:[#allocation13 + $0x18] sm:$0xf]
        %v2705 = vld [vmem:[#allocation13 + $0x1c] sm:$0xf]
        %v2706 = vld [vmem:[#allocation13 + $0x20] sm:$0xf]
        %v2707 = vld [vmem:[#allocation13 + $0x24] sm:$0xf]
        %v2708 = vld [vmem:[#allocation13 + $0x28] sm:$0xf]
        %v2709 = vld [vmem:[#allocation13 + $0x2c] sm:$0xf]
        %v2710 = vld [vmem:[#allocation13 + $0x30] sm:$0xf]
        %v2711 = vld [vmem:[#allocation13 + $0x34] sm:$0xf]
        %v2712 = vld [vmem:[#allocation13 + $0x38] sm:$0xf]
        %v2713 = vld [vmem:[#allocation13 + $0x3c] sm:$0xf]
        %v2730 = vunpack.c.l.b16 %v2698
        %v2731 = vunpack.c.l.b16 %v2699
        %v2732 = vunpack.c.l.b16 %v2700
        %v2733 = vunpack.c.l.b16 %v2701
        %v2734 = vunpack.c.l.b16 %v2702
        %v2735 = vunpack.c.l.b16 %v2703
        %v2736 = vunpack.c.l.b16 %v2704
        %v2737 = vunpack.c.l.b16 %v2705
        %v2738 = vunpack.c.l.b16 %v2706
        %v2739 = vunpack.c.l.b16 %v2707
        %v2740 = vunpack.c.l.b16 %v2708
        %v2741 = vunpack.c.l.b16 %v2709
        %v2742 = vunpack.c.l.b16 %v2710
        %v2743 = vunpack.c.l.b16 %v2711
        %v2744 = vunpack.c.l.b16 %v2712
        %v2745 = vunpack.c.l.b16 %v2713
        %v2746 = vpack.c.b16 %v2731, %v2730
        %v2747 = vpack.c.b16 %v2733, %v2732
        %v2748 = vpack.c.b16 %v2735, %v2734
        %v2749 = vpack.c.b16 %v2737, %v2736
        %v2750 = vpack.c.b16 %v2739, %v2738
        %v2751 = vpack.c.b16 %v2741, %v2740
        %v2752 = vpack.c.b16 %v2743, %v2742
        %v2753 = vpack.c.b16 %v2745, %v2744
        %2762 = vmatprep.subr.bf16.mxu0 0
        %2763 = vmatpush1.bf16.msra.mxu0 %v2746
        %2764 = vmatprep.subr.bf16.mxu0 0
        %2765 = vmatpush1.bf16.msra.mxu0 %v2747
        %2766 = vmatprep.subr.bf16.mxu0 0
        %2767 = vmatpush1.bf16.msra.mxu0 %v2748
        %2768 = vmatprep.subr.bf16.mxu0 0
        %2769 = vmatpush1.bf16.msra.mxu0 %v2749
        %2770 = vmatprep.subr.bf16.mxu0 0
        %2771 = vmatpush1.bf16.msra.mxu0 %v2750
        %2772 = vmatprep.subr.bf16.mxu0 0
        %2773 = vmatpush1.bf16.msra.mxu0 %v2751
        %2774 = vmatprep.subr.bf16.mxu0 0
        %2775 = vmatpush1.bf16.msra.mxu0 %v2752
        %2776 = vmatprep.subr.bf16.mxu0 0
        %2777 = vmatpush1.bf16.msra.mxu0 %v2753
        %2778 = vmatprep.subr.bf16.mxu0 0
        %2779 = vmatpush1.bf16.msra.mxu0 0
        %2780 = vmatprep.subr.bf16.mxu0 0
        %2781 = vmatpush1.bf16.msra.mxu0 0
        %2782 = vmatprep.subr.bf16.mxu0 0
        %2783 = vmatpush1.bf16.msra.mxu0 0
        %2784 = vmatprep.subr.bf16.mxu0 0
        %2785 = vmatpush1.bf16.msra.mxu0 0
        %2786 = vmatprep.subr.bf16.mxu0 0
        %2787 = vmatpush1.bf16.msra.mxu0 0
        %2788 = vmatprep.subr.bf16.mxu0 0
        %2789 = vmatpush1.bf16.msra.mxu0 0
        %2790 = vmatprep.subr.bf16.mxu0 0
        %2791 = vmatpush1.bf16.msra.mxu0 0
        %2792 = vmatprep.subr.bf16.mxu0 0
        %2793 = vmatpush1.bf16.msra.mxu0 0
        %2794 = vmatprep.mubr.bf16.mxu0 0
        %2795 = vmatmul.mubr.bf16.gmra.mrb[0].mxu0 %v2697
        %v2796 = vpop.f32.mrb[0].mxu0
        %v2797 = vadd.f32 0.0, %v2796
        %v2798 = vpop.f32.mrb[0].mxu0
        %v2799 = vpop.f32.mrb[0].mxu0
        %v2800 = vpop.f32.mrb[0].mxu0
        %2801 = vdwg.mxu0
        %v2802 = vld [vmem:[%s35] sm:$0xff]
        %v2803 = vld [vmem:[%s35 + $0x8] sm:$0xff]
        %v2804 = vld [vmem:[%s35 + $0x10] sm:$0xff]
        %v2805 = vld [vmem:[%s35 + $0x18] sm:$0xff]
        %v2806 = vld [vmem:[%s35 + $0x20] sm:$0xff]
        %v2807 = vld [vmem:[%s35 + $0x28] sm:$0xff]
        %v2808 = vld [vmem:[%s35 + $0x30] sm:$0xff]
        %v2809 = vld [vmem:[%s35 + $0x38] sm:$0xff]
        %v2810 = vld [vmem:[%s35 + $0x40] sm:$0xff]
        %v2811 = vld [vmem:[%s35 + $0x48] sm:$0xff]
        %v2812 = vld [vmem:[%s35 + $0x50] sm:$0xff]
        %v2813 = vld [vmem:[%s35 + $0x58] sm:$0xff]
        %v2814 = vld [vmem:[%s35 + $0x60] sm:$0xff]
        %v2815 = vld [vmem:[%s35 + $0x68] sm:$0xff]
        %v2816 = vld [vmem:[%s35 + $0x70] sm:$0xff]
        %v2817 = vld [vmem:[%s35 + $0x78] sm:$0xff]
        %v2834 = vunpack.c.l.b16 %v2802
        %v2835 = vunpack.c.h.b16 %v2802
        %v2836 = vunpack.c.l.b16 %v2803
        %v2837 = vunpack.c.h.b16 %v2803
        %v2838 = vunpack.c.l.b16 %v2804
        %v2839 = vunpack.c.h.b16 %v2804
        %v2840 = vunpack.c.l.b16 %v2805
        %v2841 = vunpack.c.h.b16 %v2805
        %v2842 = vunpack.c.l.b16 %v2806
        %v2843 = vunpack.c.h.b16 %v2806
        %v2844 = vunpack.c.l.b16 %v2807
        %v2845 = vunpack.c.h.b16 %v2807
        %v2846 = vunpack.c.l.b16 %v2808
        %v2847 = vunpack.c.h.b16 %v2808
        %v2848 = vunpack.c.l.b16 %v2809
        %v2849 = vunpack.c.h.b16 %v2809
        %v2850 = vunpack.c.l.b16 %v2810
        %v2851 = vunpack.c.h.b16 %v2810
        %v2852 = vunpack.c.l.b16 %v2811
        %v2853 = vunpack.c.h.b16 %v2811
        %v2854 = vunpack.c.l.b16 %v2812
        %v2855 = vunpack.c.h.b16 %v2812
        %v2856 = vunpack.c.l.b16 %v2813
        %v2857 = vunpack.c.h.b16 %v2813
        %v2858 = vunpack.c.l.b16 %v2814
        %v2859 = vunpack.c.h.b16 %v2814
        %v2860 = vunpack.c.l.b16 %v2815
        %v2861 = vunpack.c.h.b16 %v2815
        %v2862 = vunpack.c.l.b16 %v2816
        %v2863 = vunpack.c.h.b16 %v2816
        %v2864 = vunpack.c.l.b16 %v2817
        %v2865 = vunpack.c.h.b16 %v2817
        %v2866 = vpack.c.b16 %v2836, %v2834
        %v2867 = vpack.c.b16 %v2837, %v2835
        %v2868 = vpack.c.b16 %v2840, %v2838
        %v2869 = vpack.c.b16 %v2841, %v2839
        %v2870 = vpack.c.b16 %v2844, %v2842
        %v2871 = vpack.c.b16 %v2845, %v2843
        %v2872 = vpack.c.b16 %v2848, %v2846
        %v2873 = vpack.c.b16 %v2849, %v2847
        %v2874 = vpack.c.b16 %v2852, %v2850
        %v2875 = vpack.c.b16 %v2853, %v2851
        %v2876 = vpack.c.b16 %v2856, %v2854
        %v2877 = vpack.c.b16 %v2857, %v2855
        %v2878 = vpack.c.b16 %v2860, %v2858
        %v2879 = vpack.c.b16 %v2861, %v2859
        %v2880 = vpack.c.b16 %v2864, %v2862
        %v2881 = vpack.c.b16 %v2865, %v2863
        %2898 = vmatprep.subr.bf16.mxu0 %v2867
        %2899 = vmatpush1.bf16.msra.mxu0 %v2866
        %2900 = vmatprep.subr.bf16.mxu0 %v2869
        %2901 = vmatpush1.bf16.msra.mxu0 %v2868
        %2902 = vmatprep.subr.bf16.mxu0 %v2871
        %2903 = vmatpush1.bf16.msra.mxu0 %v2870
        %2904 = vmatprep.subr.bf16.mxu0 %v2873
        %2905 = vmatpush1.bf16.msra.mxu0 %v2872
        %2906 = vmatprep.subr.bf16.mxu0 %v2875
        %2907 = vmatpush1.bf16.msra.mxu0 %v2874
        %2908 = vmatprep.subr.bf16.mxu0 %v2877
        %2909 = vmatpush1.bf16.msra.mxu0 %v2876
        %2910 = vmatprep.subr.bf16.mxu0 %v2879
        %2911 = vmatpush1.bf16.msra.mxu0 %v2878
        %2912 = vmatprep.subr.bf16.mxu0 %v2881
        %2913 = vmatpush1.bf16.msra.mxu0 %v2880
        %2914 = vmatprep.subr.bf16.mxu0 0
        %2915 = vmatpush1.bf16.msra.mxu0 0
        %2916 = vmatprep.subr.bf16.mxu0 0
        %2917 = vmatpush1.bf16.msra.mxu0 0
        %2918 = vmatprep.subr.bf16.mxu0 0
        %2919 = vmatpush1.bf16.msra.mxu0 0
        %2920 = vmatprep.subr.bf16.mxu0 0
        %2921 = vmatpush1.bf16.msra.mxu0 0
        %2922 = vmatprep.subr.bf16.mxu0 0
        %2923 = vmatpush1.bf16.msra.mxu0 0
        %2924 = vmatprep.subr.bf16.mxu0 0
        %2925 = vmatpush1.bf16.msra.mxu0 0
        %2926 = vmatprep.subr.bf16.mxu0 0
        %2927 = vmatpush1.bf16.msra.mxu0 0
        %2928 = vmatprep.subr.bf16.mxu0 0
        %2929 = vmatpush1.bf16.msra.mxu0 0
        %2930 = vmatprep.mubr.bf16.mxu0 0
        %2931 = vmatmul.mubr.bf16.gmra.mrb[0].mxu0 %v1327
        %v2932 = vpop.f32.mrb[0].mxu0
        %v2933 = vadd.f32 0.0, %v2932
        %v2934 = vpop.f32.mrb[0].mxu0
        %v2935 = vadd.f32 0.0, %v2934
        %v2936 = vpop.f32.mrb[0].mxu0
        %v2937 = vadd.f32 0.0, %v2936
        %v2938 = vpop.f32.mrb[0].mxu0
        %v2939 = vadd.f32 0.0, %v2938
        %2940 = vdwg.mxu0
        %v2941 = vpack.c.bf16 %v2937, %v2933
        %v2942 = vpack.c.bf16 %v2939, %v2935
        %v2975 = vunpack.c.l.b16 %v1348
        %v2976 = vunpack.c.l.b16 %v1349
        %v2977 = vunpack.c.l.b16 %v1350
        %v2978 = vunpack.c.l.b16 %v1351
        %v2979 = vunpack.c.l.b16 %v1352
        %v2980 = vunpack.c.l.b16 %v1353
        %v2981 = vunpack.c.l.b16 %v1354
        %v2982 = vunpack.c.l.b16 %v1355
        %v2983 = vunpack.c.l.b16 %v1356
        %v2984 = vunpack.c.l.b16 %v1357
        %v2985 = vunpack.c.l.b16 %v1358
        %v2986 = vunpack.c.l.b16 %v1359
        %v2987 = vunpack.c.l.b16 %v1360
        %v2988 = vunpack.c.l.b16 %v1361
        %v2989 = vunpack.c.l.b16 %v1362
        %v2990 = vunpack.c.l.b16 %v1363
        %v2991 = vunpack.c.l.b16 %v1364
        %v2992 = vunpack.c.l.b16 %v1365
        %v2993 = vunpack.c.l.b16 %v1366
        %v2994 = vunpack.c.l.b16 %v1367
        %v2995 = vunpack.c.l.b16 %v1368
        %v2996 = vunpack.c.l.b16 %v1369
        %v2997 = vunpack.c.l.b16 %v1370
        %v2998 = vunpack.c.l.b16 %v1371
        %v2999 = vunpack.c.l.b16 %v1372
        %v3000 = vunpack.c.l.b16 %v1373
        %v3001 = vunpack.c.l.b16 %v1374
        %v3002 = vunpack.c.l.b16 %v1375
        %v3003 = vunpack.c.l.b16 %v1376
        %v3004 = vunpack.c.l.b16 %v1377
        %v3005 = vunpack.c.l.b16 %v1378
        %v3006 = vunpack.c.l.b16 %v1379
        %v3007 = vpack.c.b16 %v2976, %v2975
        %v3008 = vpack.c.b16 %v2978, %v2977
        %v3009 = vpack.c.b16 %v2980, %v2979
        %v3010 = vpack.c.b16 %v2982, %v2981
        %v3011 = vpack.c.b16 %v2984, %v2983
        %v3012 = vpack.c.b16 %v2986, %v2985
        %v3013 = vpack.c.b16 %v2988, %v2987
        %v3014 = vpack.c.b16 %v2990, %v2989
        %v3015 = vpack.c.b16 %v2992, %v2991
        %v3016 = vpack.c.b16 %v2994, %v2993
        %v3017 = vpack.c.b16 %v2996, %v2995
        %v3018 = vpack.c.b16 %v2998, %v2997
        %v3019 = vpack.c.b16 %v3000, %v2999
        %v3020 = vpack.c.b16 %v3002, %v3001
        %v3021 = vpack.c.b16 %v3004, %v3003
        %v3022 = vpack.c.b16 %v3006, %v3005
        %v3039 = vmul.bf16 %v2941, %v3007
        %v3040 = vmul.bf16 %v2941, %v3008
        %v3041 = vmul.bf16 %v2941, %v3009
        %v3042 = vmul.bf16 %v2941, %v3010
        %v3043 = vmul.bf16 %v2941, %v3011
        %v3044 = vmul.bf16 %v2941, %v3012
        %v3045 = vmul.bf16 %v2941, %v3013
        %v3046 = vmul.bf16 %v2941, %v3014
        %v3047 = vmul.bf16 %v2941, %v3015
        %v3048 = vmul.bf16 %v2941, %v3016
        %v3049 = vmul.bf16 %v2941, %v3017
        %v3050 = vmul.bf16 %v2941, %v3018
        %v3051 = vmul.bf16 %v2941, %v3019
        %v3052 = vmul.bf16 %v2941, %v3020
        %v3053 = vmul.bf16 %v2941, %v3021
        %v3054 = vmul.bf16 %v2941, %v3022
        %v3055 = vmul.bf16 %v2942, %v3007
        %v3056 = vmul.bf16 %v2942, %v3008
        %v3057 = vmul.bf16 %v2942, %v3009
        %v3058 = vmul.bf16 %v2942, %v3010
        %v3059 = vmul.bf16 %v2942, %v3011
        %v3060 = vmul.bf16 %v2942, %v3012
        %v3061 = vmul.bf16 %v2942, %v3013
        %v3062 = vmul.bf16 %v2942, %v3014
        %v3063 = vmul.bf16 %v2942, %v3015
        %v3064 = vmul.bf16 %v2942, %v3016
        %v3065 = vmul.bf16 %v2942, %v3017
        %v3066 = vmul.bf16 %v2942, %v3018
        %v3067 = vmul.bf16 %v2942, %v3019
        %v3068 = vmul.bf16 %v2942, %v3020
        %v3069 = vmul.bf16 %v2942, %v3021
        %v3070 = vmul.bf16 %v2942, %v3022
        %v3071 = vpack.c.bf16 %v2797, %v2797
        %3072 = vmatprep.subr.bf16.mxu0 0
        %3073 = vmatpush1.bf16.xpose.msra.mxu0 %v3039
        %3074 = vmatprep.subr.bf16.mxu0 0
        %3075 = vmatpush1.bf16.xpose.msra.mxu0 %v3040
        %3076 = vmatprep.subr.bf16.mxu0 0
        %3077 = vmatpush1.bf16.xpose.msra.mxu0 %v3041
        %3078 = vmatprep.subr.bf16.mxu0 0
        %3079 = vmatpush1.bf16.xpose.msra.mxu0 %v3042
        %3080 = vmatprep.subr.bf16.mxu0 0
        %3081 = vmatpush1.bf16.xpose.msra.mxu0 %v3043
        %3082 = vmatprep.subr.bf16.mxu0 0
        %3083 = vmatpush1.bf16.xpose.msra.mxu0 %v3044
        %3084 = vmatprep.subr.bf16.mxu0 0
        %3085 = vmatpush1.bf16.xpose.msra.mxu0 %v3045
        %3086 = vmatprep.subr.bf16.mxu0 0
        %3087 = vmatpush1.bf16.xpose.msra.mxu0 %v3046
        %3088 = vmatprep.subr.bf16.mxu0 0
        %3089 = vmatpush1.bf16.xpose.msra.mxu0 %v3047
        %3090 = vmatprep.subr.bf16.mxu0 0
        %3091 = vmatpush1.bf16.xpose.msra.mxu0 %v3048
        %3092 = vmatprep.subr.bf16.mxu0 0
        %3093 = vmatpush1.bf16.xpose.msra.mxu0 %v3049
        %3094 = vmatprep.subr.bf16.mxu0 0
        %3095 = vmatpush1.bf16.xpose.msra.mxu0 %v3050
        %3096 = vmatprep.subr.bf16.mxu0 0
        %3097 = vmatpush1.bf16.xpose.msra.mxu0 %v3051
        %3098 = vmatprep.subr.bf16.mxu0 0
        %3099 = vmatpush1.bf16.xpose.msra.mxu0 %v3052
        %3100 = vmatprep.subr.bf16.mxu0 0
        %3101 = vmatpush1.bf16.xpose.msra.mxu0 %v3053
        %3102 = vmatprep.subr.bf16.mxu0 0
        %3103 = vmatpush1.bf16.xpose.msra.mxu0 %v3054
        %3104 = vmatprep.mubr.bf16.mxu0 0
        %3105 = vmatmul.mubr.bf16.gmra.mrb[0].mxu0 %v3071
        %v3106 = vpop.f32.mrb[0].mxu0
        %v3107 = vadd.f32 0.0, %v3106
        %v3108 = vpop.f32.mrb[0].mxu0
        %v3109 = vadd.f32 0.0, %v3108
        %v3110 = vpop.f32.mrb[0].mxu0
        %v3111 = vpop.f32.mrb[0].mxu0
        %3112 = vdwg.mxu0
        %v3113 = vmul.f32 %v3107, 0.35355338
        %v3114 = vmul.f32 %v3109, 0.35355338
        %v3116 = vlaneseq
        %v3117 = vshrl.u32 %v3116, 7
        %v3118 = vsub.s32 0, %v3117
        %v3119 = vrot.slane %v1330, %v3118
        %v3120 = vlaneseq
        %v3121 = vshrl.u32 %v3120, 7
        %v3122 = vsub.s32 1, %v3121
        %v3123 = vrot.slane %v1330, %v3122
        %v3126 = vadd.f32 %v3113, %v3119
        %v3127 = vadd.f32 %v3114, %v3123
        %v3128 = vmax.f32 %v3126, %v3127
        %3129 = vmax.xlane.f32.xlu0 %v3128
        %v3130 = vpop.xlane.xlu0 %3129
        %v3131 = vsub.f32 %v3126, %v3130
        %v3132 = vsub.f32 %v3127, %v3130
        %v3133 = vmul.f32 %v3131, 1.442695
        %v3134 = vpow.pop %v3133
        %v3135 = vmul.f32 %v3132, 1.442695
        %v3136 = vpow.pop %v3135
        %v3137 = vpack.c.bf16 %v3134, %v3134
        %v3138 = vpack.c.bf16 %v3136, %v3136
        %3139 = vmatprep.subr.bf16.mxu0 0
        %3140 = vmatpush1.bf16.msra.mxu0 %v3055
        %3141 = vmatprep.subr.bf16.mxu0 0
        %3142 = vmatpush1.bf16.msra.mxu0 %v3056
        %3143 = vmatprep.subr.bf16.mxu0 0
        %3144 = vmatpush1.bf16.msra.mxu0 %v3057
        %3145 = vmatprep.subr.bf16.mxu0 0
        %3146 = vmatpush1.bf16.msra.mxu0 %v3058
        %3147 = vmatprep.subr.bf16.mxu0 0
        %3148 = vmatpush1.bf16.msra.mxu0 %v3059
        %3149 = vmatprep.subr.bf16.mxu0 0
        %3150 = vmatpush1.bf16.msra.mxu0 %v3060
        %3151 = vmatprep.subr.bf16.mxu0 0
        %3152 = vmatpush1.bf16.msra.mxu0 %v3061
        %3153 = vmatprep.subr.bf16.mxu0 0
        %3154 = vmatpush1.bf16.msra.mxu0 %v3062
        %3155 = vmatprep.subr.bf16.mxu0 0
        %3156 = vmatpush1.bf16.msra.mxu0 %v3063
        %3157 = vmatprep.subr.bf16.mxu0 0
        %3158 = vmatpush1.bf16.msra.mxu0 %v3064
        %3159 = vmatprep.subr.bf16.mxu0 0
        %3160 = vmatpush1.bf16.msra.mxu0 %v3065
        %3161 = vmatprep.subr.bf16.mxu0 0
        %3162 = vmatpush1.bf16.msra.mxu0 %v3066
        %3163 = vmatprep.subr.bf16.mxu0 0
        %3164 = vmatpush1.bf16.msra.mxu0 %v3067
        %3165 = vmatprep.subr.bf16.mxu0 0
        %3166 = vmatpush1.bf16.msra.mxu0 %v3068
        %3167 = vmatprep.subr.bf16.mxu0 0
        %3168 = vmatpush1.bf16.msra.mxu0 %v3069
        %3169 = vmatprep.subr.bf16.mxu0 0
        %3170 = vmatpush1.bf16.msra.mxu0 %v3070
        %3171 = vmatprep.mubr.bf16.mxu0 %v3138
        %3172 = vmatmul.mubr.bf16.gmra.mrb[0].mxu0 %v3137
        %v3173 = vpop.f32.mrb[0].mxu0
        %v3174 = vadd.f32 0.0, %v3173
        %v3175 = vpop.f32.mrb[0].mxu0
        %v3176 = vpop.f32.mrb[0].mxu0
        %v3177 = vpop.f32.mrb[0].mxu0
        %3178 = vdwg.mxu0
        %3179 = vmatprep.subr.bf16.mxu0 0
        %3180 = vmatpush1.bf16.msra.mxu0 %v3007
        %3181 = vmatprep.subr.bf16.mxu0 0
        %3182 = vmatpush1.bf16.msra.mxu0 %v3008
        %3183 = vmatprep.subr.bf16.mxu0 0
        %3184 = vmatpush1.bf16.msra.mxu0 %v3009
        %3185 = vmatprep.subr.bf16.mxu0 0
        %3186 = vmatpush1.bf16.msra.mxu0 %v3010
        %3187 = vmatprep.subr.bf16.mxu0 0
        %3188 = vmatpush1.bf16.msra.mxu0 %v3011
        %3189 = vmatprep.subr.bf16.mxu0 0
        %3190 = vmatpush1.bf16.msra.mxu0 %v3012
        %3191 = vmatprep.subr.bf16.mxu0 0
        %3192 = vmatpush1.bf16.msra.mxu0 %v3013
        %3193 = vmatprep.subr.bf16.mxu0 0
        %3194 = vmatpush1.bf16.msra.mxu0 %v3014
        %3195 = vmatprep.subr.bf16.mxu0 0
        %3196 = vmatpush1.bf16.msra.mxu0 %v3015
        %3197 = vmatprep.subr.bf16.mxu0 0
        %3198 = vmatpush1.bf16.msra.mxu0 %v3016
        %3199 = vmatprep.subr.bf16.mxu0 0
        %3200 = vmatpush1.bf16.msra.mxu0 %v3017
        %3201 = vmatprep.subr.bf16.mxu0 0
        %3202 = vmatpush1.bf16.msra.mxu0 %v3018
        %3203 = vmatprep.subr.bf16.mxu0 0
        %3204 = vmatpush1.bf16.msra.mxu0 %v3019
        %3205 = vmatprep.subr.bf16.mxu0 0
        %3206 = vmatpush1.bf16.msra.mxu0 %v3020
        %3207 = vmatprep.subr.bf16.mxu0 0
        %3208 = vmatpush1.bf16.msra.mxu0 %v3021
        %3209 = vmatprep.subr.bf16.mxu0 0
        %3210 = vmatpush1.bf16.msra.mxu0 %v3022
        %3211 = vmatprep.mubr.bf16.mxu0 %v3138
        %3212 = vmatmul.mubr.bf16.gmra.mrb[0].mxu0 %v3137
        %v3213 = vpop.f32.mrb[0].mxu0
        %v3214 = vadd.f32 0.0, %v3213
        %v3215 = vpop.f32.mrb[0].mxu0
        %v3216 = vpop.f32.mrb[0].mxu0
        %v3217 = vpop.f32.mrb[0].mxu0
        %3218 = vdwg.mxu0
        %v3219 = vmax.f32 %v3214, 1e-30
        %v3220 = vrcp.pop %v3219
        %v3221 = vmul.f32 %v3174, %v3220
        %v3222 = vpack.c.bf16 %v3221, %v3221
        %v3223 = vld [vmem:[#allocation14] sm:$0xf]
        %v3224 = vld [vmem:[#allocation14 + $0x4] sm:$0xf]
        %v3225 = vld [vmem:[#allocation14 + $0x8] sm:$0xf]
        %v3226 = vld [vmem:[#allocation14 + $0xc] sm:$0xf]
        %v3227 = vld [vmem:[#allocation14 + $0x10] sm:$0xf]
        %v3228 = vld [vmem:[#allocation14 + $0x14] sm:$0xf]
        %v3229 = vld [vmem:[#allocation14 + $0x18] sm:$0xf]
        %v3230 = vld [vmem:[#allocation14 + $0x1c] sm:$0xf]
        %v3231 = vld [vmem:[#allocation14 + $0x20] sm:$0xf]
        %v3232 = vld [vmem:[#allocation14 + $0x24] sm:$0xf]
        %v3233 = vld [vmem:[#allocation14 + $0x28] sm:$0xf]
        %v3234 = vld [vmem:[#allocation14 + $0x2c] sm:$0xf]
        %v3235 = vld [vmem:[#allocation14 + $0x30] sm:$0xf]
        %v3236 = vld [vmem:[#allocation14 + $0x34] sm:$0xf]
        %v3237 = vld [vmem:[#allocation14 + $0x38] sm:$0xf]
        %v3238 = vld [vmem:[#allocation14 + $0x3c] sm:$0xf]
        %v3255 = vunpack.c.l.b16 %v3223
        %v3256 = vunpack.c.l.b16 %v3224
        %v3257 = vunpack.c.l.b16 %v3225
        %v3258 = vunpack.c.l.b16 %v3226
        %v3259 = vunpack.c.l.b16 %v3227
        %v3260 = vunpack.c.l.b16 %v3228
        %v3261 = vunpack.c.l.b16 %v3229
        %v3262 = vunpack.c.l.b16 %v3230
        %v3263 = vunpack.c.l.b16 %v3231
        %v3264 = vunpack.c.l.b16 %v3232
        %v3265 = vunpack.c.l.b16 %v3233
        %v3266 = vunpack.c.l.b16 %v3234
        %v3267 = vunpack.c.l.b16 %v3235
        %v3268 = vunpack.c.l.b16 %v3236
        %v3269 = vunpack.c.l.b16 %v3237
        %v3270 = vunpack.c.l.b16 %v3238
        %v3271 = vpack.c.b16 %v3256, %v3255
        %v3272 = vpack.c.b16 %v3258, %v3257
        %v3273 = vpack.c.b16 %v3260, %v3259
        %v3274 = vpack.c.b16 %v3262, %v3261
        %v3275 = vpack.c.b16 %v3264, %v3263
        %v3276 = vpack.c.b16 %v3266, %v3265
        %v3277 = vpack.c.b16 %v3268, %v3267
        %v3278 = vpack.c.b16 %v3270, %v3269
        %3287 = vmatprep.subr.bf16.mxu0 0
        %3288 = vmatpush1.bf16.msra.mxu0 %v3271
        %3289 = vmatprep.subr.bf16.mxu0 0
        %3290 = vmatpush1.bf16.msra.mxu0 %v3272
        %3291 = vmatprep.subr.bf16.mxu0 0
        %3292 = vmatpush1.bf16.msra.mxu0 %v3273
        %3293 = vmatprep.subr.bf16.mxu0 0
        %3294 = vmatpush1.bf16.msra.mxu0 %v3274
        %3295 = vmatprep.subr.bf16.mxu0 0
        %3296 = vmatpush1.bf16.msra.mxu0 %v3275
        %3297 = vmatprep.subr.bf16.mxu0 0
        %3298 = vmatpush1.bf16.msra.mxu0 %v3276
        %3299 = vmatprep.subr.bf16.mxu0 0
        %3300 = vmatpush1.bf16.msra.mxu0 %v3277
        %3301 = vmatprep.subr.bf16.mxu0 0
        %3302 = vmatpush1.bf16.msra.mxu0 %v3278
        %3303 = vmatprep.subr.bf16.mxu0 0
        %3304 = vmatpush1.bf16.msra.mxu0 0
        %3305 = vmatprep.subr.bf16.mxu0 0
        %3306 = vmatpush1.bf16.msra.mxu0 0
        %3307 = vmatprep.subr.bf16.mxu0 0
        %3308 = vmatpush1.bf16.msra.mxu0 0
        %3309 = vmatprep.subr.bf16.mxu0 0
        %3310 = vmatpush1.bf16.msra.mxu0 0
        %3311 = vmatprep.subr.bf16.mxu0 0
        %3312 = vmatpush1.bf16.msra.mxu0 0
        %3313 = vmatprep.subr.bf16.mxu0 0
        %3314 = vmatpush1.bf16.msra.mxu0 0
        %3315 = vmatprep.subr.bf16.mxu0 0
        %3316 = vmatpush1.bf16.msra.mxu0 0
        %3317 = vmatprep.subr.bf16.mxu0 0
        %3318 = vmatpush1.bf16.msra.mxu0 0
        %3319 = vmatprep.mubr.bf16.mxu0 0
        %3320 = vmatmul.mubr.bf16.gmra.mrb[0].mxu0 %v3222
        %v3321 = vpop.f32.mrb[0].mxu0
        %v3322 = vadd.f32 %v2696, %v3321
        %v3323 = vpop.f32.mrb[0].mxu0
        %v3324 = vpop.f32.mrb[0].mxu0
        %v3325 = vpop.f32.mrb[0].mxu0
        %3326 = vdwg.mxu0
        %v3327 = vld [vmem:[#allocation16] sm:$0x1]
        %v3328 = vld [vmem:[#allocation17] sm:$0x1]
        %3329 = vadd.xlane.f32.xlu0 %v3322
        %v3330 = vpop.xlane.xlu0 %3329
        %v3331 = vmul.f32 %v3330, %v2673
        %v3332 = vsub.f32 %v3322, %v3331
        %v3333 = vmul.f32 %v3332, %v3332
        %3334 = vadd.xlane.f32.xlu0 %v3333
        %v3335 = vpop.xlane.xlu0 %3334
        %v3336 = vmul.f32 %v3335, %v2673
        %v3337 = vadd.f32 %v3336, 1e-05
        %v3338 = vrsqrt.pop %v3337
        %v3339 = vmul.f32 %v3332, %v3338
        %v3341 = vlaneseq
        %v3342 = vshrl.u32 %v3341, 7
        %v3343 = vsub.s32 0, %v3342
        %v3344 = vrot.slane %v3327, %v3343
        %v3346 = vmul.f32 %v3339, %v3344
        %v3348 = vlaneseq
        %v3349 = vshrl.u32 %v3348, 7
        %v3350 = vsub.s32 0, %v3349
        %v3351 = vrot.slane %v3328, %v3350
        %v3353 = vadd.f32 %v3346, %v3351
        %v3354 = vpack.c.bf16 %v3353, %v3353
        %v3355 = vld [vmem:[%s43] sm:$0xff]
        %v3356 = vld [vmem:[%s43 + $0x8] sm:$0xff]
        %v3357 = vld [vmem:[%s43 + $0x10] sm:$0xff]
        %v3358 = vld [vmem:[%s43 + $0x18] sm:$0xff]
        %v3359 = vld [vmem:[%s43 + $0x20] sm:$0xff]
        %v3360 = vld [vmem:[%s43 + $0x28] sm:$0xff]
        %v3361 = vld [vmem:[%s43 + $0x30] sm:$0xff]
        %v3362 = vld [vmem:[%s43 + $0x38] sm:$0xff]
        %v3363 = vld [vmem:[%s43 + $0x40] sm:$0xff]
        %v3364 = vld [vmem:[%s43 + $0x48] sm:$0xff]
        %v3365 = vld [vmem:[%s43 + $0x50] sm:$0xff]
        %v3366 = vld [vmem:[%s43 + $0x58] sm:$0xff]
        %v3367 = vld [vmem:[%s43 + $0x60] sm:$0xff]
        %v3368 = vld [vmem:[%s43 + $0x68] sm:$0xff]
        %v3369 = vld [vmem:[%s43 + $0x70] sm:$0xff]
        %v3370 = vld [vmem:[%s43 + $0x78] sm:$0xff]
        %v3371 = vld [vmem:[%s43 + $0x80] sm:$0xff]
        %v3372 = vld [vmem:[%s43 + $0x88] sm:$0xff]
        %v3373 = vld [vmem:[%s43 + $0x90] sm:$0xff]
        %v3374 = vld [vmem:[%s43 + $0x98] sm:$0xff]
        %v3375 = vld [vmem:[%s43 + $0xa0] sm:$0xff]
        %v3376 = vld [vmem:[%s43 + $0xa8] sm:$0xff]
        %v3377 = vld [vmem:[%s43 + $0xb0] sm:$0xff]
        %v3378 = vld [vmem:[%s43 + $0xb8] sm:$0xff]
        %v3379 = vld [vmem:[%s43 + $0xc0] sm:$0xff]
        %v3380 = vld [vmem:[%s43 + $0xc8] sm:$0xff]
        %v3381 = vld [vmem:[%s43 + $0xd0] sm:$0xff]
        %v3382 = vld [vmem:[%s43 + $0xd8] sm:$0xff]
        %v3383 = vld [vmem:[%s43 + $0xe0] sm:$0xff]
        %v3384 = vld [vmem:[%s43 + $0xe8] sm:$0xff]
        %v3385 = vld [vmem:[%s43 + $0xf0] sm:$0xff]
        %v3386 = vld [vmem:[%s43 + $0xf8] sm:$0xff]
        %v3387 = vld [vmem:[#allocation19] sm:$0xf]
        %v3389 = vlaneseq
        %v3390 = vshrl.u32 %v3389, 7
        %v3391 = vsub.s32 0, %v3390
        %v3392 = vrot.slane %v3387, %v3391
        %v3393 = vlaneseq
        %v3394 = vshrl.u32 %v3393, 7
        %v3395 = vsub.s32 1, %v3394
        %v3396 = vrot.slane %v3387, %v3395
        %v3397 = vlaneseq
        %v3398 = vshrl.u32 %v3397, 7
        %v3399 = vsub.s32 2, %v3398
        %v3400 = vrot.slane %v3387, %v3399
        %v3401 = vlaneseq
        %v3402 = vshrl.u32 %v3401, 7
        %v3403 = vsub.s32 3, %v3402
        %v3404 = vrot.slane %v3387, %v3403
        %v3441 = vunpack.c.l.b16 %v3355
        %v3442 = vunpack.c.h.b16 %v3355
        %v3443 = vunpack.c.l.b16 %v3356
        %v3444 = vunpack.c.h.b16 %v3356
        %v3445 = vunpack.c.l.b16 %v3357
        %v3446 = vunpack.c.h.b16 %v3357
        %v3447 = vunpack.c.l.b16 %v3358
        %v3448 = vunpack.c.h.b16 %v3358
        %v3449 = vunpack.c.l.b16 %v3359
        %v3450 = vunpack.c.h.b16 %v3359
        %v3451 = vunpack.c.l.b16 %v3360
        %v3452 = vunpack.c.h.b16 %v3360
        %v3453 = vunpack.c.l.b16 %v3361
        %v3454 = vunpack.c.h.b16 %v3361
        %v3455 = vunpack.c.l.b16 %v3362
        %v3456 = vunpack.c.h.b16 %v3362
        %v3457 = vunpack.c.l.b16 %v3363
        %v3458 = vunpack.c.h.b16 %v3363
        %v3459 = vunpack.c.l.b16 %v3364
        %v3460 = vunpack.c.h.b16 %v3364
        %v3461 = vunpack.c.l.b16 %v3365
        %v3462 = vunpack.c.h.b16 %v3365
        %v3463 = vunpack.c.l.b16 %v3366
        %v3464 = vunpack.c.h.b16 %v3366
        %v3465 = vunpack.c.l.b16 %v3367
        %v3466 = vunpack.c.h.b16 %v3367
        %v3467 = vunpack.c.l.b16 %v3368
        %v3468 = vunpack.c.h.b16 %v3368
        %v3469 = vunpack.c.l.b16 %v3369
        %v3470 = vunpack.c.h.b16 %v3369
        %v3471 = vunpack.c.l.b16 %v3370
        %v3472 = vunpack.c.h.b16 %v3370
        %v3473 = vunpack.c.l.b16 %v3371
        %v3474 = vunpack.c.h.b16 %v3371
        %v3475 = vunpack.c.l.b16 %v3372
        %v3476 = vunpack.c.h.b16 %v3372
        %v3477 = vunpack.c.l.b16 %v3373
        %v3478 = vunpack.c.h.b16 %v3373
        %v3479 = vunpack.c.l.b16 %v3374
        %v3480 = vunpack.c.h.b16 %v3374
        %v3481 = vunpack.c.l.b16 %v3375
        %v3482 = vunpack.c.h.b16 %v3375
        %v3483 = vunpack.c.l.b16 %v3376
        %v3484 = vunpack.c.h.b16 %v3376
        %v3485 = vunpack.c.l.b16 %v3377
        %v3486 = vunpack.c.h.b16 %v3377
        %v3487 = vunpack.c.l.b16 %v3378
        %v3488 = vunpack.c.h.b16 %v3378
        %v3489 = vunpack.c.l.b16 %v3379
        %v3490 = vunpack.c.h.b16 %v3379
        %v3491 = vunpack.c.l.b16 %v3380
        %v3492 = vunpack.c.h.b16 %v3380
        %v3493 = vunpack.c.l.b16 %v3381
        %v3494 = vunpack.c.h.b16 %v3381
        %v3495 = vunpack.c.l.b16 %v3382
        %v3496 = vunpack.c.h.b16 %v3382
        %v3497 = vunpack.c.l.b16 %v3383
        %v3498 = vunpack.c.h.b16 %v3383
        %v3499 = vunpack.c.l.b16 %v3384
        %v3500 = vunpack.c.h.b16 %v3384
        %v3501 = vunpack.c.l.b16 %v3385
        %v3502 = vunpack.c.h.b16 %v3385
        %v3503 = vunpack.c.l.b16 %v3386
        %v3504 = vunpack.c.h.b16 %v3386
        %v3505 = vpack.c.b16 %v3445, %v3441
        %v3506 = vpack.c.b16 %v3446, %v3442
        %v3507 = vpack.c.b16 %v3447, %v3443
        %v3508 = vpack.c.b16 %v3448, %v3444
        %v3509 = vpack.c.b16 %v3453, %v3449
        %v3510 = vpack.c.b16 %v3454, %v3450
        %v3511 = vpack.c.b16 %v3455, %v3451
        %v3512 = vpack.c.b16 %v3456, %v3452
        %v3513 = vpack.c.b16 %v3461, %v3457
        %v3514 = vpack.c.b16 %v3462, %v3458
        %v3515 = vpack.c.b16 %v3463, %v3459
        %v3516 = vpack.c.b16 %v3464, %v3460
        %v3517 = vpack.c.b16 %v3469, %v3465
        %v3518 = vpack.c.b16 %v3470, %v3466
        %v3519 = vpack.c.b16 %v3471, %v3467
        %v3520 = vpack.c.b16 %v3472, %v3468
        %v3521 = vpack.c.b16 %v3477, %v3473
        %v3522 = vpack.c.b16 %v3478, %v3474
        %v3523 = vpack.c.b16 %v3479, %v3475
        %v3524 = vpack.c.b16 %v3480, %v3476
        %v3525 = vpack.c.b16 %v3485, %v3481
        %v3526 = vpack.c.b16 %v3486, %v3482
        %v3527 = vpack.c.b16 %v3487, %v3483
        %v3528 = vpack.c.b16 %v3488, %v3484
        %v3529 = vpack.c.b16 %v3493, %v3489
        %v3530 = vpack.c.b16 %v3494, %v3490
        %v3531 = vpack.c.b16 %v3495, %v3491
        %v3532 = vpack.c.b16 %v3496, %v3492
        %v3533 = vpack.c.b16 %v3501, %v3497
        %v3534 = vpack.c.b16 %v3502, %v3498
        %v3535 = vpack.c.b16 %v3503, %v3499
        %v3536 = vpack.c.b16 %v3504, %v3500
        %3569 = vmatprep.subr.bf16.mxu0 %v3506
        %3570 = vmatpush1.bf16.msra.mxu0 %v3505
        %3571 = vmatprep.subr.bf16.mxu0 %v3510
        %3572 = vmatpush1.bf16.msra.mxu0 %v3509
        %3573 = vmatprep.subr.bf16.mxu0 %v3514
        %3574 = vmatpush1.bf16.msra.mxu0 %v3513
        %3575 = vmatprep.subr.bf16.mxu0 %v3518
        %3576 = vmatpush1.bf16.msra.mxu0 %v3517
        %3577 = vmatprep.subr.bf16.mxu0 %v3522
        %3578 = vmatpush1.bf16.msra.mxu0 %v3521
        %3579 = vmatprep.subr.bf16.mxu0 %v3526
        %3580 = vmatpush1.bf16.msra.mxu0 %v3525
        %3581 = vmatprep.subr.bf16.mxu0 %v3530
        %3582 = vmatpush1.bf16.msra.mxu0 %v3529
        %3583 = vmatprep.subr.bf16.mxu0 %v3534
        %3584 = vmatpush1.bf16.msra.mxu0 %v3533
        %3585 = vmatprep.subr.bf16.mxu0 0
        %3586 = vmatpush1.bf16.msra.mxu0 0
        %3587 = vmatprep.subr.bf16.mxu0 0
        %3588 = vmatpush1.bf16.msra.mxu0 0
        %3589 = vmatprep.subr.bf16.mxu0 0
        %3590 = vmatpush1.bf16.msra.mxu0 0
        %3591 = vmatprep.subr.bf16.mxu0 0
        %3592 = vmatpush1.bf16.msra.mxu0 0
        %3593 = vmatprep.subr.bf16.mxu0 0
        %3594 = vmatpush1.bf16.msra.mxu0 0
        %3595 = vmatprep.subr.bf16.mxu0 0
        %3596 = vmatpush1.bf16.msra.mxu0 0
        %3597 = vmatprep.subr.bf16.mxu0 0
        %3598 = vmatpush1.bf16.msra.mxu0 0
        %3599 = vmatprep.subr.bf16.mxu0 0
        %3600 = vmatpush1.bf16.msra.mxu0 0
        %3601 = vmatprep.mubr.bf16.mxu0 0
        %3602 = vmatmul.mubr.bf16.gmra.mrb[0].mxu0 %v3354
        %v3603 = vpop.f32.mrb[0].mxu0
        %v3604 = vadd.f32 %v3392, %v3603
        %v3605 = vpop.f32.mrb[0].mxu0
        %v3606 = vadd.f32 %v3396, %v3605
        %v3607 = vpop.f32.mrb[0].mxu0
        %v3608 = vpop.f32.mrb[0].mxu0
        %3609 = vdwg.mxu0
        %3610 = vmatprep.subr.bf16.mxu0 %v3508
        %3611 = vmatpush1.bf16.msra.mxu0 %v3507
        %3612 = vmatprep.subr.bf16.mxu0 %v3512
        %3613 = vmatpush1.bf16.msra.mxu0 %v3511
        %3614 = vmatprep.subr.bf16.mxu0 %v3516
        %3615 = vmatpush1.bf16.msra.mxu0 %v3515
        %3616 = vmatprep.subr.bf16.mxu0 %v3520
        %3617 = vmatpush1.bf16.msra.mxu0 %v3519
        %3618 = vmatprep.subr.bf16.mxu0 %v3524
        %3619 = vmatpush1.bf16.msra.mxu0 %v3523
        %3620 = vmatprep.subr.bf16.mxu0 %v3528
        %3621 = vmatpush1.bf16.msra.mxu0 %v3527
        %3622 = vmatprep.subr.bf16.mxu0 %v3532
        %3623 = vmatpush1.bf16.msra.mxu0 %v3531
        %3624 = vmatprep.subr.bf16.mxu0 %v3536
        %3625 = vmatpush1.bf16.msra.mxu0 %v3535
        %3626 = vmatprep.subr.bf16.mxu0 0
        %3627 = vmatpush1.bf16.msra.mxu0 0
        %3628 = vmatprep.subr.bf16.mxu0 0
        %3629 = vmatpush1.bf16.msra.mxu0 0
        %3630 = vmatprep.subr.bf16.mxu0 0
        %3631 = vmatpush1.bf16.msra.mxu0 0
        %3632 = vmatprep.subr.bf16.mxu0 0
        %3633 = vmatpush1.bf16.msra.mxu0 0
        %3634 = vmatprep.subr.bf16.mxu0 0
        %3635 = vmatpush1.bf16.msra.mxu0 0
        %3636 = vmatprep.subr.bf16.mxu0 0
        %3637 = vmatpush1.bf16.msra.mxu0 0
        %3638 = vmatprep.subr.bf16.mxu0 0
        %3639 = vmatpush1.bf16.msra.mxu0 0
        %3640 = vmatprep.subr.bf16.mxu0 0
        %3641 = vmatpush1.bf16.msra.mxu0 0
        %3642 = vmatprep.mubr.bf16.mxu0 0
        %3643 = vmatmul.mubr.bf16.gmra.mrb[0].mxu0 %v3354
        %v3644 = vpop.f32.mrb[0].mxu0
        %v3645 = vadd.f32 %v3400, %v3644
        %v3646 = vpop.f32.mrb[0].mxu0
        %v3647 = vadd.f32 %v3404, %v3646
        %v3648 = vpop.f32.mrb[0].mxu0
        %v3649 = vpop.f32.mrb[0].mxu0
        %3650 = vdwg.mxu0
        %v3651 = vmul.f32 %v3604, 0.5
        %v3652 = vmul.f32 %v3606, 0.5
        %v3653 = vmul.f32 %v3645, 0.5
        %v3654 = vmul.f32 %v3647, 0.5
        %v3655 = vmul.f32 %v3604, 0.044715
        %v3656 = vmul.f32 %v3606, 0.044715
        %v3657 = vmul.f32 %v3645, 0.044715
        %v3658 = vmul.f32 %v3647, 0.044715
        %v3659 = vmul.f32 %v3655, %v3604
        %v3660 = vmul.f32 %v3656, %v3606
        %v3661 = vmul.f32 %v3657, %v3645
        %v3662 = vmul.f32 %v3658, %v3647
        %v3663 = vmul.f32 %v3659, %v3604
        %v3664 = vmul.f32 %v3660, %v3606
        %v3665 = vmul.f32 %v3661, %v3645
        %v3666 = vmul.f32 %v3662, %v3647
        %v3667 = vadd.f32 %v3604, %v3663
        %v3668 = vadd.f32 %v3606, %v3664
        %v3669 = vadd.f32 %v3645, %v3665
        %v3670 = vadd.f32 %v3647, %v3666
        %v3671 = vmul.f32 %v3667, 0.7978846
        %v3672 = vmul.f32 %v3668, 0.7978846
        %v3673 = vmul.f32 %v3669, 0.7978846
        %v3674 = vmul.f32 %v3670, 0.7978846
        %v3675 = vtanh.pop %v3671
        %v3676 = vtanh.pop %v3672
        %v3677 = vtanh.pop %v3673
        %v3678 = vtanh.pop %v3674
        %v3679 = vadd.f32 %v3675, 1.0
        %v3680 = vadd.f32 %v3676, 1.0
        %v3681 = vadd.f32 %v3677, 1.0
        %v3682 = vadd.f32 %v3678, 1.0
        %v3683 = vmul.f32 %v3651, %v3679
        %v3684 = vmul.f32 %v3652, %v3680
        %v3685 = vmul.f32 %v3653, %v3681
        %v3686 = vmul.f32 %v3654, %v3682
        %v3687 = vpack.c.bf16 %v3683, %v3683
        %v3688 = vpack.c.bf16 %v3684, %v3684
        %v3689 = vpack.c.bf16 %v3685, %v3685
        %v3690 = vpack.c.bf16 %v3686, %v3686
        %v3691 = vld [vmem:[#allocation20] sm:$0xf]
        %v3692 = vld [vmem:[#allocation20 + $0x4] sm:$0xf]
        %v3693 = vld [vmem:[#allocation20 + $0x8] sm:$0xf]
        %v3694 = vld [vmem:[#allocation20 + $0xc] sm:$0xf]
        %v3695 = vld [vmem:[#allocation20 + $0x10] sm:$0xf]
        %v3696 = vld [vmem:[#allocation20 + $0x14] sm:$0xf]
        %v3697 = vld [vmem:[#allocation20 + $0x18] sm:$0xf]
        %v3698 = vld [vmem:[#allocation20 + $0x1c] sm:$0xf]
        %v3699 = vld [vmem:[#allocation20 + $0x20] sm:$0xf]
        %v3700 = vld [vmem:[#allocation20 + $0x24] sm:$0xf]
        %v3701 = vld [vmem:[#allocation20 + $0x28] sm:$0xf]
        %v3702 = vld [vmem:[#allocation20 + $0x2c] sm:$0xf]
        %v3703 = vld [vmem:[#allocation20 + $0x30] sm:$0xf]
        %v3704 = vld [vmem:[#allocation20 + $0x34] sm:$0xf]
        %v3705 = vld [vmem:[#allocation20 + $0x38] sm:$0xf]
        %v3706 = vld [vmem:[#allocation20 + $0x3c] sm:$0xf]
        %v3707 = vld [vmem:[#allocation20 + $0x40] sm:$0xf]
        %v3708 = vld [vmem:[#allocation20 + $0x44] sm:$0xf]
        %v3709 = vld [vmem:[#allocation20 + $0x48] sm:$0xf]
        %v3710 = vld [vmem:[#allocation20 + $0x4c] sm:$0xf]
        %v3711 = vld [vmem:[#allocation20 + $0x50] sm:$0xf]
        %v3712 = vld [vmem:[#allocation20 + $0x54] sm:$0xf]
        %v3713 = vld [vmem:[#allocation20 + $0x58] sm:$0xf]
        %v3714 = vld [vmem:[#allocation20 + $0x5c] sm:$0xf]
        %v3715 = vld [vmem:[#allocation20 + $0x60] sm:$0xf]
        %v3716 = vld [vmem:[#allocation20 + $0x64] sm:$0xf]
        %v3717 = vld [vmem:[#allocation20 + $0x68] sm:$0xf]
        %v3718 = vld [vmem:[#allocation20 + $0x6c] sm:$0xf]
        %v3719 = vld [vmem:[#allocation20 + $0x70] sm:$0xf]
        %v3720 = vld [vmem:[#allocation20 + $0x74] sm:$0xf]
        %v3721 = vld [vmem:[#allocation20 + $0x78] sm:$0xf]
        %v3722 = vld [vmem:[#allocation20 + $0x7c] sm:$0xf]
        %v3723 = vld [vmem:[#allocation20 + $0x80] sm:$0xf]
        %v3724 = vld [vmem:[#allocation20 + $0x84] sm:$0xf]
        %v3725 = vld [vmem:[#allocation20 + $0x88] sm:$0xf]
        %v3726 = vld [vmem:[#allocation20 + $0x8c] sm:$0xf]
        %v3727 = vld [vmem:[#allocation20 + $0x90] sm:$0xf]
        %v3728 = vld [vmem:[#allocation20 + $0x94] sm:$0xf]
        %v3729 = vld [vmem:[#allocation20 + $0x98] sm:$0xf]
        %v3730 = vld [vmem:[#allocation20 + $0x9c] sm:$0xf]
        %v3731 = vld [vmem:[#allocation20 + $0xa0] sm:$0xf]
        %v3732 = vld [vmem:[#allocation20 + $0xa4] sm:$0xf]
        %v3733 = vld [vmem:[#allocation20 + $0xa8] sm:$0xf]
        %v3734 = vld [vmem:[#allocation20 + $0xac] sm:$0xf]
        %v3735 = vld [vmem:[#allocation20 + $0xb0] sm:$0xf]
        %v3736 = vld [vmem:[#allocation20 + $0xb4] sm:$0xf]
        %v3737 = vld [vmem:[#allocation20 + $0xb8] sm:$0xf]
        %v3738 = vld [vmem:[#allocation20 + $0xbc] sm:$0xf]
        %v3739 = vld [vmem:[#allocation20 + $0xc0] sm:$0xf]
        %v3740 = vld [vmem:[#allocation20 + $0xc4] sm:$0xf]
        %v3741 = vld [vmem:[#allocation20 + $0xc8] sm:$0xf]
        %v3742 = vld [vmem:[#allocation20 + $0xcc] sm:$0xf]
        %v3743 = vld [vmem:[#allocation20 + $0xd0] sm:$0xf]
        %v3744 = vld [vmem:[#allocation20 + $0xd4] sm:$0xf]
        %v3745 = vld [vmem:[#allocation20 + $0xd8] sm:$0xf]
        %v3746 = vld [vmem:[#allocation20 + $0xdc] sm:$0xf]
        %v3747 = vld [vmem:[#allocation20 + $0xe0] sm:$0xf]
        %v3748 = vld [vmem:[#allocation20 + $0xe4] sm:$0xf]
        %v3749 = vld [vmem:[#allocation20 + $0xe8] sm:$0xf]
        %v3750 = vld [vmem:[#allocation20 + $0xec] sm:$0xf]
        %v3751 = vld [vmem:[#allocation20 + $0xf0] sm:$0xf]
        %v3752 = vld [vmem:[#allocation20 + $0xf4] sm:$0xf]
        %v3753 = vld [vmem:[#allocation20 + $0xf8] sm:$0xf]
        %v3754 = vld [vmem:[#allocation20 + $0xfc] sm:$0xf]
        %v3755 = vld [vmem:[#allocation22] sm:$0x1]
        %v3757 = vlaneseq
        %v3758 = vshrl.u32 %v3757, 7
        %v3759 = vsub.s32 0, %v3758
        %v3760 = vrot.slane %v3755, %v3759
        %v3826 = vunpack.c.l.b16 %v3691
        %v3827 = vunpack.c.l.b16 %v3692
        %v3828 = vunpack.c.l.b16 %v3693
        %v3829 = vunpack.c.l.b16 %v3694
        %v3830 = vunpack.c.l.b16 %v3695
        %v3831 = vunpack.c.l.b16 %v3696
        %v3832 = vunpack.c.l.b16 %v3697
        %v3833 = vunpack.c.l.b16 %v3698
        %v3834 = vunpack.c.l.b16 %v3699
        %v3835 = vunpack.c.l.b16 %v3700
        %v3836 = vunpack.c.l.b16 %v3701
        %v3837 = vunpack.c.l.b16 %v3702
        %v3838 = vunpack.c.l.b16 %v3703
        %v3839 = vunpack.c.l.b16 %v3704
        %v3840 = vunpack.c.l.b16 %v3705
        %v3841 = vunpack.c.l.b16 %v3706
        %v3842 = vunpack.c.l.b16 %v3707
        %v3843 = vunpack.c.l.b16 %v3708
        %v3844 = vunpack.c.l.b16 %v3709
        %v3845 = vunpack.c.l.b16 %v3710
        %v3846 = vunpack.c.l.b16 %v3711
        %v3847 = vunpack.c.l.b16 %v3712
        %v3848 = vunpack.c.l.b16 %v3713
        %v3849 = vunpack.c.l.b16 %v3714
        %v3850 = vunpack.c.l.b16 %v3715
        %v3851 = vunpack.c.l.b16 %v3716
        %v3852 = vunpack.c.l.b16 %v3717
        %v3853 = vunpack.c.l.b16 %v3718
        %v3854 = vunpack.c.l.b16 %v3719
        %v3855 = vunpack.c.l.b16 %v3720
        %v3856 = vunpack.c.l.b16 %v3721
        %v3857 = vunpack.c.l.b16 %v3722
        %v3858 = vunpack.c.l.b16 %v3723
        %v3859 = vunpack.c.l.b16 %v3724
        %v3860 = vunpack.c.l.b16 %v3725
        %v3861 = vunpack.c.l.b16 %v3726
        %v3862 = vunpack.c.l.b16 %v3727
        %v3863 = vunpack.c.l.b16 %v3728
        %v3864 = vunpack.c.l.b16 %v3729
        %v3865 = vunpack.c.l.b16 %v3730
        %v3866 = vunpack.c.l.b16 %v3731
        %v3867 = vunpack.c.l.b16 %v3732
        %v3868 = vunpack.c.l.b16 %v3733
        %v3869 = vunpack.c.l.b16 %v3734
        %v3870 = vunpack.c.l.b16 %v3735
        %v3871 = vunpack.c.l.b16 %v3736
        %v3872 = vunpack.c.l.b16 %v3737
        %v3873 = vunpack.c.l.b16 %v3738
        %v3874 = vunpack.c.l.b16 %v3739
        %v3875 = vunpack.c.l.b16 %v3740
        %v3876 = vunpack.c.l.b16 %v3741
        %v3877 = vunpack.c.l.b16 %v3742
        %v3878 = vunpack.c.l.b16 %v3743
        %v3879 = vunpack.c.l.b16 %v3744
        %v3880 = vunpack.c.l.b16 %v3745
        %v3881 = vunpack.c.l.b16 %v3746
        %v3882 = vunpack.c.l.b16 %v3747
        %v3883 = vunpack.c.l.b16 %v3748
        %v3884 = vunpack.c.l.b16 %v3749
        %v3885 = vunpack.c.l.b16 %v3750
        %v3886 = vunpack.c.l.b16 %v3751
        %v3887 = vunpack.c.l.b16 %v3752
        %v3888 = vunpack.c.l.b16 %v3753
        %v3889 = vunpack.c.l.b16 %v3754
        %v3890 = vpack.c.b16 %v3827, %v3826
        %v3891 = vpack.c.b16 %v3829, %v3828
        %v3892 = vpack.c.b16 %v3831, %v3830
        %v3893 = vpack.c.b16 %v3833, %v3832
        %v3894 = vpack.c.b16 %v3835, %v3834
        %v3895 = vpack.c.b16 %v3837, %v3836
        %v3896 = vpack.c.b16 %v3839, %v3838
        %v3897 = vpack.c.b16 %v3841, %v3840
        %v3898 = vpack.c.b16 %v3843, %v3842
        %v3899 = vpack.c.b16 %v3845, %v3844
        %v3900 = vpack.c.b16 %v3847, %v3846
        %v3901 = vpack.c.b16 %v3849, %v3848
        %v3902 = vpack.c.b16 %v3851, %v3850
        %v3903 = vpack.c.b16 %v3853, %v3852
        %v3904 = vpack.c.b16 %v3855, %v3854
        %v3905 = vpack.c.b16 %v3857, %v3856
        %v3906 = vpack.c.b16 %v3859, %v3858
        %v3907 = vpack.c.b16 %v3861, %v3860
        %v3908 = vpack.c.b16 %v3863, %v3862
        %v3909 = vpack.c.b16 %v3865, %v3864
        %v3910 = vpack.c.b16 %v3867, %v3866
        %v3911 = vpack.c.b16 %v3869, %v3868
        %v3912 = vpack.c.b16 %v3871, %v3870
        %v3913 = vpack.c.b16 %v3873, %v3872
        %v3914 = vpack.c.b16 %v3875, %v3874
        %v3915 = vpack.c.b16 %v3877, %v3876
        %v3916 = vpack.c.b16 %v3879, %v3878
        %v3917 = vpack.c.b16 %v3881, %v3880
        %v3918 = vpack.c.b16 %v3883, %v3882
        %v3919 = vpack.c.b16 %v3885, %v3884
        %v3920 = vpack.c.b16 %v3887, %v3886
        %v3921 = vpack.c.b16 %v3889, %v3888
        %3954 = vmatprep.subr.bf16.mxu0 0
        %3955 = vmatpush1.bf16.msra.mxu0 %v3890
        %3956 = vmatprep.subr.bf16.mxu0 0
        %3957 = vmatpush1.bf16.msra.mxu0 %v3891
        %3958 = vmatprep.subr.bf16.mxu0 0
        %3959 = vmatpush1.bf16.msra.mxu0 %v3892
        %3960 = vmatprep.subr.bf16.mxu0 0
        %3961 = vmatpush1.bf16.msra.mxu0 %v3893
        %3962 = vmatprep.subr.bf16.mxu0 0
        %3963 = vmatpush1.bf16.msra.mxu0 %v3894
        %3964 = vmatprep.subr.bf16.mxu0 0
        %3965 = vmatpush1.bf16.msra.mxu0 %v3895
        %3966 = vmatprep.subr.bf16.mxu0 0
        %3967 = vmatpush1.bf16.msra.mxu0 %v3896
        %3968 = vmatprep.subr.bf16.mxu0 0
        %3969 = vmatpush1.bf16.msra.mxu0 %v3897
        %3970 = vmatprep.subr.bf16.mxu0 0
        %3971 = vmatpush1.bf16.msra.mxu0 %v3898
        %3972 = vmatprep.subr.bf16.mxu0 0
        %3973 = vmatpush1.bf16.msra.mxu0 %v3899
        %3974 = vmatprep.subr.bf16.mxu0 0
        %3975 = vmatpush1.bf16.msra.mxu0 %v3900
        %3976 = vmatprep.subr.bf16.mxu0 0
        %3977 = vmatpush1.bf16.msra.mxu0 %v3901
        %3978 = vmatprep.subr.bf16.mxu0 0
        %3979 = vmatpush1.bf16.msra.mxu0 %v3902
        %3980 = vmatprep.subr.bf16.mxu0 0
        %3981 = vmatpush1.bf16.msra.mxu0 %v3903
        %3982 = vmatprep.subr.bf16.mxu0 0
        %3983 = vmatpush1.bf16.msra.mxu0 %v3904
        %3984 = vmatprep.subr.bf16.mxu0 0
        %3985 = vmatpush1.bf16.msra.mxu0 %v3905
        %3986 = vmatprep.mubr.bf16.mxu0 %v3688
        %3987 = vmatmul.mubr.bf16.gmra.mrb[0].mxu0 %v3687
        %v3988 = vpop.f32.mrb[0].mxu0
        %v3989 = vadd.f32 %v3760, %v3988
        %v3990 = vpop.f32.mrb[0].mxu0
        %v3991 = vpop.f32.mrb[0].mxu0
        %v3992 = vpop.f32.mrb[0].mxu0
        %3993 = vdwg.mxu0
        %3994 = vmatprep.subr.bf16.mxu0 0
        %3995 = vmatpush1.bf16.msra.mxu0 %v3906
        %3996 = vmatprep.subr.bf16.mxu0 0
        %3997 = vmatpush1.bf16.msra.mxu0 %v3907
        %3998 = vmatprep.subr.bf16.mxu0 0
        %3999 = vmatpush1.bf16.msra.mxu0 %v3908
        %4000 = vmatprep.subr.bf16.mxu0 0
        %4001 = vmatpush1.bf16.msra.mxu0 %v3909
        %4002 = vmatprep.subr.bf16.mxu0 0
        %4003 = vmatpush1.bf16.msra.mxu0 %v3910
        %4004 = vmatprep.subr.bf16.mxu0 0
        %4005 = vmatpush1.bf16.msra.mxu0 %v3911
        %4006 = vmatprep.subr.bf16.mxu0 0
        %4007 = vmatpush1.bf16.msra.mxu0 %v3912
        %4008 = vmatprep.subr.bf16.mxu0 0
        %4009 = vmatpush1.bf16.msra.mxu0 %v3913
        %4010 = vmatprep.subr.bf16.mxu0 0
        %4011 = vmatpush1.bf16.msra.mxu0 %v3914
        %4012 = vmatprep.subr.bf16.mxu0 0
        %4013 = vmatpush1.bf16.msra.mxu0 %v3915
        %4014 = vmatprep.subr.bf16.mxu0 0
        %4015 = vmatpush1.bf16.msra.mxu0 %v3916
        %4016 = vmatprep.subr.bf16.mxu0 0
        %4017 = vmatpush1.bf16.msra.mxu0 %v3917
        %4018 = vmatprep.subr.bf16.mxu0 0
        %4019 = vmatpush1.bf16.msra.mxu0 %v3918
        %4020 = vmatprep.subr.bf16.mxu0 0
        %4021 = vmatpush1.bf16.msra.mxu0 %v3919
        %4022 = vmatprep.subr.bf16.mxu0 0
        %4023 = vmatpush1.bf16.msra.mxu0 %v3920
        %4024 = vmatprep.subr.bf16.mxu0 0
        %4025 = vmatpush1.bf16.msra.mxu0 %v3921
        %4026 = vmatprep.mubr.bf16.mxu0 %v3690
        %4027 = vmatmul.mubr.bf16.gmra.mrb[0].mxu0 %v3689
        %v4028 = vpop.f32.mrb[0].mxu0
        %v4029 = vadd.f32 %v3989, %v4028
        %v4030 = vpop.f32.mrb[0].mxu0
        %v4031 = vpop.f32.mrb[0].mxu0
        %v4032 = vpop.f32.mrb[0].mxu0
        %4033 = vdwg.mxu0
        %v4034 = vadd.f32 %v3353, %v4029
        %v4035 = vld [vmem:[#allocation23] sm:$0x1]
        %v4036 = vld [vmem:[#allocation25] sm:$0x1]
        %4037 = vadd.xlane.f32.xlu0 %v4034
        %v4038 = vpop.xlane.xlu0 %4037
        %v4039 = vmul.f32 %v4038, %v2673
        %v4040 = vsub.f32 %v4034, %v4039
        %v4041 = vmul.f32 %v4040, %v4040
        %4042 = vadd.xlane.f32.xlu0 %v4041
        %v4043 = vpop.xlane.xlu0 %4042
        %v4044 = vmul.f32 %v4043, %v2673
        %v4045 = vadd.f32 %v4044, 1e-05
        %v4046 = vrsqrt.pop %v4045
        %v4047 = vmul.f32 %v4040, %v4046
        %v4049 = vlaneseq
        %v4050 = vshrl.u32 %v4049, 7
        %v4051 = vsub.s32 0, %v4050
        %v4052 = vrot.slane %v4035, %v4051
        %v4054 = vmul.f32 %v4047, %v4052
        %v4056 = vlaneseq
        %v4057 = vshrl.u32 %v4056, 7
        %v4058 = vsub.s32 0, %v4057
        %v4059 = vrot.slane %v4036, %v4058
        %v4061 = vadd.f32 %v4054, %v4059
        %v4062 = vpack.c.bf16 %v4061, %v4061
        %s4063 = scalar_lea.vmem %s21, 192
        %v4064 = vld [vmem:[%s4063] sm:$0xff]
        %v4065 = vld [vmem:[%s4063 + $0x8] sm:$0xf]
        %v4066 = vld [vmem:[%s4063 + $0xc] sm:$0xff]
        %v4067 = vld [vmem:[%s4063 + $0x14] sm:$0xf]
        %v4068 = vld [vmem:[%s4063 + $0x18] sm:$0xff]
        %v4069 = vld [vmem:[%s4063 + $0x20] sm:$0xf]
        %v4070 = vld [vmem:[%s4063 + $0x24] sm:$0xff]
        %v4071 = vld [vmem:[%s4063 + $0x2c] sm:$0xf]
        %v4072 = vld [vmem:[%s4063 + $0x30] sm:$0xff]
        %v4073 = vld [vmem:[%s4063 + $0x38] sm:$0xf]
        %v4074 = vld [vmem:[%s4063 + $0x3c] sm:$0xff]
        %v4075 = vld [vmem:[%s4063 + $0x44] sm:$0xf]
        %v4076 = vld [vmem:[%s4063 + $0x48] sm:$0xff]
        %v4077 = vld [vmem:[%s4063 + $0x50] sm:$0xf]
        %v4078 = vld [vmem:[%s4063 + $0x54] sm:$0xff]
        %v4079 = vld [vmem:[%s4063 + $0x5c] sm:$0xf]
        %v4080 = vld [vmem:[%s4063 + $0x60] sm:$0xff]
        %v4081 = vld [vmem:[%s4063 + $0x68] sm:$0xf]
        %v4082 = vld [vmem:[%s4063 + $0x6c] sm:$0xff]
        %v4083 = vld [vmem:[%s4063 + $0x74] sm:$0xf]
        %v4084 = vld [vmem:[%s4063 + $0x78] sm:$0xff]
        %v4085 = vld [vmem:[%s4063 + $0x80] sm:$0xf]
        %v4086 = vld [vmem:[%s4063 + $0x84] sm:$0xff]
        %v4087 = vld [vmem:[%s4063 + $0x8c] sm:$0xf]
        %v4088 = vld [vmem:[%s4063 + $0x90] sm:$0xff]
        %v4089 = vld [vmem:[%s4063 + $0x98] sm:$0xf]
        %v4090 = vld [vmem:[%s4063 + $0x9c] sm:$0xff]
        %v4091 = vld [vmem:[%s4063 + $0xa4] sm:$0xf]
        %v4092 = vld [vmem:[%s4063 + $0xa8] sm:$0xff]
        %v4093 = vld [vmem:[%s4063 + $0xb0] sm:$0xf]
        %v4094 = vld [vmem:[%s4063 + $0xb4] sm:$0xff]
        %v4095 = vld [vmem:[%s4063 + $0xbc] sm:$0xf]
        %v4128 = vunpack.c.l.b16 %v4064
        %v4129 = vunpack.c.h.b16 %v4064
        %v4130 = vunpack.c.l.b16 %v4065
        %v4131 = vunpack.c.l.b16 %v4066
        %v4132 = vunpack.c.h.b16 %v4066
        %v4133 = vunpack.c.l.b16 %v4067
        %v4134 = vunpack.c.l.b16 %v4068
        %v4135 = vunpack.c.h.b16 %v4068
        %v4136 = vunpack.c.l.b16 %v4069
        %v4137 = vunpack.c.l.b16 %v4070
        %v4138 = vunpack.c.h.b16 %v4070
        %v4139 = vunpack.c.l.b16 %v4071
        %v4140 = vunpack.c.l.b16 %v4072
        %v4141 = vunpack.c.h.b16 %v4072
        %v4142 = vunpack.c.l.b16 %v4073
        %v4143 = vunpack.c.l.b16 %v4074
        %v4144 = vunpack.c.h.b16 %v4074
        %v4145 = vunpack.c.l.b16 %v4075
        %v4146 = vunpack.c.l.b16 %v4076
        %v4147 = vunpack.c.h.b16 %v4076
        %v4148 = vunpack.c.l.b16 %v4077
        %v4149 = vunpack.c.l.b16 %v4078
        %v4150 = vunpack.c.h.b16 %v4078
        %v4151 = vunpack.c.l.b16 %v4079
        %v4152 = vunpack.c.l.b16 %v4080
        %v4153 = vunpack.c.h.b16 %v4080
        %v4154 = vunpack.c.l.b16 %v4081
        %v4155 = vunpack.c.l.b16 %v4082
        %v4156 = vunpack.c.h.b16 %v4082
        %v4157 = vunpack.c.l.b16 %v4083
        %v4158 = vunpack.c.l.b16 %v4084
        %v4159 = vunpack.c.h.b16 %v4084
        %v4160 = vunpack.c.l.b16 %v4085
        %v4161 = vunpack.c.l.b16 %v4086
        %v4162 = vunpack.c.h.b16 %v4086
        %v4163 = vunpack.c.l.b16 %v4087
        %v4164 = vunpack.c.l.b16 %v4088
        %v4165 = vunpack.c.h.b16 %v4088
        %v4166 = vunpack.c.l.b16 %v4089
        %v4167 = vunpack.c.l.b16 %v4090
        %v4168 = vunpack.c.h.b16 %v4090
        %v4169 = vunpack.c.l.b16 %v4091
        %v4170 = vunpack.c.l.b16 %v4092
        %v4171 = vunpack.c.h.b16 %v4092
        %v4172 = vunpack.c.l.b16 %v4093
        %v4173 = vunpack.c.l.b16 %v4094
        %v4174 = vunpack.c.h.b16 %v4094
        %v4175 = vunpack.c.l.b16 %v4095
        %v4176 = vpack.c.b16 %v4131, %v4128
        %v4177 = vpack.c.b16 %v4132, %v4129
        %v4178 = vpack.c.b16 %v4133, %v4130
        %v4179 = vpack.c.b16 %v4137, %v4134
        %v4180 = vpack.c.b16 %v4138, %v4135
        %v4181 = vpack.c.b16 %v4139, %v4136
        %v4182 = vpack.c.b16 %v4143, %v4140
        %v4183 = vpack.c.b16 %v4144, %v4141
        %v4184 = vpack.c.b16 %v4145, %v4142
        %v4185 = vpack.c.b16 %v4149, %v4146
        %v4186 = vpack.c.b16 %v4150, %v4147
        %v4187 = vpack.c.b16 %v4151, %v4148
        %v4188 = vpack.c.b16 %v4155, %v4152
        %v4189 = vpack.c.b16 %v4156, %v4153
        %v4190 = vpack.c.b16 %v4157, %v4154
        %v4191 = vpack.c.b16 %v4161, %v4158
        %v4192 = vpack.c.b16 %v4162, %v4159
        %v4193 = vpack.c.b16 %v4163, %v4160
        %v4194 = vpack.c.b16 %v4167, %v4164
        %v4195 = vpack.c.b16 %v4168, %v4165
        %v4196 = vpack.c.b16 %v4169, %v4166
        %v4197 = vpack.c.b16 %v4173, %v4170
        %v4198 = vpack.c.b16 %v4174, %v4171
        %v4199 = vpack.c.b16 %v4175, %v4172
        %4224 = vmatprep.subr.bf16.mxu0 %v4177
        %4225 = vmatpush1.bf16.msra.mxu0 %v4176
        %4226 = vmatprep.subr.bf16.mxu0 %v4180
        %4227 = vmatpush1.bf16.msra.mxu0 %v4179
        %4228 = vmatprep.subr.bf16.mxu0 %v4183
        %4229 = vmatpush1.bf16.msra.mxu0 %v4182
        %4230 = vmatprep.subr.bf16.mxu0 %v4186
        %4231 = vmatpush1.bf16.msra.mxu0 %v4185
        %4232 = vmatprep.subr.bf16.mxu0 %v4189
        %4233 = vmatpush1.bf16.msra.mxu0 %v4188
        %4234 = vmatprep.subr.bf16.mxu0 %v4192
        %4235 = vmatpush1.bf16.msra.mxu0 %v4191
        %4236 = vmatprep.subr.bf16.mxu0 %v4195
        %4237 = vmatpush1.bf16.msra.mxu0 %v4194
        %4238 = vmatprep.subr.bf16.mxu0 %v4198
        %4239 = vmatpush1.bf16.msra.mxu0 %v4197
        %4240 = vmatprep.subr.bf16.mxu0 0
        %4241 = vmatpush1.bf16.msra.mxu0 0
        %4242 = vmatprep.subr.bf16.mxu0 0
        %4243 = vmatpush1.bf16.msra.mxu0 0
        %4244 = vmatprep.subr.bf16.mxu0 0
        %4245 = vmatpush1.bf16.msra.mxu0 0
        %4246 = vmatprep.subr.bf16.mxu0 0
        %4247 = vmatpush1.bf16.msra.mxu0 0
        %4248 = vmatprep.subr.bf16.mxu0 0
        %4249 = vmatpush1.bf16.msra.mxu0 0
        %4250 = vmatprep.subr.bf16.mxu0 0
        %4251 = vmatpush1.bf16.msra.mxu0 0
        %4252 = vmatprep.subr.bf16.mxu0 0
        %4253 = vmatpush1.bf16.msra.mxu0 0
        %4254 = vmatprep.subr.bf16.mxu0 0
        %4255 = vmatpush1.bf16.msra.mxu0 0
        %4256 = vmatprep.mubr.bf16.mxu0 0
        %4257 = vmatmul.mubr.bf16.gmra.mrb[0].mxu0 %v4062
        %v4258 = vpop.f32.mrb[0].mxu0
        %v4259 = vadd.f32 0.0, %v4258
        %v4260 = vpop.f32.mrb[0].mxu0
        %v4261 = vadd.f32 0.0, %v4260
        %v4262 = vpop.f32.mrb[0].mxu0
        %v4263 = vpop.f32.mrb[0].mxu0
        %4264 = vdwg.mxu0
        %4265 = vmatprep.subr.bf16.mxu0 0
        %4266 = vmatpush1.bf16.msra.mxu0 %v4178
        %4267 = vmatprep.subr.bf16.mxu0 0
        %4268 = vmatpush1.bf16.msra.mxu0 %v4181
        %4269 = vmatprep.subr.bf16.mxu0 0
        %4270 = vmatpush1.bf16.msra.mxu0 %v4184
        %4271 = vmatprep.subr.bf16.mxu0 0
        %4272 = vmatpush1.bf16.msra.mxu0 %v4187
        %4273 = vmatprep.subr.bf16.mxu0 0
        %4274 = vmatpush1.bf16.msra.mxu0 %v4190
        %4275 = vmatprep.subr.bf16.mxu0 0
        %4276 = vmatpush1.bf16.msra.mxu0 %v4193
        %4277 = vmatprep.subr.bf16.mxu0 0
        %4278 = vmatpush1.bf16.msra.mxu0 %v4196
        %4279 = vmatprep.subr.bf16.mxu0 0
        %4280 = vmatpush1.bf16.msra.mxu0 %v4199
        %4281 = vmatprep.subr.bf16.mxu0 0
        %4282 = vmatpush1.bf16.msra.mxu0 0
        %4283 = vmatprep.subr.bf16.mxu0 0
        %4284 = vmatpush1.bf16.msra.mxu0 0
        %4285 = vmatprep.subr.bf16.mxu0 0
        %4286 = vmatpush1.bf16.msra.mxu0 0
        %4287 = vmatprep.subr.bf16.mxu0 0
        %4288 = vmatpush1.bf16.msra.mxu0 0
        %4289 = vmatprep.subr.bf16.mxu0 0
        %4290 = vmatpush1.bf16.msra.mxu0 0
        %4291 = vmatprep.subr.bf16.mxu0 0
        %4292 = vmatpush1.bf16.msra.mxu0 0
        %4293 = vmatprep.subr.bf16.mxu0 0
        %4294 = vmatpush1.bf16.msra.mxu0 0
        %4295 = vmatprep.subr.bf16.mxu0 0
        %4296 = vmatpush1.bf16.msra.mxu0 0
        %4297 = vmatprep.mubr.bf16.mxu0 0
        %4298 = vmatmul.mubr.bf16.gmra.mrb[0].mxu0 %v4062
        %v4299 = vpop.f32.mrb[0].mxu0
        %v4300 = vadd.f32 0.0, %v4299
        %v4301 = vpop.f32.mrb[0].mxu0
        %v4302 = vpop.f32.mrb[0].mxu0
        %v4303 = vpop.f32.mrb[0].mxu0
        %4304 = vdwg.mxu0
        %v4305 = vpack.c.bf16 %v4261, %v4261
        %v4306 = vpack.c.bf16 %v4300, %v4300
        %v4308 = vrot.slane %v4305, 4
        %v4311 = vsel %vm1630, %v4305, %v4308
        %v4313 = vmul.bf16 %v4311, %v1667
        %v4314 = vmul.bf16 %v4311, %v1668
        %v4315 = vmul.bf16 %v4311, %v1669
        %v4316 = vmul.bf16 %v4311, %v1670
        %v4317 = vmul.bf16 %v4311, %v1671
        %v4318 = vmul.bf16 %v4311, %v1672
        %v4319 = vmul.bf16 %v4311, %v1673
        %v4320 = vmul.bf16 %v4311, %v1674
        %v4322 = vrot.slane %v4306, 4
        %v4325 = vsel %vm1630, %v4306, %v4322
        %v4327 = vmul.bf16 %v4325, %v1667
        %v4328 = vmul.bf16 %v4325, %v1668
        %v4329 = vmul.bf16 %v4325, %v1669
        %v4330 = vmul.bf16 %v4325, %v1670
        %v4331 = vmul.bf16 %v4325, %v1671
        %v4332 = vmul.bf16 %v4325, %v1672
        %v4333 = vmul.bf16 %v4325, %v1673
        %v4334 = vmul.bf16 %v4325, %v1674
        %s4335 = scalar_lea.vmem %s23, 1
        %v4336 = vld [vmem:[%s4335] sm:$0x1]
        %v4338 = vlaneseq
        %v4339 = vshrl.u32 %v4338, 7
        %v4340 = vsub.s32 0, %v4339
        %v4341 = vrot.slane %v4336, %v4340
        %v4343 = vadd.f32 %v4259, %v4341
        %v4344 = vpack.c.bf16 %v4343, %v4343
        %s4345 = scalar_lea.vmem [#allocation7], 1
        %v4346 = vld [vmem:[%s4345] sm:$0x1]
        %v4348 = vlaneseq
        %v4349 = vshrl.u32 %v4348, 7
        %v4350 = vsub.s32 0, %v4349
        %v4351 = vrot.slane %v4346, %v4350
        %v4353 = vadd.f32 %v4259, %v4351
        %v4354 = vpack.c.bf16 %v4353, %v4353
        %v4355 = vmul.bf16 %v4354, %v1735
        %v4356 = vmul.bf16 %v4354, %v1736
        %v4357 = vmul.bf16 %v4354, %v1737
        %v4358 = vmul.bf16 %v4354, %v1738
        %v4359 = vmul.bf16 %v4354, %v1739
        %v4360 = vmul.bf16 %v4354, %v1740
        %v4361 = vmul.bf16 %v4354, %v1741
        %v4362 = vmul.bf16 %v4354, %v1742
        %s4363 = scalar_lea.vmem [#allocation5], 512
        %v4364 = vld [vmem:[%s4363] sm:$0xf]
        %v4365 = vld [vmem:[%s4363 + $0x4] sm:$0xf]
        %v4366 = vld [vmem:[%s4363 + $0x8] sm:$0xf]
        %v4367 = vld [vmem:[%s4363 + $0xc] sm:$0xf]
        %v4368 = vld [vmem:[%s4363 + $0x10] sm:$0xf]
        %v4369 = vld [vmem:[%s4363 + $0x14] sm:$0xf]
        %v4370 = vld [vmem:[%s4363 + $0x18] sm:$0xf]
        %v4371 = vld [vmem:[%s4363 + $0x1c] sm:$0xf]
        %v4372 = vld [vmem:[%s4363 + $0x20] sm:$0xf]
        %v4373 = vld [vmem:[%s4363 + $0x24] sm:$0xf]
        %v4374 = vld [vmem:[%s4363 + $0x28] sm:$0xf]
        %v4375 = vld [vmem:[%s4363 + $0x2c] sm:$0xf]
        %v4376 = vld [vmem:[%s4363 + $0x30] sm:$0xf]
        %v4377 = vld [vmem:[%s4363 + $0x34] sm:$0xf]
        %v4378 = vld [vmem:[%s4363 + $0x38] sm:$0xf]
        %v4379 = vld [vmem:[%s4363 + $0x3c] sm:$0xf]
        %v4380 = vld [vmem:[%s4363 + $0x40] sm:$0xf]
        %v4381 = vld [vmem:[%s4363 + $0x44] sm:$0xf]
        %v4382 = vld [vmem:[%s4363 + $0x48] sm:$0xf]
        %v4383 = vld [vmem:[%s4363 + $0x4c] sm:$0xf]
        %v4384 = vld [vmem:[%s4363 + $0x50] sm:$0xf]
        %v4385 = vld [vmem:[%s4363 + $0x54] sm:$0xf]
        %v4386 = vld [vmem:[%s4363 + $0x58] sm:$0xf]
        %v4387 = vld [vmem:[%s4363 + $0x5c] sm:$0xf]
        %v4388 = vld [vmem:[%s4363 + $0x60] sm:$0xf]
        %v4389 = vld [vmem:[%s4363 + $0x64] sm:$0xf]
        %v4390 = vld [vmem:[%s4363 + $0x68] sm:$0xf]
        %v4391 = vld [vmem:[%s4363 + $0x6c] sm:$0xf]
        %v4392 = vld [vmem:[%s4363 + $0x70] sm:$0xf]
        %v4393 = vld [vmem:[%s4363 + $0x74] sm:$0xf]
        %v4394 = vld [vmem:[%s4363 + $0x78] sm:$0xf]
        %v4395 = vld [vmem:[%s4363 + $0x7c] sm:$0xf]
        %v4396 = vld [vmem:[%s4363 + $0x80] sm:$0xf]
        %v4397 = vld [vmem:[%s4363 + $0x84] sm:$0xf]
        %v4398 = vld [vmem:[%s4363 + $0x88] sm:$0xf]
        %v4399 = vld [vmem:[%s4363 + $0x8c] sm:$0xf]
        %v4400 = vld [vmem:[%s4363 + $0x90] sm:$0xf]
        %v4401 = vld [vmem:[%s4363 + $0x94] sm:$0xf]
        %v4402 = vld [vmem:[%s4363 + $0x98] sm:$0xf]
        %v4403 = vld [vmem:[%s4363 + $0x9c] sm:$0xf]
        %v4404 = vld [vmem:[%s4363 + $0xa0] sm:$0xf]
        %v4405 = vld [vmem:[%s4363 + $0xa4] sm:$0xf]
        %v4406 = vld [vmem:[%s4363 + $0xa8] sm:$0xf]
        %v4407 = vld [vmem:[%s4363 + $0xac] sm:$0xf]
        %v4408 = vld [vmem:[%s4363 + $0xb0] sm:$0xf]
        %v4409 = vld [vmem:[%s4363 + $0xb4] sm:$0xf]
        %v4410 = vld [vmem:[%s4363 + $0xb8] sm:$0xf]
        %v4411 = vld [vmem:[%s4363 + $0xbc] sm:$0xf]
        %v4412 = vld [vmem:[%s4363 + $0xc0] sm:$0xf]
        %v4413 = vld [vmem:[%s4363 + $0xc4] sm:$0xf]
        %v4414 = vld [vmem:[%s4363 + $0xc8] sm:$0xf]
        %v4415 = vld [vmem:[%s4363 + $0xcc] sm:$0xf]
        %v4416 = vld [vmem:[%s4363 + $0xd0] sm:$0xf]
        %v4417 = vld [vmem:[%s4363 + $0xd4] sm:$0xf]
        %v4418 = vld [vmem:[%s4363 + $0xd8] sm:$0xf]
        %v4419 = vld [vmem:[%s4363 + $0xdc] sm:$0xf]
        %v4420 = vld [vmem:[%s4363 + $0xe0] sm:$0xf]
        %v4421 = vld [vmem:[%s4363 + $0xe4] sm:$0xf]
        %v4422 = vld [vmem:[%s4363 + $0xe8] sm:$0xf]
        %v4423 = vld [vmem:[%s4363 + $0xec] sm:$0xf]
        %v4424 = vld [vmem:[%s4363 + $0xf0] sm:$0xf]
        %v4425 = vld [vmem:[%s4363 + $0xf4] sm:$0xf]
        %v4426 = vld [vmem:[%s4363 + $0xf8] sm:$0xf]
        %v4427 = vld [vmem:[%s4363 + $0xfc] sm:$0xf]
        %v4428 = vld [vmem:[%s4363 + $0x100] sm:$0xf]
        %v4429 = vld [vmem:[%s4363 + $0x104] sm:$0xf]
        %v4430 = vld [vmem:[%s4363 + $0x108] sm:$0xf]
        %v4431 = vld [vmem:[%s4363 + $0x10c] sm:$0xf]
        %v4432 = vld [vmem:[%s4363 + $0x110] sm:$0xf]
        %v4433 = vld [vmem:[%s4363 + $0x114] sm:$0xf]
        %v4434 = vld [vmem:[%s4363 + $0x118] sm:$0xf]
        %v4435 = vld [vmem:[%s4363 + $0x11c] sm:$0xf]
        %v4436 = vld [vmem:[%s4363 + $0x120] sm:$0xf]
        %v4437 = vld [vmem:[%s4363 + $0x124] sm:$0xf]
        %v4438 = vld [vmem:[%s4363 + $0x128] sm:$0xf]
        %v4439 = vld [vmem:[%s4363 + $0x12c] sm:$0xf]
        %v4440 = vld [vmem:[%s4363 + $0x130] sm:$0xf]
        %v4441 = vld [vmem:[%s4363 + $0x134] sm:$0xf]
        %v4442 = vld [vmem:[%s4363 + $0x138] sm:$0xf]
        %v4443 = vld [vmem:[%s4363 + $0x13c] sm:$0xf]
        %v4444 = vld [vmem:[%s4363 + $0x140] sm:$0xf]
        %v4445 = vld [vmem:[%s4363 + $0x144] sm:$0xf]
        %v4446 = vld [vmem:[%s4363 + $0x148] sm:$0xf]
        %v4447 = vld [vmem:[%s4363 + $0x14c] sm:$0xf]
        %v4448 = vld [vmem:[%s4363 + $0x150] sm:$0xf]
        %v4449 = vld [vmem:[%s4363 + $0x154] sm:$0xf]
        %v4450 = vld [vmem:[%s4363 + $0x158] sm:$0xf]
        %v4451 = vld [vmem:[%s4363 + $0x15c] sm:$0xf]
        %v4452 = vld [vmem:[%s4363 + $0x160] sm:$0xf]
        %v4453 = vld [vmem:[%s4363 + $0x164] sm:$0xf]
        %v4454 = vld [vmem:[%s4363 + $0x168] sm:$0xf]
        %v4455 = vld [vmem:[%s4363 + $0x16c] sm:$0xf]
        %v4456 = vld [vmem:[%s4363 + $0x170] sm:$0xf]
        %v4457 = vld [vmem:[%s4363 + $0x174] sm:$0xf]
        %v4458 = vld [vmem:[%s4363 + $0x178] sm:$0xf]
        %v4459 = vld [vmem:[%s4363 + $0x17c] sm:$0xf]
        %v4460 = vld [vmem:[%s4363 + $0x180] sm:$0xf]
        %v4461 = vld [vmem:[%s4363 + $0x184] sm:$0xf]
        %v4462 = vld [vmem:[%s4363 + $0x188] sm:$0xf]
        %v4463 = vld [vmem:[%s4363 + $0x18c] sm:$0xf]
        %v4464 = vld [vmem:[%s4363 + $0x190] sm:$0xf]
        %v4465 = vld [vmem:[%s4363 + $0x194] sm:$0xf]
        %v4466 = vld [vmem:[%s4363 + $0x198] sm:$0xf]
        %v4467 = vld [vmem:[%s4363 + $0x19c] sm:$0xf]
        %v4468 = vld [vmem:[%s4363 + $0x1a0] sm:$0xf]
        %v4469 = vld [vmem:[%s4363 + $0x1a4] sm:$0xf]
        %v4470 = vld [vmem:[%s4363 + $0x1a8] sm:$0xf]
        %v4471 = vld [vmem:[%s4363 + $0x1ac] sm:$0xf]
        %v4472 = vld [vmem:[%s4363 + $0x1b0] sm:$0xf]
        %v4473 = vld [vmem:[%s4363 + $0x1b4] sm:$0xf]
        %v4474 = vld [vmem:[%s4363 + $0x1b8] sm:$0xf]
        %v4475 = vld [vmem:[%s4363 + $0x1bc] sm:$0xf]
        %v4476 = vld [vmem:[%s4363 + $0x1c0] sm:$0xf]
        %v4477 = vld [vmem:[%s4363 + $0x1c4] sm:$0xf]
        %v4478 = vld [vmem:[%s4363 + $0x1c8] sm:$0xf]
        %v4479 = vld [vmem:[%s4363 + $0x1cc] sm:$0xf]
        %v4480 = vld [vmem:[%s4363 + $0x1d0] sm:$0xf]
        %v4481 = vld [vmem:[%s4363 + $0x1d4] sm:$0xf]
        %v4482 = vld [vmem:[%s4363 + $0x1d8] sm:$0xf]
        %v4483 = vld [vmem:[%s4363 + $0x1dc] sm:$0xf]
        %v4484 = vld [vmem:[%s4363 + $0x1e0] sm:$0xf]
        %v4485 = vld [vmem:[%s4363 + $0x1e4] sm:$0xf]
        %v4486 = vld [vmem:[%s4363 + $0x1e8] sm:$0xf]
        %v4487 = vld [vmem:[%s4363 + $0x1ec] sm:$0xf]
        %v4488 = vld [vmem:[%s4363 + $0x1f0] sm:$0xf]
        %v4489 = vld [vmem:[%s4363 + $0x1f4] sm:$0xf]
        %v4490 = vld [vmem:[%s4363 + $0x1f8] sm:$0xf]
        %v4491 = vld [vmem:[%s4363 + $0x1fc] sm:$0xf]
        %v4620 = vunpack.c.l.b16 %v4364
        %v4621 = vunpack.c.l.b16 %v4365
        %v4622 = vunpack.c.l.b16 %v4366
        %v4623 = vunpack.c.l.b16 %v4367
        %v4624 = vunpack.c.l.b16 %v4368
        %v4625 = vunpack.c.l.b16 %v4369
        %v4626 = vunpack.c.l.b16 %v4370
        %v4627 = vunpack.c.l.b16 %v4371
        %v4628 = vunpack.c.l.b16 %v4372
        %v4629 = vunpack.c.l.b16 %v4373
        %v4630 = vunpack.c.l.b16 %v4374
        %v4631 = vunpack.c.l.b16 %v4375
        %v4632 = vunpack.c.l.b16 %v4376
        %v4633 = vunpack.c.l.b16 %v4377
        %v4634 = vunpack.c.l.b16 %v4378
        %v4635 = vunpack.c.l.b16 %v4379
        %v4636 = vunpack.c.l.b16 %v4380
        %v4637 = vunpack.c.l.b16 %v4381
        %v4638 = vunpack.c.l.b16 %v4382
        %v4639 = vunpack.c.l.b16 %v4383
        %v4640 = vunpack.c.l.b16 %v4384
        %v4641 = vunpack.c.l.b16 %v4385
        %v4642 = vunpack.c.l.b16 %v4386
        %v4643 = vunpack.c.l.b16 %v4387
        %v4644 = vunpack.c.l.b16 %v4388
        %v4645 = vunpack.c.l.b16 %v4389
        %v4646 = vunpack.c.l.b16 %v4390
        %v4647 = vunpack.c.l.b16 %v4391
        %v4648 = vunpack.c.l.b16 %v4392
        %v4649 = vunpack.c.l.b16 %v4393
        %v4650 = vunpack.c.l.b16 %v4394
        %v4651 = vunpack.c.l.b16 %v4395
        %v4652 = vunpack.c.l.b16 %v4396
        %v4653 = vunpack.c.l.b16 %v4397
        %v4654 = vunpack.c.l.b16 %v4398
        %v4655 = vunpack.c.l.b16 %v4399
        %v4656 = vunpack.c.l.b16 %v4400
        %v4657 = vunpack.c.l.b16 %v4401
        %v4658 = vunpack.c.l.b16 %v4402
        %v4659 = vunpack.c.l.b16 %v4403
        %v4660 = vunpack.c.l.b16 %v4404
        %v4661 = vunpack.c.l.b16 %v4405
        %v4662 = vunpack.c.l.b16 %v4406
        %v4663 = vunpack.c.l.b16 %v4407
        %v4664 = vunpack.c.l.b16 %v4408
        %v4665 = vunpack.c.l.b16 %v4409
        %v4666 = vunpack.c.l.b16 %v4410
        %v4667 = vunpack.c.l.b16 %v4411
        %v4668 = vunpack.c.l.b16 %v4412
        %v4669 = vunpack.c.l.b16 %v4413
        %v4670 = vunpack.c.l.b16 %v4414
        %v4671 = vunpack.c.l.b16 %v4415
        %v4672 = vunpack.c.l.b16 %v4416
        %v4673 = vunpack.c.l.b16 %v4417
        %v4674 = vunpack.c.l.b16 %v4418
        %v4675 = vunpack.c.l.b16 %v4419
        %v4676 = vunpack.c.l.b16 %v4420
        %v4677 = vunpack.c.l.b16 %v4421
        %v4678 = vunpack.c.l.b16 %v4422
        %v4679 = vunpack.c.l.b16 %v4423
        %v4680 = vunpack.c.l.b16 %v4424
        %v4681 = vunpack.c.l.b16 %v4425
        %v4682 = vunpack.c.l.b16 %v4426
        %v4683 = vunpack.c.l.b16 %v4427
        %v4684 = vunpack.c.l.b16 %v4428
        %v4685 = vunpack.c.l.b16 %v4429
        %v4686 = vunpack.c.l.b16 %v4430
        %v4687 = vunpack.c.l.b16 %v4431
        %v4688 = vunpack.c.l.b16 %v4432
        %v4689 = vunpack.c.l.b16 %v4433
        %v4690 = vunpack.c.l.b16 %v4434
        %v4691 = vunpack.c.l.b16 %v4435
        %v4692 = vunpack.c.l.b16 %v4436
        %v4693 = vunpack.c.l.b16 %v4437
        %v4694 = vunpack.c.l.b16 %v4438
        %v4695 = vunpack.c.l.b16 %v4439
        %v4696 = vunpack.c.l.b16 %v4440
        %v4697 = vunpack.c.l.b16 %v4441
        %v4698 = vunpack.c.l.b16 %v4442
        %v4699 = vunpack.c.l.b16 %v4443
        %v4700 = vunpack.c.l.b16 %v4444
        %v4701 = vunpack.c.l.b16 %v4445
        %v4702 = vunpack.c.l.b16 %v4446
        %v4703 = vunpack.c.l.b16 %v4447
        %v4704 = vunpack.c.l.b16 %v4448
        %v4705 = vunpack.c.l.b16 %v4449
        %v4706 = vunpack.c.l.b16 %v4450
        %v4707 = vunpack.c.l.b16 %v4451
        %v4708 = vunpack.c.l.b16 %v4452
        %v4709 = vunpack.c.l.b16 %v4453
        %v4710 = vunpack.c.l.b16 %v4454
        %v4711 = vunpack.c.l.b16 %v4455
        %v4712 = vunpack.c.l.b16 %v4456
        %v4713 = vunpack.c.l.b16 %v4457
        %v4714 = vunpack.c.l.b16 %v4458
        %v4715 = vunpack.c.l.b16 %v4459
        %v4716 = vunpack.c.l.b16 %v4460
        %v4717 = vunpack.c.l.b16 %v4461
        %v4718 = vunpack.c.l.b16 %v4462
        %v4719 = vunpack.c.l.b16 %v4463
        %v4720 = vunpack.c.l.b16 %v4464
        %v4721 = vunpack.c.l.b16 %v4465
        %v4722 = vunpack.c.l.b16 %v4466
        %v4723 = vunpack.c.l.b16 %v4467
        %v4724 = vunpack.c.l.b16 %v4468
        %v4725 = vunpack.c.l.b16 %v4469
        %v4726 = vunpack.c.l.b16 %v4470
        %v4727 = vunpack.c.l.b16 %v4471
        %v4728 = vunpack.c.l.b16 %v4472
        %v4729 = vunpack.c.l.b16 %v4473
        %v4730 = vunpack.c.l.b16 %v4474
        %v4731 = vunpack.c.l.b16 %v4475
        %v4732 = vunpack.c.l.b16 %v4476
        %v4733 = vunpack.c.l.b16 %v4477
        %v4734 = vunpack.c.l.b16 %v4478
        %v4735 = vunpack.c.l.b16 %v4479
        %v4736 = vunpack.c.l.b16 %v4480
        %v4737 = vunpack.c.l.b16 %v4481
        %v4738 = vunpack.c.l.b16 %v4482
        %v4739 = vunpack.c.l.b16 %v4483
        %v4740 = vunpack.c.l.b16 %v4484
        %v4741 = vunpack.c.l.b16 %v4485
        %v4742 = vunpack.c.l.b16 %v4486
        %v4743 = vunpack.c.l.b16 %v4487
        %v4744 = vunpack.c.l.b16 %v4488
        %v4745 = vunpack.c.l.b16 %v4489
        %v4746 = vunpack.c.l.b16 %v4490
        %v4747 = vunpack.c.l.b16 %v4491
        %v4748 = vpack.c.b16 %v4621, %v4620
        %v4749 = vpack.c.b16 %v4623, %v4622
        %v4750 = vpack.c.b16 %v4625, %v4624
        %v4751 = vpack.c.b16 %v4627, %v4626
        %v4752 = vpack.c.b16 %v4629, %v4628
        %v4753 = vpack.c.b16 %v4631, %v4630
        %v4754 = vpack.c.b16 %v4633, %v4632
        %v4755 = vpack.c.b16 %v4635, %v4634
        %v4756 = vpack.c.b16 %v4637, %v4636
        %v4757 = vpack.c.b16 %v4639, %v4638
        %v4758 = vpack.c.b16 %v4641, %v4640
        %v4759 = vpack.c.b16 %v4643, %v4642
        %v4760 = vpack.c.b16 %v4645, %v4644
        %v4761 = vpack.c.b16 %v4647, %v4646
        %v4762 = vpack.c.b16 %v4649, %v4648
        %v4763 = vpack.c.b16 %v4651, %v4650
        %v4764 = vpack.c.b16 %v4653, %v4652
        %v4765 = vpack.c.b16 %v4655, %v4654
        %v4766 = vpack.c.b16 %v4657, %v4656
        %v4767 = vpack.c.b16 %v4659, %v4658
        %v4768 = vpack.c.b16 %v4661, %v4660
        %v4769 = vpack.c.b16 %v4663, %v4662
        %v4770 = vpack.c.b16 %v4665, %v4664
        %v4771 = vpack.c.b16 %v4667, %v4666
        %v4772 = vpack.c.b16 %v4669, %v4668
        %v4773 = vpack.c.b16 %v4671, %v4670
        %v4774 = vpack.c.b16 %v4673, %v4672
        %v4775 = vpack.c.b16 %v4675, %v4674
        %v4776 = vpack.c.b16 %v4677, %v4676
        %v4777 = vpack.c.b16 %v4679, %v4678
        %v4778 = vpack.c.b16 %v4681, %v4680
        %v4779 = vpack.c.b16 %v4683, %v4682
        %v4780 = vpack.c.b16 %v4685, %v4684
        %v4781 = vpack.c.b16 %v4687, %v4686
        %v4782 = vpack.c.b16 %v4689, %v4688
        %v4783 = vpack.c.b16 %v4691, %v4690
        %v4784 = vpack.c.b16 %v4693, %v4692
        %v4785 = vpack.c.b16 %v4695, %v4694
        %v4786 = vpack.c.b16 %v4697, %v4696
        %v4787 = vpack.c.b16 %v4699, %v4698
        %v4788 = vpack.c.b16 %v4701, %v4700
        %v4789 = vpack.c.b16 %v4703, %v4702
        %v4790 = vpack.c.b16 %v4705, %v4704
        %v4791 = vpack.c.b16 %v4707, %v4706
        %v4792 = vpack.c.b16 %v4709, %v4708
        %v4793 = vpack.c.b16 %v4711, %v4710
        %v4794 = vpack.c.b16 %v4713, %v4712
        %v4795 = vpack.c.b16 %v4715, %v4714
        %v4796 = vpack.c.b16 %v4717, %v4716
        %v4797 = vpack.c.b16 %v4719, %v4718
        %v4798 = vpack.c.b16 %v4721, %v4720
        %v4799 = vpack.c.b16 %v4723, %v4722
        %v4800 = vpack.c.b16 %v4725, %v4724
        %v4801 = vpack.c.b16 %v4727, %v4726
        %v4802 = vpack.c.b16 %v4729, %v4728
        %v4803 = vpack.c.b16 %v4731, %v4730
        %v4804 = vpack.c.b16 %v4733, %v4732
        %v4805 = vpack.c.b16 %v4735, %v4734
        %v4806 = vpack.c.b16 %v4737, %v4736
        %v4807 = vpack.c.b16 %v4739, %v4738
        %v4808 = vpack.c.b16 %v4741, %v4740
        %v4809 = vpack.c.b16 %v4743, %v4742
        %v4810 = vpack.c.b16 %v4745, %v4744
        %v4811 = vpack.c.b16 %v4747, %v4746
        %4876 = vmatprep.subr.bf16.mxu0 0
        %4877 = vmatpush1.bf16.msra.mxu0 %v4748
        %4878 = vmatprep.subr.bf16.mxu0 0
        %4879 = vmatpush1.bf16.msra.mxu0 %v4749
        %4880 = vmatprep.subr.bf16.mxu0 0
        %4881 = vmatpush1.bf16.msra.mxu0 %v4750
        %4882 = vmatprep.subr.bf16.mxu0 0
        %4883 = vmatpush1.bf16.msra.mxu0 %v4751
        %4884 = vmatprep.subr.bf16.mxu0 0
        %4885 = vmatpush1.bf16.msra.mxu0 %v4752
        %4886 = vmatprep.subr.bf16.mxu0 0
        %4887 = vmatpush1.bf16.msra.mxu0 %v4753
        %4888 = vmatprep.subr.bf16.mxu0 0
        %4889 = vmatpush1.bf16.msra.mxu0 %v4754
        %4890 = vmatprep.subr.bf16.mxu0 0
        %4891 = vmatpush1.bf16.msra.mxu0 %v4755
        %4892 = vmatprep.subr.bf16.mxu0 0
        %4893 = vmatpush1.bf16.msra.mxu0 %v4756
        %4894 = vmatprep.subr.bf16.mxu0 0
        %4895 = vmatpush1.bf16.msra.mxu0 %v4757
        %4896 = vmatprep.subr.bf16.mxu0 0
        %4897 = vmatpush1.bf16.msra.mxu0 %v4758
        %4898 = vmatprep.subr.bf16.mxu0 0
        %4899 = vmatpush1.bf16.msra.mxu0 %v4759
        %4900 = vmatprep.subr.bf16.mxu0 0
        %4901 = vmatpush1.bf16.msra.mxu0 %v4760
        %4902 = vmatprep.subr.bf16.mxu0 0
        %4903 = vmatpush1.bf16.msra.mxu0 %v4761
        %4904 = vmatprep.subr.bf16.mxu0 0
        %4905 = vmatpush1.bf16.msra.mxu0 %v4762
        %4906 = vmatprep.subr.bf16.mxu0 0
        %4907 = vmatpush1.bf16.msra.mxu0 %v4763
        %4908 = vmatprep.mubr.bf16.mxu0 %v4356
        %4909 = vmatmul.mubr.bf16.gmra.mrb[0].mxu0 %v4355
        %v4910 = vpop.f32.mrb[0].mxu0
        %v4911 = vadd.f32 0.0, %v4910
        %v4912 = vpop.f32.mrb[0].mxu0
        %v4913 = vpop.f32.mrb[0].mxu0
        %v4914 = vpop.f32.mrb[0].mxu0
        %4915 = vdwg.mxu0
        %4916 = vmatprep.subr.bf16.mxu0 0
        %4917 = vmatpush1.bf16.msra.mxu0 %v4764
        %4918 = vmatprep.subr.bf16.mxu0 0
        %4919 = vmatpush1.bf16.msra.mxu0 %v4765
        %4920 = vmatprep.subr.bf16.mxu0 0
        %4921 = vmatpush1.bf16.msra.mxu0 %v4766
        %4922 = vmatprep.subr.bf16.mxu0 0
        %4923 = vmatpush1.bf16.msra.mxu0 %v4767
        %4924 = vmatprep.subr.bf16.mxu0 0
        %4925 = vmatpush1.bf16.msra.mxu0 %v4768
        %4926 = vmatprep.subr.bf16.mxu0 0
        %4927 = vmatpush1.bf16.msra.mxu0 %v4769
        %4928 = vmatprep.subr.bf16.mxu0 0
        %4929 = vmatpush1.bf16.msra.mxu0 %v4770
        %4930 = vmatprep.subr.bf16.mxu0 0
        %4931 = vmatpush1.bf16.msra.mxu0 %v4771
        %4932 = vmatprep.subr.bf16.mxu0 0
        %4933 = vmatpush1.bf16.msra.mxu0 %v4772
        %4934 = vmatprep.subr.bf16.mxu0 0
        %4935 = vmatpush1.bf16.msra.mxu0 %v4773
        %4936 = vmatprep.subr.bf16.mxu0 0
        %4937 = vmatpush1.bf16.msra.mxu0 %v4774
        %4938 = vmatprep.subr.bf16.mxu0 0
        %4939 = vmatpush1.bf16.msra.mxu0 %v4775
        %4940 = vmatprep.subr.bf16.mxu0 0
        %4941 = vmatpush1.bf16.msra.mxu0 %v4776
        %4942 = vmatprep.subr.bf16.mxu0 0
        %4943 = vmatpush1.bf16.msra.mxu0 %v4777
        %4944 = vmatprep.subr.bf16.mxu0 0
        %4945 = vmatpush1.bf16.msra.mxu0 %v4778
        %4946 = vmatprep.subr.bf16.mxu0 0
        %4947 = vmatpush1.bf16.msra.mxu0 %v4779
        %4948 = vmatprep.mubr.bf16.mxu0 %v4358
        %4949 = vmatmul.mubr.bf16.gmra.mrb[0].mxu0 %v4357
        %v4950 = vpop.f32.mrb[0].mxu0
        %v4951 = vadd.f32 %v4911, %v4950
        %v4952 = vpop.f32.mrb[0].mxu0
        %v4953 = vpop.f32.mrb[0].mxu0
        %v4954 = vpop.f32.mrb[0].mxu0
        %4955 = vdwg.mxu0
        %4956 = vmatprep.subr.bf16.mxu0 0
        %4957 = vmatpush1.bf16.msra.mxu0 %v4780
        %4958 = vmatprep.subr.bf16.mxu0 0
        %4959 = vmatpush1.bf16.msra.mxu0 %v4781
        %4960 = vmatprep.subr.bf16.mxu0 0
        %4961 = vmatpush1.bf16.msra.mxu0 %v4782
        %4962 = vmatprep.subr.bf16.mxu0 0
        %4963 = vmatpush1.bf16.msra.mxu0 %v4783
        %4964 = vmatprep.subr.bf16.mxu0 0
        %4965 = vmatpush1.bf16.msra.mxu0 %v4784
        %4966 = vmatprep.subr.bf16.mxu0 0
        %4967 = vmatpush1.bf16.msra.mxu0 %v4785
        %4968 = vmatprep.subr.bf16.mxu0 0
        %4969 = vmatpush1.bf16.msra.mxu0 %v4786
        %4970 = vmatprep.subr.bf16.mxu0 0
        %4971 = vmatpush1.bf16.msra.mxu0 %v4787
        %4972 = vmatprep.subr.bf16.mxu0 0
        %4973 = vmatpush1.bf16.msra.mxu0 %v4788
        %4974 = vmatprep.subr.bf16.mxu0 0
        %4975 = vmatpush1.bf16.msra.mxu0 %v4789
        %4976 = vmatprep.subr.bf16.mxu0 0
        %4977 = vmatpush1.bf16.msra.mxu0 %v4790
        %4978 = vmatprep.subr.bf16.mxu0 0
        %4979 = vmatpush1.bf16.msra.mxu0 %v4791
        %4980 = vmatprep.subr.bf16.mxu0 0
        %4981 = vmatpush1.bf16.msra.mxu0 %v4792
        %4982 = vmatprep.subr.bf16.mxu0 0
        %4983 = vmatpush1.bf16.msra.mxu0 %v4793
        %4984 = vmatprep.subr.bf16.mxu0 0
        %4985 = vmatpush1.bf16.msra.mxu0 %v4794
        %4986 = vmatprep.subr.bf16.mxu0 0
        %4987 = vmatpush1.bf16.msra.mxu0 %v4795
        %4988 = vmatprep.mubr.bf16.mxu0 %v4360
        %4989 = vmatmul.mubr.bf16.gmra.mrb[0].mxu0 %v4359
        %v4990 = vpop.f32.mrb[0].mxu0
        %v4991 = vadd.f32 %v4951, %v4990
        %v4992 = vpop.f32.mrb[0].mxu0
        %v4993 = vpop.f32.mrb[0].mxu0
        %v4994 = vpop.f32.mrb[0].mxu0
        %4995 = vdwg.mxu0
        %4996 = vmatprep.subr.bf16.mxu0 0
        %4997 = vmatpush1.bf16.msra.mxu0 %v4796
        %4998 = vmatprep.subr.bf16.mxu0 0
        %4999 = vmatpush1.bf16.msra.mxu0 %v4797
        %5000 = vmatprep.subr.bf16.mxu0 0
        %5001 = vmatpush1.bf16.msra.mxu0 %v4798
        %5002 = vmatprep.subr.bf16.mxu0 0
        %5003 = vmatpush1.bf16.msra.mxu0 %v4799
        %5004 = vmatprep.subr.bf16.mxu0 0
        %5005 = vmatpush1.bf16.msra.mxu0 %v4800
        %5006 = vmatprep.subr.bf16.mxu0 0
        %5007 = vmatpush1.bf16.msra.mxu0 %v4801
        %5008 = vmatprep.subr.bf16.mxu0 0
        %5009 = vmatpush1.bf16.msra.mxu0 %v4802
        %5010 = vmatprep.subr.bf16.mxu0 0
        %5011 = vmatpush1.bf16.msra.mxu0 %v4803
        %5012 = vmatprep.subr.bf16.mxu0 0
        %5013 = vmatpush1.bf16.msra.mxu0 %v4804
        %5014 = vmatprep.subr.bf16.mxu0 0
        %5015 = vmatpush1.bf16.msra.mxu0 %v4805
        %5016 = vmatprep.subr.bf16.mxu0 0
        %5017 = vmatpush1.bf16.msra.mxu0 %v4806
        %5018 = vmatprep.subr.bf16.mxu0 0
        %5019 = vmatpush1.bf16.msra.mxu0 %v4807
        %5020 = vmatprep.subr.bf16.mxu0 0
        %5021 = vmatpush1.bf16.msra.mxu0 %v4808
        %5022 = vmatprep.subr.bf16.mxu0 0
        %5023 = vmatpush1.bf16.msra.mxu0 %v4809
        %5024 = vmatprep.subr.bf16.mxu0 0
        %5025 = vmatpush1.bf16.msra.mxu0 %v4810
        %5026 = vmatprep.subr.bf16.mxu0 0
        %5027 = vmatpush1.bf16.msra.mxu0 %v4811
        %5028 = vmatprep.mubr.bf16.mxu0 %v4362
        %5029 = vmatmul.mubr.bf16.gmra.mrb[0].mxu0 %v4361
        %v5030 = vpop.f32.mrb[0].mxu0
        %v5031 = vadd.f32 %v4991, %v5030
        %v5032 = vpop.f32.mrb[0].mxu0
        %v5033 = vpop.f32.mrb[0].mxu0
        %v5034 = vpop.f32.mrb[0].mxu0
        %5035 = vdwg.mxu0
        %5036 = vmatprep.subr.bf16.mxu0 0
        %5037 = vmatpush1.bf16.xpose.msra.mxu0 %v4313
        %5038 = vmatprep.subr.bf16.mxu0 0
        %5039 = vmatpush1.bf16.xpose.msra.mxu0 %v4314
        %5040 = vmatprep.subr.bf16.mxu0 0
        %5041 = vmatpush1.bf16.xpose.msra.mxu0 %v4315
        %5042 = vmatprep.subr.bf16.mxu0 0
        %5043 = vmatpush1.bf16.xpose.msra.mxu0 %v4316
        %5044 = vmatprep.subr.bf16.mxu0 0
        %5045 = vmatpush1.bf16.xpose.msra.mxu0 %v4317
        %5046 = vmatprep.subr.bf16.mxu0 0
        %5047 = vmatpush1.bf16.xpose.msra.mxu0 %v4318
        %5048 = vmatprep.subr.bf16.mxu0 0
        %5049 = vmatpush1.bf16.xpose.msra.mxu0 %v4319
        %5050 = vmatprep.subr.bf16.mxu0 0
        %5051 = vmatpush1.bf16.xpose.msra.mxu0 %v4320
        %5052 = vmatprep.subr.bf16.mxu0 0
        %5053 = vmatpush1.bf16.xpose.msra.mxu0 0
        %5054 = vmatprep.subr.bf16.mxu0 0
        %5055 = vmatpush1.bf16.xpose.msra.mxu0 0
        %5056 = vmatprep.subr.bf16.mxu0 0
        %5057 = vmatpush1.bf16.xpose.msra.mxu0 0
        %5058 = vmatprep.subr.bf16.mxu0 0
        %5059 = vmatpush1.bf16.xpose.msra.mxu0 0
        %5060 = vmatprep.subr.bf16.mxu0 0
        %5061 = vmatpush1.bf16.xpose.msra.mxu0 0
        %5062 = vmatprep.subr.bf16.mxu0 0
        %5063 = vmatpush1.bf16.xpose.msra.mxu0 0
        %5064 = vmatprep.subr.bf16.mxu0 0
        %5065 = vmatpush1.bf16.xpose.msra.mxu0 0
        %5066 = vmatprep.subr.bf16.mxu0 0
        %5067 = vmatpush1.bf16.xpose.msra.mxu0 0
        %5068 = vmatprep.mubr.bf16.mxu0 0
        %5069 = vmatmul.mubr.bf16.gmra.mrb[0].mxu0 %v4344
        %v5070 = vpop.f32.mrb[0].mxu0
        %v5071 = vadd.f32 %v5031, %v5070
        %v5072 = vpop.f32.mrb[0].mxu0
        %v5073 = vpop.f32.mrb[0].mxu0
        %v5074 = vpop.f32.mrb[0].mxu0
        %5075 = vdwg.mxu0
        %v5076 = vmul.f32 %v5071, 0.35355338
        %v5077 = vsel %vm2472, %v5076, -1e+30
        %5078 = vmax.xlane.f32.xlu0 %v5077
        %v5079 = vpop.xlane.xlu0 %5078
        %v5080 = vsub.f32 %v5077, %v5079
        %v5081 = vmul.f32 %v5080, 1.442695
        %v5082 = vpow.pop %v5081
        %v5083 = vpack.c.bf16 %v5082, %v5082
        %5084 = vmatprep.subr.bf16.mxu0 0
        %5085 = vmatpush1.bf16.msra.mxu0 %v4327
        %5086 = vmatprep.subr.bf16.mxu0 0
        %5087 = vmatpush1.bf16.msra.mxu0 %v4328
        %5088 = vmatprep.subr.bf16.mxu0 0
        %5089 = vmatpush1.bf16.msra.mxu0 %v4329
        %5090 = vmatprep.subr.bf16.mxu0 0
        %5091 = vmatpush1.bf16.msra.mxu0 %v4330
        %5092 = vmatprep.subr.bf16.mxu0 0
        %5093 = vmatpush1.bf16.msra.mxu0 %v4331
        %5094 = vmatprep.subr.bf16.mxu0 0
        %5095 = vmatpush1.bf16.msra.mxu0 %v4332
        %5096 = vmatprep.subr.bf16.mxu0 0
        %5097 = vmatpush1.bf16.msra.mxu0 %v4333
        %5098 = vmatprep.subr.bf16.mxu0 0
        %5099 = vmatpush1.bf16.msra.mxu0 %v4334
        %5100 = vmatprep.subr.bf16.mxu0 0
        %5101 = vmatpush1.bf16.msra.mxu0 0
        %5102 = vmatprep.subr.bf16.mxu0 0
        %5103 = vmatpush1.bf16.msra.mxu0 0
        %5104 = vmatprep.subr.bf16.mxu0 0
        %5105 = vmatpush1.bf16.msra.mxu0 0
        %5106 = vmatprep.subr.bf16.mxu0 0
        %5107 = vmatpush1.bf16.msra.mxu0 0
        %5108 = vmatprep.subr.bf16.mxu0 0
        %5109 = vmatpush1.bf16.msra.mxu0 0
        %5110 = vmatprep.subr.bf16.mxu0 0
        %5111 = vmatpush1.bf16.msra.mxu0 0
        %5112 = vmatprep.subr.bf16.mxu0 0
        %5113 = vmatpush1.bf16.msra.mxu0 0
        %5114 = vmatprep.subr.bf16.mxu0 0
        %5115 = vmatpush1.bf16.msra.mxu0 0
        %5116 = vmatprep.mubr.bf16.mxu0 0
        %5117 = vmatmul.mubr.bf16.gmra.mrb[0].mxu0 %v5083
        %v5118 = vpop.f32.mrb[0].mxu0
        %v5119 = vadd.f32 0.0, %v5118
        %v5120 = vpop.f32.mrb[0].mxu0
        %v5121 = vpop.f32.mrb[0].mxu0
        %v5122 = vpop.f32.mrb[0].mxu0
        %5123 = vdwg.mxu0
        %5124 = vmatprep.subr.bf16.mxu0 0
        %5125 = vmatpush1.bf16.msra.mxu0 %v1667
        %5126 = vmatprep.subr.bf16.mxu0 0
        %5127 = vmatpush1.bf16.msra.mxu0 %v1668
        %5128 = vmatprep.subr.bf16.mxu0 0
        %5129 = vmatpush1.bf16.msra.mxu0 %v1669
        %5130 = vmatprep.subr.bf16.mxu0 0
        %5131 = vmatpush1.bf16.msra.mxu0 %v1670
        %5132 = vmatprep.subr.bf16.mxu0 0
        %5133 = vmatpush1.bf16.msra.mxu0 %v1671
        %5134 = vmatprep.subr.bf16.mxu0 0
        %5135 = vmatpush1.bf16.msra.mxu0 %v1672
        %5136 = vmatprep.subr.bf16.mxu0 0
        %5137 = vmatpush1.bf16.msra.mxu0 %v1673
        %5138 = vmatprep.subr.bf16.mxu0 0
        %5139 = vmatpush1.bf16.msra.mxu0 %v1674
        %5140 = vmatprep.subr.bf16.mxu0 0
        %5141 = vmatpush1.bf16.msra.mxu0 0
        %5142 = vmatprep.subr.bf16.mxu0 0
        %5143 = vmatpush1.bf16.msra.mxu0 0
        %5144 = vmatprep.subr.bf16.mxu0 0
        %5145 = vmatpush1.bf16.msra.mxu0 0
        %5146 = vmatprep.subr.bf16.mxu0 0
        %5147 = vmatpush1.bf16.msra.mxu0 0
        %5148 = vmatprep.subr.bf16.mxu0 0
        %5149 = vmatpush1.bf16.msra.mxu0 0
        %5150 = vmatprep.subr.bf16.mxu0 0
        %5151 = vmatpush1.bf16.msra.mxu0 0
        %5152 = vmatprep.subr.bf16.mxu0 0
        %5153 = vmatpush1.bf16.msra.mxu0 0
        %5154 = vmatprep.subr.bf16.mxu0 0
        %5155 = vmatpush1.bf16.msra.mxu0 0
        %5156 = vmatprep.mubr.bf16.mxu0 0
        %5157 = vmatmul.mubr.bf16.gmra.mrb[0].mxu0 %v5083
        %v5158 = vpop.f32.mrb[0].mxu0
        %v5159 = vadd.f32 0.0, %v5158
        %v5160 = vpop.f32.mrb[0].mxu0
        %v5161 = vpop.f32.mrb[0].mxu0
        %v5162 = vpop.f32.mrb[0].mxu0
        %5163 = vdwg.mxu0
        %v5164 = vmax.f32 %v5159, 1e-30
        %v5165 = vrcp.pop %v5164
        %v5166 = vmul.f32 %v5119, %v5165
        %v5167 = vpack.c.bf16 %v5166, %v5166
        %s5168 = scalar_lea.vmem [#allocation8], 64
        %v5169 = vld [vmem:[%s5168] sm:$0xf]
        %v5170 = vld [vmem:[%s5168 + $0x4] sm:$0xf]
        %v5171 = vld [vmem:[%s5168 + $0x8] sm:$0xf]
        %v5172 = vld [vmem:[%s5168 + $0xc] sm:$0xf]
        %v5173 = vld [vmem:[%s5168 + $0x10] sm:$0xf]
        %v5174 = vld [vmem:[%s5168 + $0x14] sm:$0xf]
        %v5175 = vld [vmem:[%s5168 + $0x18] sm:$0xf]
        %v5176 = vld [vmem:[%s5168 + $0x1c] sm:$0xf]
        %v5177 = vld [vmem:[%s5168 + $0x20] sm:$0xf]
        %v5178 = vld [vmem:[%s5168 + $0x24] sm:$0xf]
        %v5179 = vld [vmem:[%s5168 + $0x28] sm:$0xf]
        %v5180 = vld [vmem:[%s5168 + $0x2c] sm:$0xf]
        %v5181 = vld [vmem:[%s5168 + $0x30] sm:$0xf]
        %v5182 = vld [vmem:[%s5168 + $0x34] sm:$0xf]
        %v5183 = vld [vmem:[%s5168 + $0x38] sm:$0xf]
        %v5184 = vld [vmem:[%s5168 + $0x3c] sm:$0xf]
        %v5201 = vunpack.c.l.b16 %v5169
        %v5202 = vunpack.c.l.b16 %v5170
        %v5203 = vunpack.c.l.b16 %v5171
        %v5204 = vunpack.c.l.b16 %v5172
        %v5205 = vunpack.c.l.b16 %v5173
        %v5206 = vunpack.c.l.b16 %v5174
        %v5207 = vunpack.c.l.b16 %v5175
        %v5208 = vunpack.c.l.b16 %v5176
        %v5209 = vunpack.c.l.b16 %v5177
        %v5210 = vunpack.c.l.b16 %v5178
        %v5211 = vunpack.c.l.b16 %v5179
        %v5212 = vunpack.c.l.b16 %v5180
        %v5213 = vunpack.c.l.b16 %v5181
        %v5214 = vunpack.c.l.b16 %v5182
        %v5215 = vunpack.c.l.b16 %v5183
        %v5216 = vunpack.c.l.b16 %v5184
        %v5217 = vpack.c.b16 %v5202, %v5201
        %v5218 = vpack.c.b16 %v5204, %v5203
        %v5219 = vpack.c.b16 %v5206, %v5205
        %v5220 = vpack.c.b16 %v5208, %v5207
        %v5221 = vpack.c.b16 %v5210, %v5209
        %v5222 = vpack.c.b16 %v5212, %v5211
        %v5223 = vpack.c.b16 %v5214, %v5213
        %v5224 = vpack.c.b16 %v5216, %v5215
        %5233 = vmatprep.subr.bf16.mxu0 0
        %5234 = vmatpush1.bf16.msra.mxu0 %v5217
        %5235 = vmatprep.subr.bf16.mxu0 0
        %5236 = vmatpush1.bf16.msra.mxu0 %v5218
        %5237 = vmatprep.subr.bf16.mxu0 0
        %5238 = vmatpush1.bf16.msra.mxu0 %v5219
        %5239 = vmatprep.subr.bf16.mxu0 0
        %5240 = vmatpush1.bf16.msra.mxu0 %v5220
        %5241 = vmatprep.subr.bf16.mxu0 0
        %5242 = vmatpush1.bf16.msra.mxu0 %v5221
        %5243 = vmatprep.subr.bf16.mxu0 0
        %5244 = vmatpush1.bf16.msra.mxu0 %v5222
        %5245 = vmatprep.subr.bf16.mxu0 0
        %5246 = vmatpush1.bf16.msra.mxu0 %v5223
        %5247 = vmatprep.subr.bf16.mxu0 0
        %5248 = vmatpush1.bf16.msra.mxu0 %v5224
        %5249 = vmatprep.subr.bf16.mxu0 0
        %5250 = vmatpush1.bf16.msra.mxu0 0
        %5251 = vmatprep.subr.bf16.mxu0 0
        %5252 = vmatpush1.bf16.msra.mxu0 0
        %5253 = vmatprep.subr.bf16.mxu0 0
        %5254 = vmatpush1.bf16.msra.mxu0 0
        %5255 = vmatprep.subr.bf16.mxu0 0
        %5256 = vmatpush1.bf16.msra.mxu0 0
        %5257 = vmatprep.subr.bf16.mxu0 0
        %5258 = vmatpush1.bf16.msra.mxu0 0
        %5259 = vmatprep.subr.bf16.mxu0 0
        %5260 = vmatpush1.bf16.msra.mxu0 0
        %5261 = vmatprep.subr.bf16.mxu0 0
        %5262 = vmatpush1.bf16.msra.mxu0 0
        %5263 = vmatprep.subr.bf16.mxu0 0
        %5264 = vmatpush1.bf16.msra.mxu0 0
        %5265 = vmatprep.mubr.bf16.mxu0 0
        %5266 = vmatmul.mubr.bf16.gmra.mrb[0].mxu0 %v5167
        %v5267 = vpop.f32.mrb[0].mxu0
        %v5268 = vadd.f32 0.0, %v5267
        %v5269 = vpop.f32.mrb[0].mxu0
        %v5270 = vpop.f32.mrb[0].mxu0
        %v5271 = vpop.f32.mrb[0].mxu0
        %5272 = vdwg.mxu0
        %v5273 = vadd.f32 %v4061, %v5268
        %s5274 = scalar_lea.vmem [#allocation10], 1
        %v5275 = vld [vmem:[%s5274] sm:$0x1]
        %s5276 = scalar_lea.vmem [#allocation11], 1
        %v5277 = vld [vmem:[%s5276] sm:$0x1]
        %5278 = vadd.xlane.f32.xlu0 %v5273
        %v5279 = vpop.xlane.xlu0 %5278
        %v5280 = vmul.f32 %v5279, %v2673
        %v5281 = vsub.f32 %v5273, %v5280
        %v5282 = vmul.f32 %v5281, %v5281
        %5283 = vadd.xlane.f32.xlu0 %v5282
        %v5284 = vpop.xlane.xlu0 %5283
        %v5285 = vmul.f32 %v5284, %v2673
        %v5286 = vadd.f32 %v5285, 1e-05
        %v5287 = vrsqrt.pop %v5286
        %v5288 = vmul.f32 %v5281, %v5287
        %v5290 = vlaneseq
        %v5291 = vshrl.u32 %v5290, 7
        %v5292 = vsub.s32 0, %v5291
        %v5293 = vrot.slane %v5275, %v5292
        %v5295 = vmul.f32 %v5288, %v5293
        %v5297 = vlaneseq
        %v5298 = vshrl.u32 %v5297, 7
        %v5299 = vsub.s32 0, %v5298
        %v5300 = vrot.slane %v5277, %v5299
        %v5302 = vadd.f32 %v5295, %v5300
        %v5303 = vpack.c.bf16 %v5302, %v5302
        %s5304 = scalar_lea.vmem [#allocation13], 64
        %v5305 = vld [vmem:[%s5304] sm:$0xf]
        %v5306 = vld [vmem:[%s5304 + $0x4] sm:$0xf]
        %v5307 = vld [vmem:[%s5304 + $0x8] sm:$0xf]
        %v5308 = vld [vmem:[%s5304 + $0xc] sm:$0xf]
        %v5309 = vld [vmem:[%s5304 + $0x10] sm:$0xf]
        %v5310 = vld [vmem:[%s5304 + $0x14] sm:$0xf]
        %v5311 = vld [vmem:[%s5304 + $0x18] sm:$0xf]
        %v5312 = vld [vmem:[%s5304 + $0x1c] sm:$0xf]
        %v5313 = vld [vmem:[%s5304 + $0x20] sm:$0xf]
        %v5314 = vld [vmem:[%s5304 + $0x24] sm:$0xf]
        %v5315 = vld [vmem:[%s5304 + $0x28] sm:$0xf]
        %v5316 = vld [vmem:[%s5304 + $0x2c] sm:$0xf]
        %v5317 = vld [vmem:[%s5304 + $0x30] sm:$0xf]
        %v5318 = vld [vmem:[%s5304 + $0x34] sm:$0xf]
        %v5319 = vld [vmem:[%s5304 + $0x38] sm:$0xf]
        %v5320 = vld [vmem:[%s5304 + $0x3c] sm:$0xf]
        %v5337 = vunpack.c.l.b16 %v5305
        %v5338 = vunpack.c.l.b16 %v5306
        %v5339 = vunpack.c.l.b16 %v5307
        %v5340 = vunpack.c.l.b16 %v5308
        %v5341 = vunpack.c.l.b16 %v5309
        %v5342 = vunpack.c.l.b16 %v5310
        %v5343 = vunpack.c.l.b16 %v5311
        %v5344 = vunpack.c.l.b16 %v5312
        %v5345 = vunpack.c.l.b16 %v5313
        %v5346 = vunpack.c.l.b16 %v5314
        %v5347 = vunpack.c.l.b16 %v5315
        %v5348 = vunpack.c.l.b16 %v5316
        %v5349 = vunpack.c.l.b16 %v5317
        %v5350 = vunpack.c.l.b16 %v5318
        %v5351 = vunpack.c.l.b16 %v5319
        %v5352 = vunpack.c.l.b16 %v5320
        %v5353 = vpack.c.b16 %v5338, %v5337
        %v5354 = vpack.c.b16 %v5340, %v5339
        %v5355 = vpack.c.b16 %v5342, %v5341
        %v5356 = vpack.c.b16 %v5344, %v5343
        %v5357 = vpack.c.b16 %v5346, %v5345
        %v5358 = vpack.c.b16 %v5348, %v5347
        %v5359 = vpack.c.b16 %v5350, %v5349
        %v5360 = vpack.c.b16 %v5352, %v5351
        %5369 = vmatprep.subr.bf16.mxu0 0
        %5370 = vmatpush1.bf16.msra.mxu0 %v5353
        %5371 = vmatprep.subr.bf16.mxu0 0
        %5372 = vmatpush1.bf16.msra.mxu0 %v5354
        %5373 = vmatprep.subr.bf16.mxu0 0
        %5374 = vmatpush1.bf16.msra.mxu0 %v5355
        %5375 = vmatprep.subr.bf16.mxu0 0
        %5376 = vmatpush1.bf16.msra.mxu0 %v5356
        %5377 = vmatprep.subr.bf16.mxu0 0
        %5378 = vmatpush1.bf16.msra.mxu0 %v5357
        %5379 = vmatprep.subr.bf16.mxu0 0
        %5380 = vmatpush1.bf16.msra.mxu0 %v5358
        %5381 = vmatprep.subr.bf16.mxu0 0
        %5382 = vmatpush1.bf16.msra.mxu0 %v5359
        %5383 = vmatprep.subr.bf16.mxu0 0
        %5384 = vmatpush1.bf16.msra.mxu0 %v5360
        %5385 = vmatprep.subr.bf16.mxu0 0
        %5386 = vmatpush1.bf16.msra.mxu0 0
        %5387 = vmatprep.subr.bf16.mxu0 0
        %5388 = vmatpush1.bf16.msra.mxu0 0
        %5389 = vmatprep.subr.bf16.mxu0 0
        %5390 = vmatpush1.bf16.msra.mxu0 0
        %5391 = vmatprep.subr.bf16.mxu0 0
        %5392 = vmatpush1.bf16.msra.mxu0 0
        %5393 = vmatprep.subr.bf16.mxu0 0
        %5394 = vmatpush1.bf16.msra.mxu0 0
        %5395 = vmatprep.subr.bf16.mxu0 0
        %5396 = vmatpush1.bf16.msra.mxu0 0
        %5397 = vmatprep.subr.bf16.mxu0 0
        %5398 = vmatpush1.bf16.msra.mxu0 0
        %5399 = vmatprep.subr.bf16.mxu0 0
        %5400 = vmatpush1.bf16.msra.mxu0 0
        %5401 = vmatprep.mubr.bf16.mxu0 0
        %5402 = vmatmul.mubr.bf16.gmra.mrb[0].mxu0 %v5303
        %v5403 = vpop.f32.mrb[0].mxu0
        %v5404 = vadd.f32 0.0, %v5403
        %v5405 = vpop.f32.mrb[0].mxu0
        %v5406 = vpop.f32.mrb[0].mxu0
        %v5407 = vpop.f32.mrb[0].mxu0
        %5408 = vdwg.mxu0
        %s5409 = scalar_lea.vmem %s35, 128
        %v5410 = vld [vmem:[%s5409] sm:$0xff]
        %v5411 = vld [vmem:[%s5409 + $0x8] sm:$0xff]
        %v5412 = vld [vmem:[%s5409 + $0x10] sm:$0xff]
        %v5413 = vld [vmem:[%s5409 + $0x18] sm:$0xff]
        %v5414 = vld [vmem:[%s5409 + $0x20] sm:$0xff]
        %v5415 = vld [vmem:[%s5409 + $0x28] sm:$0xff]
        %v5416 = vld [vmem:[%s5409 + $0x30] sm:$0xff]
        %v5417 = vld [vmem:[%s5409 + $0x38] sm:$0xff]
        %v5418 = vld [vmem:[%s5409 + $0x40] sm:$0xff]
        %v5419 = vld [vmem:[%s5409 + $0x48] sm:$0xff]
        %v5420 = vld [vmem:[%s5409 + $0x50] sm:$0xff]
        %v5421 = vld [vmem:[%s5409 + $0x58] sm:$0xff]
        %v5422 = vld [vmem:[%s5409 + $0x60] sm:$0xff]
        %v5423 = vld [vmem:[%s5409 + $0x68] sm:$0xff]
        %v5424 = vld [vmem:[%s5409 + $0x70] sm:$0xff]
        %v5425 = vld [vmem:[%s5409 + $0x78] sm:$0xff]
        %v5442 = vunpack.c.l.b16 %v5410
        %v5443 = vunpack.c.h.b16 %v5410
        %v5444 = vunpack.c.l.b16 %v5411
        %v5445 = vunpack.c.h.b16 %v5411
        %v5446 = vunpack.c.l.b16 %v5412
        %v5447 = vunpack.c.h.b16 %v5412
        %v5448 = vunpack.c.l.b16 %v5413
        %v5449 = vunpack.c.h.b16 %v5413
        %v5450 = vunpack.c.l.b16 %v5414
        %v5451 = vunpack.c.h.b16 %v5414
        %v5452 = vunpack.c.l.b16 %v5415
        %v5453 = vunpack.c.h.b16 %v5415
        %v5454 = vunpack.c.l.b16 %v5416
        %v5455 = vunpack.c.h.b16 %v5416
        %v5456 = vunpack.c.l.b16 %v5417
        %v5457 = vunpack.c.h.b16 %v5417
        %v5458 = vunpack.c.l.b16 %v5418
        %v5459 = vunpack.c.h.b16 %v5418
        %v5460 = vunpack.c.l.b16 %v5419
        %v5461 = vunpack.c.h.b16 %v5419
        %v5462 = vunpack.c.l.b16 %v5420
        %v5463 = vunpack.c.h.b16 %v5420
        %v5464 = vunpack.c.l.b16 %v5421
        %v5465 = vunpack.c.h.b16 %v5421
        %v5466 = vunpack.c.l.b16 %v5422
        %v5467 = vunpack.c.h.b16 %v5422
        %v5468 = vunpack.c.l.b16 %v5423
        %v5469 = vunpack.c.h.b16 %v5423
        %v5470 = vunpack.c.l.b16 %v5424
        %v5471 = vunpack.c.h.b16 %v5424
        %v5472 = vunpack.c.l.b16 %v5425
        %v5473 = vunpack.c.h.b16 %v5425
        %v5474 = vpack.c.b16 %v5444, %v5442
        %v5475 = vpack.c.b16 %v5445, %v5443
        %v5476 = vpack.c.b16 %v5448, %v5446
        %v5477 = vpack.c.b16 %v5449, %v5447
        %v5478 = vpack.c.b16 %v5452, %v5450
        %v5479 = vpack.c.b16 %v5453, %v5451
        %v5480 = vpack.c.b16 %v5456, %v5454
        %v5481 = vpack.c.b16 %v5457, %v5455
        %v5482 = vpack.c.b16 %v5460, %v5458
        %v5483 = vpack.c.b16 %v5461, %v5459
        %v5484 = vpack.c.b16 %v5464, %v5462
        %v5485 = vpack.c.b16 %v5465, %v5463
        %v5486 = vpack.c.b16 %v5468, %v5466
        %v5487 = vpack.c.b16 %v5469, %v5467
        %v5488 = vpack.c.b16 %v5472, %v5470
        %v5489 = vpack.c.b16 %v5473, %v5471
        %5506 = vmatprep.subr.bf16.mxu0 %v5475
        %5507 = vmatpush1.bf16.msra.mxu0 %v5474
        %5508 = vmatprep.subr.bf16.mxu0 %v5477
        %5509 = vmatpush1.bf16.msra.mxu0 %v5476
        %5510 = vmatprep.subr.bf16.mxu0 %v5479
        %5511 = vmatpush1.bf16.msra.mxu0 %v5478
        %5512 = vmatprep.subr.bf16.mxu0 %v5481
        %5513 = vmatpush1.bf16.msra.mxu0 %v5480
        %5514 = vmatprep.subr.bf16.mxu0 %v5483
        %5515 = vmatpush1.bf16.msra.mxu0 %v5482
        %5516 = vmatprep.subr.bf16.mxu0 %v5485
        %5517 = vmatpush1.bf16.msra.mxu0 %v5484
        %5518 = vmatprep.subr.bf16.mxu0 %v5487
        %5519 = vmatpush1.bf16.msra.mxu0 %v5486
        %5520 = vmatprep.subr.bf16.mxu0 %v5489
        %5521 = vmatpush1.bf16.msra.mxu0 %v5488
        %5522 = vmatprep.subr.bf16.mxu0 0
        %5523 = vmatpush1.bf16.msra.mxu0 0
        %5524 = vmatprep.subr.bf16.mxu0 0
        %5525 = vmatpush1.bf16.msra.mxu0 0
        %5526 = vmatprep.subr.bf16.mxu0 0
        %5527 = vmatpush1.bf16.msra.mxu0 0
        %5528 = vmatprep.subr.bf16.mxu0 0
        %5529 = vmatpush1.bf16.msra.mxu0 0
        %5530 = vmatprep.subr.bf16.mxu0 0
        %5531 = vmatpush1.bf16.msra.mxu0 0
        %5532 = vmatprep.subr.bf16.mxu0 0
        %5533 = vmatpush1.bf16.msra.mxu0 0
        %5534 = vmatprep.subr.bf16.mxu0 0
        %5535 = vmatpush1.bf16.msra.mxu0 0
        %5536 = vmatprep.subr.bf16.mxu0 0
        %5537 = vmatpush1.bf16.msra.mxu0 0
        %5538 = vmatprep.mubr.bf16.mxu0 0
        %5539 = vmatmul.mubr.bf16.gmra.mrb[0].mxu0 %v1327
        %v5540 = vpop.f32.mrb[0].mxu0
        %v5541 = vadd.f32 0.0, %v5540
        %v5542 = vpop.f32.mrb[0].mxu0
        %v5543 = vadd.f32 0.0, %v5542
        %v5544 = vpop.f32.mrb[0].mxu0
        %v5545 = vadd.f32 0.0, %v5544
        %v5546 = vpop.f32.mrb[0].mxu0
        %v5547 = vadd.f32 0.0, %v5546
        %5548 = vdwg.mxu0
        %v5549 = vpack.c.bf16 %v5545, %v5541
        %v5550 = vpack.c.bf16 %v5547, %v5543
        %v5551 = vmul.bf16 %v5549, %v3007
        %v5552 = vmul.bf16 %v5549, %v3008
        %v5553 = vmul.bf16 %v5549, %v3009
        %v5554 = vmul.bf16 %v5549, %v3010
        %v5555 = vmul.bf16 %v5549, %v3011
        %v5556 = vmul.bf16 %v5549, %v3012
        %v5557 = vmul.bf16 %v5549, %v3013
        %v5558 = vmul.bf16 %v5549, %v3014
        %v5559 = vmul.bf16 %v5549, %v3015
        %v5560 = vmul.bf16 %v5549, %v3016
        %v5561 = vmul.bf16 %v5549, %v3017
        %v5562 = vmul.bf16 %v5549, %v3018
        %v5563 = vmul.bf16 %v5549, %v3019
        %v5564 = vmul.bf16 %v5549, %v3020
        %v5565 = vmul.bf16 %v5549, %v3021
        %v5566 = vmul.bf16 %v5549, %v3022
        %v5567 = vmul.bf16 %v5550, %v3007
        %v5568 = vmul.bf16 %v5550, %v3008
        %v5569 = vmul.bf16 %v5550, %v3009
        %v5570 = vmul.bf16 %v5550, %v3010
        %v5571 = vmul.bf16 %v5550, %v3011
        %v5572 = vmul.bf16 %v5550, %v3012
        %v5573 = vmul.bf16 %v5550, %v3013
        %v5574 = vmul.bf16 %v5550, %v3014
        %v5575 = vmul.bf16 %v5550, %v3015
        %v5576 = vmul.bf16 %v5550, %v3016
        %v5577 = vmul.bf16 %v5550, %v3017
        %v5578 = vmul.bf16 %v5550, %v3018
        %v5579 = vmul.bf16 %v5550, %v3019
        %v5580 = vmul.bf16 %v5550, %v3020
        %v5581 = vmul.bf16 %v5550, %v3021
        %v5582 = vmul.bf16 %v5550, %v3022
        %v5583 = vpack.c.bf16 %v5404, %v5404
        %5584 = vmatprep.subr.bf16.mxu0 0
        %5585 = vmatpush1.bf16.xpose.msra.mxu0 %v5551
        %5586 = vmatprep.subr.bf16.mxu0 0
        %5587 = vmatpush1.bf16.xpose.msra.mxu0 %v5552
        %5588 = vmatprep.subr.bf16.mxu0 0
        %5589 = vmatpush1.bf16.xpose.msra.mxu0 %v5553
        %5590 = vmatprep.subr.bf16.mxu0 0
        %5591 = vmatpush1.bf16.xpose.msra.mxu0 %v5554
        %5592 = vmatprep.subr.bf16.mxu0 0
        %5593 = vmatpush1.bf16.xpose.msra.mxu0 %v5555
        %5594 = vmatprep.subr.bf16.mxu0 0
        %5595 = vmatpush1.bf16.xpose.msra.mxu0 %v5556
        %5596 = vmatprep.subr.bf16.mxu0 0
        %5597 = vmatpush1.bf16.xpose.msra.mxu0 %v5557
        %5598 = vmatprep.subr.bf16.mxu0 0
        %5599 = vmatpush1.bf16.xpose.msra.mxu0 %v5558
        %5600 = vmatprep.subr.bf16.mxu0 0
        %5601 = vmatpush1.bf16.xpose.msra.mxu0 %v5559
        %5602 = vmatprep.subr.bf16.mxu0 0
        %5603 = vmatpush1.bf16.xpose.msra.mxu0 %v5560
        %5604 = vmatprep.subr.bf16.mxu0 0
        %5605 = vmatpush1.bf16.xpose.msra.mxu0 %v5561
        %5606 = vmatprep.subr.bf16.mxu0 0
        %5607 = vmatpush1.bf16.xpose.msra.mxu0 %v5562
        %5608 = vmatprep.subr.bf16.mxu0 0
        %5609 = vmatpush1.bf16.xpose.msra.mxu0 %v5563
        %5610 = vmatprep.subr.bf16.mxu0 0
        %5611 = vmatpush1.bf16.xpose.msra.mxu0 %v5564
        %5612 = vmatprep.subr.bf16.mxu0 0
        %5613 = vmatpush1.bf16.xpose.msra.mxu0 %v5565
        %5614 = vmatprep.subr.bf16.mxu0 0
        %5615 = vmatpush1.bf16.xpose.msra.mxu0 %v5566
        %5616 = vmatprep.mubr.bf16.mxu0 0
        %5617 = vmatmul.mubr.bf16.gmra.mrb[0].mxu0 %v5583
        %v5618 = vpop.f32.mrb[0].mxu0
        %v5619 = vadd.f32 0.0, %v5618
        %v5620 = vpop.f32.mrb[0].mxu0
        %v5621 = vadd.f32 0.0, %v5620
        %v5622 = vpop.f32.mrb[0].mxu0
        %v5623 = vpop.f32.mrb[0].mxu0
        %5624 = vdwg.mxu0
        %v5625 = vmul.f32 %v5619, 0.35355338
        %v5626 = vmul.f32 %v5621, 0.35355338
        %v5627 = vadd.f32 %v5625, %v3119
        %v5628 = vadd.f32 %v5626, %v3123
        %v5629 = vmax.f32 %v5627, %v5628
        %5630 = vmax.xlane.f32.xlu0 %v5629
        %v5631 = vpop.xlane.xlu0 %5630
        %v5632 = vsub.f32 %v5627, %v5631
        %v5633 = vsub.f32 %v5628, %v5631
        %v5634 = vmul.f32 %v5632, 1.442695
        %v5635 = vpow.pop %v5634
        %v5636 = vmul.f32 %v5633, 1.442695
        %v5637 = vpow.pop %v5636
        %v5638 = vpack.c.bf16 %v5635, %v5635
        %v5639 = vpack.c.bf16 %v5637, %v5637
        %5640 = vmatprep.subr.bf16.mxu0 0
        %5641 = vmatpush1.bf16.msra.mxu0 %v5567
        %5642 = vmatprep.subr.bf16.mxu0 0
        %5643 = vmatpush1.bf16.msra.mxu0 %v5568
        %5644 = vmatprep.subr.bf16.mxu0 0
        %5645 = vmatpush1.bf16.msra.mxu0 %v5569
        %5646 = vmatprep.subr.bf16.mxu0 0
        %5647 = vmatpush1.bf16.msra.mxu0 %v5570
        %5648 = vmatprep.subr.bf16.mxu0 0
        %5649 = vmatpush1.bf16.msra.mxu0 %v5571
        %5650 = vmatprep.subr.bf16.mxu0 0
        %5651 = vmatpush1.bf16.msra.mxu0 %v5572
        %5652 = vmatprep.subr.bf16.mxu0 0
        %5653 = vmatpush1.bf16.msra.mxu0 %v5573
        %5654 = vmatprep.subr.bf16.mxu0 0
        %5655 = vmatpush1.bf16.msra.mxu0 %v5574
        %5656 = vmatprep.subr.bf16.mxu0 0
        %5657 = vmatpush1.bf16.msra.mxu0 %v5575
        %5658 = vmatprep.subr.bf16.mxu0 0
        %5659 = vmatpush1.bf16.msra.mxu0 %v5576
        %5660 = vmatprep.subr.bf16.mxu0 0
        %5661 = vmatpush1.bf16.msra.mxu0 %v5577
        %5662 = vmatprep.subr.bf16.mxu0 0
        %5663 = vmatpush1.bf16.msra.mxu0 %v5578
        %5664 = vmatprep.subr.bf16.mxu0 0
        %5665 = vmatpush1.bf16.msra.mxu0 %v5579
        %5666 = vmatprep.subr.bf16.mxu0 0
        %5667 = vmatpush1.bf16.msra.mxu0 %v5580
        %5668 = vmatprep.subr.bf16.mxu0 0
        %5669 = vmatpush1.bf16.msra.mxu0 %v5581
        %5670 = vmatprep.subr.bf16.mxu0 0
        %5671 = vmatpush1.bf16.msra.mxu0 %v5582
        %5672 = vmatprep.mubr.bf16.mxu0 %v5639
        %5673 = vmatmul.mubr.bf16.gmra.mrb[0].mxu0 %v5638
        %v5674 = vpop.f32.mrb[0].mxu0
        %v5675 = vadd.f32 0.0, %v5674
        %v5676 = vpop.f32.mrb[0].mxu0
        %v5677 = vpop.f32.mrb[0].mxu0
        %v5678 = vpop.f32.mrb[0].mxu0
        %5679 = vdwg.mxu0
        %5680 = vmatprep.subr.bf16.mxu0 0
        %5681 = vmatpush1.bf16.msra.mxu0 %v3007
        %5682 = vmatprep.subr.bf16.mxu0 0
        %5683 = vmatpush1.bf16.msra.mxu0 %v3008
        %5684 = vmatprep.subr.bf16.mxu0 0
        %5685 = vmatpush1.bf16.msra.mxu0 %v3009
        %5686 = vmatprep.subr.bf16.mxu0 0
        %5687 = vmatpush1.bf16.msra.mxu0 %v3010
        %5688 = vmatprep.subr.bf16.mxu0 0
        %5689 = vmatpush1.bf16.msra.mxu0 %v3011
        %5690 = vmatprep.subr.bf16.mxu0 0
        %5691 = vmatpush1.bf16.msra.mxu0 %v3012
        %5692 = vmatprep.subr.bf16.mxu0 0
        %5693 = vmatpush1.bf16.msra.mxu0 %v3013
        %5694 = vmatprep.subr.bf16.mxu0 0
        %5695 = vmatpush1.bf16.msra.mxu0 %v3014
        %5696 = vmatprep.subr.bf16.mxu0 0
        %5697 = vmatpush1.bf16.msra.mxu0 %v3015
        %5698 = vmatprep.subr.bf16.mxu0 0
        %5699 = vmatpush1.bf16.msra.mxu0 %v3016
        %5700 = vmatprep.subr.bf16.mxu0 0
        %5701 = vmatpush1.bf16.msra.mxu0 %v3017
        %5702 = vmatprep.subr.bf16.mxu0 0
        %5703 = vmatpush1.bf16.msra.mxu0 %v3018
        %5704 = vmatprep.subr.bf16.mxu0 0
        %5705 = vmatpush1.bf16.msra.mxu0 %v3019
        %5706 = vmatprep.subr.bf16.mxu0 0
        %5707 = vmatpush1.bf16.msra.mxu0 %v3020
        %5708 = vmatprep.subr.bf16.mxu0 0
        %5709 = vmatpush1.bf16.msra.mxu0 %v3021
        %5710 = vmatprep.subr.bf16.mxu0 0
        %5711 = vmatpush1.bf16.msra.mxu0 %v3022
        %5712 = vmatprep.mubr.bf16.mxu0 %v5639
        %5713 = vmatmul.mubr.bf16.gmra.mrb[0].mxu0 %v5638
        %v5714 = vpop.f32.mrb[0].mxu0
        %v5715 = vadd.f32 0.0, %v5714
        %v5716 = vpop.f32.mrb[0].mxu0
        %v5717 = vpop.f32.mrb[0].mxu0
        %v5718 = vpop.f32.mrb[0].mxu0
        %5719 = vdwg.mxu0
        %v5720 = vmax.f32 %v5715, 1e-30
        %v5721 = vrcp.pop %v5720
        %v5722 = vmul.f32 %v5675, %v5721
        %v5723 = vpack.c.bf16 %v5722, %v5722
        %s5724 = scalar_lea.vmem [#allocation14], 64
        %v5725 = vld [vmem:[%s5724] sm:$0xf]
        %v5726 = vld [vmem:[%s5724 + $0x4] sm:$0xf]
        %v5727 = vld [vmem:[%s5724 + $0x8] sm:$0xf]
        %v5728 = vld [vmem:[%s5724 + $0xc] sm:$0xf]
        %v5729 = vld [vmem:[%s5724 + $0x10] sm:$0xf]
        %v5730 = vld [vmem:[%s5724 + $0x14] sm:$0xf]
        %v5731 = vld [vmem:[%s5724 + $0x18] sm:$0xf]
        %v5732 = vld [vmem:[%s5724 + $0x1c] sm:$0xf]
        %v5733 = vld [vmem:[%s5724 + $0x20] sm:$0xf]
        %v5734 = vld [vmem:[%s5724 + $0x24] sm:$0xf]
        %v5735 = vld [vmem:[%s5724 + $0x28] sm:$0xf]
        %v5736 = vld [vmem:[%s5724 + $0x2c] sm:$0xf]
        %v5737 = vld [vmem:[%s5724 + $0x30] sm:$0xf]
        %v5738 = vld [vmem:[%s5724 + $0x34] sm:$0xf]
        %v5739 = vld [vmem:[%s5724 + $0x38] sm:$0xf]
        %v5740 = vld [vmem:[%s5724 + $0x3c] sm:$0xf]
        %v5757 = vunpack.c.l.b16 %v5725
        %v5758 = vunpack.c.l.b16 %v5726
        %v5759 = vunpack.c.l.b16 %v5727
        %v5760 = vunpack.c.l.b16 %v5728
        %v5761 = vunpack.c.l.b16 %v5729
        %v5762 = vunpack.c.l.b16 %v5730
        %v5763 = vunpack.c.l.b16 %v5731
        %v5764 = vunpack.c.l.b16 %v5732
        %v5765 = vunpack.c.l.b16 %v5733
        %v5766 = vunpack.c.l.b16 %v5734
        %v5767 = vunpack.c.l.b16 %v5735
        %v5768 = vunpack.c.l.b16 %v5736
        %v5769 = vunpack.c.l.b16 %v5737
        %v5770 = vunpack.c.l.b16 %v5738
        %v5771 = vunpack.c.l.b16 %v5739
        %v5772 = vunpack.c.l.b16 %v5740
        %v5773 = vpack.c.b16 %v5758, %v5757
        %v5774 = vpack.c.b16 %v5760, %v5759
        %v5775 = vpack.c.b16 %v5762, %v5761
        %v5776 = vpack.c.b16 %v5764, %v5763
        %v5777 = vpack.c.b16 %v5766, %v5765
        %v5778 = vpack.c.b16 %v5768, %v5767
        %v5779 = vpack.c.b16 %v5770, %v5769
        %v5780 = vpack.c.b16 %v5772, %v5771
        %5789 = vmatprep.subr.bf16.mxu0 0
        %5790 = vmatpush1.bf16.msra.mxu0 %v5773
        %5791 = vmatprep.subr.bf16.mxu0 0
        %5792 = vmatpush1.bf16.msra.mxu0 %v5774
        %5793 = vmatprep.subr.bf16.mxu0 0
        %5794 = vmatpush1.bf16.msra.mxu0 %v5775
        %5795 = vmatprep.subr.bf16.mxu0 0
        %5796 = vmatpush1.bf16.msra.mxu0 %v5776
        %5797 = vmatprep.subr.bf16.mxu0 0
        %5798 = vmatpush1.bf16.msra.mxu0 %v5777
        %5799 = vmatprep.subr.bf16.mxu0 0
        %5800 = vmatpush1.bf16.msra.mxu0 %v5778
        %5801 = vmatprep.subr.bf16.mxu0 0
        %5802 = vmatpush1.bf16.msra.mxu0 %v5779
        %5803 = vmatprep.subr.bf16.mxu0 0
        %5804 = vmatpush1.bf16.msra.mxu0 %v5780
        %5805 = vmatprep.subr.bf16.mxu0 0
        %5806 = vmatpush1.bf16.msra.mxu0 0
        %5807 = vmatprep.subr.bf16.mxu0 0
        %5808 = vmatpush1.bf16.msra.mxu0 0
        %5809 = vmatprep.subr.bf16.mxu0 0
        %5810 = vmatpush1.bf16.msra.mxu0 0
        %5811 = vmatprep.subr.bf16.mxu0 0
        %5812 = vmatpush1.bf16.msra.mxu0 0
        %5813 = vmatprep.subr.bf16.mxu0 0
        %5814 = vmatpush1.bf16.msra.mxu0 0
        %5815 = vmatprep.subr.bf16.mxu0 0
        %5816 = vmatpush1.bf16.msra.mxu0 0
        %5817 = vmatprep.subr.bf16.mxu0 0
        %5818 = vmatpush1.bf16.msra.mxu0 0
        %5819 = vmatprep.subr.bf16.mxu0 0
        %5820 = vmatpush1.bf16.msra.mxu0 0
        %5821 = vmatprep.mubr.bf16.mxu0 0
        %5822 = vmatmul.mubr.bf16.gmra.mrb[0].mxu0 %v5723
        %v5823 = vpop.f32.mrb[0].mxu0
        %v5824 = vadd.f32 %v5302, %v5823
        %v5825 = vpop.f32.mrb[0].mxu0
        %v5826 = vpop.f32.mrb[0].mxu0
        %v5827 = vpop.f32.mrb[0].mxu0
        %5828 = vdwg.mxu0
        %s5829 = scalar_lea.vmem [#allocation16], 1
        %v5830 = vld [vmem:[%s5829] sm:$0x1]
        %s5831 = scalar_lea.vmem [#allocation17], 1
        %v5832 = vld [vmem:[%s5831] sm:$0x1]
        %5833 = vadd.xlane.f32.xlu0 %v5824
        %v5834 = vpop.xlane.xlu0 %5833
        %v5835 = vmul.f32 %v5834, %v2673
        %v5836 = vsub.f32 %v5824, %v5835
        %v5837 = vmul.f32 %v5836, %v5836
        %5838 = vadd.xlane.f32.xlu0 %v5837
        %v5839 = vpop.xlane.xlu0 %5838
        %v5840 = vmul.f32 %v5839, %v2673
        %v5841 = vadd.f32 %v5840, 1e-05
        %v5842 = vrsqrt.pop %v5841
        %v5843 = vmul.f32 %v5836, %v5842
        %v5845 = vlaneseq
        %v5846 = vshrl.u32 %v5845, 7
        %v5847 = vsub.s32 0, %v5846
        %v5848 = vrot.slane %v5830, %v5847
        %v5850 = vmul.f32 %v5843, %v5848
        %v5852 = vlaneseq
        %v5853 = vshrl.u32 %v5852, 7
        %v5854 = vsub.s32 0, %v5853
        %v5855 = vrot.slane %v5832, %v5854
        %v5857 = vadd.f32 %v5850, %v5855
        %v5858 = vpack.c.bf16 %v5857, %v5857
        %s5859 = scalar_lea.vmem %s43, 256
        %v5860 = vld [vmem:[%s5859] sm:$0xff]
        %v5861 = vld [vmem:[%s5859 + $0x8] sm:$0xff]
        %v5862 = vld [vmem:[%s5859 + $0x10] sm:$0xff]
        %v5863 = vld [vmem:[%s5859 + $0x18] sm:$0xff]
        %v5864 = vld [vmem:[%s5859 + $0x20] sm:$0xff]
        %v5865 = vld [vmem:[%s5859 + $0x28] sm:$0xff]
        %v5866 = vld [vmem:[%s5859 + $0x30] sm:$0xff]
        %v5867 = vld [vmem:[%s5859 + $0x38] sm:$0xff]
        %v5868 = vld [vmem:[%s5859 + $0x40] sm:$0xff]
        %v5869 = vld [vmem:[%s5859 + $0x48] sm:$0xff]
        %v5870 = vld [vmem:[%s5859 + $0x50] sm:$0xff]
        %v5871 = vld [vmem:[%s5859 + $0x58] sm:$0xff]
        %v5872 = vld [vmem:[%s5859 + $0x60] sm:$0xff]
        %v5873 = vld [vmem:[%s5859 + $0x68] sm:$0xff]
        %v5874 = vld [vmem:[%s5859 + $0x70] sm:$0xff]
        %v5875 = vld [vmem:[%s5859 + $0x78] sm:$0xff]
        %v5876 = vld [vmem:[%s5859 + $0x80] sm:$0xff]
        %v5877 = vld [vmem:[%s5859 + $0x88] sm:$0xff]
        %v5878 = vld [vmem:[%s5859 + $0x90] sm:$0xff]
        %v5879 = vld [vmem:[%s5859 + $0x98] sm:$0xff]
        %v5880 = vld [vmem:[%s5859 + $0xa0] sm:$0xff]
        %v5881 = vld [vmem:[%s5859 + $0xa8] sm:$0xff]
        %v5882 = vld [vmem:[%s5859 + $0xb0] sm:$0xff]
        %v5883 = vld [vmem:[%s5859 + $0xb8] sm:$0xff]
        %v5884 = vld [vmem:[%s5859 + $0xc0] sm:$0xff]
        %v5885 = vld [vmem:[%s5859 + $0xc8] sm:$0xff]
        %v5886 = vld [vmem:[%s5859 + $0xd0] sm:$0xff]
        %v5887 = vld [vmem:[%s5859 + $0xd8] sm:$0xff]
        %v5888 = vld [vmem:[%s5859 + $0xe0] sm:$0xff]
        %v5889 = vld [vmem:[%s5859 + $0xe8] sm:$0xff]
        %v5890 = vld [vmem:[%s5859 + $0xf0] sm:$0xff]
        %v5891 = vld [vmem:[%s5859 + $0xf8] sm:$0xff]
        %s5892 = scalar_lea.vmem [#allocation19], 4
        %v5893 = vld [vmem:[%s5892] sm:$0xf]
        %v5895 = vlaneseq
        %v5896 = vshrl.u32 %v5895, 7
        %v5897 = vsub.s32 0, %v5896
        %v5898 = vrot.slane %v5893, %v5897
        %v5899 = vlaneseq
        %v5900 = vshrl.u32 %v5899, 7
        %v5901 = vsub.s32 1, %v5900
        %v5902 = vrot.slane %v5893, %v5901
        %v5903 = vlaneseq
        %v5904 = vshrl.u32 %v5903, 7
        %v5905 = vsub.s32 2, %v5904
        %v5906 = vrot.slane %v5893, %v5905
        %v5907 = vlaneseq
        %v5908 = vshrl.u32 %v5907, 7
        %v5909 = vsub.s32 3, %v5908
        %v5910 = vrot.slane %v5893, %v5909
        %v5947 = vunpack.c.l.b16 %v5860
        %v5948 = vunpack.c.h.b16 %v5860
        %v5949 = vunpack.c.l.b16 %v5861
        %v5950 = vunpack.c.h.b16 %v5861
        %v5951 = vunpack.c.l.b16 %v5862
        %v5952 = vunpack.c.h.b16 %v5862
        %v5953 = vunpack.c.l.b16 %v5863
        %v5954 = vunpack.c.h.b16 %v5863
        %v5955 = vunpack.c.l.b16 %v5864
        %v5956 = vunpack.c.h.b16 %v5864
        %v5957 = vunpack.c.l.b16 %v5865
        %v5958 = vunpack.c.h.b16 %v5865
        %v5959 = vunpack.c.l.b16 %v5866
        %v5960 = vunpack.c.h.b16 %v5866
        %v5961 = vunpack.c.l.b16 %v5867
        %v5962 = vunpack.c.h.b16 %v5867
        %v5963 = vunpack.c.l.b16 %v5868
        %v5964 = vunpack.c.h.b16 %v5868
        %v5965 = vunpack.c.l.b16 %v5869
        %v5966 = vunpack.c.h.b16 %v5869
        %v5967 = vunpack.c.l.b16 %v5870
        %v5968 = vunpack.c.h.b16 %v5870
        %v5969 = vunpack.c.l.b16 %v5871
        %v5970 = vunpack.c.h.b16 %v5871
        %v5971 = vunpack.c.l.b16 %v5872
        %v5972 = vunpack.c.h.b16 %v5872
        %v5973 = vunpack.c.l.b16 %v5873
        %v5974 = vunpack.c.h.b16 %v5873
        %v5975 = vunpack.c.l.b16 %v5874
        %v5976 = vunpack.c.h.b16 %v5874
        %v5977 = vunpack.c.l.b16 %v5875
        %v5978 = vunpack.c.h.b16 %v5875
        %v5979 = vunpack.c.l.b16 %v5876
        %v5980 = vunpack.c.h.b16 %v5876
        %v5981 = vunpack.c.l.b16 %v5877
        %v5982 = vunpack.c.h.b16 %v5877
        %v5983 = vunpack.c.l.b16 %v5878
        %v5984 = vunpack.c.h.b16 %v5878
        %v5985 = vunpack.c.l.b16 %v5879
        %v5986 = vunpack.c.h.b16 %v5879
        %v5987 = vunpack.c.l.b16 %v5880
        %v5988 = vunpack.c.h.b16 %v5880
        %v5989 = vunpack.c.l.b16 %v5881
        %v5990 = vunpack.c.h.b16 %v5881
        %v5991 = vunpack.c.l.b16 %v5882
        %v5992 = vunpack.c.h.b16 %v5882
        %v5993 = vunpack.c.l.b16 %v5883
        %v5994 = vunpack.c.h.b16 %v5883
        %v5995 = vunpack.c.l.b16 %v5884
        %v5996 = vunpack.c.h.b16 %v5884
        %v5997 = vunpack.c.l.b16 %v5885
        %v5998 = vunpack.c.h.b16 %v5885
        %v5999 = vunpack.c.l.b16 %v5886
        %v6000 = vunpack.c.h.b16 %v5886
        %v6001 = vunpack.c.l.b16 %v5887
        %v6002 = vunpack.c.h.b16 %v5887
        %v6003 = vunpack.c.l.b16 %v5888
        %v6004 = vunpack.c.h.b16 %v5888
        %v6005 = vunpack.c.l.b16 %v5889
        %v6006 = vunpack.c.h.b16 %v5889
        %v6007 = vunpack.c.l.b16 %v5890
        %v6008 = vunpack.c.h.b16 %v5890
        %v6009 = vunpack.c.l.b16 %v5891
        %v6010 = vunpack.c.h.b16 %v5891
        %v6011 = vpack.c.b16 %v5951, %v5947
        %v6012 = vpack.c.b16 %v5952, %v5948
        %v6013 = vpack.c.b16 %v5953, %v5949
        %v6014 = vpack.c.b16 %v5954, %v5950
        %v6015 = vpack.c.b16 %v5959, %v5955
        %v6016 = vpack.c.b16 %v5960, %v5956
        %v6017 = vpack.c.b16 %v5961, %v5957
        %v6018 = vpack.c.b16 %v5962, %v5958
        %v6019 = vpack.c.b16 %v5967, %v5963
        %v6020 = vpack.c.b16 %v5968, %v5964
        %v6021 = vpack.c.b16 %v5969, %v5965
        %v6022 = vpack.c.b16 %v5970, %v5966
        %v6023 = vpack.c.b16 %v5975, %v5971
        %v6024 = vpack.c.b16 %v5976, %v5972
        %v6025 = vpack.c.b16 %v5977, %v5973
        %v6026 = vpack.c.b16 %v5978, %v5974
        %v6027 = vpack.c.b16 %v5983, %v5979
        %v6028 = vpack.c.b16 %v5984, %v5980
        %v6029 = vpack.c.b16 %v5985, %v5981
        %v6030 = vpack.c.b16 %v5986, %v5982
        %v6031 = vpack.c.b16 %v5991, %v5987
        %v6032 = vpack.c.b16 %v5992, %v5988
        %v6033 = vpack.c.b16 %v5993, %v5989
        %v6034 = vpack.c.b16 %v5994, %v5990
        %v6035 = vpack.c.b16 %v5999, %v5995
        %v6036 = vpack.c.b16 %v6000, %v5996
        %v6037 = vpack.c.b16 %v6001, %v5997
        %v6038 = vpack.c.b16 %v6002, %v5998
        %v6039 = vpack.c.b16 %v6007, %v6003
        %v6040 = vpack.c.b16 %v6008, %v6004
        %v6041 = vpack.c.b16 %v6009, %v6005
        %v6042 = vpack.c.b16 %v6010, %v6006
        %6075 = vmatprep.subr.bf16.mxu0 %v6012
        %6076 = vmatpush1.bf16.msra.mxu0 %v6011
        %6077 = vmatprep.subr.bf16.mxu0 %v6016
        %6078 = vmatpush1.bf16.msra.mxu0 %v6015
        %6079 = vmatprep.subr.bf16.mxu0 %v6020
        %6080 = vmatpush1.bf16.msra.mxu0 %v6019
        %6081 = vmatprep.subr.bf16.mxu0 %v6024
        %6082 = vmatpush1.bf16.msra.mxu0 %v6023
        %6083 = vmatprep.subr.bf16.mxu0 %v6028
        %6084 = vmatpush1.bf16.msra.mxu0 %v6027
        %6085 = vmatprep.subr.bf16.mxu0 %v6032
        %6086 = vmatpush1.bf16.msra.mxu0 %v6031
        %6087 = vmatprep.subr.bf16.mxu0 %v6036
        %6088 = vmatpush1.bf16.msra.mxu0 %v6035
        %6089 = vmatprep.subr.bf16.mxu0 %v6040
        %6090 = vmatpush1.bf16.msra.mxu0 %v6039
        %6091 = vmatprep.subr.bf16.mxu0 0
        %6092 = vmatpush1.bf16.msra.mxu0 0
        %6093 = vmatprep.subr.bf16.mxu0 0
        %6094 = vmatpush1.bf16.msra.mxu0 0
        %6095 = vmatprep.subr.bf16.mxu0 0
        %6096 = vmatpush1.bf16.msra.mxu0 0
        %6097 = vmatprep.subr.bf16.mxu0 0
        %6098 = vmatpush1.bf16.msra.mxu0 0
        %6099 = vmatprep.subr.bf16.mxu0 0
        %6100 = vmatpush1.bf16.msra.mxu0 0
        %6101 = vmatprep.subr.bf16.mxu0 0
        %6102 = vmatpush1.bf16.msra.mxu0 0
        %6103 = vmatprep.subr.bf16.mxu0 0
        %6104 = vmatpush1.bf16.msra.mxu0 0
        %6105 = vmatprep.subr.bf16.mxu0 0
        %6106 = vmatpush1.bf16.msra.mxu0 0
        %6107 = vmatprep.mubr.bf16.mxu0 0
        %6108 = vmatmul.mubr.bf16.gmra.mrb[0].mxu0 %v5858
        %v6109 = vpop.f32.mrb[0].mxu0
        %v6110 = vadd.f32 %v5898, %v6109
        %v6111 = vpop.f32.mrb[0].mxu0
        %v6112 = vadd.f32 %v5902, %v6111
        %v6113 = vpop.f32.mrb[0].mxu0
        %v6114 = vpop.f32.mrb[0].mxu0
        %6115 = vdwg.mxu0
        %6116 = vmatprep.subr.bf16.mxu0 %v6014
        %6117 = vmatpush1.bf16.msra.mxu0 %v6013
        %6118 = vmatprep.subr.bf16.mxu0 %v6018
        %6119 = vmatpush1.bf16.msra.mxu0 %v6017
        %6120 = vmatprep.subr.bf16.mxu0 %v6022
        %6121 = vmatpush1.bf16.msra.mxu0 %v6021
        %6122 = vmatprep.subr.bf16.mxu0 %v6026
        %6123 = vmatpush1.bf16.msra.mxu0 %v6025
        %6124 = vmatprep.subr.bf16.mxu0 %v6030
        %6125 = vmatpush1.bf16.msra.mxu0 %v6029
        %6126 = vmatprep.subr.bf16.mxu0 %v6034
        %6127 = vmatpush1.bf16.msra.mxu0 %v6033
        %6128 = vmatprep.subr.bf16.mxu0 %v6038
        %6129 = vmatpush1.bf16.msra.mxu0 %v6037
        %6130 = vmatprep.subr.bf16.mxu0 %v6042
        %6131 = vmatpush1.bf16.msra.mxu0 %v6041
        %6132 = vmatprep.subr.bf16.mxu0 0
        %6133 = vmatpush1.bf16.msra.mxu0 0
        %6134 = vmatprep.subr.bf16.mxu0 0
        %6135 = vmatpush1.bf16.msra.mxu0 0
        %6136 = vmatprep.subr.bf16.mxu0 0
        %6137 = vmatpush1.bf16.msra.mxu0 0
        %6138 = vmatprep.subr.bf16.mxu0 0
        %6139 = vmatpush1.bf16.msra.mxu0 0
        %6140 = vmatprep.subr.bf16.mxu0 0
        %6141 = vmatpush1.bf16.msra.mxu0 0
        %6142 = vmatprep.subr.bf16.mxu0 0
        %6143 = vmatpush1.bf16.msra.mxu0 0
        %6144 = vmatprep.subr.bf16.mxu0 0
        %6145 = vmatpush1.bf16.msra.mxu0 0
        %6146 = vmatprep.subr.bf16.mxu0 0
        %6147 = vmatpush1.bf16.msra.mxu0 0
        %6148 = vmatprep.mubr.bf16.mxu0 0
        %6149 = vmatmul.mubr.bf16.gmra.mrb[0].mxu0 %v5858
        %v6150 = vpop.f32.mrb[0].mxu0
        %v6151 = vadd.f32 %v5906, %v6150
        %v6152 = vpop.f32.mrb[0].mxu0
        %v6153 = vadd.f32 %v5910, %v6152
        %v6154 = vpop.f32.mrb[0].mxu0
        %v6155 = vpop.f32.mrb[0].mxu0
        %6156 = vdwg.mxu0
        %v6157 = vmul.f32 %v6110, 0.5
        %v6158 = vmul.f32 %v6112, 0.5
        %v6159 = vmul.f32 %v6151, 0.5
        %v6160 = vmul.f32 %v6153, 0.5
        %v6161 = vmul.f32 %v6110, 0.044715
        %v6162 = vmul.f32 %v6112, 0.044715
        %v6163 = vmul.f32 %v6151, 0.044715
        %v6164 = vmul.f32 %v6153, 0.044715
        %v6165 = vmul.f32 %v6161, %v6110
        %v6166 = vmul.f32 %v6162, %v6112
        %v6167 = vmul.f32 %v6163, %v6151
        %v6168 = vmul.f32 %v6164, %v6153
        %v6169 = vmul.f32 %v6165, %v6110
        %v6170 = vmul.f32 %v6166, %v6112
        %v6171 = vmul.f32 %v6167, %v6151
        %v6172 = vmul.f32 %v6168, %v6153
        %v6173 = vadd.f32 %v6110, %v6169
        %v6174 = vadd.f32 %v6112, %v6170
        %v6175 = vadd.f32 %v6151, %v6171
        %v6176 = vadd.f32 %v6153, %v6172
        %v6177 = vmul.f32 %v6173, 0.7978846
        %v6178 = vmul.f32 %v6174, 0.7978846
        %v6179 = vmul.f32 %v6175, 0.7978846
        %v6180 = vmul.f32 %v6176, 0.7978846
        %v6181 = vtanh.pop %v6177
        %v6182 = vtanh.pop %v6178
        %v6183 = vtanh.pop %v6179
        %v6184 = vtanh.pop %v6180
        %v6185 = vadd.f32 %v6181, 1.0
        %v6186 = vadd.f32 %v6182, 1.0
        %v6187 = vadd.f32 %v6183, 1.0
        %v6188 = vadd.f32 %v6184, 1.0
        %v6189 = vmul.f32 %v6157, %v6185
        %v6190 = vmul.f32 %v6158, %v6186
        %v6191 = vmul.f32 %v6159, %v6187
        %v6192 = vmul.f32 %v6160, %v6188
        %v6193 = vpack.c.bf16 %v6189, %v6189
        %v6194 = vpack.c.bf16 %v6190, %v6190
        %v6195 = vpack.c.bf16 %v6191, %v6191
        %v6196 = vpack.c.bf16 %v6192, %v6192
        %s6197 = scalar_lea.vmem [#allocation20], 256
        %v6198 = vld [vmem:[%s6197] sm:$0xf]
        %v6199 = vld [vmem:[%s6197 + $0x4] sm:$0xf]
        %v6200 = vld [vmem:[%s6197 + $0x8] sm:$0xf]
        %v6201 = vld [vmem:[%s6197 + $0xc] sm:$0xf]
        %v6202 = vld [vmem:[%s6197 + $0x10] sm:$0xf]
        %v6203 = vld [vmem:[%s6197 + $0x14] sm:$0xf]
        %v6204 = vld [vmem:[%s6197 + $0x18] sm:$0xf]
        %v6205 = vld [vmem:[%s6197 + $0x1c] sm:$0xf]
        %v6206 = vld [vmem:[%s6197 + $0x20] sm:$0xf]
        %v6207 = vld [vmem:[%s6197 + $0x24] sm:$0xf]
        %v6208 = vld [vmem:[%s6197 + $0x28] sm:$0xf]
        %v6209 = vld [vmem:[%s6197 + $0x2c] sm:$0xf]
        %v6210 = vld [vmem:[%s6197 + $0x30] sm:$0xf]
        %v6211 = vld [vmem:[%s6197 + $0x34] sm:$0xf]
        %v6212 = vld [vmem:[%s6197 + $0x38] sm:$0xf]
        %v6213 = vld [vmem:[%s6197 + $0x3c] sm:$0xf]
        %v6214 = vld [vmem:[%s6197 + $0x40] sm:$0xf]
        %v6215 = vld [vmem:[%s6197 + $0x44] sm:$0xf]
        %v6216 = vld [vmem:[%s6197 + $0x48] sm:$0xf]
        %v6217 = vld [vmem:[%s6197 + $0x4c] sm:$0xf]
        %v6218 = vld [vmem:[%s6197 + $0x50] sm:$0xf]
        %v6219 = vld [vmem:[%s6197 + $0x54] sm:$0xf]
        %v6220 = vld [vmem:[%s6197 + $0x58] sm:$0xf]
        %v6221 = vld [vmem:[%s6197 + $0x5c] sm:$0xf]
        %v6222 = vld [vmem:[%s6197 + $0x60] sm:$0xf]
        %v6223 = vld [vmem:[%s6197 + $0x64] sm:$0xf]
        %v6224 = vld [vmem:[%s6197 + $0x68] sm:$0xf]
        %v6225 = vld [vmem:[%s6197 + $0x6c] sm:$0xf]
        %v6226 = vld [vmem:[%s6197 + $0x70] sm:$0xf]
        %v6227 = vld [vmem:[%s6197 + $0x74] sm:$0xf]
        %v6228 = vld [vmem:[%s6197 + $0x78] sm:$0xf]
        %v6229 = vld [vmem:[%s6197 + $0x7c] sm:$0xf]
        %v6230 = vld [vmem:[%s6197 + $0x80] sm:$0xf]
        %v6231 = vld [vmem:[%s6197 + $0x84] sm:$0xf]
        %v6232 = vld [vmem:[%s6197 + $0x88] sm:$0xf]
        %v6233 = vld [vmem:[%s6197 + $0x8c] sm:$0xf]
        %v6234 = vld [vmem:[%s6197 + $0x90] sm:$0xf]
        %v6235 = vld [vmem:[%s6197 + $0x94] sm:$0xf]
        %v6236 = vld [vmem:[%s6197 + $0x98] sm:$0xf]
        %v6237 = vld [vmem:[%s6197 + $0x9c] sm:$0xf]
        %v6238 = vld [vmem:[%s6197 + $0xa0] sm:$0xf]
        %v6239 = vld [vmem:[%s6197 + $0xa4] sm:$0xf]
        %v6240 = vld [vmem:[%s6197 + $0xa8] sm:$0xf]
        %v6241 = vld [vmem:[%s6197 + $0xac] sm:$0xf]
        %v6242 = vld [vmem:[%s6197 + $0xb0] sm:$0xf]
        %v6243 = vld [vmem:[%s6197 + $0xb4] sm:$0xf]
        %v6244 = vld [vmem:[%s6197 + $0xb8] sm:$0xf]
        %v6245 = vld [vmem:[%s6197 + $0xbc] sm:$0xf]
        %v6246 = vld [vmem:[%s6197 + $0xc0] sm:$0xf]
        %v6247 = vld [vmem:[%s6197 + $0xc4] sm:$0xf]
        %v6248 = vld [vmem:[%s6197 + $0xc8] sm:$0xf]
        %v6249 = vld [vmem:[%s6197 + $0xcc] sm:$0xf]
        %v6250 = vld [vmem:[%s6197 + $0xd0] sm:$0xf]
        %v6251 = vld [vmem:[%s6197 + $0xd4] sm:$0xf]
        %v6252 = vld [vmem:[%s6197 + $0xd8] sm:$0xf]
        %v6253 = vld [vmem:[%s6197 + $0xdc] sm:$0xf]
        %v6254 = vld [vmem:[%s6197 + $0xe0] sm:$0xf]
        %v6255 = vld [vmem:[%s6197 + $0xe4] sm:$0xf]
        %v6256 = vld [vmem:[%s6197 + $0xe8] sm:$0xf]
        %v6257 = vld [vmem:[%s6197 + $0xec] sm:$0xf]
        %v6258 = vld [vmem:[%s6197 + $0xf0] sm:$0xf]
        %v6259 = vld [vmem:[%s6197 + $0xf4] sm:$0xf]
        %v6260 = vld [vmem:[%s6197 + $0xf8] sm:$0xf]
        %v6261 = vld [vmem:[%s6197 + $0xfc] sm:$0xf]
        %s6262 = scalar_lea.vmem [#allocation22], 1
        %v6263 = vld [vmem:[%s6262] sm:$0x1]
        %v6265 = vlaneseq
        %v6266 = vshrl.u32 %v6265, 7
        %v6267 = vsub.s32 0, %v6266
        %v6268 = vrot.slane %v6263, %v6267
        %v6334 = vunpack.c.l.b16 %v6198
        %v6335 = vunpack.c.l.b16 %v6199
        %v6336 = vunpack.c.l.b16 %v6200
        %v6337 = vunpack.c.l.b16 %v6201
        %v6338 = vunpack.c.l.b16 %v6202
        %v6339 = vunpack.c.l.b16 %v6203
        %v6340 = vunpack.c.l.b16 %v6204
        %v6341 = vunpack.c.l.b16 %v6205
        %v6342 = vunpack.c.l.b16 %v6206
        %v6343 = vunpack.c.l.b16 %v6207
        %v6344 = vunpack.c.l.b16 %v6208
        %v6345 = vunpack.c.l.b16 %v6209
        %v6346 = vunpack.c.l.b16 %v6210
        %v6347 = vunpack.c.l.b16 %v6211
        %v6348 = vunpack.c.l.b16 %v6212
        %v6349 = vunpack.c.l.b16 %v6213
        %v6350 = vunpack.c.l.b16 %v6214
        %v6351 = vunpack.c.l.b16 %v6215
        %v6352 = vunpack.c.l.b16 %v6216
        %v6353 = vunpack.c.l.b16 %v6217
        %v6354 = vunpack.c.l.b16 %v6218
        %v6355 = vunpack.c.l.b16 %v6219
        %v6356 = vunpack.c.l.b16 %v6220
        %v6357 = vunpack.c.l.b16 %v6221
        %v6358 = vunpack.c.l.b16 %v6222
        %v6359 = vunpack.c.l.b16 %v6223
        %v6360 = vunpack.c.l.b16 %v6224
        %v6361 = vunpack.c.l.b16 %v6225
        %v6362 = vunpack.c.l.b16 %v6226
        %v6363 = vunpack.c.l.b16 %v6227
        %v6364 = vunpack.c.l.b16 %v6228
        %v6365 = vunpack.c.l.b16 %v6229
        %v6366 = vunpack.c.l.b16 %v6230
        %v6367 = vunpack.c.l.b16 %v6231
        %v6368 = vunpack.c.l.b16 %v6232
        %v6369 = vunpack.c.l.b16 %v6233
        %v6370 = vunpack.c.l.b16 %v6234
        %v6371 = vunpack.c.l.b16 %v6235
        %v6372 = vunpack.c.l.b16 %v6236
        %v6373 = vunpack.c.l.b16 %v6237
        %v6374 = vunpack.c.l.b16 %v6238
        %v6375 = vunpack.c.l.b16 %v6239
        %v6376 = vunpack.c.l.b16 %v6240
        %v6377 = vunpack.c.l.b16 %v6241
        %v6378 = vunpack.c.l.b16 %v6242
        %v6379 = vunpack.c.l.b16 %v6243
        %v6380 = vunpack.c.l.b16 %v6244
        %v6381 = vunpack.c.l.b16 %v6245
        %v6382 = vunpack.c.l.b16 %v6246
        %v6383 = vunpack.c.l.b16 %v6247
        %v6384 = vunpack.c.l.b16 %v6248
        %v6385 = vunpack.c.l.b16 %v6249
        %v6386 = vunpack.c.l.b16 %v6250
        %v6387 = vunpack.c.l.b16 %v6251
        %v6388 = vunpack.c.l.b16 %v6252
        %v6389 = vunpack.c.l.b16 %v6253
        %v6390 = vunpack.c.l.b16 %v6254
        %v6391 = vunpack.c.l.b16 %v6255
        %v6392 = vunpack.c.l.b16 %v6256
        %v6393 = vunpack.c.l.b16 %v6257
        %v6394 = vunpack.c.l.b16 %v6258
        %v6395 = vunpack.c.l.b16 %v6259
        %v6396 = vunpack.c.l.b16 %v6260
        %v6397 = vunpack.c.l.b16 %v6261
        %v6398 = vpack.c.b16 %v6335, %v6334
        %v6399 = vpack.c.b16 %v6337, %v6336
        %v6400 = vpack.c.b16 %v6339, %v6338
        %v6401 = vpack.c.b16 %v6341, %v6340
        %v6402 = vpack.c.b16 %v6343, %v6342
        %v6403 = vpack.c.b16 %v6345, %v6344
        %v6404 = vpack.c.b16 %v6347, %v6346
        %v6405 = vpack.c.b16 %v6349, %v6348
        %v6406 = vpack.c.b16 %v6351, %v6350
        %v6407 = vpack.c.b16 %v6353, %v6352
        %v6408 = vpack.c.b16 %v6355, %v6354
        %v6409 = vpack.c.b16 %v6357, %v6356
        %v6410 = vpack.c.b16 %v6359, %v6358
        %v6411 = vpack.c.b16 %v6361, %v6360
        %v6412 = vpack.c.b16 %v6363, %v6362
        %v6413 = vpack.c.b16 %v6365, %v6364
        %v6414 = vpack.c.b16 %v6367, %v6366
        %v6415 = vpack.c.b16 %v6369, %v6368
        %v6416 = vpack.c.b16 %v6371, %v6370
        %v6417 = vpack.c.b16 %v6373, %v6372
        %v6418 = vpack.c.b16 %v6375, %v6374
        %v6419 = vpack.c.b16 %v6377, %v6376
        %v6420 = vpack.c.b16 %v6379, %v6378
        %v6421 = vpack.c.b16 %v6381, %v6380
        %v6422 = vpack.c.b16 %v6383, %v6382
        %v6423 = vpack.c.b16 %v6385, %v6384
        %v6424 = vpack.c.b16 %v6387, %v6386
        %v6425 = vpack.c.b16 %v6389, %v6388
        %v6426 = vpack.c.b16 %v6391, %v6390
        %v6427 = vpack.c.b16 %v6393, %v6392
        %v6428 = vpack.c.b16 %v6395, %v6394
        %v6429 = vpack.c.b16 %v6397, %v6396
        %6462 = vmatprep.subr.bf16.mxu0 0
        %6463 = vmatpush1.bf16.msra.mxu0 %v6398
        %6464 = vmatprep.subr.bf16.mxu0 0
        %6465 = vmatpush1.bf16.msra.mxu0 %v6399
        %6466 = vmatprep.subr.bf16.mxu0 0
        %6467 = vmatpush1.bf16.msra.mxu0 %v6400
        %6468 = vmatprep.subr.bf16.mxu0 0
        %6469 = vmatpush1.bf16.msra.mxu0 %v6401
        %6470 = vmatprep.subr.bf16.mxu0 0
        %6471 = vmatpush1.bf16.msra.mxu0 %v6402
        %6472 = vmatprep.subr.bf16.mxu0 0
        %6473 = vmatpush1.bf16.msra.mxu0 %v6403
        %6474 = vmatprep.subr.bf16.mxu0 0
        %6475 = vmatpush1.bf16.msra.mxu0 %v6404
        %6476 = vmatprep.subr.bf16.mxu0 0
        %6477 = vmatpush1.bf16.msra.mxu0 %v6405
        %6478 = vmatprep.subr.bf16.mxu0 0
        %6479 = vmatpush1.bf16.msra.mxu0 %v6406
        %6480 = vmatprep.subr.bf16.mxu0 0
        %6481 = vmatpush1.bf16.msra.mxu0 %v6407
        %6482 = vmatprep.subr.bf16.mxu0 0
        %6483 = vmatpush1.bf16.msra.mxu0 %v6408
        %6484 = vmatprep.subr.bf16.mxu0 0
        %6485 = vmatpush1.bf16.msra.mxu0 %v6409
        %6486 = vmatprep.subr.bf16.mxu0 0
        %6487 = vmatpush1.bf16.msra.mxu0 %v6410
        %6488 = vmatprep.subr.bf16.mxu0 0
        %6489 = vmatpush1.bf16.msra.mxu0 %v6411
        %6490 = vmatprep.subr.bf16.mxu0 0
        %6491 = vmatpush1.bf16.msra.mxu0 %v6412
        %6492 = vmatprep.subr.bf16.mxu0 0
        %6493 = vmatpush1.bf16.msra.mxu0 %v6413
        %6494 = vmatprep.mubr.bf16.mxu0 %v6194
        %6495 = vmatmul.mubr.bf16.gmra.mrb[0].mxu0 %v6193
        %v6496 = vpop.f32.mrb[0].mxu0
        %v6497 = vadd.f32 %v6268, %v6496
        %v6498 = vpop.f32.mrb[0].mxu0
        %v6499 = vpop.f32.mrb[0].mxu0
        %v6500 = vpop.f32.mrb[0].mxu0
        %6501 = vdwg.mxu0
        %6502 = vmatprep.subr.bf16.mxu0 0
        %6503 = vmatpush1.bf16.msra.mxu0 %v6414
        %6504 = vmatprep.subr.bf16.mxu0 0
        %6505 = vmatpush1.bf16.msra.mxu0 %v6415
        %6506 = vmatprep.subr.bf16.mxu0 0
        %6507 = vmatpush1.bf16.msra.mxu0 %v6416
        %6508 = vmatprep.subr.bf16.mxu0 0
        %6509 = vmatpush1.bf16.msra.mxu0 %v6417
        %6510 = vmatprep.subr.bf16.mxu0 0
        %6511 = vmatpush1.bf16.msra.mxu0 %v6418
        %6512 = vmatprep.subr.bf16.mxu0 0
        %6513 = vmatpush1.bf16.msra.mxu0 %v6419
        %6514 = vmatprep.subr.bf16.mxu0 0
        %6515 = vmatpush1.bf16.msra.mxu0 %v6420
        %6516 = vmatprep.subr.bf16.mxu0 0
        %6517 = vmatpush1.bf16.msra.mxu0 %v6421
        %6518 = vmatprep.subr.bf16.mxu0 0
        %6519 = vmatpush1.bf16.msra.mxu0 %v6422
        %6520 = vmatprep.subr.bf16.mxu0 0
        %6521 = vmatpush1.bf16.msra.mxu0 %v6423
        %6522 = vmatprep.subr.bf16.mxu0 0
        %6523 = vmatpush1.bf16.msra.mxu0 %v6424
        %6524 = vmatprep.subr.bf16.mxu0 0
        %6525 = vmatpush1.bf16.msra.mxu0 %v6425
        %6526 = vmatprep.subr.bf16.mxu0 0
        %6527 = vmatpush1.bf16.msra.mxu0 %v6426
        %6528 = vmatprep.subr.bf16.mxu0 0
        %6529 = vmatpush1.bf16.msra.mxu0 %v6427
        %6530 = vmatprep.subr.bf16.mxu0 0
        %6531 = vmatpush1.bf16.msra.mxu0 %v6428
        %6532 = vmatprep.subr.bf16.mxu0 0
        %6533 = vmatpush1.bf16.msra.mxu0 %v6429
        %6534 = vmatprep.mubr.bf16.mxu0 %v6196
        %6535 = vmatmul.mubr.bf16.gmra.mrb[0].mxu0 %v6195
        %v6536 = vpop.f32.mrb[0].mxu0
        %v6537 = vadd.f32 %v6497, %v6536
        %v6538 = vpop.f32.mrb[0].mxu0
        %v6539 = vpop.f32.mrb[0].mxu0
        %v6540 = vpop.f32.mrb[0].mxu0
        %6541 = vdwg.mxu0
        %v6542 = vadd.f32 %v5857, %v6537
        %s6543 = scalar_lea.vmem [#allocation23], 1
        %v6544 = vld [vmem:[%s6543] sm:$0x1]
        %s6545 = scalar_lea.vmem [#allocation25], 1
        %v6546 = vld [vmem:[%s6545] sm:$0x1]
        %6547 = vadd.xlane.f32.xlu0 %v6542
        %v6548 = vpop.xlane.xlu0 %6547
        %v6549 = vmul.f32 %v6548, %v2673
        %v6550 = vsub.f32 %v6542, %v6549
        %v6551 = vmul.f32 %v6550, %v6550
        %6552 = vadd.xlane.f32.xlu0 %v6551
        %v6553 = vpop.xlane.xlu0 %6552
        %v6554 = vmul.f32 %v6553, %v2673
        %v6555 = vadd.f32 %v6554, 1e-05
        %v6556 = vrsqrt.pop %v6555
        %v6557 = vmul.f32 %v6550, %v6556
        %v6559 = vlaneseq
        %v6560 = vshrl.u32 %v6559, 7
        %v6561 = vsub.s32 0, %v6560
        %v6562 = vrot.slane %v6544, %v6561
        %v6564 = vmul.f32 %v6557, %v6562
        %v6566 = vlaneseq
        %v6567 = vshrl.u32 %v6566, 7
        %v6568 = vsub.s32 0, %v6567
        %v6569 = vrot.slane %v6546, %v6568
        %v6571 = vadd.f32 %v6564, %v6569
        %v6572 = vld [vmem:[%s1312] sm:$0xff]
        %v6573 = vld [vmem:[%s1312 + $0x8] sm:$0xff]
        %v6574 = vld [vmem:[%s1316] sm:$0xff]
        %v6575 = vpack.c.bf16 %v6571, %v6571
        %v6576 = vld [vmem:[#allocation26] sm:$0xff]
        %v6577 = vld [vmem:[#allocation26 + $0x8] sm:$0xff]
        %v6578 = vld [vmem:[#allocation26 + $0x10] sm:$0xff]
        %v6579 = vld [vmem:[#allocation26 + $0x18] sm:$0xff]
        %v6580 = vld [vmem:[#allocation26 + $0x20] sm:$0xff]
        %v6581 = vld [vmem:[#allocation26 + $0x28] sm:$0xff]
        %v6582 = vld [vmem:[#allocation26 + $0x30] sm:$0xff]
        %v6583 = vld [vmem:[#allocation26 + $0x38] sm:$0xff]
        %v6584 = vld [vmem:[#allocation26 + $0x40] sm:$0xff]
        %v6585 = vld [vmem:[#allocation26 + $0x48] sm:$0xff]
        %v6586 = vld [vmem:[#allocation26 + $0x50] sm:$0xff]
        %v6587 = vld [vmem:[#allocation26 + $0x58] sm:$0xff]
        %v6588 = vld [vmem:[#allocation26 + $0x60] sm:$0xff]
        %v6589 = vld [vmem:[#allocation26 + $0x68] sm:$0xff]
        %v6590 = vld [vmem:[#allocation26 + $0x70] sm:$0xff]
        %v6591 = vld [vmem:[#allocation26 + $0x78] sm:$0xff]
        %v6592 = vld [vmem:[#allocation28] sm:$0x3]
        %v6594 = vlaneseq
        %v6595 = vshrl.u32 %v6594, 7
        %v6596 = vsub.s32 0, %v6595
        %v6597 = vrot.slane %v6592, %v6596
        %v6598 = vlaneseq
        %v6599 = vshrl.u32 %v6598, 7
        %v6600 = vsub.s32 1, %v6599
        %v6601 = vrot.slane %v6592, %v6600
        %v6620 = vunpack.c.l.b16 %v6576
        %v6621 = vunpack.c.h.b16 %v6576
        %v6622 = vunpack.c.l.b16 %v6577
        %v6623 = vunpack.c.h.b16 %v6577
        %v6624 = vunpack.c.l.b16 %v6578
        %v6625 = vunpack.c.h.b16 %v6578
        %v6626 = vunpack.c.l.b16 %v6579
        %v6627 = vunpack.c.h.b16 %v6579
        %v6628 = vunpack.c.l.b16 %v6580
        %v6629 = vunpack.c.h.b16 %v6580
        %v6630 = vunpack.c.l.b16 %v6581
        %v6631 = vunpack.c.h.b16 %v6581
        %v6632 = vunpack.c.l.b16 %v6582
        %v6633 = vunpack.c.h.b16 %v6582
        %v6634 = vunpack.c.l.b16 %v6583
        %v6635 = vunpack.c.h.b16 %v6583
        %v6636 = vunpack.c.l.b16 %v6584
        %v6637 = vunpack.c.h.b16 %v6584
        %v6638 = vunpack.c.l.b16 %v6585
        %v6639 = vunpack.c.h.b16 %v6585
        %v6640 = vunpack.c.l.b16 %v6586
        %v6641 = vunpack.c.h.b16 %v6586
        %v6642 = vunpack.c.l.b16 %v6587
        %v6643 = vunpack.c.h.b16 %v6587
        %v6644 = vunpack.c.l.b16 %v6588
        %v6645 = vunpack.c.h.b16 %v6588
        %v6646 = vunpack.c.l.b16 %v6589
        %v6647 = vunpack.c.h.b16 %v6589
        %v6648 = vunpack.c.l.b16 %v6590
        %v6649 = vunpack.c.h.b16 %v6590
        %v6650 = vunpack.c.l.b16 %v6591
        %v6651 = vunpack.c.h.b16 %v6591
        %v6652 = vpack.c.b16 %v6622, %v6620
        %v6653 = vpack.c.b16 %v6623, %v6621
        %v6654 = vpack.c.b16 %v6626, %v6624
        %v6655 = vpack.c.b16 %v6627, %v6625
        %v6656 = vpack.c.b16 %v6630, %v6628
        %v6657 = vpack.c.b16 %v6631, %v6629
        %v6658 = vpack.c.b16 %v6634, %v6632
        %v6659 = vpack.c.b16 %v6635, %v6633
        %v6660 = vpack.c.b16 %v6638, %v6636
        %v6661 = vpack.c.b16 %v6639, %v6637
        %v6662 = vpack.c.b16 %v6642, %v6640
        %v6663 = vpack.c.b16 %v6643, %v6641
        %v6664 = vpack.c.b16 %v6646, %v6644
        %v6665 = vpack.c.b16 %v6647, %v6645
        %v6666 = vpack.c.b16 %v6650, %v6648
        %v6667 = vpack.c.b16 %v6651, %v6649
        %6684 = vmatprep.subr.bf16.mxu0 %v6653
        %6685 = vmatpush1.bf16.msra.mxu0 %v6652
        %6686 = vmatprep.subr.bf16.mxu0 %v6655
        %6687 = vmatpush1.bf16.msra.mxu0 %v6654
        %6688 = vmatprep.subr.bf16.mxu0 %v6657
        %6689 = vmatpush1.bf16.msra.mxu0 %v6656
        %6690 = vmatprep.subr.bf16.mxu0 %v6659
        %6691 = vmatpush1.bf16.msra.mxu0 %v6658
        %6692 = vmatprep.subr.bf16.mxu0 %v6661
        %6693 = vmatpush1.bf16.msra.mxu0 %v6660
        %6694 = vmatprep.subr.bf16.mxu0 %v6663
        %6695 = vmatpush1.bf16.msra.mxu0 %v6662
        %6696 = vmatprep.subr.bf16.mxu0 %v6665
        %6697 = vmatpush1.bf16.msra.mxu0 %v6664
        %6698 = vmatprep.subr.bf16.mxu0 %v6667
        %6699 = vmatpush1.bf16.msra.mxu0 %v6666
        %6700 = vmatprep.subr.bf16.mxu0 0
        %6701 = vmatpush1.bf16.msra.mxu0 0
        %6702 = vmatprep.subr.bf16.mxu0 0
        %6703 = vmatpush1.bf16.msra.mxu0 0
        %6704 = vmatprep.subr.bf16.mxu0 0
        %6705 = vmatpush1.bf16.msra.mxu0 0
        %6706 = vmatprep.subr.bf16.mxu0 0
        %6707 = vmatpush1.bf16.msra.mxu0 0
        %6708 = vmatprep.subr.bf16.mxu0 0
        %6709 = vmatpush1.bf16.msra.mxu0 0
        %6710 = vmatprep.subr.bf16.mxu0 0
        %6711 = vmatpush1.bf16.msra.mxu0 0
        %6712 = vmatprep.subr.bf16.mxu0 0
        %6713 = vmatpush1.bf16.msra.mxu0 0
        %6714 = vmatprep.subr.bf16.mxu0 0
        %6715 = vmatpush1.bf16.msra.mxu0 0
        %6716 = vmatprep.mubr.bf16.mxu0 0
        %6717 = vmatmul.mubr.bf16.gmra.mrb[0].mxu0 %v6575
        %v6718 = vpop.f32.mrb[0].mxu0
        %v6719 = vadd.f32 %v6597, %v6718
        %v6720 = vpop.f32.mrb[0].mxu0
        %v6721 = vadd.f32 %v6601, %v6720
        %v6722 = vpop.f32.mrb[0].mxu0
        %v6723 = vpop.f32.mrb[0].mxu0
        %6724 = vdwg.mxu0
        %6725 = vmax.xlane.f32.xlu0 %v6719
        %v6726 = vpop.xlane.xlu0 %6725
        %v6727 = vsub.f32 %v6719, %v6726
        %v6728 = vmul.f32 %v6727, 1.442695
        %v6729 = vpow.pop %v6728
        %6730 = vadd.xlane.f32.xlu0 %v6729
        %v6731 = vpop.xlane.xlu0 %6730
        %v6732 = vrcp.pop %v6731
        %v6733 = vmul.f32 %v6729, %v6732
        %v6734 = vpack.c.bf16 %v6721, %v6721
        %6735 = vmatprep.subr.bf16.mxu0 0
        %6736 = vmatpush1.bf16.xpose.msra.mxu0 %v1327
        %6737 = vmatprep.subr.bf16.mxu0 0
        %6738 = vmatpush1.bf16.xpose.msra.mxu0 0
        %6739 = vmatprep.subr.bf16.mxu0 0
        %6740 = vmatpush1.bf16.xpose.msra.mxu0 0
        %6741 = vmatprep.subr.bf16.mxu0 0
        %6742 = vmatpush1.bf16.xpose.msra.mxu0 0
        %6743 = vmatprep.subr.bf16.mxu0 0
        %6744 = vmatpush1.bf16.xpose.msra.mxu0 0
        %6745 = vmatprep.subr.bf16.mxu0 0
        %6746 = vmatpush1.bf16.xpose.msra.mxu0 0
        %6747 = vmatprep.subr.bf16.mxu0 0
        %6748 = vmatpush1.bf16.xpose.msra.mxu0 0
        %6749 = vmatprep.subr.bf16.mxu0 0
        %6750 = vmatpush1.bf16.xpose.msra.mxu0 0
        %6751 = vmatprep.subr.bf16.mxu0 0
        %6752 = vmatpush1.bf16.xpose.msra.mxu0 0
        %6753 = vmatprep.subr.bf16.mxu0 0
        %6754 = vmatpush1.bf16.xpose.msra.mxu0 0
        %6755 = vmatprep.subr.bf16.mxu0 0
        %6756 = vmatpush1.bf16.xpose.msra.mxu0 0
        %6757 = vmatprep.subr.bf16.mxu0 0
        %6758 = vmatpush1.bf16.xpose.msra.mxu0 0
        %6759 = vmatprep.subr.bf16.mxu0 0
        %6760 = vmatpush1.bf16.xpose.msra.mxu0 0
        %6761 = vmatprep.subr.bf16.mxu0 0
        %6762 = vmatpush1.bf16.xpose.msra.mxu0 0
        %6763 = vmatprep.subr.bf16.mxu0 0
        %6764 = vmatpush1.bf16.xpose.msra.mxu0 0
        %6765 = vmatprep.subr.bf16.mxu0 0
        %6766 = vmatpush1.bf16.xpose.msra.mxu0 0
        %6767 = vmatprep.mubr.bf16.mxu0 0
        %6768 = vmatmul.mubr.bf16.gmra.mrb[0].mxu0 %v6734
        %v6769 = vpop.f32.mrb[0].mxu0
        %v6770 = vadd.f32 %v3119, %v6769
        %v6771 = vpop.f32.mrb[0].mxu0
        %v6772 = vpop.f32.mrb[0].mxu0
        %v6773 = vpop.f32.mrb[0].mxu0
        %6774 = vdwg.mxu0
        %vm6775 = vcmask 130048
        %v6776 = vsel %vm6775, %v6770, -inf
        %6777 = vmax.xlane.f32.xlu0 %v6776
        %v6778 = vpop.xlane.xlu0 %6777
        %v6779 = vsub.f32 %v6770, %v6778
        %v6780 = vmul.f32 %v6779, 1.442695
        %v6781 = vpow.pop %v6780
        %v6782 = vsel %vm6775, %v6781, 0.0
        %6783 = vadd.xlane.f32.xlu0 %v6782
        %v6784 = vpop.xlane.xlu0 %6783
        %v6785 = vrcp.pop %v6784
        %v6786 = vmul.f32 %v6781, %v6785
        %v6787 = vld [vmem:[#allocation29] sm:$0x1]
        %v6789 = vlaneseq
        %v6790 = vshrl.u32 %v6789, 7
        %v6791 = vsub.s32 0, %v6790
        %v6792 = vrot.slane %v6787, %v6791
        %v6794 = vmul.f32 %v6571, %v6792
        %6795 = vadd.xlane.f32.xlu0 %v6794
        %v6796 = vpop.xlane.xlu0 %6795
        %v6797 = vld [vmem:[#allocation2] sm:$0x1]
        %v6799 = vlaneseq
        %v6800 = vshrl.u32 %v6799, 7
        %v6801 = vsub.s32 0, %v6800
        %v6802 = vrot.slane %v6797, %v6801
        %v6804 = vadd.f32 %v6796, %v6802
        %v6805 = vsub.f32 0.0, %v6804
        %v6806 = vmul.f32 %v6805, 1.442695
        %v6807 = vpow.pop %v6806
        %v6808 = vadd.f32 %v6807, 1.0
        %v6809 = vrcp.pop %v6808
        %6811 = vset.pattern.permute.xlu0 0
        %6812 = vperm.xlu0 %6811, %v6809
        %v6813 = vpop.permute.xlu0 %6812
        %v6815 = vmul.f32 %v6733, %v6813
        %v6816 = vlaneseq
        %v6817 = vand.u32 %v6816, 127
        %6818 = vset.pattern.permute.xlu0 0
        %6819 = vperm.xlu0 %6818, %v6572
        %v6820 = vpop.permute.xlu0 %6819
        %6821 = vset.pattern.permute.xlu0 0
        %6822 = vperm.xlu0 %6821, %v6573
        %v6823 = vpop.permute.xlu0 %6822
        %vm6824 = vcmp.eq.s32.totalorder %v6820, %v6817
        %vm6825 = vcmp.eq.s32.totalorder %v6823, %v6817
        %v6826 = vsel %vm6824, 1, 0
        %v6827 = vsel %vm6825, 1, 0
        %v6828 = vcvt.s32.f32 %v6826
        %v6829 = vcvt.s32.f32 %v6827
        %v6830 = vpack.c.bf16 %v6829, %v6828
        %v6831 = vsub.f32 1.0, %v6809
        %6833 = vset.pattern.permute.xlu0 0
        %6834 = vperm.xlu0 %6833, %v6831
        %v6835 = vpop.permute.xlu0 %6834
        %v6837 = vmul.f32 %v6835, %v6786
        %v6838 = vpack.c.bf16 %v6837, %v6837
        %v6840 = vsel %vm6775, %v6838, 0
        %6842 = vmatprep.subr.bf16.mxu0 0
        %6843 = vmatpush1.bf16.msra.mxu0 %v6830
        %6844 = vmatprep.subr.bf16.mxu0 0
        %6845 = vmatpush1.bf16.msra.mxu0 0
        %6846 = vmatprep.subr.bf16.mxu0 0
        %6847 = vmatpush1.bf16.msra.mxu0 0
        %6848 = vmatprep.subr.bf16.mxu0 0
        %6849 = vmatpush1.bf16.msra.mxu0 0
        %6850 = vmatprep.subr.bf16.mxu0 0
        %6851 = vmatpush1.bf16.msra.mxu0 0
        %6852 = vmatprep.subr.bf16.mxu0 0
        %6853 = vmatpush1.bf16.msra.mxu0 0
        %6854 = vmatprep.subr.bf16.mxu0 0
        %6855 = vmatpush1.bf16.msra.mxu0 0
        %6856 = vmatprep.subr.bf16.mxu0 0
        %6857 = vmatpush1.bf16.msra.mxu0 0
        %6858 = vmatprep.subr.bf16.mxu0 0
        %6859 = vmatpush1.bf16.msra.mxu0 0
        %6860 = vmatprep.subr.bf16.mxu0 0
        %6861 = vmatpush1.bf16.msra.mxu0 0
        %6862 = vmatprep.subr.bf16.mxu0 0
        %6863 = vmatpush1.bf16.msra.mxu0 0
        %6864 = vmatprep.subr.bf16.mxu0 0
        %6865 = vmatpush1.bf16.msra.mxu0 0
        %6866 = vmatprep.subr.bf16.mxu0 0
        %6867 = vmatpush1.bf16.msra.mxu0 0
        %6868 = vmatprep.subr.bf16.mxu0 0
        %6869 = vmatpush1.bf16.msra.mxu0 0
        %6870 = vmatprep.subr.bf16.mxu0 0
        %6871 = vmatpush1.bf16.msra.mxu0 0
        %6872 = vmatprep.subr.bf16.mxu0 0
        %6873 = vmatpush1.bf16.msra.mxu0 0
        %6874 = vmatprep.mubr.bf16.mxu0 0
        %6875 = vmatmul.mubr.bf16.gmra.mrb[0].mxu0 %v6840
        %v6876 = vpop.f32.mrb[0].mxu0
        %v6877 = vadd.f32 0.0, %v6876
        %v6878 = vpop.f32.mrb[0].mxu0
        %v6879 = vpop.f32.mrb[0].mxu0
        %v6880 = vpop.f32.mrb[0].mxu0
        %6881 = vdwg.mxu0
        %v6882 = vadd.f32 %v6815, %v6877
        %6883 = vset.pattern.permute.xlu0 0
        %6884 = vperm.xlu0 %6883, %v6574
        %v6885 = vpop.permute.xlu0 %6884
        %vm6886 = vcmp.eq.s32.totalorder %v6885, %v6817
        %v6887 = vsel %vm6886, 1, 0
        %v6888 = vcvt.s32.f32 %v6887
        %v6889 = vmul.f32 %v6882, %v6888
        %6890 = vadd.xlane.f32.xlu0 %v6889
        %v6891 = vpop.xlane.xlu0 %6890
        %vm6892 = vcmp.ne.s32.totalorder %v6574, 0
        %v6893 = vsel %vm6892, 1, 0
        %v6894 = vcvt.s32.f32 %v6893
        %v6895 = vadd.f32 %v6891, 1e-06
        %v6896 = vlog2.pop %v6895
        %v6897 = vmul.f32 %v6896, 0.6931472
        %v6898 = vsub.f32 0.0, %v6897
        %v6899 = vmul.f32 %v6898, %v6894
        %vm6900 = vcmask 7168
        %v6901 = vsel %vm6900, %v6899, 0.0
        %6902 = vadd.xlane.f32.xlu0 %v6901
        %v6903 = vpop.xlane.xlu0 %6902
        %v6904 = vrot.slane %v6903, 4
        %v6905 = vadd.f32 %v6903, %v6904
        %v6906 = vrot.slane %v6905, 2
        %v6907 = vadd.f32 %v6905, %v6906
        %v6908 = vrot.slane %v6907, 1
        %v6909 = vadd.f32 %v6907, %v6908
        %s6910 = vtos %v6909
        %v6911 = vstv %s6910
        %vm6912 = vcmask 0
        %6913 = vst.msk [vmem:[%s1319] sm:$0x1] %vm6912, %v6911
        %v6914 = vsel %vm6900, %v6894, 0.0
        %6915 = vadd.xlane.f32.xlu0 %v6914
        %v6916 = vpop.xlane.xlu0 %6915
        %v6917 = vrot.slane %v6916, 4
        %v6918 = vadd.f32 %v6916, %v6917
        %v6919 = vrot.slane %v6918, 2
        %v6920 = vadd.f32 %v6918, %v6919
        %v6921 = vrot.slane %v6920, 1
        %v6922 = vadd.f32 %v6920, %v6921
        %s6923 = vtos %v6922
        %v6924 = vstv %s6923
        %6925 = vst.msk [vmem:[%s1322] sm:$0x1] %vm6912, %v6924
        %p6926 = scmp.lt.s32.totalorder %s89, 1
        %s6927 = scalar_select %p6926, %s89, 1
        %s6928 = scalar_lea.vmem %s63, %s6927
        %p6929 = scmp.lt.s32.totalorder %s89, 1
        %s6930 = scalar_select %p6929, %s89, 1
        %s6931 = scalar_lea.vmem %s65, %s6930
        // Predicated region
        $region217: #{question_generation_forward.1} parent=143 // pred_check
          %p6932 = pneg %p783
        $region218: #{question_generation_forward.1} parent=143 // pred_check_branch
          %6934 = sbr.rel (%p6932) target = $region220
        $region219: #{question_generation_forward.1} parent=143 // pred_region
          _
        $region220: #{question_generation_forward.1} parent=143 // pred_fallthru
          _
        // Predicated region
        $region221: #{question_generation_forward.1} parent=143 // pred_check
          %p6935 = pneg %p809
        $region222: #{question_generation_forward.1} parent=143 // pred_check_branch
          %6937 = sbr.rel (%p6935) target = $region224
        $region223: #{question_generation_forward.1} parent=143 // pred_region
          _
        $region224: #{question_generation_forward.1} parent=143 // pred_fallthru
          _
      $region144: #{question_generation_forward.1} parent=5 // pred_fallthru
        _
      %p6938 = scmp.le.s32.totalorder 2, %s84
      // Predicated region
      $region225: #{question_generation_forward.1} parent=5 // pred_check
        %p6939 = pneg %p6938
      $region226: #{question_generation_forward.1} parent=5 // pred_check_branch
        %6941 = sbr.rel (%p6939) target = $region228
      $region227: #{question_generation_forward.1} parent=5 // pred_region
        %s6942 = ssub.s32 %s84, 2
        // Predicated region
        $region229: #{question_generation_forward.1} parent=227 // pred_check
          %p6943 = pneg %p789
        $region230: #{question_generation_forward.1} parent=227 // pred_check_branch
          %6945 = sbr.rel (%p6943) target = $region232
        $region231: #{question_generation_forward.1} parent=227 // pred_region
          %p6946 = scmp.lt.s32.totalorder %s90, 1
          %s6947 = scalar_select %p6946, %s90, 1
          %s6948 = scalar_lea.vmem %s63, %s6947
        $region232: #{question_generation_forward.1} parent=227 // pred_fallthru
          _
        // Predicated region
        $region233: #{question_generation_forward.1} parent=227 // pred_check
          %p6949 = pneg %p815
        $region234: #{question_generation_forward.1} parent=227 // pred_check_branch
          %6951 = sbr.rel (%p6949) target = $region236
        $region235: #{question_generation_forward.1} parent=227 // pred_region
          %p6952 = scmp.lt.s32.totalorder %s90, 1
          %s6953 = scalar_select %p6952, %s90, 1
          %s6954 = scalar_lea.vmem %s65, %s6953
        $region236: #{question_generation_forward.1} parent=227 // pred_fallthru
          _
      $region228: #{question_generation_forward.1} parent=5 // pred_fallthru
        _
    $region6: #{question_generation_forward.1} parent=1 // loop_footer
      %s88 = sadd.s32 1, %s84
    $region7: #{question_generation_forward.1} parent=1 // loop_footer_branch
      %83 = sbr.rel target = $region3
    $region8: #{question_generation_forward.1} parent=1 // loop_exit
      _
    %6955 = vsyncpa [#allocation4], 1
    %s6956 = scalar_lea.sflag [#allocation4], 1
    %6957 = vsyncpa %s6956, 1
    %6958 = vsyncpa [#allocation6], 1
    %6959 = vsyncpa [#allocation9], 1
    %6960 = vsyncpa [#allocation12], 1
    %6961 = vsyncpa [#allocation15], 1
    %6962 = vsyncpa [#allocation18], 1
    %6963 = vsyncpa [#allocation21], 1
    %6964 = vsyncpa [#allocation24], 1
    %6965 = vsyncpa [#allocation27], 1
    %6966 = vsyncpa [#allocation30], 1

</llo_original>
